<compile_context>
chip_gen: v7x
topology: tpu7x:2x2x1
jax: 0.10.0
libtpu: 0.0.40
codegen_flags: <defaults>
</compile_context>

<pallas_src>
import math

import jax
import jax.numpy as jnp
from jax import lax
from jax.experimental import pallas as pl
from jax.experimental.pallas import tpu as pltpu

LN_EPS = 1e-5  # nn.LayerNorm default

# Set to jnp.bfloat16 to trade ~1e-3 accuracy for ~2x MXU throughput on v6e/v7x
# (accumulation stays f32).  Kept f32 by default to preserve reference numerics.
MATMUL_DTYPE = jnp.float32


def _mm(a, b):
    return jnp.dot(a.astype(MATMUL_DTYPE), b.astype(MATMUL_DTYPE),
                   preferred_element_type=jnp.float32)


def _softplus(x):
    # matches torch.nn.Softplus (beta=1, threshold=20)
    xs = jnp.minimum(x, 20.0)
    return jnp.where(x > 20.0, x, jnp.log(1.0 + jnp.exp(xs)))


def _silu(x):
    return x * (1.0 / (1.0 + jnp.exp(-x)))


def _bimamba_kernel(
    x_ref,        # (1, S, D)      one batch element
    nw_ref,       # (L, 1, D)      layernorm weight
    nb_ref,       # (L, 1, D)      layernorm bias
    wix_ref,      # (L, D, DI)     in_proj (x half)
    wiz_ref,      # (L, D, DI)     in_proj (z half)
    cw_ref,       # (L, K, DI)     depthwise conv weight
    cb_ref,       # (L, 1, DI)     conv bias
    wdl_ref,      # (L, DI, R)     x -> delta low-rank
    wB_ref,       # (L, DI, N)     x -> B
    wC_ref,       # (L, DI, N)     x -> C
    wdt_ref,      # (L, R, DI)     dt_proj weight
    bdt_ref,      # (L, 1, DI)     dt_proj bias
    alog_ref,     # (L, N, DI)     A_log (transposed vs torch (DI, N))
    dprm_ref,     # (L, 1, DI)     D
    wout_ref,     # (L, DI, D)     out_proj
    o_ref,        # (1, S, D)      output
    # scratch (lane-dense: DI on lanes)
    dA_ref,       # (2S, N, DI)
    dBx_ref,      # (2S, N, DI)
    c_ref,        # (2S, N)
    y_ref,        # (2S, DI)
):
    S = x_ref.shape[1]
    L, N, DI = alog_ref.shape
    K = cw_ref.shape[1]

    x = x_ref[0].astype(jnp.float32)                       # (S, D)

    for l in range(L):                                     # depth is static & small
        skip = x

        # ---- LayerNorm ----
        mu = jnp.mean(x, axis=-1, keepdims=True)
        var = jnp.mean((x - mu) ** 2, axis=-1, keepdims=True)
        xn = (x - mu) * lax.rsqrt(var + LN_EPS)
        xn = xn * nw_ref[l] + nb_ref[l]

        # ---- in_proj (weights pre-split -> no misaligned lane slicing) ----
        x1 = _mm(xn, wix_ref[l])                           # (S, DI)
        z1 = _mm(xn, wiz_ref[l])                           # (S, DI)

        # ---- shared depthwise conv, both directions, fully in registers ----
        # forward  : causal conv of x1            (== torch conv on x1)
        # backward : anti-causal conv, reversed kernel
        #            (== flip(torch conv applied to flip(x1)))
        cw = cw_ref[l]                                     # (K, DI)
        cb = cb_ref[l]                                     # (1, DI)
        zpad = jnp.zeros((K - 1, DI), jnp.float32)
        xpad = jnp.concatenate([zpad, x1, zpad], axis=0)   # (S + 2K - 2, DI)
        acc_f = xpad[0:S] * cw[0:1, :]
        acc_b = xpad[K - 1:K - 1 + S] * cw[K - 1:K, :]
        for k in range(1, K):
            acc_f = acc_f + xpad[k:k + S] * cw[k:k + 1, :]
            acc_b = acc_b + xpad[K - 1 + k:K - 1 + k + S] * cw[K - 1 - k:K - k, :]
        # BiMambaBlock applies Softplus (not SiLU) after the conv -- per the spec.
        xc = _softplus(jnp.concatenate([acc_f + cb, acc_b + cb], axis=0))  # (2S, DI)

        # ---- SSM projections, both directions batched (2S rows) ----
        dlr = _mm(xc, wdl_ref[l])                          # (2S, R)
        Bm = _mm(xc, wB_ref[l])                            # (2S, N)
        Cm = _mm(xc, wC_ref[l])                            # (2S, N)
        delta = _softplus(_mm(dlr, wdt_ref[l]) + bdt_ref[l])   # (2S, DI)

        A_nd = -jnp.exp(alog_ref[l])                       # (N, DI), lane-dense
        dA_ref[...] = jnp.exp(delta[:, None, :] * A_nd[None, :, :])   # (2S, N, DI)
        dBx_ref[...] = (delta * xc)[:, None, :] * Bm[:, :, None]      # (2S, N, DI)
        c_ref[...] = Cm                                                # (2S, N)

        # ---- selective scan ----
        # forward scan over rows [0, S); backward scan over rows [S, 2S)
        # (row S + t holds forward-time t of the reversed direction).
        # h carried in registers; C read-out fused into the scan (no hs buffer).
        h0 = jnp.zeros((N, DI), jnp.float32)

        def scan_body(s, carry):
            h_f, h_b = carry
            rb = 2 * S - 1 - s                              # backward-direction row
            h_f = dA_ref[s] * h_f + dBx_ref[s]
            h_b = dA_ref[rb] * h_b + dBx_ref[rb]
            y_ref[pl.ds(s, 1), :] = jnp.dot(
                c_ref[pl.ds(s, 1), :], h_f, preferred_element_type=jnp.float32)
            y_ref[pl.ds(rb, 1), :] = jnp.dot(
                c_ref[pl.ds(rb, 1), :], h_b, preferred_element_type=jnp.float32)
            return (h_f, h_b)

        lax.fori_loop(0, S, scan_body, (h0, h0), unroll=True)

        y = y_ref[...] + dprm_ref[l] * xc                   # + D*x term, (2S, DI)

        # gate: y1*silu(z1) + flip(y2*silu(z2)) == silu(z1)*(y_fwd + y_bwd)
        comb = (y[:S] + y[S:]) * (0.5 * _silu(z1))          # (S, DI)
        x = _mm(comb, wout_ref[l]) + skip                   # residual, (S, D)

    o_ref[0] = x.astype(o_ref.dtype)


_PARAM_ORDER = ["norm_w", "norm_b", "w_in_x", "w_in_z", "conv_w", "conv_b",
                "w_dl", "w_b", "w_c", "w_dt", "b_dt", "a_log", "d_param", "w_out"]


def bimamba_forward_call(x, params):
    """Full BiMamba forward (all depth layers fused): (B, S, D) -> (B, S, D)."""
    B, S, D = x.shape
    L, N, DI = params["a_log"].shape

    def full_spec(arr):
        nd = arr.ndim
        # constant index_map across the batch grid -> block is never re-fetched
        return pl.BlockSpec(arr.shape, lambda i, _n=nd: (0,) * _n)

    in_specs = [pl.BlockSpec((1, S, D), lambda i: (i, 0, 0))] + \
               [full_spec(params[k]) for k in _PARAM_ORDER]

    return pl.pallas_call(
        _bimamba_kernel,
        out_shape=jax.ShapeDtypeStruct((B, S, D), jnp.float32),
        grid=(B,),
        in_specs=in_specs,
        out_specs=pl.BlockSpec((1, S, D), lambda i: (i, 0, 0)),
        scratch_shapes=[
            pltpu.VMEM((2 * S, N, DI), jnp.float32),   # dA   (lane-dense)
            pltpu.VMEM((2 * S, N, DI), jnp.float32),   # dB*x (lane-dense)
            pltpu.VMEM((2 * S, N), jnp.float32),       # C per row
            pltpu.VMEM((2 * S, DI), jnp.float32),      # scan output y
        ],
        compiler_params=pltpu.CompilerParams(dimension_semantics=("parallel",)),
    )(x, *(params[k] for k in _PARAM_ORDER))


def init_bimamba_params(key, dim, depth, d_state, d_conv, expand_factor=2):
    """Deterministic synthetic params, stacked over depth (shapes as in torch,
    Linear weights stored transposed i.e. (in, out); A_log stored (N, DI))."""
    d_inner = expand_factor * dim
    dt_rank = math.ceil(dim / d_state)
    L = depth
    ks = jax.random.split(key, 9)

    def rnd(kk, shape, fan_in):
        return jax.random.normal(kk, shape, jnp.float32) / math.sqrt(fan_in)

    return {
        "norm_w": jnp.ones((L, 1, dim), jnp.float32),
        "norm_b": jnp.zeros((L, 1, dim), jnp.float32),
        "w_in_x": rnd(ks[0], (L, dim, d_inner), dim),
        "w_in_z": rnd(ks[1], (L, dim, d_inner), dim),
        "conv_w": rnd(ks[2], (L, d_conv, d_inner), d_conv),
        "conv_b": 0.01 * jax.random.normal(ks[3], (L, 1, d_inner), jnp.float32),
        "w_dl": rnd(ks[4], (L, d_inner, dt_rank), d_inner),
        "w_b": rnd(ks[5], (L, d_inner, d_state), d_inner),
        "w_c": rnd(ks[6], (L, d_inner, d_state), d_inner),
        "w_dt": rnd(ks[7], (L, dt_rank, d_inner), dt_rank),
        "b_dt": 0.01 * jax.random.normal(ks[8], (L, 1, d_inner), jnp.float32),
        "a_log": jnp.broadcast_to(
            jnp.log(jnp.arange(1, d_state + 1, dtype=jnp.float32))[None, :, None],
            (L, d_state, d_inner)),
        "d_param": jnp.ones((L, 1, d_inner), jnp.float32),
        "w_out": rnd(jax.random.fold_in(key, 99), (L, d_inner, dim), d_inner),
    }


if __name__ == "__main__":
    # MambaConfig(dim=16, d_state=8, depth=2, expand_factor=2, d_conv=4)
    dim, depth, d_state, d_conv = 16, 2, 8, 4
    B, S = 2, 8

    key = jax.random.PRNGKey(0)
    kx, kp = jax.random.split(key)
    x = jax.random.normal(kx, (B, S, dim), jnp.float32)
    params = init_bimamba_params(kp, dim, depth, d_state, d_conv)

    out = jax.jit(bimamba_forward_call)(x, params)
    jax.block_until_ready(out)
    assert out.shape == x.shape and bool(jnp.all(jnp.isfinite(out)))
    print("KERNEL_OK")
</pallas_src>

<mosaic_0001>
module attributes {stable_mosaic.version = 11 : i64} {
  func.func @_bimamba_kernel(%arg0: i32, %arg1: memref<1x8x16xf32, #tpu.memory_space<vmem>>, %arg2: memref<2x1x16xf32, #tpu.memory_space<vmem>>, %arg3: memref<2x1x16xf32, #tpu.memory_space<vmem>>, %arg4: memref<2x16x32xf32, #tpu.memory_space<vmem>>, %arg5: memref<2x16x32xf32, #tpu.memory_space<vmem>>, %arg6: memref<2x4x32xf32, #tpu.memory_space<vmem>>, %arg7: memref<2x1x32xf32, #tpu.memory_space<vmem>>, %arg8: memref<2x32x2xf32, #tpu.memory_space<vmem>>, %arg9: memref<2x32x8xf32, #tpu.memory_space<vmem>>, %arg10: memref<2x32x8xf32, #tpu.memory_space<vmem>>, %arg11: memref<2x2x32xf32, #tpu.memory_space<vmem>>, %arg12: memref<2x1x32xf32, #tpu.memory_space<vmem>>, %arg13: memref<2x8x32xf32, #tpu.memory_space<vmem>>, %arg14: memref<2x1x32xf32, #tpu.memory_space<vmem>>, %arg15: memref<2x32x16xf32, #tpu.memory_space<vmem>>, %arg16: memref<1x8x16xf32, #tpu.memory_space<vmem>>, %arg17: memref<16x8x32xf32, #tpu.memory_space<vmem>>, %arg18: memref<16x8x32xf32, #tpu.memory_space<vmem>>, %arg19: memref<16x8xf32, #tpu.memory_space<vmem>>, %arg20: memref<16x32xf32, #tpu.memory_space<vmem>>) attributes {dimension_semantics = [#tpu.dimension_semantics<parallel>], iteration_bounds = array<i64: 2>, scalar_prefetch = 0 : i64, scratch_operands = 4 : i64, tpu.core_type = #tpu.core_type<tc>, window_params = [{transform_indices = @transform_0, window_bounds = array<i64: 1, 8, 16>}, {pipeline_mode = #tpu.pipeline_mode<synchronous>, transform_indices = @transform_1, window_bounds = array<i64: 2, 1, 16>}, {pipeline_mode = #tpu.pipeline_mode<synchronous>, transform_indices = @transform_2, window_bounds = array<i64: 2, 1, 16>}, {pipeline_mode = #tpu.pipeline_mode<synchronous>, transform_indices = @transform_3, window_bounds = array<i64: 2, 16, 32>}, {pipeline_mode = #tpu.pipeline_mode<synchronous>, transform_indices = @transform_4, window_bounds = array<i64: 2, 16, 32>}, {pipeline_mode = #tpu.pipeline_mode<synchronous>, transform_indices = @transform_5, window_bounds = array<i64: 2, 4, 32>}, {pipeline_mode = #tpu.pipeline_mode<synchronous>, transform_indices = @transform_6, window_bounds = array<i64: 2, 1, 32>}, {pipeline_mode = #tpu.pipeline_mode<synchronous>, transform_indices = @transform_7, window_bounds = array<i64: 2, 32, 2>}, {pipeline_mode = #tpu.pipeline_mode<synchronous>, transform_indices = @transform_8, window_bounds = array<i64: 2, 32, 8>}, {pipeline_mode = #tpu.pipeline_mode<synchronous>, transform_indices = @transform_9, window_bounds = array<i64: 2, 32, 8>}, {pipeline_mode = #tpu.pipeline_mode<synchronous>, transform_indices = @transform_10, window_bounds = array<i64: 2, 2, 32>}, {pipeline_mode = #tpu.pipeline_mode<synchronous>, transform_indices = @transform_11, window_bounds = array<i64: 2, 1, 32>}, {pipeline_mode = #tpu.pipeline_mode<synchronous>, transform_indices = @transform_12, window_bounds = array<i64: 2, 8, 32>}, {pipeline_mode = #tpu.pipeline_mode<synchronous>, transform_indices = @transform_13, window_bounds = array<i64: 2, 1, 32>}, {pipeline_mode = #tpu.pipeline_mode<synchronous>, transform_indices = @transform_14, window_bounds = array<i64: 2, 32, 16>}, {transform_indices = @transform_15, window_bounds = array<i64: 1, 8, 16>}]} {
    %c0 = arith.constant 0 : index
    %c0_0 = arith.constant 0 : index
    %c0_1 = arith.constant 0 : index
    %0 = vector.load %arg1[%c0, %c0_0, %c0_1] : memref<1x8x16xf32, #tpu.memory_space<vmem>>, vector<1x8x16xf32>
    %1 = vector.shape_cast %0 : vector<1x8x16xf32> to vector<8x16xf32>
    %cst = arith.constant dense<0.000000e+00> : vector<8xf32>
    %2 = vector.multi_reduction <add>, %1, %cst [1] : vector<8x16xf32> to vector<8xf32>
    %3 = vector.shape_cast %2 : vector<8xf32> to vector<8x1xf32>
    %cst_2 = arith.constant 1.600000e+01 : f32
    %4 = vector.broadcast %cst_2 : f32 to vector<8x1xf32>
    %5 = arith.divf %3, %4 : vector<8x1xf32>
    %6 = vector.broadcast %5 : vector<8x1xf32> to vector<8x16xf32>
    %7 = arith.subf %1, %6 : vector<8x16xf32>
    %8 = arith.mulf %7, %7 : vector<8x16xf32>
    %cst_3 = arith.constant dense<0.000000e+00> : vector<8xf32>
    %9 = vector.multi_reduction <add>, %8, %cst_3 [1] : vector<8x16xf32> to vector<8xf32>
    %10 = vector.shape_cast %9 : vector<8xf32> to vector<8x1xf32>
    %cst_4 = arith.constant 1.600000e+01 : f32
    %11 = vector.broadcast %cst_4 : f32 to vector<8x1xf32>
    %12 = arith.divf %10, %11 : vector<8x1xf32>
    %13 = vector.broadcast %5 : vector<8x1xf32> to vector<8x16xf32>
    %14 = arith.subf %1, %13 : vector<8x16xf32>
    %cst_5 = arith.constant 9.99999974E-6 : f32
    %15 = vector.broadcast %cst_5 : f32 to vector<8x1xf32>
    %16 = arith.addf %12, %15 : vector<8x1xf32>
    %17 = math.rsqrt %16 : vector<8x1xf32>
    %18 = vector.broadcast %17 : vector<8x1xf32> to vector<8x16xf32>
    %19 = arith.mulf %14, %18 : vector<8x16xf32>
    %c0_6 = arith.constant 0 : index
    %c0_7 = arith.constant 0 : index
    %c0_8 = arith.constant 0 : index
    %20 = vector.load %arg2[%c0_6, %c0_7, %c0_8] : memref<2x1x16xf32, #tpu.memory_space<vmem>>, vector<1x1x16xf32>
    %21 = vector.shape_cast %20 : vector<1x1x16xf32> to vector<1x16xf32>
    %22 = vector.broadcast %21 : vector<1x16xf32> to vector<8x16xf32>
    %23 = arith.mulf %19, %22 : vector<8x16xf32>
    %c0_9 = arith.constant 0 : index
    %c0_10 = arith.constant 0 : index
    %c0_11 = arith.constant 0 : index
    %24 = vector.load %arg3[%c0_9, %c0_10, %c0_11] : memref<2x1x16xf32, #tpu.memory_space<vmem>>, vector<1x1x16xf32>
    %25 = vector.shape_cast %24 : vector<1x1x16xf32> to vector<1x16xf32>
    %26 = vector.broadcast %25 : vector<1x16xf32> to vector<8x16xf32>
    %27 = arith.addf %23, %26 : vector<8x16xf32>
    %c0_12 = arith.constant 0 : index
    %c0_13 = arith.constant 0 : index
    %c0_14 = arith.constant 0 : index
    %28 = vector.load %arg4[%c0_12, %c0_13, %c0_14] : memref<2x16x32xf32, #tpu.memory_space<vmem>>, vector<1x16x32xf32>
    %29 = vector.shape_cast %28 : vector<1x16x32xf32> to vector<16x32xf32>
    %cst_15 = arith.constant dense<0.000000e+00> : vector<8x32xf32>
    %30 = tpu.matmul %27, %29, %cst_15 {dimension_numbers = #tpu.dot_dimension_numbers<[1], [0], [0], [1], [0, 0, 1, 1], [], []>} : vector<8x16xf32>, vector<16x32xf32>, vector<8x32xf32> -> vector<8x32xf32>
    %c0_16 = arith.constant 0 : index
    %c0_17 = arith.constant 0 : index
    %c0_18 = arith.constant 0 : index
    %31 = vector.load %arg5[%c0_16, %c0_17, %c0_18] : memref<2x16x32xf32, #tpu.memory_space<vmem>>, vector<1x16x32xf32>
    %32 = vector.shape_cast %31 : vector<1x16x32xf32> to vector<16x32xf32>
    %cst_19 = arith.constant dense<0.000000e+00> : vector<8x32xf32>
    %33 = tpu.matmul %27, %32, %cst_19 {dimension_numbers = #tpu.dot_dimension_numbers<[1], [0], [0], [1], [0, 0, 1, 1], [], []>} : vector<8x16xf32>, vector<16x32xf32>, vector<8x32xf32> -> vector<8x32xf32>
    %c0_20 = arith.constant 0 : index
    %c0_21 = arith.constant 0 : index
    %c0_22 = arith.constant 0 : index
    %34 = vector.load %arg6[%c0_20, %c0_21, %c0_22] : memref<2x4x32xf32, #tpu.memory_space<vmem>>, vector<1x4x32xf32>
    %35 = vector.shape_cast %34 : vector<1x4x32xf32> to vector<4x32xf32>
    %c0_23 = arith.constant 0 : index
    %c0_24 = arith.constant 0 : index
    %c0_25 = arith.constant 0 : index
    %36 = vector.load %arg7[%c0_23, %c0_24, %c0_25] : memref<2x1x32xf32, #tpu.memory_space<vmem>>, vector<1x1x32xf32>
    %37 = vector.shape_cast %36 : vector<1x1x32xf32> to vector<1x32xf32>
    %cst_26 = arith.constant 0.000000e+00 : f32
    %38 = vector.broadcast %cst_26 : f32 to vector<3x32xf32>
    %39 = tpu.concatenate %38, %30, %38 in 0 : vector<3x32xf32>, vector<8x32xf32>, vector<3x32xf32> -> vector<14x32xf32>
    %40 = vector.extract_strided_slice %39 {offsets = [0, 0], sizes = [8, 32], strides = [1, 1]} : vector<14x32xf32> to vector<8x32xf32>
    %41 = vector.extract_strided_slice %35 {offsets = [0, 0], sizes = [1, 32], strides = [1, 1]} : vector<4x32xf32> to vector<1x32xf32>
    %42 = vector.broadcast %41 : vector<1x32xf32> to vector<8x32xf32>
    %43 = arith.mulf %40, %42 : vector<8x32xf32>
    %44 = vector.extract_strided_slice %39 {offsets = [3, 0], sizes = [8, 32], strides = [1, 1]} : vector<14x32xf32> to vector<8x32xf32>
    %45 = vector.extract_strided_slice %35 {offsets = [3, 0], sizes = [1, 32], strides = [1, 1]} : vector<4x32xf32> to vector<1x32xf32>
    %46 = vector.broadcast %45 : vector<1x32xf32> to vector<8x32xf32>
    %47 = arith.mulf %44, %46 : vector<8x32xf32>
    %48 = vector.extract_strided_slice %39 {offsets = [1, 0], sizes = [8, 32], strides = [1, 1]} : vector<14x32xf32> to vector<8x32xf32>
    %49 = vector.extract_strided_slice %35 {offsets = [1, 0], sizes = [1, 32], strides = [1, 1]} : vector<4x32xf32> to vector<1x32xf32>
    %50 = vector.broadcast %49 : vector<1x32xf32> to vector<8x32xf32>
    %51 = arith.mulf %48, %50 : vector<8x32xf32>
    %52 = arith.addf %43, %51 : vector<8x32xf32>
    %53 = vector.extract_strided_slice %39 {offsets = [4, 0], sizes = [8, 32], strides = [1, 1]} : vector<14x32xf32> to vector<8x32xf32>
    %54 = vector.extract_strided_slice %35 {offsets = [2, 0], sizes = [1, 32], strides = [1, 1]} : vector<4x32xf32> to vector<1x32xf32>
    %55 = vector.broadcast %54 : vector<1x32xf32> to vector<8x32xf32>
    %56 = arith.mulf %53, %55 : vector<8x32xf32>
    %57 = arith.addf %47, %56 : vector<8x32xf32>
    %58 = vector.extract_strided_slice %39 {offsets = [2, 0], sizes = [8, 32], strides = [1, 1]} : vector<14x32xf32> to vector<8x32xf32>
    %59 = vector.extract_strided_slice %35 {offsets = [2, 0], sizes = [1, 32], strides = [1, 1]} : vector<4x32xf32> to vector<1x32xf32>
    %60 = vector.broadcast %59 : vector<1x32xf32> to vector<8x32xf32>
    %61 = arith.mulf %58, %60 : vector<8x32xf32>
    %62 = arith.addf %52, %61 : vector<8x32xf32>
    %63 = vector.extract_strided_slice %39 {offsets = [5, 0], sizes = [8, 32], strides = [1, 1]} : vector<14x32xf32> to vector<8x32xf32>
    %64 = vector.extract_strided_slice %35 {offsets = [1, 0], sizes = [1, 32], strides = [1, 1]} : vector<4x32xf32> to vector<1x32xf32>
    %65 = vector.broadcast %64 : vector<1x32xf32> to vector<8x32xf32>
    %66 = arith.mulf %63, %65 : vector<8x32xf32>
    %67 = arith.addf %57, %66 : vector<8x32xf32>
    %68 = vector.extract_strided_slice %39 {offsets = [3, 0], sizes = [8, 32], strides = [1, 1]} : vector<14x32xf32> to vector<8x32xf32>
    %69 = vector.extract_strided_slice %35 {offsets = [3, 0], sizes = [1, 32], strides = [1, 1]} : vector<4x32xf32> to vector<1x32xf32>
    %70 = vector.broadcast %69 : vector<1x32xf32> to vector<8x32xf32>
    %71 = arith.mulf %68, %70 : vector<8x32xf32>
    %72 = arith.addf %62, %71 : vector<8x32xf32>
    %73 = vector.extract_strided_slice %39 {offsets = [6, 0], sizes = [8, 32], strides = [1, 1]} : vector<14x32xf32> to vector<8x32xf32>
    %74 = vector.extract_strided_slice %35 {offsets = [0, 0], sizes = [1, 32], strides = [1, 1]} : vector<4x32xf32> to vector<1x32xf32>
    %75 = vector.broadcast %74 : vector<1x32xf32> to vector<8x32xf32>
    %76 = arith.mulf %73, %75 : vector<8x32xf32>
    %77 = arith.addf %67, %76 : vector<8x32xf32>
    %78 = vector.broadcast %37 : vector<1x32xf32> to vector<8x32xf32>
    %79 = arith.addf %72, %78 : vector<8x32xf32>
    %80 = vector.broadcast %37 : vector<1x32xf32> to vector<8x32xf32>
    %81 = arith.addf %77, %80 : vector<8x32xf32>
    %82 = tpu.concatenate %79, %81 in 0 : vector<8x32xf32>, vector<8x32xf32> -> vector<16x32xf32>
    %cst_27 = arith.constant 2.000000e+01 : f32
    %83 = vector.broadcast %cst_27 : f32 to vector<16x32xf32>
    %84 = arith.minimumf %82, %83 : vector<16x32xf32>
    %cst_28 = arith.constant 2.000000e+01 : f32
    %85 = vector.broadcast %cst_28 : f32 to vector<16x32xf32>
    %86 = arith.cmpf ogt, %82, %85 : vector<16x32xf32>
    %87 = math.exp %84 : vector<16x32xf32>
    %cst_29 = arith.constant 1.000000e+00 : f32
    %88 = vector.broadcast %cst_29 : f32 to vector<16x32xf32>
    %89 = arith.addf %88, %87 : vector<16x32xf32>
    %90 = math.log %89 : vector<16x32xf32>
    %91 = arith.select %86, %82, %90 : vector<16x32xi1>, vector<16x32xf32>
    %c0_30 = arith.constant 0 : index
    %c0_31 = arith.constant 0 : index
    %c0_32 = arith.constant 0 : index
    %92 = vector.load %arg8[%c0_30, %c0_31, %c0_32] : memref<2x32x2xf32, #tpu.memory_space<vmem>>, vector<1x32x2xf32>
    %93 = vector.shape_cast %92 : vector<1x32x2xf32> to vector<32x2xf32>
    %cst_33 = arith.constant dense<0.000000e+00> : vector<16x2xf32>
    %94 = tpu.matmul %91, %93, %cst_33 {dimension_numbers = #tpu.dot_dimension_numbers<[1], [0], [0], [1], [0, 0, 1, 1], [], []>} : vector<16x32xf32>, vector<32x2xf32>, vector<16x2xf32> -> vector<16x2xf32>
    %c0_34 = arith.constant 0 : index
    %c0_35 = arith.constant 0 : index
    %c0_36 = arith.constant 0 : index
    %95 = vector.load %arg9[%c0_34, %c0_35, %c0_36] : memref<2x32x8xf32, #tpu.memory_space<vmem>>, vector<1x32x8xf32>
    %96 = vector.shape_cast %95 : vector<1x32x8xf32> to vector<32x8xf32>
    %cst_37 = arith.constant dense<0.000000e+00> : vector<16x8xf32>
    %97 = tpu.matmul %91, %96, %cst_37 {dimension_numbers = #tpu.dot_dimension_numbers<[1], [0], [0], [1], [0, 0, 1, 1], [], []>} : vector<16x32xf32>, vector<32x8xf32>, vector<16x8xf32> -> vector<16x8xf32>
    %c0_38 = arith.constant 0 : index
    %c0_39 = arith.constant 0 : index
    %c0_40 = arith.constant 0 : index
    %98 = vector.load %arg10[%c0_38, %c0_39, %c0_40] : memref<2x32x8xf32, #tpu.memory_space<vmem>>, vector<1x32x8xf32>
    %99 = vector.shape_cast %98 : vector<1x32x8xf32> to vector<32x8xf32>
    %cst_41 = arith.constant dense<0.000000e+00> : vector<16x8xf32>
    %100 = tpu.matmul %91, %99, %cst_41 {dimension_numbers = #tpu.dot_dimension_numbers<[1], [0], [0], [1], [0, 0, 1, 1], [], []>} : vector<16x32xf32>, vector<32x8xf32>, vector<16x8xf32> -> vector<16x8xf32>
    %c0_42 = arith.constant 0 : index
    %c0_43 = arith.constant 0 : index
    %c0_44 = arith.constant 0 : index
    %101 = vector.load %arg11[%c0_42, %c0_43, %c0_44] : memref<2x2x32xf32, #tpu.memory_space<vmem>>, vector<1x2x32xf32>
    %102 = vector.shape_cast %101 : vector<1x2x32xf32> to vector<2x32xf32>
    %cst_45 = arith.constant dense<0.000000e+00> : vector<16x32xf32>
    %103 = tpu.matmul %94, %102, %cst_45 {dimension_numbers = #tpu.dot_dimension_numbers<[1], [0], [0], [1], [0, 0, 1, 1], [], []>} : vector<16x2xf32>, vector<2x32xf32>, vector<16x32xf32> -> vector<16x32xf32>
    %c0_46 = arith.constant 0 : index
    %c0_47 = arith.constant 0 : index
    %c0_48 = arith.constant 0 : index
    %104 = vector.load %arg12[%c0_46, %c0_47, %c0_48] : memref<2x1x32xf32, #tpu.memory_space<vmem>>, vector<1x1x32xf32>
    %105 = vector.shape_cast %104 : vector<1x1x32xf32> to vector<1x32xf32>
    %106 = vector.broadcast %105 : vector<1x32xf32> to vector<16x32xf32>
    %107 = arith.addf %103, %106 : vector<16x32xf32>
    %cst_49 = arith.constant 2.000000e+01 : f32
    %108 = vector.broadcast %cst_49 : f32 to vector<16x32xf32>
    %109 = arith.minimumf %107, %108 : vector<16x32xf32>
    %cst_50 = arith.constant 2.000000e+01 : f32
    %110 = vector.broadcast %cst_50 : f32 to vector<16x32xf32>
    %111 = arith.cmpf ogt, %107, %110 : vector<16x32xf32>
    %112 = math.exp %109 : vector<16x32xf32>
    %cst_51 = arith.constant 1.000000e+00 : f32
    %113 = vector.broadcast %cst_51 : f32 to vector<16x32xf32>
    %114 = arith.addf %113, %112 : vector<16x32xf32>
    %115 = math.log %114 : vector<16x32xf32>
    %116 = arith.select %111, %107, %115 : vector<16x32xi1>, vector<16x32xf32>
    %c0_52 = arith.constant 0 : index
    %c0_53 = arith.constant 0 : index
    %c0_54 = arith.constant 0 : index
    %117 = vector.load %arg13[%c0_52, %c0_53, %c0_54] : memref<2x8x32xf32, #tpu.memory_space<vmem>>, vector<1x8x32xf32>
    %118 = vector.shape_cast %117 : vector<1x8x32xf32> to vector<8x32xf32>
    %119 = math.exp %118 : vector<8x32xf32>
    %cst_55 = arith.constant 0.000000e+00 : f32
    %120 = vector.broadcast %cst_55 : f32 to vector<8x32xf32>
    %121 = arith.subf %120, %119 : vector<8x32xf32>
    %122 = vector.shape_cast %116 : vector<16x32xf32> to vector<16x1x32xf32>
    %123 = vector.shape_cast %121 : vector<8x32xf32> to vector<1x8x32xf32>
    %124 = vector.broadcast %122 : vector<16x1x32xf32> to vector<16x8x32xf32>
    %125 = vector.broadcast %123 : vector<1x8x32xf32> to vector<16x8x32xf32>
    %126 = arith.mulf %124, %125 : vector<16x8x32xf32>
    %127 = math.exp %126 : vector<16x8x32xf32>
    %c0_56 = arith.constant 0 : index
    %c0_57 = arith.constant 0 : index
    %c0_58 = arith.constant 0 : index
    %128 = vector.load %arg17[%c0_56, %c0_57, %c0_58] : memref<16x8x32xf32, #tpu.memory_space<vmem>>, vector<16x8x32xf32>
    tpu.vector_store %arg17[%c0_56, %c0_57, %c0_58], %127 {strides = array<i32>} : memref<16x8x32xf32, #tpu.memory_space<vmem>>, vector<16x8x32xf32>,
    %129 = arith.mulf %116, %91 : vector<16x32xf32>
    %130 = vector.shape_cast %129 : vector<16x32xf32> to vector<16x1x32xf32>
    %131 = vector.shape_cast %97 : vector<16x8xf32> to vector<16x8x1xf32>
    %132 = vector.broadcast %130 : vector<16x1x32xf32> to vector<16x8x32xf32>
    %133 = vector.broadcast %131 : vector<16x8x1xf32> to vector<16x8x32xf32>
    %134 = arith.mulf %132, %133 : vector<16x8x32xf32>
    %c0_59 = arith.constant 0 : index
    %c0_60 = arith.constant 0 : index
    %c0_61 = arith.constant 0 : index
    %135 = vector.load %arg18[%c0_59, %c0_60, %c0_61] : memref<16x8x32xf32, #tpu.memory_space<vmem>>, vector<16x8x32xf32>
    tpu.vector_store %arg18[%c0_59, %c0_60, %c0_61], %134 {strides = array<i32>} : memref<16x8x32xf32, #tpu.memory_space<vmem>>, vector<16x8x32xf32>,
    %c0_62 = arith.constant 0 : index
    %c0_63 = arith.constant 0 : index
    %136 = vector.load %arg19[%c0_62, %c0_63] : memref<16x8xf32, #tpu.memory_space<vmem>>, vector<16x8xf32>
    tpu.vector_store %arg19[%c0_62, %c0_63], %100 {strides = array<i32>} : memref<16x8xf32, #tpu.memory_space<vmem>>, vector<16x8xf32>,
    %cst_64 = arith.constant 0.000000e+00 : f32
    %137 = vector.broadcast %cst_64 : f32 to vector<8x32xf32>
    %c0_i32 = arith.constant 0 : i32
    %c15_i32 = arith.constant 15 : i32
    %138 = arith.subi %c15_i32, %c0_i32 : i32
    %139 = arith.index_cast %c0_i32 : i32 to index
    %c0_65 = arith.constant 0 : index
    %c0_66 = arith.constant 0 : index
    %140 = vector.load %arg17[%139, %c0_65, %c0_66] : memref<16x8x32xf32, #tpu.memory_space<vmem>>, vector<1x8x32xf32>
    %141 = vector.shape_cast %140 : vector<1x8x32xf32> to vector<8x32xf32>
    %142 = arith.mulf %141, %137 : vector<8x32xf32>
    %143 = arith.index_cast %c0_i32 : i32 to index
    %c0_67 = arith.constant 0 : index
    %c0_68 = arith.constant 0 : index
    %144 = vector.load %arg18[%143, %c0_67, %c0_68] : memref<16x8x32xf32, #tpu.memory_space<vmem>>, vector<1x8x32xf32>
    %145 = vector.shape_cast %144 : vector<1x8x32xf32> to vector<8x32xf32>
    %146 = arith.addf %142, %145 : vector<8x32xf32>
    %147 = arith.index_cast %138 : i32 to index
    %c0_69 = arith.constant 0 : index
    %c0_70 = arith.constant 0 : index
    %148 = vector.load %arg17[%147, %c0_69, %c0_70] : memref<16x8x32xf32, #tpu.memory_space<vmem>>, vector<1x8x32xf32>
    %149 = vector.shape_cast %148 : vector<1x8x32xf32> to vector<8x32xf32>
    %150 = arith.mulf %149, %137 : vector<8x32xf32>
    %151 = arith.index_cast %138 : i32 to index
    %c0_71 = arith.constant 0 : index
    %c0_72 = arith.constant 0 : index
    %152 = vector.load %arg18[%151, %c0_71, %c0_72] : memref<16x8x32xf32, #tpu.memory_space<vmem>>, vector<1x8x32xf32>
    %153 = vector.shape_cast %152 : vector<1x8x32xf32> to vector<8x32xf32>
    %154 = arith.addf %150, %153 : vector<8x32xf32>
    %155 = arith.index_cast %c0_i32 : i32 to index
    %c0_73 = arith.constant 0 : index
    %156 = vector.load %arg19[%155, %c0_73] : memref<16x8xf32, #tpu.memory_space<vmem>>, vector<1x8xf32>
    %cst_74 = arith.constant dense<0.000000e+00> : vector<1x32xf32>
    %157 = tpu.matmul %156, %146, %cst_74 {dimension_numbers = #tpu.dot_dimension_numbers<[1], [0], [0], [1], [0, 0, 1, 1], [], []>} : vector<1x8xf32>, vector<8x32xf32>, vector<1x32xf32> -> vector<1x32xf32>
    %158 = arith.index_cast %c0_i32 : i32 to index
    %c0_75 = arith.constant 0 : index
    %159 = vector.load %arg20[%158, %c0_75] : memref<16x32xf32, #tpu.memory_space<vmem>>, vector<1x32xf32>
    tpu.vector_store %arg20[%158, %c0_75], %157 {strides = array<i32>} : memref<16x32xf32, #tpu.memory_space<vmem>>, vector<1x32xf32>,
    %160 = arith.index_cast %138 : i32 to index
    %c0_76 = arith.constant 0 : index
    %161 = vector.load %arg19[%160, %c0_76] : memref<16x8xf32, #tpu.memory_space<vmem>>, vector<1x8xf32>
    %cst_77 = arith.constant dense<0.000000e+00> : vector<1x32xf32>
    %162 = tpu.matmul %161, %154, %cst_77 {dimension_numbers = #tpu.dot_dimension_numbers<[1], [0], [0], [1], [0, 0, 1, 1], [], []>} : vector<1x8xf32>, vector<8x32xf32>, vector<1x32xf32> -> vector<1x32xf32>
    %163 = arith.index_cast %138 : i32 to index
    %c0_78 = arith.constant 0 : index
    %164 = vector.load %arg20[%163, %c0_78] : memref<16x32xf32, #tpu.memory_space<vmem>>, vector<1x32xf32>
    tpu.vector_store %arg20[%163, %c0_78], %162 {strides = array<i32>} : memref<16x32xf32, #tpu.memory_space<vmem>>, vector<1x32xf32>,
    %c1_i32 = arith.constant 1 : i32
    %c15_i32_79 = arith.constant 15 : i32
    %165 = arith.subi %c15_i32_79, %c1_i32 : i32
    %166 = arith.index_cast %c1_i32 : i32 to index
    %c0_80 = arith.constant 0 : index
    %c0_81 = arith.constant 0 : index
    %167 = vector.load %arg17[%166, %c0_80, %c0_81] : memref<16x8x32xf32, #tpu.memory_space<vmem>>, vector<1x8x32xf32>
    %168 = vector.shape_cast %167 : vector<1x8x32xf32> to vector<8x32xf32>
    %169 = arith.mulf %168, %146 : vector<8x32xf32>
    %170 = arith.index_cast %c1_i32 : i32 to index
    %c0_82 = arith.constant 0 : index
    %c0_83 = arith.constant 0 : index
    %171 = vector.load %arg18[%170, %c0_82, %c0_83] : memref<16x8x32xf32, #tpu.memory_space<vmem>>, vector<1x8x32xf32>
    %172 = vector.shape_cast %171 : vector<1x8x32xf32> to vector<8x32xf32>
    %173 = arith.addf %169, %172 : vector<8x32xf32>
    %174 = arith.index_cast %165 : i32 to index
    %c0_84 = arith.constant 0 : index
    %c0_85 = arith.constant 0 : index
    %175 = vector.load %arg17[%174, %c0_84, %c0_85] : memref<16x8x32xf32, #tpu.memory_space<vmem>>, vector<1x8x32xf32>
    %176 = vector.shape_cast %175 : vector<1x8x32xf32> to vector<8x32xf32>
    %177 = arith.mulf %176, %154 : vector<8x32xf32>
    %178 = arith.index_cast %165 : i32 to index
    %c0_86 = arith.constant 0 : index
    %c0_87 = arith.constant 0 : index
    %179 = vector.load %arg18[%178, %c0_86, %c0_87] : memref<16x8x32xf32, #tpu.memory_space<vmem>>, vector<1x8x32xf32>
    %180 = vector.shape_cast %179 : vector<1x8x32xf32> to vector<8x32xf32>
    %181 = arith.addf %177, %180 : vector<8x32xf32>
    %182 = arith.index_cast %c1_i32 : i32 to index
    %c0_88 = arith.constant 0 : index
    %183 = vector.load %arg19[%182, %c0_88] : memref<16x8xf32, #tpu.memory_space<vmem>>, vector<1x8xf32>
    %cst_89 = arith.constant dense<0.000000e+00> : vector<1x32xf32>
    %184 = tpu.matmul %183, %173, %cst_89 {dimension_numbers = #tpu.dot_dimension_numbers<[1], [0], [0], [1], [0, 0, 1, 1], [], []>} : vector<1x8xf32>, vector<8x32xf32>, vector<1x32xf32> -> vector<1x32xf32>
    %185 = arith.index_cast %c1_i32 : i32 to index
    %c0_90 = arith.constant 0 : index
    %186 = vector.load %arg20[%185, %c0_90] : memref<16x32xf32, #tpu.memory_space<vmem>>, vector<1x32xf32>
    tpu.vector_store %arg20[%185, %c0_90], %184 {strides = array<i32>} : memref<16x32xf32, #tpu.memory_space<vmem>>, vector<1x32xf32>,
    %187 = arith.index_cast %165 : i32 to index
    %c0_91 = arith.constant 0 : index
    %188 = vector.load %arg19[%187, %c0_91] : memref<16x8xf32, #tpu.memory_space<vmem>>, vector<1x8xf32>
    %cst_92 = arith.constant dense<0.000000e+00> : vector<1x32xf32>
    %189 = tpu.matmul %188, %181, %cst_92 {dimension_numbers = #tpu.dot_dimension_numbers<[1], [0], [0], [1], [0, 0, 1, 1], [], []>} : vector<1x8xf32>, vector<8x32xf32>, vector<1x32xf32> -> vector<1x32xf32>
    %190 = arith.index_cast %165 : i32 to index
    %c0_93 = arith.constant 0 : index
    %191 = vector.load %arg20[%190, %c0_93] : memref<16x32xf32, #tpu.memory_space<vmem>>, vector<1x32xf32>
    tpu.vector_store %arg20[%190, %c0_93], %189 {strides = array<i32>} : memref<16x32xf32, #tpu.memory_space<vmem>>, vector<1x32xf32>,
    %c2_i32 = arith.constant 2 : i32
    %c15_i32_94 = arith.constant 15 : i32
    %192 = arith.subi %c15_i32_94, %c2_i32 : i32
    %193 = arith.index_cast %c2_i32 : i32 to index
    %c0_95 = arith.constant 0 : index
    %c0_96 = arith.constant 0 : index
    %194 = vector.load %arg17[%193, %c0_95, %c0_96] : memref<16x8x32xf32, #tpu.memory_space<vmem>>, vector<1x8x32xf32>
    %195 = vector.shape_cast %194 : vector<1x8x32xf32> to vector<8x32xf32>
    %196 = arith.mulf %195, %173 : vector<8x32xf32>
    %197 = arith.index_cast %c2_i32 : i32 to index
    %c0_97 = arith.constant 0 : index
    %c0_98 = arith.constant 0 : index
    %198 = vector.load %arg18[%197, %c0_97, %c0_98] : memref<16x8x32xf32, #tpu.memory_space<vmem>>, vector<1x8x32xf32>
    %199 = vector.shape_cast %198 : vector<1x8x32xf32> to vector<8x32xf32>
    %200 = arith.addf %196, %199 : vector<8x32xf32>
    %201 = arith.index_cast %192 : i32 to index
    %c0_99 = arith.constant 0 : index
    %c0_100 = arith.constant 0 : index
    %202 = vector.load %arg17[%201, %c0_99, %c0_100] : memref<16x8x32xf32, #tpu.memory_space<vmem>>, vector<1x8x32xf32>
    %203 = vector.shape_cast %202 : vector<1x8x32xf32> to vector<8x32xf32>
    %204 = arith.mulf %203, %181 : vector<8x32xf32>
    %205 = arith.index_cast %192 : i32 to index
    %c0_101 = arith.constant 0 : index
    %c0_102 = arith.constant 0 : index
    %206 = vector.load %arg18[%205, %c0_101, %c0_102] : memref<16x8x32xf32, #tpu.memory_space<vmem>>, vector<1x8x32xf32>
    %207 = vector.shape_cast %206 : vector<1x8x32xf32> to vector<8x32xf32>
    %208 = arith.addf %204, %207 : vector<8x32xf32>
    %209 = arith.index_cast %c2_i32 : i32 to index
    %c0_103 = arith.constant 0 : index
    %210 = vector.load %arg19[%209, %c0_103] : memref<16x8xf32, #tpu.memory_space<vmem>>, vector<1x8xf32>
    %cst_104 = arith.constant dense<0.000000e+00> : vector<1x32xf32>
    %211 = tpu.matmul %210, %200, %cst_104 {dimension_numbers = #tpu.dot_dimension_numbers<[1], [0], [0], [1], [0, 0, 1, 1], [], []>} : vector<1x8xf32>, vector<8x32xf32>, vector<1x32xf32> -> vector<1x32xf32>
    %212 = arith.index_cast %c2_i32 : i32 to index
    %c0_105 = arith.constant 0 : index
    %213 = vector.load %arg20[%212, %c0_105] : memref<16x32xf32, #tpu.memory_space<vmem>>, vector<1x32xf32>
    tpu.vector_store %arg20[%212, %c0_105], %211 {strides = array<i32>} : memref<16x32xf32, #tpu.memory_space<vmem>>, vector<1x32xf32>,
    %214 = arith.index_cast %192 : i32 to index
    %c0_106 = arith.constant 0 : index
    %215 = vector.load %arg19[%214, %c0_106] : memref<16x8xf32, #tpu.memory_space<vmem>>, vector<1x8xf32>
    %cst_107 = arith.constant dense<0.000000e+00> : vector<1x32xf32>
    %216 = tpu.matmul %215, %208, %cst_107 {dimension_numbers = #tpu.dot_dimension_numbers<[1], [0], [0], [1], [0, 0, 1, 1], [], []>} : vector<1x8xf32>, vector<8x32xf32>, vector<1x32xf32> -> vector<1x32xf32>
    %217 = arith.index_cast %192 : i32 to index
    %c0_108 = arith.constant 0 : index
    %218 = vector.load %arg20[%217, %c0_108] : memref<16x32xf32, #tpu.memory_space<vmem>>, vector<1x32xf32>
    tpu.vector_store %arg20[%217, %c0_108], %216 {strides = array<i32>} : memref<16x32xf32, #tpu.memory_space<vmem>>, vector<1x32xf32>,
    %c3_i32 = arith.constant 3 : i32
    %c15_i32_109 = arith.constant 15 : i32
    %219 = arith.subi %c15_i32_109, %c3_i32 : i32
    %220 = arith.index_cast %c3_i32 : i32 to index
    %c0_110 = arith.constant 0 : index
    %c0_111 = arith.constant 0 : index
    %221 = vector.load %arg17[%220, %c0_110, %c0_111] : memref<16x8x32xf32, #tpu.memory_space<vmem>>, vector<1x8x32xf32>
    %222 = vector.shape_cast %221 : vector<1x8x32xf32> to vector<8x32xf32>
    %223 = arith.mulf %222, %200 : vector<8x32xf32>
    %224 = arith.index_cast %c3_i32 : i32 to index
    %c0_112 = arith.constant 0 : index
    %c0_113 = arith.constant 0 : index
    %225 = vector.load %arg18[%224, %c0_112, %c0_113] : memref<16x8x32xf32, #tpu.memory_space<vmem>>, vector<1x8x32xf32>
    %226 = vector.shape_cast %225 : vector<1x8x32xf32> to vector<8x32xf32>
    %227 = arith.addf %223, %226 : vector<8x32xf32>
    %228 = arith.index_cast %219 : i32 to index
    %c0_114 = arith.constant 0 : index
    %c0_115 = arith.constant 0 : index
    %229 = vector.load %arg17[%228, %c0_114, %c0_115] : memref<16x8x32xf32, #tpu.memory_space<vmem>>, vector<1x8x32xf32>
    %230 = vector.shape_cast %229 : vector<1x8x32xf32> to vector<8x32xf32>
    %231 = arith.mulf %230, %208 : vector<8x32xf32>
    %232 = arith.index_cast %219 : i32 to index
    %c0_116 = arith.constant 0 : index
    %c0_117 = arith.constant 0 : index
    %233 = vector.load %arg18[%232, %c0_116, %c0_117] : memref<16x8x32xf32, #tpu.memory_space<vmem>>, vector<1x8x32xf32>
    %234 = vector.shape_cast %233 : vector<1x8x32xf32> to vector<8x32xf32>
    %235 = arith.addf %231, %234 : vector<8x32xf32>
    %236 = arith.index_cast %c3_i32 : i32 to index
    %c0_118 = arith.constant 0 : index
    %237 = vector.load %arg19[%236, %c0_118] : memref<16x8xf32, #tpu.memory_space<vmem>>, vector<1x8xf32>
    %cst_119 = arith.constant dense<0.000000e+00> : vector<1x32xf32>
    %238 = tpu.matmul %237, %227, %cst_119 {dimension_numbers = #tpu.dot_dimension_numbers<[1], [0], [0], [1], [0, 0, 1, 1], [], []>} : vector<1x8xf32>, vector<8x32xf32>, vector<1x32xf32> -> vector<1x32xf32>
    %239 = arith.index_cast %c3_i32 : i32 to index
    %c0_120 = arith.constant 0 : index
    %240 = vector.load %arg20[%239, %c0_120] : memref<16x32xf32, #tpu.memory_space<vmem>>, vector<1x32xf32>
    tpu.vector_store %arg20[%239, %c0_120], %238 {strides = array<i32>} : memref<16x32xf32, #tpu.memory_space<vmem>>, vector<1x32xf32>,
    %241 = arith.index_cast %219 : i32 to index
    %c0_121 = arith.constant 0 : index
    %242 = vector.load %arg19[%241, %c0_121] : memref<16x8xf32, #tpu.memory_space<vmem>>, vector<1x8xf32>
    %cst_122 = arith.constant dense<0.000000e+00> : vector<1x32xf32>
    %243 = tpu.matmul %242, %235, %cst_122 {dimension_numbers = #tpu.dot_dimension_numbers<[1], [0], [0], [1], [0, 0, 1, 1], [], []>} : vector<1x8xf32>, vector<8x32xf32>, vector<1x32xf32> -> vector<1x32xf32>
    %244 = arith.index_cast %219 : i32 to index
    %c0_123 = arith.constant 0 : index
    %245 = vector.load %arg20[%244, %c0_123] : memref<16x32xf32, #tpu.memory_space<vmem>>, vector<1x32xf32>
    tpu.vector_store %arg20[%244, %c0_123], %243 {strides = array<i32>} : memref<16x32xf32, #tpu.memory_space<vmem>>, vector<1x32xf32>,
    %c4_i32 = arith.constant 4 : i32
    %c15_i32_124 = arith.constant 15 : i32
    %246 = arith.subi %c15_i32_124, %c4_i32 : i32
    %247 = arith.index_cast %c4_i32 : i32 to index
    %c0_125 = arith.constant 0 : index
    %c0_126 = arith.constant 0 : index
    %248 = vector.load %arg17[%247, %c0_125, %c0_126] : memref<16x8x32xf32, #tpu.memory_space<vmem>>, vector<1x8x32xf32>
    %249 = vector.shape_cast %248 : vector<1x8x32xf32> to vector<8x32xf32>
    %250 = arith.mulf %249, %227 : vector<8x32xf32>
    %251 = arith.index_cast %c4_i32 : i32 to index
    %c0_127 = arith.constant 0 : index
    %c0_128 = arith.constant 0 : index
    %252 = vector.load %arg18[%251, %c0_127, %c0_128] : memref<16x8x32xf32, #tpu.memory_space<vmem>>, vector<1x8x32xf32>
    %253 = vector.shape_cast %252 : vector<1x8x32xf32> to vector<8x32xf32>
    %254 = arith.addf %250, %253 : vector<8x32xf32>
    %255 = arith.index_cast %246 : i32 to index
    %c0_129 = arith.constant 0 : index
    %c0_130 = arith.constant 0 : index
    %256 = vector.load %arg17[%255, %c0_129, %c0_130] : memref<16x8x32xf32, #tpu.memory_space<vmem>>, vector<1x8x32xf32>
    %257 = vector.shape_cast %256 : vector<1x8x32xf32> to vector<8x32xf32>
    %258 = arith.mulf %257, %235 : vector<8x32xf32>
    %259 = arith.index_cast %246 : i32 to index
    %c0_131 = arith.constant 0 : index
    %c0_132 = arith.constant 0 : index
    %260 = vector.load %arg18[%259, %c0_131, %c0_132] : memref<16x8x32xf32, #tpu.memory_space<vmem>>, vector<1x8x32xf32>
    %261 = vector.shape_cast %260 : vector<1x8x32xf32> to vector<8x32xf32>
    %262 = arith.addf %258, %261 : vector<8x32xf32>
    %263 = arith.index_cast %c4_i32 : i32 to index
    %c0_133 = arith.constant 0 : index
    %264 = vector.load %arg19[%263, %c0_133] : memref<16x8xf32, #tpu.memory_space<vmem>>, vector<1x8xf32>
    %cst_134 = arith.constant dense<0.000000e+00> : vector<1x32xf32>
    %265 = tpu.matmul %264, %254, %cst_134 {dimension_numbers = #tpu.dot_dimension_numbers<[1], [0], [0], [1], [0, 0, 1, 1], [], []>} : vector<1x8xf32>, vector<8x32xf32>, vector<1x32xf32> -> vector<1x32xf32>
    %266 = arith.index_cast %c4_i32 : i32 to index
    %c0_135 = arith.constant 0 : index
    %267 = vector.load %arg20[%266, %c0_135] : memref<16x32xf32, #tpu.memory_space<vmem>>, vector<1x32xf32>
    tpu.vector_store %arg20[%266, %c0_135], %265 {strides = array<i32>} : memref<16x32xf32, #tpu.memory_space<vmem>>, vector<1x32xf32>,
    %268 = arith.index_cast %246 : i32 to index
    %c0_136 = arith.constant 0 : index
    %269 = vector.load %arg19[%268, %c0_136] : memref<16x8xf32, #tpu.memory_space<vmem>>, vector<1x8xf32>
    %cst_137 = arith.constant dense<0.000000e+00> : vector<1x32xf32>
    %270 = tpu.matmul %269, %262, %cst_137 {dimension_numbers = #tpu.dot_dimension_numbers<[1], [0], [0], [1], [0, 0, 1, 1], [], []>} : vector<1x8xf32>, vector<8x32xf32>, vector<1x32xf32> -> vector<1x32xf32>
    %271 = arith.index_cast %246 : i32 to index
    %c0_138 = arith.constant 0 : index
    %272 = vector.load %arg20[%271, %c0_138] : memref<16x32xf32, #tpu.memory_space<vmem>>, vector<1x32xf32>
    tpu.vector_store %arg20[%271, %c0_138], %270 {strides = array<i32>} : memref<16x32xf32, #tpu.memory_space<vmem>>, vector<1x32xf32>,
    %c5_i32 = arith.constant 5 : i32
    %c15_i32_139 = arith.constant 15 : i32
    %273 = arith.subi %c15_i32_139, %c5_i32 : i32
    %274 = arith.index_cast %c5_i32 : i32 to index
    %c0_140 = arith.constant 0 : index
    %c0_141 = arith.constant 0 : index
    %275 = vector.load %arg17[%274, %c0_140, %c0_141] : memref<16x8x32xf32, #tpu.memory_space<vmem>>, vector<1x8x32xf32>
    %276 = vector.shape_cast %275 : vector<1x8x32xf32> to vector<8x32xf32>
    %277 = arith.mulf %276, %254 : vector<8x32xf32>
    %278 = arith.index_cast %c5_i32 : i32 to index
    %c0_142 = arith.constant 0 : index
    %c0_143 = arith.constant 0 : index
    %279 = vector.load %arg18[%278, %c0_142, %c0_143] : memref<16x8x32xf32, #tpu.memory_space<vmem>>, vector<1x8x32xf32>
    %280 = vector.shape_cast %279 : vector<1x8x32xf32> to vector<8x32xf32>
    %281 = arith.addf %277, %280 : vector<8x32xf32>
    %282 = arith.index_cast %273 : i32 to index
    %c0_144 = arith.constant 0 : index
    %c0_145 = arith.constant 0 : index
    %283 = vector.load %arg17[%282, %c0_144, %c0_145] : memref<16x8x32xf32, #tpu.memory_space<vmem>>, vector<1x8x32xf32>
    %284 = vector.shape_cast %283 : vector<1x8x32xf32> to vector<8x32xf32>
    %285 = arith.mulf %284, %262 : vector<8x32xf32>
    %286 = arith.index_cast %273 : i32 to index
    %c0_146 = arith.constant 0 : index
    %c0_147 = arith.constant 0 : index
    %287 = vector.load %arg18[%286, %c0_146, %c0_147] : memref<16x8x32xf32, #tpu.memory_space<vmem>>, vector<1x8x32xf32>
    %288 = vector.shape_cast %287 : vector<1x8x32xf32> to vector<8x32xf32>
    %289 = arith.addf %285, %288 : vector<8x32xf32>
    %290 = arith.index_cast %c5_i32 : i32 to index
    %c0_148 = arith.constant 0 : index
    %291 = vector.load %arg19[%290, %c0_148] : memref<16x8xf32, #tpu.memory_space<vmem>>, vector<1x8xf32>
    %cst_149 = arith.constant dense<0.000000e+00> : vector<1x32xf32>
    %292 = tpu.matmul %291, %281, %cst_149 {dimension_numbers = #tpu.dot_dimension_numbers<[1], [0], [0], [1], [0, 0, 1, 1], [], []>} : vector<1x8xf32>, vector<8x32xf32>, vector<1x32xf32> -> vector<1x32xf32>
    %293 = arith.index_cast %c5_i32 : i32 to index
    %c0_150 = arith.constant 0 : index
    %294 = vector.load %arg20[%293, %c0_150] : memref<16x32xf32, #tpu.memory_space<vmem>>, vector<1x32xf32>
    tpu.vector_store %arg20[%293, %c0_150], %292 {strides = array<i32>} : memref<16x32xf32, #tpu.memory_space<vmem>>, vector<1x32xf32>,
    %295 = arith.index_cast %273 : i32 to index
    %c0_151 = arith.constant 0 : index
    %296 = vector.load %arg19[%295, %c0_151] : memref<16x8xf32, #tpu.memory_space<vmem>>, vector<1x8xf32>
    %cst_152 = arith.constant dense<0.000000e+00> : vector<1x32xf32>
    %297 = tpu.matmul %296, %289, %cst_152 {dimension_numbers = #tpu.dot_dimension_numbers<[1], [0], [0], [1], [0, 0, 1, 1], [], []>} : vector<1x8xf32>, vector<8x32xf32>, vector<1x32xf32> -> vector<1x32xf32>
    %298 = arith.index_cast %273 : i32 to index
    %c0_153 = arith.constant 0 : index
    %299 = vector.load %arg20[%298, %c0_153] : memref<16x32xf32, #tpu.memory_space<vmem>>, vector<1x32xf32>
    tpu.vector_store %arg20[%298, %c0_153], %297 {strides = array<i32>} : memref<16x32xf32, #tpu.memory_space<vmem>>, vector<1x32xf32>,
    %c6_i32 = arith.constant 6 : i32
    %c15_i32_154 = arith.constant 15 : i32
    %300 = arith.subi %c15_i32_154, %c6_i32 : i32
    %301 = arith.index_cast %c6_i32 : i32 to index
    %c0_155 = arith.constant 0 : index
    %c0_156 = arith.constant 0 : index
    %302 = vector.load %arg17[%301, %c0_155, %c0_156] : memref<16x8x32xf32, #tpu.memory_space<vmem>>, vector<1x8x32xf32>
    %303 = vector.shape_cast %302 : vector<1x8x32xf32> to vector<8x32xf32>
    %304 = arith.mulf %303, %281 : vector<8x32xf32>
    %305 = arith.index_cast %c6_i32 : i32 to index
    %c0_157 = arith.constant 0 : index
    %c0_158 = arith.constant 0 : index
    %306 = vector.load %arg18[%305, %c0_157, %c0_158] : memref<16x8x32xf32, #tpu.memory_space<vmem>>, vector<1x8x32xf32>
    %307 = vector.shape_cast %306 : vector<1x8x32xf32> to vector<8x32xf32>
    %308 = arith.addf %304, %307 : vector<8x32xf32>
    %309 = arith.index_cast %300 : i32 to index
    %c0_159 = arith.constant 0 : index
    %c0_160 = arith.constant 0 : index
    %310 = vector.load %arg17[%309, %c0_159, %c0_160] : memref<16x8x32xf32, #tpu.memory_space<vmem>>, vector<1x8x32xf32>
    %311 = vector.shape_cast %310 : vector<1x8x32xf32> to vector<8x32xf32>
    %312 = arith.mulf %311, %289 : vector<8x32xf32>
    %313 = arith.index_cast %300 : i32 to index
    %c0_161 = arith.constant 0 : index
    %c0_162 = arith.constant 0 : index
    %314 = vector.load %arg18[%313, %c0_161, %c0_162] : memref<16x8x32xf32, #tpu.memory_space<vmem>>, vector<1x8x32xf32>
    %315 = vector.shape_cast %314 : vector<1x8x32xf32> to vector<8x32xf32>
    %316 = arith.addf %312, %315 : vector<8x32xf32>
    %317 = arith.index_cast %c6_i32 : i32 to index
    %c0_163 = arith.constant 0 : index
    %318 = vector.load %arg19[%317, %c0_163] : memref<16x8xf32, #tpu.memory_space<vmem>>, vector<1x8xf32>
    %cst_164 = arith.constant dense<0.000000e+00> : vector<1x32xf32>
    %319 = tpu.matmul %318, %308, %cst_164 {dimension_numbers = #tpu.dot_dimension_numbers<[1], [0], [0], [1], [0, 0, 1, 1], [], []>} : vector<1x8xf32>, vector<8x32xf32>, vector<1x32xf32> -> vector<1x32xf32>
    %320 = arith.index_cast %c6_i32 : i32 to index
    %c0_165 = arith.constant 0 : index
    %321 = vector.load %arg20[%320, %c0_165] : memref<16x32xf32, #tpu.memory_space<vmem>>, vector<1x32xf32>
    tpu.vector_store %arg20[%320, %c0_165], %319 {strides = array<i32>} : memref<16x32xf32, #tpu.memory_space<vmem>>, vector<1x32xf32>,
    %322 = arith.index_cast %300 : i32 to index
    %c0_166 = arith.constant 0 : index
    %323 = vector.load %arg19[%322, %c0_166] : memref<16x8xf32, #tpu.memory_space<vmem>>, vector<1x8xf32>
    %cst_167 = arith.constant dense<0.000000e+00> : vector<1x32xf32>
    %324 = tpu.matmul %323, %316, %cst_167 {dimension_numbers = #tpu.dot_dimension_numbers<[1], [0], [0], [1], [0, 0, 1, 1], [], []>} : vector<1x8xf32>, vector<8x32xf32>, vector<1x32xf32> -> vector<1x32xf32>
    %325 = arith.index_cast %300 : i32 to index
    %c0_168 = arith.constant 0 : index
    %326 = vector.load %arg20[%325, %c0_168] : memref<16x32xf32, #tpu.memory_space<vmem>>, vector<1x32xf32>
    tpu.vector_store %arg20[%325, %c0_168], %324 {strides = array<i32>} : memref<16x32xf32, #tpu.memory_space<vmem>>, vector<1x32xf32>,
    %c7_i32 = arith.constant 7 : i32
    %c15_i32_169 = arith.constant 15 : i32
    %327 = arith.subi %c15_i32_169, %c7_i32 : i32
    %328 = arith.index_cast %c7_i32 : i32 to index
    %c0_170 = arith.constant 0 : index
    %c0_171 = arith.constant 0 : index
    %329 = vector.load %arg17[%328, %c0_170, %c0_171] : memref<16x8x32xf32, #tpu.memory_space<vmem>>, vector<1x8x32xf32>
    %330 = vector.shape_cast %329 : vector<1x8x32xf32> to vector<8x32xf32>
    %331 = arith.mulf %330, %308 : vector<8x32xf32>
    %332 = arith.index_cast %c7_i32 : i32 to index
    %c0_172 = arith.constant 0 : index
    %c0_173 = arith.constant 0 : index
    %333 = vector.load %arg18[%332, %c0_172, %c0_173] : memref<16x8x32xf32, #tpu.memory_space<vmem>>, vector<1x8x32xf32>
    %334 = vector.shape_cast %333 : vector<1x8x32xf32> to vector<8x32xf32>
    %335 = arith.addf %331, %334 : vector<8x32xf32>
    %336 = arith.index_cast %327 : i32 to index
    %c0_174 = arith.constant 0 : index
    %c0_175 = arith.constant 0 : index
    %337 = vector.load %arg17[%336, %c0_174, %c0_175] : memref<16x8x32xf32, #tpu.memory_space<vmem>>, vector<1x8x32xf32>
    %338 = vector.shape_cast %337 : vector<1x8x32xf32> to vector<8x32xf32>
    %339 = arith.mulf %338, %316 : vector<8x32xf32>
    %340 = arith.index_cast %327 : i32 to index
    %c0_176 = arith.constant 0 : index
    %c0_177 = arith.constant 0 : index
    %341 = vector.load %arg18[%340, %c0_176, %c0_177] : memref<16x8x32xf32, #tpu.memory_space<vmem>>, vector<1x8x32xf32>
    %342 = vector.shape_cast %341 : vector<1x8x32xf32> to vector<8x32xf32>
    %343 = arith.addf %339, %342 : vector<8x32xf32>
    %344 = arith.index_cast %c7_i32 : i32 to index
    %c0_178 = arith.constant 0 : index
    %345 = vector.load %arg19[%344, %c0_178] : memref<16x8xf32, #tpu.memory_space<vmem>>, vector<1x8xf32>
    %cst_179 = arith.constant dense<0.000000e+00> : vector<1x32xf32>
    %346 = tpu.matmul %345, %335, %cst_179 {dimension_numbers = #tpu.dot_dimension_numbers<[1], [0], [0], [1], [0, 0, 1, 1], [], []>} : vector<1x8xf32>, vector<8x32xf32>, vector<1x32xf32> -> vector<1x32xf32>
    %347 = arith.index_cast %c7_i32 : i32 to index
    %c0_180 = arith.constant 0 : index
    %348 = vector.load %arg20[%347, %c0_180] : memref<16x32xf32, #tpu.memory_space<vmem>>, vector<1x32xf32>
    tpu.vector_store %arg20[%347, %c0_180], %346 {strides = array<i32>} : memref<16x32xf32, #tpu.memory_space<vmem>>, vector<1x32xf32>,
    %349 = arith.index_cast %327 : i32 to index
    %c0_181 = arith.constant 0 : index
    %350 = vector.load %arg19[%349, %c0_181] : memref<16x8xf32, #tpu.memory_space<vmem>>, vector<1x8xf32>
    %cst_182 = arith.constant dense<0.000000e+00> : vector<1x32xf32>
    %351 = tpu.matmul %350, %343, %cst_182 {dimension_numbers = #tpu.dot_dimension_numbers<[1], [0], [0], [1], [0, 0, 1, 1], [], []>} : vector<1x8xf32>, vector<8x32xf32>, vector<1x32xf32> -> vector<1x32xf32>
    %352 = arith.index_cast %327 : i32 to index
    %c0_183 = arith.constant 0 : index
    %353 = vector.load %arg20[%352, %c0_183] : memref<16x32xf32, #tpu.memory_space<vmem>>, vector<1x32xf32>
    tpu.vector_store %arg20[%352, %c0_183], %351 {strides = array<i32>} : memref<16x32xf32, #tpu.memory_space<vmem>>, vector<1x32xf32>,
    %c8_i32 = arith.constant 8 : i32
    %c0_184 = arith.constant 0 : index
    %c0_185 = arith.constant 0 : index
    %354 = vector.load %arg20[%c0_184, %c0_185] : memref<16x32xf32, #tpu.memory_space<vmem>>, vector<16x32xf32>
    %c0_186 = arith.constant 0 : index
    %c0_187 = arith.constant 0 : index
    %c0_188 = arith.constant 0 : index
    %355 = vector.load %arg14[%c0_186, %c0_187, %c0_188] : memref<2x1x32xf32, #tpu.memory_space<vmem>>, vector<1x1x32xf32>
    %356 = vector.shape_cast %355 : vector<1x1x32xf32> to vector<1x32xf32>
    %357 = vector.broadcast %356 : vector<1x32xf32> to vector<16x32xf32>
    %358 = arith.mulf %357, %91 : vector<16x32xf32>
    %359 = arith.addf %354, %358 : vector<16x32xf32>
    %360 = vector.extract_strided_slice %359 {offsets = [0, 0], sizes = [8, 32], strides = [1, 1]} : vector<16x32xf32> to vector<8x32xf32>
    %361 = vector.extract_strided_slice %359 {offsets = [8, 0], sizes = [8, 32], strides = [1, 1]} : vector<16x32xf32> to vector<8x32xf32>
    %362 = arith.addf %360, %361 : vector<8x32xf32>
    %cst_189 = arith.constant 0.000000e+00 : f32
    %363 = vector.broadcast %cst_189 : f32 to vector<8x32xf32>
    %364 = arith.subf %363, %33 : vector<8x32xf32>
    %365 = math.exp %364 : vector<8x32xf32>
    %cst_190 = arith.constant 1.000000e+00 : f32
    %366 = vector.broadcast %cst_190 : f32 to vector<8x32xf32>
    %367 = arith.addf %366, %365 : vector<8x32xf32>
    %cst_191 = arith.constant 1.000000e+00 : f32
    %368 = vector.broadcast %cst_191 : f32 to vector<8x32xf32>
    %369 = arith.divf %368, %367 : vector<8x32xf32>
    %370 = arith.mulf %33, %369 : vector<8x32xf32>
    %cst_192 = arith.constant 5.000000e-01 : f32
    %371 = vector.broadcast %cst_192 : f32 to vector<8x32xf32>
    %372 = arith.mulf %371, %370 : vector<8x32xf32>
    %373 = arith.mulf %362, %372 : vector<8x32xf32>
    %c0_193 = arith.constant 0 : index
    %c0_194 = arith.constant 0 : index
    %c0_195 = arith.constant 0 : index
    %374 = vector.load %arg15[%c0_193, %c0_194, %c0_195] : memref<2x32x16xf32, #tpu.memory_space<vmem>>, vector<1x32x16xf32>
    %375 = vector.shape_cast %374 : vector<1x32x16xf32> to vector<32x16xf32>
    %cst_196 = arith.constant dense<0.000000e+00> : vector<8x16xf32>
    %376 = tpu.matmul %373, %375, %cst_196 {dimension_numbers = #tpu.dot_dimension_numbers<[1], [0], [0], [1], [0, 0, 1, 1], [], []>} : vector<8x32xf32>, vector<32x16xf32>, vector<8x16xf32> -> vector<8x16xf32>
    %377 = arith.addf %376, %1 : vector<8x16xf32>
    %cst_197 = arith.constant dense<0.000000e+00> : vector<8xf32>
    %378 = vector.multi_reduction <add>, %377, %cst_197 [1] : vector<8x16xf32> to vector<8xf32>
    %379 = vector.shape_cast %378 : vector<8xf32> to vector<8x1xf32>
    %cst_198 = arith.constant 1.600000e+01 : f32
    %380 = vector.broadcast %cst_198 : f32 to vector<8x1xf32>
    %381 = arith.divf %379, %380 : vector<8x1xf32>
    %382 = vector.broadcast %381 : vector<8x1xf32> to vector<8x16xf32>
    %383 = arith.subf %377, %382 : vector<8x16xf32>
    %384 = arith.mulf %383, %383 : vector<8x16xf32>
    %cst_199 = arith.constant dense<0.000000e+00> : vector<8xf32>
    %385 = vector.multi_reduction <add>, %384, %cst_199 [1] : vector<8x16xf32> to vector<8xf32>
    %386 = vector.shape_cast %385 : vector<8xf32> to vector<8x1xf32>
    %cst_200 = arith.constant 1.600000e+01 : f32
    %387 = vector.broadcast %cst_200 : f32 to vector<8x1xf32>
    %388 = arith.divf %386, %387 : vector<8x1xf32>
    %389 = vector.broadcast %381 : vector<8x1xf32> to vector<8x16xf32>
    %390 = arith.subf %377, %389 : vector<8x16xf32>
    %cst_201 = arith.constant 9.99999974E-6 : f32
    %391 = vector.broadcast %cst_201 : f32 to vector<8x1xf32>
    %392 = arith.addf %388, %391 : vector<8x1xf32>
    %393 = math.rsqrt %392 : vector<8x1xf32>
    %394 = vector.broadcast %393 : vector<8x1xf32> to vector<8x16xf32>
    %395 = arith.mulf %390, %394 : vector<8x16xf32>
    %c1 = arith.constant 1 : index
    %c0_202 = arith.constant 0 : index
    %c0_203 = arith.constant 0 : index
    %396 = vector.load %arg2[%c1, %c0_202, %c0_203] : memref<2x1x16xf32, #tpu.memory_space<vmem>>, vector<1x1x16xf32>
    %397 = vector.shape_cast %396 : vector<1x1x16xf32> to vector<1x16xf32>
    %398 = vector.broadcast %397 : vector<1x16xf32> to vector<8x16xf32>
    %399 = arith.mulf %395, %398 : vector<8x16xf32>
    %c1_204 = arith.constant 1 : index
    %c0_205 = arith.constant 0 : index
    %c0_206 = arith.constant 0 : index
    %400 = vector.load %arg3[%c1_204, %c0_205, %c0_206] : memref<2x1x16xf32, #tpu.memory_space<vmem>>, vector<1x1x16xf32>
    %401 = vector.shape_cast %400 : vector<1x1x16xf32> to vector<1x16xf32>
    %402 = vector.broadcast %401 : vector<1x16xf32> to vector<8x16xf32>
    %403 = arith.addf %399, %402 : vector<8x16xf32>
    %c1_207 = arith.constant 1 : index
    %c0_208 = arith.constant 0 : index
    %c0_209 = arith.constant 0 : index
    %404 = vector.load %arg4[%c1_207, %c0_208, %c0_209] : memref<2x16x32xf32, #tpu.memory_space<vmem>>, vector<1x16x32xf32>
    %405 = vector.shape_cast %404 : vector<1x16x32xf32> to vector<16x32xf32>
    %cst_210 = arith.constant dense<0.000000e+00> : vector<8x32xf32>
    %406 = tpu.matmul %403, %405, %cst_210 {dimension_numbers = #tpu.dot_dimension_numbers<[1], [0], [0], [1], [0, 0, 1, 1], [], []>} : vector<8x16xf32>, vector<16x32xf32>, vector<8x32xf32> -> vector<8x32xf32>
    %c1_211 = arith.constant 1 : index
    %c0_212 = arith.constant 0 : index
    %c0_213 = arith.constant 0 : index
    %407 = vector.load %arg5[%c1_211, %c0_212, %c0_213] : memref<2x16x32xf32, #tpu.memory_space<vmem>>, vector<1x16x32xf32>
    %408 = vector.shape_cast %407 : vector<1x16x32xf32> to vector<16x32xf32>
    %cst_214 = arith.constant dense<0.000000e+00> : vector<8x32xf32>
    %409 = tpu.matmul %403, %408, %cst_214 {dimension_numbers = #tpu.dot_dimension_numbers<[1], [0], [0], [1], [0, 0, 1, 1], [], []>} : vector<8x16xf32>, vector<16x32xf32>, vector<8x32xf32> -> vector<8x32xf32>
    %c1_215 = arith.constant 1 : index
    %c0_216 = arith.constant 0 : index
    %c0_217 = arith.constant 0 : index
    %410 = vector.load %arg6[%c1_215, %c0_216, %c0_217] : memref<2x4x32xf32, #tpu.memory_space<vmem>>, vector<1x4x32xf32>
    %411 = vector.shape_cast %410 : vector<1x4x32xf32> to vector<4x32xf32>
    %c1_218 = arith.constant 1 : index
    %c0_219 = arith.constant 0 : index
    %c0_220 = arith.constant 0 : index
    %412 = vector.load %arg7[%c1_218, %c0_219, %c0_220] : memref<2x1x32xf32, #tpu.memory_space<vmem>>, vector<1x1x32xf32>
    %413 = vector.shape_cast %412 : vector<1x1x32xf32> to vector<1x32xf32>
    %cst_221 = arith.constant 0.000000e+00 : f32
    %414 = vector.broadcast %cst_221 : f32 to vector<3x32xf32>
    %415 = tpu.concatenate %414, %406, %414 in 0 : vector<3x32xf32>, vector<8x32xf32>, vector<3x32xf32> -> vector<14x32xf32>
    %416 = vector.extract_strided_slice %415 {offsets = [0, 0], sizes = [8, 32], strides = [1, 1]} : vector<14x32xf32> to vector<8x32xf32>
    %417 = vector.extract_strided_slice %411 {offsets = [0, 0], sizes = [1, 32], strides = [1, 1]} : vector<4x32xf32> to vector<1x32xf32>
    %418 = vector.broadcast %417 : vector<1x32xf32> to vector<8x32xf32>
    %419 = arith.mulf %416, %418 : vector<8x32xf32>
    %420 = vector.extract_strided_slice %415 {offsets = [3, 0], sizes = [8, 32], strides = [1, 1]} : vector<14x32xf32> to vector<8x32xf32>
    %421 = vector.extract_strided_slice %411 {offsets = [3, 0], sizes = [1, 32], strides = [1, 1]} : vector<4x32xf32> to vector<1x32xf32>
    %422 = vector.broadcast %421 : vector<1x32xf32> to vector<8x32xf32>
    %423 = arith.mulf %420, %422 : vector<8x32xf32>
    %424 = vector.extract_strided_slice %415 {offsets = [1, 0], sizes = [8, 32], strides = [1, 1]} : vector<14x32xf32> to vector<8x32xf32>
    %425 = vector.extract_strided_slice %411 {offsets = [1, 0], sizes = [1, 32], strides = [1, 1]} : vector<4x32xf32> to vector<1x32xf32>
    %426 = vector.broadcast %425 : vector<1x32xf32> to vector<8x32xf32>
    %427 = arith.mulf %424, %426 : vector<8x32xf32>
    %428 = arith.addf %419, %427 : vector<8x32xf32>
    %429 = vector.extract_strided_slice %415 {offsets = [4, 0], sizes = [8, 32], strides = [1, 1]} : vector<14x32xf32> to vector<8x32xf32>
    %430 = vector.extract_strided_slice %411 {offsets = [2, 0], sizes = [1, 32], strides = [1, 1]} : vector<4x32xf32> to vector<1x32xf32>
    %431 = vector.broadcast %430 : vector<1x32xf32> to vector<8x32xf32>
    %432 = arith.mulf %429, %431 : vector<8x32xf32>
    %433 = arith.addf %423, %432 : vector<8x32xf32>
    %434 = vector.extract_strided_slice %415 {offsets = [2, 0], sizes = [8, 32], strides = [1, 1]} : vector<14x32xf32> to vector<8x32xf32>
    %435 = vector.extract_strided_slice %411 {offsets = [2, 0], sizes = [1, 32], strides = [1, 1]} : vector<4x32xf32> to vector<1x32xf32>
    %436 = vector.broadcast %435 : vector<1x32xf32> to vector<8x32xf32>
    %437 = arith.mulf %434, %436 : vector<8x32xf32>
    %438 = arith.addf %428, %437 : vector<8x32xf32>
    %439 = vector.extract_strided_slice %415 {offsets = [5, 0], sizes = [8, 32], strides = [1, 1]} : vector<14x32xf32> to vector<8x32xf32>
    %440 = vector.extract_strided_slice %411 {offsets = [1, 0], sizes = [1, 32], strides = [1, 1]} : vector<4x32xf32> to vector<1x32xf32>
    %441 = vector.broadcast %440 : vector<1x32xf32> to vector<8x32xf32>
    %442 = arith.mulf %439, %441 : vector<8x32xf32>
    %443 = arith.addf %433, %442 : vector<8x32xf32>
    %444 = vector.extract_strided_slice %415 {offsets = [3, 0], sizes = [8, 32], strides = [1, 1]} : vector<14x32xf32> to vector<8x32xf32>
    %445 = vector.extract_strided_slice %411 {offsets = [3, 0], sizes = [1, 32], strides = [1, 1]} : vector<4x32xf32> to vector<1x32xf32>
    %446 = vector.broadcast %445 : vector<1x32xf32> to vector<8x32xf32>
    %447 = arith.mulf %444, %446 : vector<8x32xf32>
    %448 = arith.addf %438, %447 : vector<8x32xf32>
    %449 = vector.extract_strided_slice %415 {offsets = [6, 0], sizes = [8, 32], strides = [1, 1]} : vector<14x32xf32> to vector<8x32xf32>
    %450 = vector.extract_strided_slice %411 {offsets = [0, 0], sizes = [1, 32], strides = [1, 1]} : vector<4x32xf32> to vector<1x32xf32>
    %451 = vector.broadcast %450 : vector<1x32xf32> to vector<8x32xf32>
    %452 = arith.mulf %449, %451 : vector<8x32xf32>
    %453 = arith.addf %443, %452 : vector<8x32xf32>
    %454 = vector.broadcast %413 : vector<1x32xf32> to vector<8x32xf32>
    %455 = arith.addf %448, %454 : vector<8x32xf32>
    %456 = vector.broadcast %413 : vector<1x32xf32> to vector<8x32xf32>
    %457 = arith.addf %453, %456 : vector<8x32xf32>
    %458 = tpu.concatenate %455, %457 in 0 : vector<8x32xf32>, vector<8x32xf32> -> vector<16x32xf32>
    %cst_222 = arith.constant 2.000000e+01 : f32
    %459 = vector.broadcast %cst_222 : f32 to vector<16x32xf32>
    %460 = arith.minimumf %458, %459 : vector<16x32xf32>
    %cst_223 = arith.constant 2.000000e+01 : f32
    %461 = vector.broadcast %cst_223 : f32 to vector<16x32xf32>
    %462 = arith.cmpf ogt, %458, %461 : vector<16x32xf32>
    %463 = math.exp %460 : vector<16x32xf32>
    %cst_224 = arith.constant 1.000000e+00 : f32
    %464 = vector.broadcast %cst_224 : f32 to vector<16x32xf32>
    %465 = arith.addf %464, %463 : vector<16x32xf32>
    %466 = math.log %465 : vector<16x32xf32>
    %467 = arith.select %462, %458, %466 : vector<16x32xi1>, vector<16x32xf32>
    %c1_225 = arith.constant 1 : index
    %c0_226 = arith.constant 0 : index
    %c0_227 = arith.constant 0 : index
    %468 = vector.load %arg8[%c1_225, %c0_226, %c0_227] : memref<2x32x2xf32, #tpu.memory_space<vmem>>, vector<1x32x2xf32>
    %469 = vector.shape_cast %468 : vector<1x32x2xf32> to vector<32x2xf32>
    %cst_228 = arith.constant dense<0.000000e+00> : vector<16x2xf32>
    %470 = tpu.matmul %467, %469, %cst_228 {dimension_numbers = #tpu.dot_dimension_numbers<[1], [0], [0], [1], [0, 0, 1, 1], [], []>} : vector<16x32xf32>, vector<32x2xf32>, vector<16x2xf32> -> vector<16x2xf32>
    %c1_229 = arith.constant 1 : index
    %c0_230 = arith.constant 0 : index
    %c0_231 = arith.constant 0 : index
    %471 = vector.load %arg9[%c1_229, %c0_230, %c0_231] : memref<2x32x8xf32, #tpu.memory_space<vmem>>, vector<1x32x8xf32>
    %472 = vector.shape_cast %471 : vector<1x32x8xf32> to vector<32x8xf32>
    %cst_232 = arith.constant dense<0.000000e+00> : vector<16x8xf32>
    %473 = tpu.matmul %467, %472, %cst_232 {dimension_numbers = #tpu.dot_dimension_numbers<[1], [0], [0], [1], [0, 0, 1, 1], [], []>} : vector<16x32xf32>, vector<32x8xf32>, vector<16x8xf32> -> vector<16x8xf32>
    %c1_233 = arith.constant 1 : index
    %c0_234 = arith.constant 0 : index
    %c0_235 = arith.constant 0 : index
    %474 = vector.load %arg10[%c1_233, %c0_234, %c0_235] : memref<2x32x8xf32, #tpu.memory_space<vmem>>, vector<1x32x8xf32>
    %475 = vector.shape_cast %474 : vector<1x32x8xf32> to vector<32x8xf32>
    %cst_236 = arith.constant dense<0.000000e+00> : vector<16x8xf32>
    %476 = tpu.matmul %467, %475, %cst_236 {dimension_numbers = #tpu.dot_dimension_numbers<[1], [0], [0], [1], [0, 0, 1, 1], [], []>} : vector<16x32xf32>, vector<32x8xf32>, vector<16x8xf32> -> vector<16x8xf32>
    %c1_237 = arith.constant 1 : index
    %c0_238 = arith.constant 0 : index
    %c0_239 = arith.constant 0 : index
    %477 = vector.load %arg11[%c1_237, %c0_238, %c0_239] : memref<2x2x32xf32, #tpu.memory_space<vmem>>, vector<1x2x32xf32>
    %478 = vector.shape_cast %477 : vector<1x2x32xf32> to vector<2x32xf32>
    %cst_240 = arith.constant dense<0.000000e+00> : vector<16x32xf32>
    %479 = tpu.matmul %470, %478, %cst_240 {dimension_numbers = #tpu.dot_dimension_numbers<[1], [0], [0], [1], [0, 0, 1, 1], [], []>} : vector<16x2xf32>, vector<2x32xf32>, vector<16x32xf32> -> vector<16x32xf32>
    %c1_241 = arith.constant 1 : index
    %c0_242 = arith.constant 0 : index
    %c0_243 = arith.constant 0 : index
    %480 = vector.load %arg12[%c1_241, %c0_242, %c0_243] : memref<2x1x32xf32, #tpu.memory_space<vmem>>, vector<1x1x32xf32>
    %481 = vector.shape_cast %480 : vector<1x1x32xf32> to vector<1x32xf32>
    %482 = vector.broadcast %481 : vector<1x32xf32> to vector<16x32xf32>
    %483 = arith.addf %479, %482 : vector<16x32xf32>
    %cst_244 = arith.constant 2.000000e+01 : f32
    %484 = vector.broadcast %cst_244 : f32 to vector<16x32xf32>
    %485 = arith.minimumf %483, %484 : vector<16x32xf32>
    %cst_245 = arith.constant 2.000000e+01 : f32
    %486 = vector.broadcast %cst_245 : f32 to vector<16x32xf32>
    %487 = arith.cmpf ogt, %483, %486 : vector<16x32xf32>
    %488 = math.exp %485 : vector<16x32xf32>
    %cst_246 = arith.constant 1.000000e+00 : f32
    %489 = vector.broadcast %cst_246 : f32 to vector<16x32xf32>
    %490 = arith.addf %489, %488 : vector<16x32xf32>
    %491 = math.log %490 : vector<16x32xf32>
    %492 = arith.select %487, %483, %491 : vector<16x32xi1>, vector<16x32xf32>
    %c1_247 = arith.constant 1 : index
    %c0_248 = arith.constant 0 : index
    %c0_249 = arith.constant 0 : index
    %493 = vector.load %arg13[%c1_247, %c0_248, %c0_249] : memref<2x8x32xf32, #tpu.memory_space<vmem>>, vector<1x8x32xf32>
    %494 = vector.shape_cast %493 : vector<1x8x32xf32> to vector<8x32xf32>
    %495 = math.exp %494 : vector<8x32xf32>
    %cst_250 = arith.constant 0.000000e+00 : f32
    %496 = vector.broadcast %cst_250 : f32 to vector<8x32xf32>
    %497 = arith.subf %496, %495 : vector<8x32xf32>
    %498 = vector.shape_cast %492 : vector<16x32xf32> to vector<16x1x32xf32>
    %499 = vector.shape_cast %497 : vector<8x32xf32> to vector<1x8x32xf32>
    %500 = vector.broadcast %498 : vector<16x1x32xf32> to vector<16x8x32xf32>
    %501 = vector.broadcast %499 : vector<1x8x32xf32> to vector<16x8x32xf32>
    %502 = arith.mulf %500, %501 : vector<16x8x32xf32>
    %503 = math.exp %502 : vector<16x8x32xf32>
    %c0_251 = arith.constant 0 : index
    %c0_252 = arith.constant 0 : index
    %c0_253 = arith.constant 0 : index
    %504 = vector.load %arg17[%c0_251, %c0_252, %c0_253] : memref<16x8x32xf32, #tpu.memory_space<vmem>>, vector<16x8x32xf32>
    tpu.vector_store %arg17[%c0_251, %c0_252, %c0_253], %503 {strides = array<i32>} : memref<16x8x32xf32, #tpu.memory_space<vmem>>, vector<16x8x32xf32>,
    %505 = arith.mulf %492, %467 : vector<16x32xf32>
    %506 = vector.shape_cast %505 : vector<16x32xf32> to vector<16x1x32xf32>
    %507 = vector.shape_cast %473 : vector<16x8xf32> to vector<16x8x1xf32>
    %508 = vector.broadcast %506 : vector<16x1x32xf32> to vector<16x8x32xf32>
    %509 = vector.broadcast %507 : vector<16x8x1xf32> to vector<16x8x32xf32>
    %510 = arith.mulf %508, %509 : vector<16x8x32xf32>
    %c0_254 = arith.constant 0 : index
    %c0_255 = arith.constant 0 : index
    %c0_256 = arith.constant 0 : index
    %511 = vector.load %arg18[%c0_254, %c0_255, %c0_256] : memref<16x8x32xf32, #tpu.memory_space<vmem>>, vector<16x8x32xf32>
    tpu.vector_store %arg18[%c0_254, %c0_255, %c0_256], %510 {strides = array<i32>} : memref<16x8x32xf32, #tpu.memory_space<vmem>>, vector<16x8x32xf32>,
    %c0_257 = arith.constant 0 : index
    %c0_258 = arith.constant 0 : index
    %512 = vector.load %arg19[%c0_257, %c0_258] : memref<16x8xf32, #tpu.memory_space<vmem>>, vector<16x8xf32>
    tpu.vector_store %arg19[%c0_257, %c0_258], %476 {strides = array<i32>} : memref<16x8xf32, #tpu.memory_space<vmem>>, vector<16x8xf32>,
    %cst_259 = arith.constant 0.000000e+00 : f32
    %513 = vector.broadcast %cst_259 : f32 to vector<8x32xf32>
    %c0_i32_260 = arith.constant 0 : i32
    %c15_i32_261 = arith.constant 15 : i32
    %514 = arith.subi %c15_i32_261, %c0_i32_260 : i32
    %515 = arith.index_cast %c0_i32_260 : i32 to index
    %c0_262 = arith.constant 0 : index
    %c0_263 = arith.constant 0 : index
    %516 = vector.load %arg17[%515, %c0_262, %c0_263] : memref<16x8x32xf32, #tpu.memory_space<vmem>>, vector<1x8x32xf32>
    %517 = vector.shape_cast %516 : vector<1x8x32xf32> to vector<8x32xf32>
    %518 = arith.mulf %517, %513 : vector<8x32xf32>
    %519 = arith.index_cast %c0_i32_260 : i32 to index
    %c0_264 = arith.constant 0 : index
    %c0_265 = arith.constant 0 : index
    %520 = vector.load %arg18[%519, %c0_264, %c0_265] : memref<16x8x32xf32, #tpu.memory_space<vmem>>, vector<1x8x32xf32>
    %521 = vector.shape_cast %520 : vector<1x8x32xf32> to vector<8x32xf32>
    %522 = arith.addf %518, %521 : vector<8x32xf32>
    %523 = arith.index_cast %514 : i32 to index
    %c0_266 = arith.constant 0 : index
    %c0_267 = arith.constant 0 : index
    %524 = vector.load %arg17[%523, %c0_266, %c0_267] : memref<16x8x32xf32, #tpu.memory_space<vmem>>, vector<1x8x32xf32>
    %525 = vector.shape_cast %524 : vector<1x8x32xf32> to vector<8x32xf32>
    %526 = arith.mulf %525, %513 : vector<8x32xf32>
    %527 = arith.index_cast %514 : i32 to index
    %c0_268 = arith.constant 0 : index
    %c0_269 = arith.constant 0 : index
    %528 = vector.load %arg18[%527, %c0_268, %c0_269] : memref<16x8x32xf32, #tpu.memory_space<vmem>>, vector<1x8x32xf32>
    %529 = vector.shape_cast %528 : vector<1x8x32xf32> to vector<8x32xf32>
    %530 = arith.addf %526, %529 : vector<8x32xf32>
    %531 = arith.index_cast %c0_i32_260 : i32 to index
    %c0_270 = arith.constant 0 : index
    %532 = vector.load %arg19[%531, %c0_270] : memref<16x8xf32, #tpu.memory_space<vmem>>, vector<1x8xf32>
    %cst_271 = arith.constant dense<0.000000e+00> : vector<1x32xf32>
    %533 = tpu.matmul %532, %522, %cst_271 {dimension_numbers = #tpu.dot_dimension_numbers<[1], [0], [0], [1], [0, 0, 1, 1], [], []>} : vector<1x8xf32>, vector<8x32xf32>, vector<1x32xf32> -> vector<1x32xf32>
    %534 = arith.index_cast %c0_i32_260 : i32 to index
    %c0_272 = arith.constant 0 : index
    %535 = vector.load %arg20[%534, %c0_272] : memref<16x32xf32, #tpu.memory_space<vmem>>, vector<1x32xf32>
    tpu.vector_store %arg20[%534, %c0_272], %533 {strides = array<i32>} : memref<16x32xf32, #tpu.memory_space<vmem>>, vector<1x32xf32>,
    %536 = arith.index_cast %514 : i32 to index
    %c0_273 = arith.constant 0 : index
    %537 = vector.load %arg19[%536, %c0_273] : memref<16x8xf32, #tpu.memory_space<vmem>>, vector<1x8xf32>
    %cst_274 = arith.constant dense<0.000000e+00> : vector<1x32xf32>
    %538 = tpu.matmul %537, %530, %cst_274 {dimension_numbers = #tpu.dot_dimension_numbers<[1], [0], [0], [1], [0, 0, 1, 1], [], []>} : vector<1x8xf32>, vector<8x32xf32>, vector<1x32xf32> -> vector<1x32xf32>
    %539 = arith.index_cast %514 : i32 to index
    %c0_275 = arith.constant 0 : index
    %540 = vector.load %arg20[%539, %c0_275] : memref<16x32xf32, #tpu.memory_space<vmem>>, vector<1x32xf32>
    tpu.vector_store %arg20[%539, %c0_275], %538 {strides = array<i32>} : memref<16x32xf32, #tpu.memory_space<vmem>>, vector<1x32xf32>,
    %c1_i32_276 = arith.constant 1 : i32
    %c15_i32_277 = arith.constant 15 : i32
    %541 = arith.subi %c15_i32_277, %c1_i32_276 : i32
    %542 = arith.index_cast %c1_i32_276 : i32 to index
    %c0_278 = arith.constant 0 : index
    %c0_279 = arith.constant 0 : index
    %543 = vector.load %arg17[%542, %c0_278, %c0_279] : memref<16x8x32xf32, #tpu.memory_space<vmem>>, vector<1x8x32xf32>
    %544 = vector.shape_cast %543 : vector<1x8x32xf32> to vector<8x32xf32>
    %545 = arith.mulf %544, %522 : vector<8x32xf32>
    %546 = arith.index_cast %c1_i32_276 : i32 to index
    %c0_280 = arith.constant 0 : index
    %c0_281 = arith.constant 0 : index
    %547 = vector.load %arg18[%546, %c0_280, %c0_281] : memref<16x8x32xf32, #tpu.memory_space<vmem>>, vector<1x8x32xf32>
    %548 = vector.shape_cast %547 : vector<1x8x32xf32> to vector<8x32xf32>
    %549 = arith.addf %545, %548 : vector<8x32xf32>
    %550 = arith.index_cast %541 : i32 to index
    %c0_282 = arith.constant 0 : index
    %c0_283 = arith.constant 0 : index
    %551 = vector.load %arg17[%550, %c0_282, %c0_283] : memref<16x8x32xf32, #tpu.memory_space<vmem>>, vector<1x8x32xf32>
    %552 = vector.shape_cast %551 : vector<1x8x32xf32> to vector<8x32xf32>
    %553 = arith.mulf %552, %530 : vector<8x32xf32>
    %554 = arith.index_cast %541 : i32 to index
    %c0_284 = arith.constant 0 : index
    %c0_285 = arith.constant 0 : index
    %555 = vector.load %arg18[%554, %c0_284, %c0_285] : memref<16x8x32xf32, #tpu.memory_space<vmem>>, vector<1x8x32xf32>
    %556 = vector.shape_cast %555 : vector<1x8x32xf32> to vector<8x32xf32>
    %557 = arith.addf %553, %556 : vector<8x32xf32>
    %558 = arith.index_cast %c1_i32_276 : i32 to index
    %c0_286 = arith.constant 0 : index
    %559 = vector.load %arg19[%558, %c0_286] : memref<16x8xf32, #tpu.memory_space<vmem>>, vector<1x8xf32>
    %cst_287 = arith.constant dense<0.000000e+00> : vector<1x32xf32>
    %560 = tpu.matmul %559, %549, %cst_287 {dimension_numbers = #tpu.dot_dimension_numbers<[1], [0], [0], [1], [0, 0, 1, 1], [], []>} : vector<1x8xf32>, vector<8x32xf32>, vector<1x32xf32> -> vector<1x32xf32>
    %561 = arith.index_cast %c1_i32_276 : i32 to index
    %c0_288 = arith.constant 0 : index
    %562 = vector.load %arg20[%561, %c0_288] : memref<16x32xf32, #tpu.memory_space<vmem>>, vector<1x32xf32>
    tpu.vector_store %arg20[%561, %c0_288], %560 {strides = array<i32>} : memref<16x32xf32, #tpu.memory_space<vmem>>, vector<1x32xf32>,
    %563 = arith.index_cast %541 : i32 to index
    %c0_289 = arith.constant 0 : index
    %564 = vector.load %arg19[%563, %c0_289] : memref<16x8xf32, #tpu.memory_space<vmem>>, vector<1x8xf32>
    %cst_290 = arith.constant dense<0.000000e+00> : vector<1x32xf32>
    %565 = tpu.matmul %564, %557, %cst_290 {dimension_numbers = #tpu.dot_dimension_numbers<[1], [0], [0], [1], [0, 0, 1, 1], [], []>} : vector<1x8xf32>, vector<8x32xf32>, vector<1x32xf32> -> vector<1x32xf32>
    %566 = arith.index_cast %541 : i32 to index
    %c0_291 = arith.constant 0 : index
    %567 = vector.load %arg20[%566, %c0_291] : memref<16x32xf32, #tpu.memory_space<vmem>>, vector<1x32xf32>
    tpu.vector_store %arg20[%566, %c0_291], %565 {strides = array<i32>} : memref<16x32xf32, #tpu.memory_space<vmem>>, vector<1x32xf32>,
    %c2_i32_292 = arith.constant 2 : i32
    %c15_i32_293 = arith.constant 15 : i32
    %568 = arith.subi %c15_i32_293, %c2_i32_292 : i32
    %569 = arith.index_cast %c2_i32_292 : i32 to index
    %c0_294 = arith.constant 0 : index
    %c0_295 = arith.constant 0 : index
    %570 = vector.load %arg17[%569, %c0_294, %c0_295] : memref<16x8x32xf32, #tpu.memory_space<vmem>>, vector<1x8x32xf32>
    %571 = vector.shape_cast %570 : vector<1x8x32xf32> to vector<8x32xf32>
    %572 = arith.mulf %571, %549 : vector<8x32xf32>
    %573 = arith.index_cast %c2_i32_292 : i32 to index
    %c0_296 = arith.constant 0 : index
    %c0_297 = arith.constant 0 : index
    %574 = vector.load %arg18[%573, %c0_296, %c0_297] : memref<16x8x32xf32, #tpu.memory_space<vmem>>, vector<1x8x32xf32>
    %575 = vector.shape_cast %574 : vector<1x8x32xf32> to vector<8x32xf32>
    %576 = arith.addf %572, %575 : vector<8x32xf32>
    %577 = arith.index_cast %568 : i32 to index
    %c0_298 = arith.constant 0 : index
    %c0_299 = arith.constant 0 : index
    %578 = vector.load %arg17[%577, %c0_298, %c0_299] : memref<16x8x32xf32, #tpu.memory_space<vmem>>, vector<1x8x32xf32>
    %579 = vector.shape_cast %578 : vector<1x8x32xf32> to vector<8x32xf32>
    %580 = arith.mulf %579, %557 : vector<8x32xf32>
    %581 = arith.index_cast %568 : i32 to index
    %c0_300 = arith.constant 0 : index
    %c0_301 = arith.constant 0 : index
    %582 = vector.load %arg18[%581, %c0_300, %c0_301] : memref<16x8x32xf32, #tpu.memory_space<vmem>>, vector<1x8x32xf32>
    %583 = vector.shape_cast %582 : vector<1x8x32xf32> to vector<8x32xf32>
    %584 = arith.addf %580, %583 : vector<8x32xf32>
    %585 = arith.index_cast %c2_i32_292 : i32 to index
    %c0_302 = arith.constant 0 : index
    %586 = vector.load %arg19[%585, %c0_302] : memref<16x8xf32, #tpu.memory_space<vmem>>, vector<1x8xf32>
    %cst_303 = arith.constant dense<0.000000e+00> : vector<1x32xf32>
    %587 = tpu.matmul %586, %576, %cst_303 {dimension_numbers = #tpu.dot_dimension_numbers<[1], [0], [0], [1], [0, 0, 1, 1], [], []>} : vector<1x8xf32>, vector<8x32xf32>, vector<1x32xf32> -> vector<1x32xf32>
    %588 = arith.index_cast %c2_i32_292 : i32 to index
    %c0_304 = arith.constant 0 : index
    %589 = vector.load %arg20[%588, %c0_304] : memref<16x32xf32, #tpu.memory_space<vmem>>, vector<1x32xf32>
    tpu.vector_store %arg20[%588, %c0_304], %587 {strides = array<i32>} : memref<16x32xf32, #tpu.memory_space<vmem>>, vector<1x32xf32>,
    %590 = arith.index_cast %568 : i32 to index
    %c0_305 = arith.constant 0 : index
    %591 = vector.load %arg19[%590, %c0_305] : memref<16x8xf32, #tpu.memory_space<vmem>>, vector<1x8xf32>
    %cst_306 = arith.constant dense<0.000000e+00> : vector<1x32xf32>
    %592 = tpu.matmul %591, %584, %cst_306 {dimension_numbers = #tpu.dot_dimension_numbers<[1], [0], [0], [1], [0, 0, 1, 1], [], []>} : vector<1x8xf32>, vector<8x32xf32>, vector<1x32xf32> -> vector<1x32xf32>
    %593 = arith.index_cast %568 : i32 to index
    %c0_307 = arith.constant 0 : index
    %594 = vector.load %arg20[%593, %c0_307] : memref<16x32xf32, #tpu.memory_space<vmem>>, vector<1x32xf32>
    tpu.vector_store %arg20[%593, %c0_307], %592 {strides = array<i32>} : memref<16x32xf32, #tpu.memory_space<vmem>>, vector<1x32xf32>,
    %c3_i32_308 = arith.constant 3 : i32
    %c15_i32_309 = arith.constant 15 : i32
    %595 = arith.subi %c15_i32_309, %c3_i32_308 : i32
    %596 = arith.index_cast %c3_i32_308 : i32 to index
    %c0_310 = arith.constant 0 : index
    %c0_311 = arith.constant 0 : index
    %597 = vector.load %arg17[%596, %c0_310, %c0_311] : memref<16x8x32xf32, #tpu.memory_space<vmem>>, vector<1x8x32xf32>
    %598 = vector.shape_cast %597 : vector<1x8x32xf32> to vector<8x32xf32>
    %599 = arith.mulf %598, %576 : vector<8x32xf32>
    %600 = arith.index_cast %c3_i32_308 : i32 to index
    %c0_312 = arith.constant 0 : index
    %c0_313 = arith.constant 0 : index
    %601 = vector.load %arg18[%600, %c0_312, %c0_313] : memref<16x8x32xf32, #tpu.memory_space<vmem>>, vector<1x8x32xf32>
    %602 = vector.shape_cast %601 : vector<1x8x32xf32> to vector<8x32xf32>
    %603 = arith.addf %599, %602 : vector<8x32xf32>
    %604 = arith.index_cast %595 : i32 to index
    %c0_314 = arith.constant 0 : index
    %c0_315 = arith.constant 0 : index
    %605 = vector.load %arg17[%604, %c0_314, %c0_315] : memref<16x8x32xf32, #tpu.memory_space<vmem>>, vector<1x8x32xf32>
    %606 = vector.shape_cast %605 : vector<1x8x32xf32> to vector<8x32xf32>
    %607 = arith.mulf %606, %584 : vector<8x32xf32>
    %608 = arith.index_cast %595 : i32 to index
    %c0_316 = arith.constant 0 : index
    %c0_317 = arith.constant 0 : index
    %609 = vector.load %arg18[%608, %c0_316, %c0_317] : memref<16x8x32xf32, #tpu.memory_space<vmem>>, vector<1x8x32xf32>
    %610 = vector.shape_cast %609 : vector<1x8x32xf32> to vector<8x32xf32>
    %611 = arith.addf %607, %610 : vector<8x32xf32>
    %612 = arith.index_cast %c3_i32_308 : i32 to index
    %c0_318 = arith.constant 0 : index
    %613 = vector.load %arg19[%612, %c0_318] : memref<16x8xf32, #tpu.memory_space<vmem>>, vector<1x8xf32>
    %cst_319 = arith.constant dense<0.000000e+00> : vector<1x32xf32>
    %614 = tpu.matmul %613, %603, %cst_319 {dimension_numbers = #tpu.dot_dimension_numbers<[1], [0], [0], [1], [0, 0, 1, 1], [], []>} : vector<1x8xf32>, vector<8x32xf32>, vector<1x32xf32> -> vector<1x32xf32>
    %615 = arith.index_cast %c3_i32_308 : i32 to index
    %c0_320 = arith.constant 0 : index
    %616 = vector.load %arg20[%615, %c0_320] : memref<16x32xf32, #tpu.memory_space<vmem>>, vector<1x32xf32>
    tpu.vector_store %arg20[%615, %c0_320], %614 {strides = array<i32>} : memref<16x32xf32, #tpu.memory_space<vmem>>, vector<1x32xf32>,
    %617 = arith.index_cast %595 : i32 to index
    %c0_321 = arith.constant 0 : index
    %618 = vector.load %arg19[%617, %c0_321] : memref<16x8xf32, #tpu.memory_space<vmem>>, vector<1x8xf32>
    %cst_322 = arith.constant dense<0.000000e+00> : vector<1x32xf32>
    %619 = tpu.matmul %618, %611, %cst_322 {dimension_numbers = #tpu.dot_dimension_numbers<[1], [0], [0], [1], [0, 0, 1, 1], [], []>} : vector<1x8xf32>, vector<8x32xf32>, vector<1x32xf32> -> vector<1x32xf32>
    %620 = arith.index_cast %595 : i32 to index
    %c0_323 = arith.constant 0 : index
    %621 = vector.load %arg20[%620, %c0_323] : memref<16x32xf32, #tpu.memory_space<vmem>>, vector<1x32xf32>
    tpu.vector_store %arg20[%620, %c0_323], %619 {strides = array<i32>} : memref<16x32xf32, #tpu.memory_space<vmem>>, vector<1x32xf32>,
    %c4_i32_324 = arith.constant 4 : i32
    %c15_i32_325 = arith.constant 15 : i32
    %622 = arith.subi %c15_i32_325, %c4_i32_324 : i32
    %623 = arith.index_cast %c4_i32_324 : i32 to index
    %c0_326 = arith.constant 0 : index
    %c0_327 = arith.constant 0 : index
    %624 = vector.load %arg17[%623, %c0_326, %c0_327] : memref<16x8x32xf32, #tpu.memory_space<vmem>>, vector<1x8x32xf32>
    %625 = vector.shape_cast %624 : vector<1x8x32xf32> to vector<8x32xf32>
    %626 = arith.mulf %625, %603 : vector<8x32xf32>
    %627 = arith.index_cast %c4_i32_324 : i32 to index
    %c0_328 = arith.constant 0 : index
    %c0_329 = arith.constant 0 : index
    %628 = vector.load %arg18[%627, %c0_328, %c0_329] : memref<16x8x32xf32, #tpu.memory_space<vmem>>, vector<1x8x32xf32>
    %629 = vector.shape_cast %628 : vector<1x8x32xf32> to vector<8x32xf32>
    %630 = arith.addf %626, %629 : vector<8x32xf32>
    %631 = arith.index_cast %622 : i32 to index
    %c0_330 = arith.constant 0 : index
    %c0_331 = arith.constant 0 : index
    %632 = vector.load %arg17[%631, %c0_330, %c0_331] : memref<16x8x32xf32, #tpu.memory_space<vmem>>, vector<1x8x32xf32>
    %633 = vector.shape_cast %632 : vector<1x8x32xf32> to vector<8x32xf32>
    %634 = arith.mulf %633, %611 : vector<8x32xf32>
    %635 = arith.index_cast %622 : i32 to index
    %c0_332 = arith.constant 0 : index
    %c0_333 = arith.constant 0 : index
    %636 = vector.load %arg18[%635, %c0_332, %c0_333] : memref<16x8x32xf32, #tpu.memory_space<vmem>>, vector<1x8x32xf32>
    %637 = vector.shape_cast %636 : vector<1x8x32xf32> to vector<8x32xf32>
    %638 = arith.addf %634, %637 : vector<8x32xf32>
    %639 = arith.index_cast %c4_i32_324 : i32 to index
    %c0_334 = arith.constant 0 : index
    %640 = vector.load %arg19[%639, %c0_334] : memref<16x8xf32, #tpu.memory_space<vmem>>, vector<1x8xf32>
    %cst_335 = arith.constant dense<0.000000e+00> : vector<1x32xf32>
    %641 = tpu.matmul %640, %630, %cst_335 {dimension_numbers = #tpu.dot_dimension_numbers<[1], [0], [0], [1], [0, 0, 1, 1], [], []>} : vector<1x8xf32>, vector<8x32xf32>, vector<1x32xf32> -> vector<1x32xf32>
    %642 = arith.index_cast %c4_i32_324 : i32 to index
    %c0_336 = arith.constant 0 : index
    %643 = vector.load %arg20[%642, %c0_336] : memref<16x32xf32, #tpu.memory_space<vmem>>, vector<1x32xf32>
    tpu.vector_store %arg20[%642, %c0_336], %641 {strides = array<i32>} : memref<16x32xf32, #tpu.memory_space<vmem>>, vector<1x32xf32>,
    %644 = arith.index_cast %622 : i32 to index
    %c0_337 = arith.constant 0 : index
    %645 = vector.load %arg19[%644, %c0_337] : memref<16x8xf32, #tpu.memory_space<vmem>>, vector<1x8xf32>
    %cst_338 = arith.constant dense<0.000000e+00> : vector<1x32xf32>
    %646 = tpu.matmul %645, %638, %cst_338 {dimension_numbers = #tpu.dot_dimension_numbers<[1], [0], [0], [1], [0, 0, 1, 1], [], []>} : vector<1x8xf32>, vector<8x32xf32>, vector<1x32xf32> -> vector<1x32xf32>
    %647 = arith.index_cast %622 : i32 to index
    %c0_339 = arith.constant 0 : index
    %648 = vector.load %arg20[%647, %c0_339] : memref<16x32xf32, #tpu.memory_space<vmem>>, vector<1x32xf32>
    tpu.vector_store %arg20[%647, %c0_339], %646 {strides = array<i32>} : memref<16x32xf32, #tpu.memory_space<vmem>>, vector<1x32xf32>,
    %c5_i32_340 = arith.constant 5 : i32
    %c15_i32_341 = arith.constant 15 : i32
    %649 = arith.subi %c15_i32_341, %c5_i32_340 : i32
    %650 = arith.index_cast %c5_i32_340 : i32 to index
    %c0_342 = arith.constant 0 : index
    %c0_343 = arith.constant 0 : index
    %651 = vector.load %arg17[%650, %c0_342, %c0_343] : memref<16x8x32xf32, #tpu.memory_space<vmem>>, vector<1x8x32xf32>
    %652 = vector.shape_cast %651 : vector<1x8x32xf32> to vector<8x32xf32>
    %653 = arith.mulf %652, %630 : vector<8x32xf32>
    %654 = arith.index_cast %c5_i32_340 : i32 to index
    %c0_344 = arith.constant 0 : index
    %c0_345 = arith.constant 0 : index
    %655 = vector.load %arg18[%654, %c0_344, %c0_345] : memref<16x8x32xf32, #tpu.memory_space<vmem>>, vector<1x8x32xf32>
    %656 = vector.shape_cast %655 : vector<1x8x32xf32> to vector<8x32xf32>
    %657 = arith.addf %653, %656 : vector<8x32xf32>
    %658 = arith.index_cast %649 : i32 to index
    %c0_346 = arith.constant 0 : index
    %c0_347 = arith.constant 0 : index
    %659 = vector.load %arg17[%658, %c0_346, %c0_347] : memref<16x8x32xf32, #tpu.memory_space<vmem>>, vector<1x8x32xf32>
    %660 = vector.shape_cast %659 : vector<1x8x32xf32> to vector<8x32xf32>
    %661 = arith.mulf %660, %638 : vector<8x32xf32>
    %662 = arith.index_cast %649 : i32 to index
    %c0_348 = arith.constant 0 : index
    %c0_349 = arith.constant 0 : index
    %663 = vector.load %arg18[%662, %c0_348, %c0_349] : memref<16x8x32xf32, #tpu.memory_space<vmem>>, vector<1x8x32xf32>
    %664 = vector.shape_cast %663 : vector<1x8x32xf32> to vector<8x32xf32>
    %665 = arith.addf %661, %664 : vector<8x32xf32>
    %666 = arith.index_cast %c5_i32_340 : i32 to index
    %c0_350 = arith.constant 0 : index
    %667 = vector.load %arg19[%666, %c0_350] : memref<16x8xf32, #tpu.memory_space<vmem>>, vector<1x8xf32>
    %cst_351 = arith.constant dense<0.000000e+00> : vector<1x32xf32>
    %668 = tpu.matmul %667, %657, %cst_351 {dimension_numbers = #tpu.dot_dimension_numbers<[1], [0], [0], [1], [0, 0, 1, 1], [], []>} : vector<1x8xf32>, vector<8x32xf32>, vector<1x32xf32> -> vector<1x32xf32>
    %669 = arith.index_cast %c5_i32_340 : i32 to index
    %c0_352 = arith.constant 0 : index
    %670 = vector.load %arg20[%669, %c0_352] : memref<16x32xf32, #tpu.memory_space<vmem>>, vector<1x32xf32>
    tpu.vector_store %arg20[%669, %c0_352], %668 {strides = array<i32>} : memref<16x32xf32, #tpu.memory_space<vmem>>, vector<1x32xf32>,
    %671 = arith.index_cast %649 : i32 to index
    %c0_353 = arith.constant 0 : index
    %672 = vector.load %arg19[%671, %c0_353] : memref<16x8xf32, #tpu.memory_space<vmem>>, vector<1x8xf32>
    %cst_354 = arith.constant dense<0.000000e+00> : vector<1x32xf32>
    %673 = tpu.matmul %672, %665, %cst_354 {dimension_numbers = #tpu.dot_dimension_numbers<[1], [0], [0], [1], [0, 0, 1, 1], [], []>} : vector<1x8xf32>, vector<8x32xf32>, vector<1x32xf32> -> vector<1x32xf32>
    %674 = arith.index_cast %649 : i32 to index
    %c0_355 = arith.constant 0 : index
    %675 = vector.load %arg20[%674, %c0_355] : memref<16x32xf32, #tpu.memory_space<vmem>>, vector<1x32xf32>
    tpu.vector_store %arg20[%674, %c0_355], %673 {strides = array<i32>} : memref<16x32xf32, #tpu.memory_space<vmem>>, vector<1x32xf32>,
    %c6_i32_356 = arith.constant 6 : i32
    %c15_i32_357 = arith.constant 15 : i32
    %676 = arith.subi %c15_i32_357, %c6_i32_356 : i32
    %677 = arith.index_cast %c6_i32_356 : i32 to index
    %c0_358 = arith.constant 0 : index
    %c0_359 = arith.constant 0 : index
    %678 = vector.load %arg17[%677, %c0_358, %c0_359] : memref<16x8x32xf32, #tpu.memory_space<vmem>>, vector<1x8x32xf32>
    %679 = vector.shape_cast %678 : vector<1x8x32xf32> to vector<8x32xf32>
    %680 = arith.mulf %679, %657 : vector<8x32xf32>
    %681 = arith.index_cast %c6_i32_356 : i32 to index
    %c0_360 = arith.constant 0 : index
    %c0_361 = arith.constant 0 : index
    %682 = vector.load %arg18[%681, %c0_360, %c0_361] : memref<16x8x32xf32, #tpu.memory_space<vmem>>, vector<1x8x32xf32>
    %683 = vector.shape_cast %682 : vector<1x8x32xf32> to vector<8x32xf32>
    %684 = arith.addf %680, %683 : vector<8x32xf32>
    %685 = arith.index_cast %676 : i32 to index
    %c0_362 = arith.constant 0 : index
    %c0_363 = arith.constant 0 : index
    %686 = vector.load %arg17[%685, %c0_362, %c0_363] : memref<16x8x32xf32, #tpu.memory_space<vmem>>, vector<1x8x32xf32>
    %687 = vector.shape_cast %686 : vector<1x8x32xf32> to vector<8x32xf32>
    %688 = arith.mulf %687, %665 : vector<8x32xf32>
    %689 = arith.index_cast %676 : i32 to index
    %c0_364 = arith.constant 0 : index
    %c0_365 = arith.constant 0 : index
    %690 = vector.load %arg18[%689, %c0_364, %c0_365] : memref<16x8x32xf32, #tpu.memory_space<vmem>>, vector<1x8x32xf32>
    %691 = vector.shape_cast %690 : vector<1x8x32xf32> to vector<8x32xf32>
    %692 = arith.addf %688, %691 : vector<8x32xf32>
    %693 = arith.index_cast %c6_i32_356 : i32 to index
    %c0_366 = arith.constant 0 : index
    %694 = vector.load %arg19[%693, %c0_366] : memref<16x8xf32, #tpu.memory_space<vmem>>, vector<1x8xf32>
    %cst_367 = arith.constant dense<0.000000e+00> : vector<1x32xf32>
    %695 = tpu.matmul %694, %684, %cst_367 {dimension_numbers = #tpu.dot_dimension_numbers<[1], [0], [0], [1], [0, 0, 1, 1], [], []>} : vector<1x8xf32>, vector<8x32xf32>, vector<1x32xf32> -> vector<1x32xf32>
    %696 = arith.index_cast %c6_i32_356 : i32 to index
    %c0_368 = arith.constant 0 : index
    %697 = vector.load %arg20[%696, %c0_368] : memref<16x32xf32, #tpu.memory_space<vmem>>, vector<1x32xf32>
    tpu.vector_store %arg20[%696, %c0_368], %695 {strides = array<i32>} : memref<16x32xf32, #tpu.memory_space<vmem>>, vector<1x32xf32>,
    %698 = arith.index_cast %676 : i32 to index
    %c0_369 = arith.constant 0 : index
    %699 = vector.load %arg19[%698, %c0_369] : memref<16x8xf32, #tpu.memory_space<vmem>>, vector<1x8xf32>
    %cst_370 = arith.constant dense<0.000000e+00> : vector<1x32xf32>
    %700 = tpu.matmul %699, %692, %cst_370 {dimension_numbers = #tpu.dot_dimension_numbers<[1], [0], [0], [1], [0, 0, 1, 1], [], []>} : vector<1x8xf32>, vector<8x32xf32>, vector<1x32xf32> -> vector<1x32xf32>
    %701 = arith.index_cast %676 : i32 to index
    %c0_371 = arith.constant 0 : index
    %702 = vector.load %arg20[%701, %c0_371] : memref<16x32xf32, #tpu.memory_space<vmem>>, vector<1x32xf32>
    tpu.vector_store %arg20[%701, %c0_371], %700 {strides = array<i32>} : memref<16x32xf32, #tpu.memory_space<vmem>>, vector<1x32xf32>,
    %c7_i32_372 = arith.constant 7 : i32
    %c15_i32_373 = arith.constant 15 : i32
    %703 = arith.subi %c15_i32_373, %c7_i32_372 : i32
    %704 = arith.index_cast %c7_i32_372 : i32 to index
    %c0_374 = arith.constant 0 : index
    %c0_375 = arith.constant 0 : index
    %705 = vector.load %arg17[%704, %c0_374, %c0_375] : memref<16x8x32xf32, #tpu.memory_space<vmem>>, vector<1x8x32xf32>
    %706 = vector.shape_cast %705 : vector<1x8x32xf32> to vector<8x32xf32>
    %707 = arith.mulf %706, %684 : vector<8x32xf32>
    %708 = arith.index_cast %c7_i32_372 : i32 to index
    %c0_376 = arith.constant 0 : index
    %c0_377 = arith.constant 0 : index
    %709 = vector.load %arg18[%708, %c0_376, %c0_377] : memref<16x8x32xf32, #tpu.memory_space<vmem>>, vector<1x8x32xf32>
    %710 = vector.shape_cast %709 : vector<1x8x32xf32> to vector<8x32xf32>
    %711 = arith.addf %707, %710 : vector<8x32xf32>
    %712 = arith.index_cast %703 : i32 to index
    %c0_378 = arith.constant 0 : index
    %c0_379 = arith.constant 0 : index
    %713 = vector.load %arg17[%712, %c0_378, %c0_379] : memref<16x8x32xf32, #tpu.memory_space<vmem>>, vector<1x8x32xf32>
    %714 = vector.shape_cast %713 : vector<1x8x32xf32> to vector<8x32xf32>
    %715 = arith.mulf %714, %692 : vector<8x32xf32>
    %716 = arith.index_cast %703 : i32 to index
    %c0_380 = arith.constant 0 : index
    %c0_381 = arith.constant 0 : index
    %717 = vector.load %arg18[%716, %c0_380, %c0_381] : memref<16x8x32xf32, #tpu.memory_space<vmem>>, vector<1x8x32xf32>
    %718 = vector.shape_cast %717 : vector<1x8x32xf32> to vector<8x32xf32>
    %719 = arith.addf %715, %718 : vector<8x32xf32>
    %720 = arith.index_cast %c7_i32_372 : i32 to index
    %c0_382 = arith.constant 0 : index
    %721 = vector.load %arg19[%720, %c0_382] : memref<16x8xf32, #tpu.memory_space<vmem>>, vector<1x8xf32>
    %cst_383 = arith.constant dense<0.000000e+00> : vector<1x32xf32>
    %722 = tpu.matmul %721, %711, %cst_383 {dimension_numbers = #tpu.dot_dimension_numbers<[1], [0], [0], [1], [0, 0, 1, 1], [], []>} : vector<1x8xf32>, vector<8x32xf32>, vector<1x32xf32> -> vector<1x32xf32>
    %723 = arith.index_cast %c7_i32_372 : i32 to index
    %c0_384 = arith.constant 0 : index
    %724 = vector.load %arg20[%723, %c0_384] : memref<16x32xf32, #tpu.memory_space<vmem>>, vector<1x32xf32>
    tpu.vector_store %arg20[%723, %c0_384], %722 {strides = array<i32>} : memref<16x32xf32, #tpu.memory_space<vmem>>, vector<1x32xf32>,
    %725 = arith.index_cast %703 : i32 to index
    %c0_385 = arith.constant 0 : index
    %726 = vector.load %arg19[%725, %c0_385] : memref<16x8xf32, #tpu.memory_space<vmem>>, vector<1x8xf32>
    %cst_386 = arith.constant dense<0.000000e+00> : vector<1x32xf32>
    %727 = tpu.matmul %726, %719, %cst_386 {dimension_numbers = #tpu.dot_dimension_numbers<[1], [0], [0], [1], [0, 0, 1, 1], [], []>} : vector<1x8xf32>, vector<8x32xf32>, vector<1x32xf32> -> vector<1x32xf32>
    %728 = arith.index_cast %703 : i32 to index
    %c0_387 = arith.constant 0 : index
    %729 = vector.load %arg20[%728, %c0_387] : memref<16x32xf32, #tpu.memory_space<vmem>>, vector<1x32xf32>
    tpu.vector_store %arg20[%728, %c0_387], %727 {strides = array<i32>} : memref<16x32xf32, #tpu.memory_space<vmem>>, vector<1x32xf32>,
    %c8_i32_388 = arith.constant 8 : i32
    %c0_389 = arith.constant 0 : index
    %c0_390 = arith.constant 0 : index
    %730 = vector.load %arg20[%c0_389, %c0_390] : memref<16x32xf32, #tpu.memory_space<vmem>>, vector<16x32xf32>
    %c1_391 = arith.constant 1 : index
    %c0_392 = arith.constant 0 : index
    %c0_393 = arith.constant 0 : index
    %731 = vector.load %arg14[%c1_391, %c0_392, %c0_393] : memref<2x1x32xf32, #tpu.memory_space<vmem>>, vector<1x1x32xf32>
    %732 = vector.shape_cast %731 : vector<1x1x32xf32> to vector<1x32xf32>
    %733 = vector.broadcast %732 : vector<1x32xf32> to vector<16x32xf32>
    %734 = arith.mulf %733, %467 : vector<16x32xf32>
    %735 = arith.addf %730, %734 : vector<16x32xf32>
    %736 = vector.extract_strided_slice %735 {offsets = [0, 0], sizes = [8, 32], strides = [1, 1]} : vector<16x32xf32> to vector<8x32xf32>
    %737 = vector.extract_strided_slice %735 {offsets = [8, 0], sizes = [8, 32], strides = [1, 1]} : vector<16x32xf32> to vector<8x32xf32>
    %738 = arith.addf %736, %737 : vector<8x32xf32>
    %cst_394 = arith.constant 0.000000e+00 : f32
    %739 = vector.broadcast %cst_394 : f32 to vector<8x32xf32>
    %740 = arith.subf %739, %409 : vector<8x32xf32>
    %741 = math.exp %740 : vector<8x32xf32>
    %cst_395 = arith.constant 1.000000e+00 : f32
    %742 = vector.broadcast %cst_395 : f32 to vector<8x32xf32>
    %743 = arith.addf %742, %741 : vector<8x32xf32>
    %cst_396 = arith.constant 1.000000e+00 : f32
    %744 = vector.broadcast %cst_396 : f32 to vector<8x32xf32>
    %745 = arith.divf %744, %743 : vector<8x32xf32>
    %746 = arith.mulf %409, %745 : vector<8x32xf32>
    %cst_397 = arith.constant 5.000000e-01 : f32
    %747 = vector.broadcast %cst_397 : f32 to vector<8x32xf32>
    %748 = arith.mulf %747, %746 : vector<8x32xf32>
    %749 = arith.mulf %738, %748 : vector<8x32xf32>
    %c1_398 = arith.constant 1 : index
    %c0_399 = arith.constant 0 : index
    %c0_400 = arith.constant 0 : index
    %750 = vector.load %arg15[%c1_398, %c0_399, %c0_400] : memref<2x32x16xf32, #tpu.memory_space<vmem>>, vector<1x32x16xf32>
    %751 = vector.shape_cast %750 : vector<1x32x16xf32> to vector<32x16xf32>
    %cst_401 = arith.constant dense<0.000000e+00> : vector<8x16xf32>
    %752 = tpu.matmul %749, %751, %cst_401 {dimension_numbers = #tpu.dot_dimension_numbers<[1], [0], [0], [1], [0, 0, 1, 1], [], []>} : vector<8x32xf32>, vector<32x16xf32>, vector<8x16xf32> -> vector<8x16xf32>
    %753 = arith.addf %752, %377 : vector<8x16xf32>
    %c0_402 = arith.constant 0 : index
    %c0_403 = arith.constant 0 : index
    %c0_404 = arith.constant 0 : index
    %754 = vector.load %arg16[%c0_402, %c0_403, %c0_404] : memref<1x8x16xf32, #tpu.memory_space<vmem>>, vector<1x8x16xf32>
    %755 = vector.shape_cast %754 : vector<1x8x16xf32> to vector<8x16xf32>
    %756 = vector.shape_cast %753 : vector<8x16xf32> to vector<1x8x16xf32>
    tpu.vector_store %arg16[%c0_402, %c0_403, %c0_404], %756 {strides = array<i32>} : memref<1x8x16xf32, #tpu.memory_space<vmem>>, vector<1x8x16xf32>,
    return
  }
  func.func @transform_0(%arg0: i32) -> (i32, i32, i32) {
    %c0_i32 = arith.constant 0 : i32
    %c0_i32_0 = arith.constant 0 : i32
    %c0_i32_1 = arith.constant 0 : i32
    return %arg0, %c0_i32, %c0_i32_0 : i32, i32, i32
  }
  func.func @transform_1(%arg0: i32) -> (i32, i32, i32) {
    %c0_i32 = arith.constant 0 : i32
    %c0_i32_0 = arith.constant 0 : i32
    %c0_i32_1 = arith.constant 0 : i32
    %c0_i32_2 = arith.constant 0 : i32
    return %c0_i32, %c0_i32_0, %c0_i32_1 : i32, i32, i32
  }
  func.func @transform_2(%arg0: i32) -> (i32, i32, i32) {
    %c0_i32 = arith.constant 0 : i32
    %c0_i32_0 = arith.constant 0 : i32
    %c0_i32_1 = arith.constant 0 : i32
    %c0_i32_2 = arith.constant 0 : i32
    return %c0_i32, %c0_i32_0, %c0_i32_1 : i32, i32, i32
  }
  func.func @transform_3(%arg0: i32) -> (i32, i32, i32) {
    %c0_i32 = arith.constant 0 : i32
    %c0_i32_0 = arith.constant 0 : i32
    %c0_i32_1 = arith.constant 0 : i32
    %c0_i32_2 = arith.constant 0 : i32
    return %c0_i32, %c0_i32_0, %c0_i32_1 : i32, i32, i32
  }
  func.func @transform_4(%arg0: i32) -> (i32, i32, i32) {
    %c0_i32 = arith.constant 0 : i32
    %c0_i32_0 = arith.constant 0 : i32
    %c0_i32_1 = arith.constant 0 : i32
    %c0_i32_2 = arith.constant 0 : i32
    return %c0_i32, %c0_i32_0, %c0_i32_1 : i32, i32, i32
  }
  func.func @transform_5(%arg0: i32) -> (i32, i32, i32) {
    %c0_i32 = arith.constant 0 : i32
    %c0_i32_0 = arith.constant 0 : i32
    %c0_i32_1 = arith.constant 0 : i32
    %c0_i32_2 = arith.constant 0 : i32
    return %c0_i32, %c0_i32_0, %c0_i32_1 : i32, i32, i32
  }
  func.func @transform_6(%arg0: i32) -> (i32, i32, i32) {
    %c0_i32 = arith.constant 0 : i32
    %c0_i32_0 = arith.constant 0 : i32
    %c0_i32_1 = arith.constant 0 : i32
    %c0_i32_2 = arith.constant 0 : i32
    return %c0_i32, %c0_i32_0, %c0_i32_1 : i32, i32, i32
  }
  func.func @transform_7(%arg0: i32) -> (i32, i32, i32) {
    %c0_i32 = arith.constant 0 : i32
    %c0_i32_0 = arith.constant 0 : i32
    %c0_i32_1 = arith.constant 0 : i32
    %c0_i32_2 = arith.constant 0 : i32
    return %c0_i32, %c0_i32_0, %c0_i32_1 : i32, i32, i32
  }
  func.func @transform_8(%arg0: i32) -> (i32, i32, i32) {
    %c0_i32 = arith.constant 0 : i32
    %c0_i32_0 = arith.constant 0 : i32
    %c0_i32_1 = arith.constant 0 : i32
    %c0_i32_2 = arith.constant 0 : i32
    return %c0_i32, %c0_i32_0, %c0_i32_1 : i32, i32, i32
  }
  func.func @transform_9(%arg0: i32) -> (i32, i32, i32) {
    %c0_i32 = arith.constant 0 : i32
    %c0_i32_0 = arith.constant 0 : i32
    %c0_i32_1 = arith.constant 0 : i32
    %c0_i32_2 = arith.constant 0 : i32
    return %c0_i32, %c0_i32_0, %c0_i32_1 : i32, i32, i32
  }
  func.func @transform_10(%arg0: i32) -> (i32, i32, i32) {
    %c0_i32 = arith.constant 0 : i32
    %c0_i32_0 = arith.constant 0 : i32
    %c0_i32_1 = arith.constant 0 : i32
    %c0_i32_2 = arith.constant 0 : i32
    return %c0_i32, %c0_i32_0, %c0_i32_1 : i32, i32, i32
  }
  func.func @transform_11(%arg0: i32) -> (i32, i32, i32) {
    %c0_i32 = arith.constant 0 : i32
    %c0_i32_0 = arith.constant 0 : i32
    %c0_i32_1 = arith.constant 0 : i32
    %c0_i32_2 = arith.constant 0 : i32
    return %c0_i32, %c0_i32_0, %c0_i32_1 : i32, i32, i32
  }
  func.func @transform_12(%arg0: i32) -> (i32, i32, i32) {
    %c0_i32 = arith.constant 0 : i32
    %c0_i32_0 = arith.constant 0 : i32
    %c0_i32_1 = arith.constant 0 : i32
    %c0_i32_2 = arith.constant 0 : i32
    return %c0_i32, %c0_i32_0, %c0_i32_1 : i32, i32, i32
  }
  func.func @transform_13(%arg0: i32) -> (i32, i32, i32) {
    %c0_i32 = arith.constant 0 : i32
    %c0_i32_0 = arith.constant 0 : i32
    %c0_i32_1 = arith.constant 0 : i32
    %c0_i32_2 = arith.constant 0 : i32
    return %c0_i32, %c0_i32_0, %c0_i32_1 : i32, i32, i32
  }
  func.func @transform_14(%arg0: i32) -> (i32, i32, i32) {
    %c0_i32 = arith.constant 0 : i32
    %c0_i32_0 = arith.constant 0 : i32
    %c0_i32_1 = arith.constant 0 : i32
    %c0_i32_2 = arith.constant 0 : i32
    return %c0_i32, %c0_i32_0, %c0_i32_1 : i32, i32, i32
  }
  func.func @transform_15(%arg0: i32) -> (i32, i32, i32) {
    %c0_i32 = arith.constant 0 : i32
    %c0_i32_0 = arith.constant 0 : i32
    %c0_i32_1 = arith.constant 0 : i32
    return %arg0, %c0_i32, %c0_i32_0 : i32, i32, i32
  }
}

</mosaic_0001>

<llo_original>
// kernel: bimamba_forward_call.1
$region0: #{bimamba_forward_call.1}
  #allocation0 [shape = 'u32[]', space=smem, size = 0x4, offset = 0x4, fixed_abs, tag = 'smem constant byte address 0x4 - core index']
  #allocation1 [shape = 'u32[144,128]{1,0:T(1,128)}', space=vmem, size = 0x12000, scoped, tag = 'internal scratch']
  #allocation2 [shape = 'f32[16,8,32]{2,1,0:T(8,128)}', space=vmem, size = 0x10000, scoped, tag = 'scratch operand']
  #allocation3 [shape = 'f32[16,8,32]{2,1,0:T(8,128)}', space=vmem, size = 0x10000, scoped, tag = 'scratch operand']
  #allocation4 [shape = 'f32[16,8]{1,0:T(8,128)}', space=vmem, size = 0x2000, scoped, tag = 'scratch operand']
  #allocation5 [shape = 'f32[16,32]{1,0:T(8,128)}', space=vmem, size = 0x2000, scoped, tag = 'scratch operand']
  %s0 = inlined_call_operand.vmem [shape: f32[2,8,16], index: 0, kind: input, shape index: {}]
  %s1 = inlined_call_operand.vmem [shape: f32[2,1,16], index: 1, kind: input, shape index: {}]
  %s2 = inlined_call_operand.vmem [shape: f32[2,1,16], index: 2, kind: input, shape index: {}]
  %s3 = inlined_call_operand.vmem [shape: f32[2,16,32], index: 3, kind: input, shape index: {}]
  %s4 = inlined_call_operand.vmem [shape: f32[2,16,32], index: 4, kind: input, shape index: {}]
  %s5 = inlined_call_operand.vmem [shape: f32[2,4,32], index: 5, kind: input, shape index: {}]
  %s6 = inlined_call_operand.vmem [shape: f32[2,1,32], index: 6, kind: input, shape index: {}]
  %s7 = inlined_call_operand.vmem [shape: f32[2,32,2], index: 7, kind: input, shape index: {}]
  %s8 = inlined_call_operand.vmem [shape: f32[2,32,8], index: 8, kind: input, shape index: {}]
  %s9 = inlined_call_operand.vmem [shape: f32[2,32,8], index: 9, kind: input, shape index: {}]
  %s10 = inlined_call_operand.vmem [shape: f32[2,2,32], index: 10, kind: input, shape index: {}]
  %s11 = inlined_call_operand.vmem [shape: f32[2,1,32], index: 11, kind: input, shape index: {}]
  %s12 = inlined_call_operand.vmem [shape: f32[2,8,32], index: 12, kind: input, shape index: {}]
  %s13 = inlined_call_operand.vmem [shape: f32[2,1,32], index: 13, kind: input, shape index: {}]
  %s14 = inlined_call_operand.vmem [shape: f32[2,32,16], index: 14, kind: input, shape index: {}]
  %s15 = inlined_call_operand.hbm [shape: f32[2,8,16], index: 15, kind: output, shape index: {}]
  %s16 = sld [smem:[#allocation0]]
  $region93: #{bimamba_forward_call.1} parent=0
    _
  %s18 = ssub.s32 1, %s16
  %s19 = scalar_select 0, %s18, %s16
  $region1: #{bimamba_forward_call.1} parent=0
    #allocation6 [shape = 'u8[8192]{0}', space=vmem, size = 0x2000, scoped, tag = 'output window, operand 0']
    #allocation7 [shape = 's32[2]{0}', space=sflag, size = 0x8, scoped, tag = 'scoped memory for bimamba_forward_call.1']
    %20 = vsyncpa [#allocation7], 0
    %s21 = scalar_lea.sflag [#allocation7], 1
    %22 = vsyncpa %s21, 0
    loop: start=0, step=1, limit=4
    $region2: #{bimamba_forward_call.1} parent=1 // loop_pre_header
      _
    $region3: #{bimamba_forward_call.1} parent=1 // loop_header
      %s24 = sphi 0, %s28
      %p25 = scmp.ge.s32.totalorder %s24, 4
      %s34 = sphi 0, %s36
      %s37 = sphi 0, %s34
      %s38 = sphi 0, %s37
      %s54 = sphi 0, %s38
      %s58 = sphi 0, %s58
      %s60 = sphi 0, %s58
      %s61 = sphi 0, %s60
      %s75 = sphi 0, %s61
      %s79 = sphi 0, %s79
      %s81 = sphi 0, %s79
      %s82 = sphi 0, %s81
      %s96 = sphi 0, %s82
      %s100 = sphi 0, %s100
      %s102 = sphi 0, %s100
      %s103 = sphi 0, %s102
      %s117 = sphi 0, %s103
      %s121 = sphi 0, %s121
      %s123 = sphi 0, %s121
      %s124 = sphi 0, %s123
      %s138 = sphi 0, %s124
      %s142 = sphi 0, %s142
      %s144 = sphi 0, %s142
      %s145 = sphi 0, %s144
      %s159 = sphi 0, %s145
      %s163 = sphi 0, %s163
      %s165 = sphi 0, %s163
      %s166 = sphi 0, %s165
      %s180 = sphi 0, %s166
      %s184 = sphi 0, %s184
      %s186 = sphi 0, %s184
      %s187 = sphi 0, %s186
      %s201 = sphi 0, %s187
      %s205 = sphi 0, %s205
      %s207 = sphi 0, %s205
      %s208 = sphi 0, %s207
      %s222 = sphi 0, %s208
      %s226 = sphi 0, %s226
      %s228 = sphi 0, %s226
      %s229 = sphi 0, %s228
      %s243 = sphi 0, %s229
      %s247 = sphi 0, %s247
      %s249 = sphi 0, %s247
      %s250 = sphi 0, %s249
      %s264 = sphi 0, %s250
      %s268 = sphi 0, %s268
      %s270 = sphi 0, %s268
      %s271 = sphi 0, %s270
      %s285 = sphi 0, %s271
      %s289 = sphi 0, %s289
      %s291 = sphi 0, %s289
      %s292 = sphi 0, %s291
      %s306 = sphi 0, %s292
      %s310 = sphi 0, %s310
      %s312 = sphi 0, %s310
      %s313 = sphi 0, %s312
      %s327 = sphi 0, %s313
      %s331 = sphi 0, %s331
      %s333 = sphi 0, %s331
      %s334 = sphi 0, %s333
      %s348 = sphi 0, %s334
      %s354 = sphi 0, %s356
      %s357 = sphi 0, %s354
      %s358 = sphi 0, %s357
      %s374 = sphi 0, %s358
    $region4: #{bimamba_forward_call.1} parent=1 // loop_header_branch
      %27 = sbr.rel (%p25) target = $region8
    $region5: #{bimamba_forward_call.1} parent=1 // loop_body
      %s29 = ssub.s32 %s24, 1
      %s30 = ssub.s32 %s24, 2
      %s31 = sadd.s32 %s24, 1
      %s32 = ssub.s32 %s24, %s31
      %p33 = scmp.eq.s32.totalorder %s32, 0
      %s35 = sadd.s32 %s34, 1
      %s36 = scalar_select %p33, %s34, %s35
      %p39 = pneg %p33
      %p40 = scmp.eq.s32.totalorder %s24, 1
      %p41 = por %p39, %p40
      %p42 = scmp.ne.s32.totalorder %s34, %s37
      %p43 = scmp.eq.s32.totalorder %s24, 0
      %p44 = por %p42, %p43
      %p45 = scmp.ne.s32.totalorder %s34, %s37
      %p46 = scmp.eq.s32.totalorder %s29, 1
      %p47 = por %p45, %p46
      %p48 = scmp.ne.s32.totalorder %s37, %s38
      %p49 = scmp.eq.s32.totalorder %s29, 0
      %p50 = por %p48, %p49
      %p51 = scmp.ne.s32.totalorder %s37, %s38
      %p52 = scmp.eq.s32.totalorder %s30, 1
      %p53 = por %p51, %p52
      %p55 = scmp.ne.s32.totalorder %s38, %s54
      %p56 = scmp.eq.s32.totalorder %s30, 0
      %p57 = por %p55, %p56
      %s59 = sadd.s32 %s58, 1
      %p62 = scmp.eq.s32.totalorder %s24, 1
      %p63 = scmp.ne.s32.totalorder %s58, %s60
      %p64 = scmp.eq.s32.totalorder %s24, 0
      %p65 = por %p63, %p64
      %p66 = scmp.ne.s32.totalorder %s58, %s60
      %p67 = scmp.eq.s32.totalorder %s29, 1
      %p68 = por %p66, %p67
      %p69 = scmp.ne.s32.totalorder %s60, %s61
      %p70 = scmp.eq.s32.totalorder %s29, 0
      %p71 = por %p69, %p70
      %p72 = scmp.ne.s32.totalorder %s60, %s61
      %p73 = scmp.eq.s32.totalorder %s30, 1
      %p74 = por %p72, %p73
      %p76 = scmp.ne.s32.totalorder %s61, %s75
      %p77 = scmp.eq.s32.totalorder %s30, 0
      %p78 = por %p76, %p77
      %s80 = sadd.s32 %s79, 1
      %p83 = scmp.eq.s32.totalorder %s24, 1
      %p84 = scmp.ne.s32.totalorder %s79, %s81
      %p85 = scmp.eq.s32.totalorder %s24, 0
      %p86 = por %p84, %p85
      %p87 = scmp.ne.s32.totalorder %s79, %s81
      %p88 = scmp.eq.s32.totalorder %s29, 1
      %p89 = por %p87, %p88
      %p90 = scmp.ne.s32.totalorder %s81, %s82
      %p91 = scmp.eq.s32.totalorder %s29, 0
      %p92 = por %p90, %p91
      %p93 = scmp.ne.s32.totalorder %s81, %s82
      %p94 = scmp.eq.s32.totalorder %s30, 1
      %p95 = por %p93, %p94
      %p97 = scmp.ne.s32.totalorder %s82, %s96
      %p98 = scmp.eq.s32.totalorder %s30, 0
      %p99 = por %p97, %p98
      %s101 = sadd.s32 %s100, 1
      %p104 = scmp.eq.s32.totalorder %s24, 1
      %p105 = scmp.ne.s32.totalorder %s100, %s102
      %p106 = scmp.eq.s32.totalorder %s24, 0
      %p107 = por %p105, %p106
      %p108 = scmp.ne.s32.totalorder %s100, %s102
      %p109 = scmp.eq.s32.totalorder %s29, 1
      %p110 = por %p108, %p109
      %p111 = scmp.ne.s32.totalorder %s102, %s103
      %p112 = scmp.eq.s32.totalorder %s29, 0
      %p113 = por %p111, %p112
      %p114 = scmp.ne.s32.totalorder %s102, %s103
      %p115 = scmp.eq.s32.totalorder %s30, 1
      %p116 = por %p114, %p115
      %p118 = scmp.ne.s32.totalorder %s103, %s117
      %p119 = scmp.eq.s32.totalorder %s30, 0
      %p120 = por %p118, %p119
      %s122 = sadd.s32 %s121, 1
      %p125 = scmp.eq.s32.totalorder %s24, 1
      %p126 = scmp.ne.s32.totalorder %s121, %s123
      %p127 = scmp.eq.s32.totalorder %s24, 0
      %p128 = por %p126, %p127
      %p129 = scmp.ne.s32.totalorder %s121, %s123
      %p130 = scmp.eq.s32.totalorder %s29, 1
      %p131 = por %p129, %p130
      %p132 = scmp.ne.s32.totalorder %s123, %s124
      %p133 = scmp.eq.s32.totalorder %s29, 0
      %p134 = por %p132, %p133
      %p135 = scmp.ne.s32.totalorder %s123, %s124
      %p136 = scmp.eq.s32.totalorder %s30, 1
      %p137 = por %p135, %p136
      %p139 = scmp.ne.s32.totalorder %s124, %s138
      %p140 = scmp.eq.s32.totalorder %s30, 0
      %p141 = por %p139, %p140
      %s143 = sadd.s32 %s142, 1
      %p146 = scmp.eq.s32.totalorder %s24, 1
      %p147 = scmp.ne.s32.totalorder %s142, %s144
      %p148 = scmp.eq.s32.totalorder %s24, 0
      %p149 = por %p147, %p148
      %p150 = scmp.ne.s32.totalorder %s142, %s144
      %p151 = scmp.eq.s32.totalorder %s29, 1
      %p152 = por %p150, %p151
      %p153 = scmp.ne.s32.totalorder %s144, %s145
      %p154 = scmp.eq.s32.totalorder %s29, 0
      %p155 = por %p153, %p154
      %p156 = scmp.ne.s32.totalorder %s144, %s145
      %p157 = scmp.eq.s32.totalorder %s30, 1
      %p158 = por %p156, %p157
      %p160 = scmp.ne.s32.totalorder %s145, %s159
      %p161 = scmp.eq.s32.totalorder %s30, 0
      %p162 = por %p160, %p161
      %s164 = sadd.s32 %s163, 1
      %p167 = scmp.eq.s32.totalorder %s24, 1
      %p168 = scmp.ne.s32.totalorder %s163, %s165
      %p169 = scmp.eq.s32.totalorder %s24, 0
      %p170 = por %p168, %p169
      %p171 = scmp.ne.s32.totalorder %s163, %s165
      %p172 = scmp.eq.s32.totalorder %s29, 1
      %p173 = por %p171, %p172
      %p174 = scmp.ne.s32.totalorder %s165, %s166
      %p175 = scmp.eq.s32.totalorder %s29, 0
      %p176 = por %p174, %p175
      %p177 = scmp.ne.s32.totalorder %s165, %s166
      %p178 = scmp.eq.s32.totalorder %s30, 1
      %p179 = por %p177, %p178
      %p181 = scmp.ne.s32.totalorder %s166, %s180
      %p182 = scmp.eq.s32.totalorder %s30, 0
      %p183 = por %p181, %p182
      %s185 = sadd.s32 %s184, 1
      %p188 = scmp.eq.s32.totalorder %s24, 1
      %p189 = scmp.ne.s32.totalorder %s184, %s186
      %p190 = scmp.eq.s32.totalorder %s24, 0
      %p191 = por %p189, %p190
      %p192 = scmp.ne.s32.totalorder %s184, %s186
      %p193 = scmp.eq.s32.totalorder %s29, 1
      %p194 = por %p192, %p193
      %p195 = scmp.ne.s32.totalorder %s186, %s187
      %p196 = scmp.eq.s32.totalorder %s29, 0
      %p197 = por %p195, %p196
      %p198 = scmp.ne.s32.totalorder %s186, %s187
      %p199 = scmp.eq.s32.totalorder %s30, 1
      %p200 = por %p198, %p199
      %p202 = scmp.ne.s32.totalorder %s187, %s201
      %p203 = scmp.eq.s32.totalorder %s30, 0
      %p204 = por %p202, %p203
      %s206 = sadd.s32 %s205, 1
      %p209 = scmp.eq.s32.totalorder %s24, 1
      %p210 = scmp.ne.s32.totalorder %s205, %s207
      %p211 = scmp.eq.s32.totalorder %s24, 0
      %p212 = por %p210, %p211
      %p213 = scmp.ne.s32.totalorder %s205, %s207
      %p214 = scmp.eq.s32.totalorder %s29, 1
      %p215 = por %p213, %p214
      %p216 = scmp.ne.s32.totalorder %s207, %s208
      %p217 = scmp.eq.s32.totalorder %s29, 0
      %p218 = por %p216, %p217
      %p219 = scmp.ne.s32.totalorder %s207, %s208
      %p220 = scmp.eq.s32.totalorder %s30, 1
      %p221 = por %p219, %p220
      %p223 = scmp.ne.s32.totalorder %s208, %s222
      %p224 = scmp.eq.s32.totalorder %s30, 0
      %p225 = por %p223, %p224
      %s227 = sadd.s32 %s226, 1
      %p230 = scmp.eq.s32.totalorder %s24, 1
      %p231 = scmp.ne.s32.totalorder %s226, %s228
      %p232 = scmp.eq.s32.totalorder %s24, 0
      %p233 = por %p231, %p232
      %p234 = scmp.ne.s32.totalorder %s226, %s228
      %p235 = scmp.eq.s32.totalorder %s29, 1
      %p236 = por %p234, %p235
      %p237 = scmp.ne.s32.totalorder %s228, %s229
      %p238 = scmp.eq.s32.totalorder %s29, 0
      %p239 = por %p237, %p238
      %p240 = scmp.ne.s32.totalorder %s228, %s229
      %p241 = scmp.eq.s32.totalorder %s30, 1
      %p242 = por %p240, %p241
      %p244 = scmp.ne.s32.totalorder %s229, %s243
      %p245 = scmp.eq.s32.totalorder %s30, 0
      %p246 = por %p244, %p245
      %s248 = sadd.s32 %s247, 1
      %p251 = scmp.eq.s32.totalorder %s24, 1
      %p252 = scmp.ne.s32.totalorder %s247, %s249
      %p253 = scmp.eq.s32.totalorder %s24, 0
      %p254 = por %p252, %p253
      %p255 = scmp.ne.s32.totalorder %s247, %s249
      %p256 = scmp.eq.s32.totalorder %s29, 1
      %p257 = por %p255, %p256
      %p258 = scmp.ne.s32.totalorder %s249, %s250
      %p259 = scmp.eq.s32.totalorder %s29, 0
      %p260 = por %p258, %p259
      %p261 = scmp.ne.s32.totalorder %s249, %s250
      %p262 = scmp.eq.s32.totalorder %s30, 1
      %p263 = por %p261, %p262
      %p265 = scmp.ne.s32.totalorder %s250, %s264
      %p266 = scmp.eq.s32.totalorder %s30, 0
      %p267 = por %p265, %p266
      %s269 = sadd.s32 %s268, 1
      %p272 = scmp.eq.s32.totalorder %s24, 1
      %p273 = scmp.ne.s32.totalorder %s268, %s270
      %p274 = scmp.eq.s32.totalorder %s24, 0
      %p275 = por %p273, %p274
      %p276 = scmp.ne.s32.totalorder %s268, %s270
      %p277 = scmp.eq.s32.totalorder %s29, 1
      %p278 = por %p276, %p277
      %p279 = scmp.ne.s32.totalorder %s270, %s271
      %p280 = scmp.eq.s32.totalorder %s29, 0
      %p281 = por %p279, %p280
      %p282 = scmp.ne.s32.totalorder %s270, %s271
      %p283 = scmp.eq.s32.totalorder %s30, 1
      %p284 = por %p282, %p283
      %p286 = scmp.ne.s32.totalorder %s271, %s285
      %p287 = scmp.eq.s32.totalorder %s30, 0
      %p288 = por %p286, %p287
      %s290 = sadd.s32 %s289, 1
      %p293 = scmp.eq.s32.totalorder %s24, 1
      %p294 = scmp.ne.s32.totalorder %s289, %s291
      %p295 = scmp.eq.s32.totalorder %s24, 0
      %p296 = por %p294, %p295
      %p297 = scmp.ne.s32.totalorder %s289, %s291
      %p298 = scmp.eq.s32.totalorder %s29, 1
      %p299 = por %p297, %p298
      %p300 = scmp.ne.s32.totalorder %s291, %s292
      %p301 = scmp.eq.s32.totalorder %s29, 0
      %p302 = por %p300, %p301
      %p303 = scmp.ne.s32.totalorder %s291, %s292
      %p304 = scmp.eq.s32.totalorder %s30, 1
      %p305 = por %p303, %p304
      %p307 = scmp.ne.s32.totalorder %s292, %s306
      %p308 = scmp.eq.s32.totalorder %s30, 0
      %p309 = por %p307, %p308
      %s311 = sadd.s32 %s310, 1
      %p314 = scmp.eq.s32.totalorder %s24, 1
      %p315 = scmp.ne.s32.totalorder %s310, %s312
      %p316 = scmp.eq.s32.totalorder %s24, 0
      %p317 = por %p315, %p316
      %p318 = scmp.ne.s32.totalorder %s310, %s312
      %p319 = scmp.eq.s32.totalorder %s29, 1
      %p320 = por %p318, %p319
      %p321 = scmp.ne.s32.totalorder %s312, %s313
      %p322 = scmp.eq.s32.totalorder %s29, 0
      %p323 = por %p321, %p322
      %p324 = scmp.ne.s32.totalorder %s312, %s313
      %p325 = scmp.eq.s32.totalorder %s30, 1
      %p326 = por %p324, %p325
      %p328 = scmp.ne.s32.totalorder %s313, %s327
      %p329 = scmp.eq.s32.totalorder %s30, 0
      %p330 = por %p328, %p329
      %s332 = sadd.s32 %s331, 1
      %p335 = scmp.eq.s32.totalorder %s24, 1
      %p336 = scmp.ne.s32.totalorder %s331, %s333
      %p337 = scmp.eq.s32.totalorder %s24, 0
      %p338 = por %p336, %p337
      %p339 = scmp.ne.s32.totalorder %s331, %s333
      %p340 = scmp.eq.s32.totalorder %s29, 1
      %p341 = por %p339, %p340
      %p342 = scmp.ne.s32.totalorder %s333, %s334
      %p343 = scmp.eq.s32.totalorder %s29, 0
      %p344 = por %p342, %p343
      %p345 = scmp.ne.s32.totalorder %s333, %s334
      %p346 = scmp.eq.s32.totalorder %s30, 1
      %p347 = por %p345, %p346
      %p349 = scmp.ne.s32.totalorder %s334, %s348
      %p350 = scmp.eq.s32.totalorder %s30, 0
      %p351 = por %p349, %p350
      %s352 = ssub.s32 %s24, %s31
      %p353 = scmp.eq.s32.totalorder %s352, 0
      %s355 = sadd.s32 %s354, 1
      %s356 = scalar_select %p353, %s354, %s355
      %p359 = pneg %p353
      %p360 = scmp.eq.s32.totalorder %s24, 1
      %p361 = por %p359, %p360
      %p362 = scmp.ne.s32.totalorder %s354, %s357
      %p363 = scmp.eq.s32.totalorder %s24, 0
      %p364 = por %p362, %p363
      %p365 = scmp.ne.s32.totalorder %s354, %s357
      %p366 = scmp.eq.s32.totalorder %s29, 1
      %p367 = por %p365, %p366
      %p368 = scmp.ne.s32.totalorder %s357, %s358
      %p369 = scmp.eq.s32.totalorder %s29, 0
      %p370 = por %p368, %p369
      %p371 = scmp.ne.s32.totalorder %s357, %s358
      %p372 = scmp.eq.s32.totalorder %s30, 1
      %p373 = por %p371, %p372
      %p375 = scmp.ne.s32.totalorder %s358, %s374
      %p376 = scmp.eq.s32.totalorder %s30, 0
      %p377 = por %p375, %p376
      %p378 = scmp.le.s32.totalorder 1, %s24
      %p379 = scmp.lt.s32.totalorder %s24, 3
      %p380 = pnand %p378, %p379
      %p381 = pneg %p380
      // Predicated region
      $region9: #{bimamba_forward_call.1} parent=5 // pred_check
        _
      $region10: #{bimamba_forward_call.1} parent=5 // pred_check_branch
        %383 = sbr.rel (%p380) target = $region12
      $region11: #{bimamba_forward_call.1} parent=5 // pred_region
        %s384 = ssub.s32 %s24, 1
        // Predicated region
        $region13: #{bimamba_forward_call.1} parent=11 // pred_check
          %p385 = pneg %p71
        $region14: #{bimamba_forward_call.1} parent=11 // pred_check_branch
          %387 = sbr.rel (%p385) target = $region16
        $region15: #{bimamba_forward_call.1} parent=11 // pred_region
          _
        $region16: #{bimamba_forward_call.1} parent=11 // pred_fallthru
          _
        // Predicated region
        $region17: #{bimamba_forward_call.1} parent=11 // pred_check
          %p388 = pneg %p92
        $region18: #{bimamba_forward_call.1} parent=11 // pred_check_branch
          %390 = sbr.rel (%p388) target = $region20
        $region19: #{bimamba_forward_call.1} parent=11 // pred_region
          _
        $region20: #{bimamba_forward_call.1} parent=11 // pred_fallthru
          _
        // Predicated region
        $region21: #{bimamba_forward_call.1} parent=11 // pred_check
          %p391 = pneg %p113
        $region22: #{bimamba_forward_call.1} parent=11 // pred_check_branch
          %393 = sbr.rel (%p391) target = $region24
        $region23: #{bimamba_forward_call.1} parent=11 // pred_region
          _
        $region24: #{bimamba_forward_call.1} parent=11 // pred_fallthru
          _
        // Predicated region
        $region25: #{bimamba_forward_call.1} parent=11 // pred_check
          %p394 = pneg %p134
        $region26: #{bimamba_forward_call.1} parent=11 // pred_check_branch
          %396 = sbr.rel (%p394) target = $region28
        $region27: #{bimamba_forward_call.1} parent=11 // pred_region
          _
        $region28: #{bimamba_forward_call.1} parent=11 // pred_fallthru
          _
        // Predicated region
        $region29: #{bimamba_forward_call.1} parent=11 // pred_check
          %p397 = pneg %p155
        $region30: #{bimamba_forward_call.1} parent=11 // pred_check_branch
          %399 = sbr.rel (%p397) target = $region32
        $region31: #{bimamba_forward_call.1} parent=11 // pred_region
          _
        $region32: #{bimamba_forward_call.1} parent=11 // pred_fallthru
          _
        // Predicated region
        $region33: #{bimamba_forward_call.1} parent=11 // pred_check
          %p400 = pneg %p176
        $region34: #{bimamba_forward_call.1} parent=11 // pred_check_branch
          %402 = sbr.rel (%p400) target = $region36
        $region35: #{bimamba_forward_call.1} parent=11 // pred_region
          _
        $region36: #{bimamba_forward_call.1} parent=11 // pred_fallthru
          _
        // Predicated region
        $region37: #{bimamba_forward_call.1} parent=11 // pred_check
          %p403 = pneg %p197
        $region38: #{bimamba_forward_call.1} parent=11 // pred_check_branch
          %405 = sbr.rel (%p403) target = $region40
        $region39: #{bimamba_forward_call.1} parent=11 // pred_region
          _
        $region40: #{bimamba_forward_call.1} parent=11 // pred_fallthru
          _
        // Predicated region
        $region41: #{bimamba_forward_call.1} parent=11 // pred_check
          %p406 = pneg %p218
        $region42: #{bimamba_forward_call.1} parent=11 // pred_check_branch
          %408 = sbr.rel (%p406) target = $region44
        $region43: #{bimamba_forward_call.1} parent=11 // pred_region
          _
        $region44: #{bimamba_forward_call.1} parent=11 // pred_fallthru
          _
        // Predicated region
        $region45: #{bimamba_forward_call.1} parent=11 // pred_check
          %p409 = pneg %p239
        $region46: #{bimamba_forward_call.1} parent=11 // pred_check_branch
          %411 = sbr.rel (%p409) target = $region48
        $region47: #{bimamba_forward_call.1} parent=11 // pred_region
          _
        $region48: #{bimamba_forward_call.1} parent=11 // pred_fallthru
          _
        // Predicated region
        $region49: #{bimamba_forward_call.1} parent=11 // pred_check
          %p412 = pneg %p260
        $region50: #{bimamba_forward_call.1} parent=11 // pred_check_branch
          %414 = sbr.rel (%p412) target = $region52
        $region51: #{bimamba_forward_call.1} parent=11 // pred_region
          _
        $region52: #{bimamba_forward_call.1} parent=11 // pred_fallthru
          _
        // Predicated region
        $region53: #{bimamba_forward_call.1} parent=11 // pred_check
          %p415 = pneg %p281
        $region54: #{bimamba_forward_call.1} parent=11 // pred_check_branch
          %417 = sbr.rel (%p415) target = $region56
        $region55: #{bimamba_forward_call.1} parent=11 // pred_region
          _
        $region56: #{bimamba_forward_call.1} parent=11 // pred_fallthru
          _
        // Predicated region
        $region57: #{bimamba_forward_call.1} parent=11 // pred_check
          %p418 = pneg %p302
        $region58: #{bimamba_forward_call.1} parent=11 // pred_check_branch
          %420 = sbr.rel (%p418) target = $region60
        $region59: #{bimamba_forward_call.1} parent=11 // pred_region
          _
        $region60: #{bimamba_forward_call.1} parent=11 // pred_fallthru
          _
        // Predicated region
        $region61: #{bimamba_forward_call.1} parent=11 // pred_check
          %p421 = pneg %p323
        $region62: #{bimamba_forward_call.1} parent=11 // pred_check_branch
          %423 = sbr.rel (%p421) target = $region64
        $region63: #{bimamba_forward_call.1} parent=11 // pred_region
          _
        $region64: #{bimamba_forward_call.1} parent=11 // pred_fallthru
          _
        // Predicated region
        $region65: #{bimamba_forward_call.1} parent=11 // pred_check
          %p424 = pneg %p344
        $region66: #{bimamba_forward_call.1} parent=11 // pred_check_branch
          %426 = sbr.rel (%p424) target = $region68
        $region67: #{bimamba_forward_call.1} parent=11 // pred_region
          _
        $region68: #{bimamba_forward_call.1} parent=11 // pred_fallthru
          _
      $region12: #{bimamba_forward_call.1} parent=5 // pred_fallthru
        _
      %p427 = scmp.lt.s32.totalorder %s24, 2
      // Predicated region
      $region69: #{bimamba_forward_call.1} parent=5 // pred_check
        %p428 = pneg %p427
      $region70: #{bimamba_forward_call.1} parent=5 // pred_check_branch
        %430 = sbr.rel (%p428) target = $region72
      $region71: #{bimamba_forward_call.1} parent=5 // pred_region
        // Predicated region
        $region73: #{bimamba_forward_call.1} parent=71 // pred_check
          %p431 = pneg %p44
        $region74: #{bimamba_forward_call.1} parent=71 // pred_check_branch
          %433 = sbr.rel (%p431) target = $region76
        $region75: #{bimamba_forward_call.1} parent=71 // pred_region
          %p434 = scmp.lt.s32.totalorder %s24, 1
          %s435 = scalar_select %p434, %s24, 1
          %s436 = smul.addr %s435, 8
          %s437 = scalar_lea.vmem %s0, %s436
        $region76: #{bimamba_forward_call.1} parent=71 // pred_fallthru
          _
      $region72: #{bimamba_forward_call.1} parent=5 // pred_fallthru
        _
      %p438 = scmp.le.s32.totalorder 1, %s24
      %p439 = scmp.lt.s32.totalorder %s24, 3
      %p440 = pnand %p438, %p439
      %p441 = pneg %p440
      // Predicated region
      $region77: #{bimamba_forward_call.1} parent=5 // pred_check
        _
      $region78: #{bimamba_forward_call.1} parent=5 // pred_check_branch
        %443 = sbr.rel (%p440) target = $region80
      $region79: #{bimamba_forward_call.1} parent=5 // pred_region
        %s444 = ssub.s32 %s24, 1
        %p445 = scmp.lt.s32.totalorder %s29, 1
        %s446 = scalar_select %p445, %s29, 1
        %s447 = smul.addr %s446, 8
        %s448 = scalar_lea.vmem %s0, %s447
        %p449 = pneg %p50
        %p450 = pneg %p47
        %p451 = pneg %p71
        %p452 = pneg %p68
        %p453 = pneg %p92
        %p454 = pneg %p89
        %p455 = pneg %p113
        %p456 = pneg %p110
        %p457 = pneg %p134
        %p458 = pneg %p131
        %p459 = pneg %p155
        %p460 = pneg %p152
        %p461 = pneg %p176
        %p462 = pneg %p173
        %p463 = pneg %p197
        %p464 = pneg %p194
        %p465 = pneg %p218
        %p466 = pneg %p215
        %p467 = pneg %p239
        %p468 = pneg %p236
        %p469 = pneg %p260
        %p470 = pneg %p257
        %p471 = pneg %p281
        %p472 = pneg %p278
        %p473 = pneg %p302
        %p474 = pneg %p299
        %p475 = pneg %p323
        %p476 = pneg %p320
        %p477 = pneg %p344
        %p478 = pneg %p341
        %p479 = pneg %p370
        %p480 = pneg %p367
        %s481 = sand.u32 %s357, 1
        %s482 = scalar_lea.sflag [#allocation7], %s481
        %s483 = sand.u32 %s357, 1
        %s484 = smul.addr %s483, 8
        %s485 = scalar_lea.vmem [#allocation6], %s484
        %p486 = scmp.lt.s32.totalorder %s29, 1
        %s487 = scalar_select %p486, %s29, 1
        %s488 = smul.addr %s487, 8
        %s489 = scalar_lea.vmem %s0, %s488
        %v490 = vld [vmem:[%s489] sm:$0xff]
        %vm491 = vcmask 130048
        %v492 = vsel %vm491, %v490, 0.0
        %493 = vadd.xlane.f32.xlu0 %v492
        %v494 = vpop.xlane.xlu0 %493
        %v495 = vrcp.pop 16.0
        %v496 = vmul.f32 %v494, %v495
        %v497 = vsub.f32 %v490, %v496
        %v498 = vmul.f32 %v497, %v497
        %v499 = vsel %vm491, %v498, 0.0
        %500 = vadd.xlane.f32.xlu0 %v499
        %v501 = vpop.xlane.xlu0 %500
        %v502 = vmul.f32 %v501, %v495
        %v503 = vadd.f32 %v502, 1e-05
        %v504 = vrsqrt.pop %v503
        %v505 = vmul.f32 %v497, %v504
        %v506 = vld [vmem:[%s1] sm:$0x1]
        %v508 = vlaneseq
        %v509 = vshrl.u32 %v508, 7
        %v510 = vsub.s32 0, %v509
        %v511 = vrot.slane %v506, %v510
        %v513 = vmul.f32 %v505, %v511
        %v514 = vld [vmem:[%s2] sm:$0x1]
        %v516 = vlaneseq
        %v517 = vshrl.u32 %v516, 7
        %v518 = vsub.s32 0, %v517
        %v519 = vrot.slane %v514, %v518
        %v521 = vadd.f32 %v513, %v519
        %v522 = vld [vmem:[%s3] sm:$0xff]
        %v523 = vld [vmem:[%s3 + $0x8] sm:$0xff]
        %v525 = vsel %vm491, %v521, 0
        %527 = vmatprep.subr.mxu0 0.0
        %528 = vmatpush1.msra.mxu0 %v522
        %529 = vmatprep.subr.mxu0 0.0
        %530 = vmatpush1.msra.mxu0 %v523
        %531 = vmatprep.subr.mxu0 0.0
        %532 = vmatpush1.msra.mxu0 0.0
        %533 = vmatprep.subr.mxu0 0.0
        %534 = vmatpush1.msra.mxu0 0.0
        %535 = vmatprep.subr.mxu0 0.0
        %536 = vmatpush1.msra.mxu0 0.0
        %537 = vmatprep.subr.mxu0 0.0
        %538 = vmatpush1.msra.mxu0 0.0
        %539 = vmatprep.subr.mxu0 0.0
        %540 = vmatpush1.msra.mxu0 0.0
        %541 = vmatprep.subr.mxu0 0.0
        %542 = vmatpush1.msra.mxu0 0.0
        %543 = vmatprep.subr.mxu0 0.0
        %544 = vmatpush1.msra.mxu0 0.0
        %545 = vmatprep.subr.mxu0 0.0
        %546 = vmatpush1.msra.mxu0 0.0
        %547 = vmatprep.subr.mxu0 0.0
        %548 = vmatpush1.msra.mxu0 0.0
        %549 = vmatprep.subr.mxu0 0.0
        %550 = vmatpush1.msra.mxu0 0.0
        %551 = vmatprep.subr.mxu0 0.0
        %552 = vmatpush1.msra.mxu0 0.0
        %553 = vmatprep.subr.mxu0 0.0
        %554 = vmatpush1.msra.mxu0 0.0
        %555 = vmatprep.subr.mxu0 0.0
        %556 = vmatpush1.msra.mxu0 0.0
        %557 = vmatprep.subr.mxu0 0.0
        %558 = vmatpush1.msra.mxu0 0.0
        %559 = vmatprep.subr.mxu0 0.0
        %560 = vmatpush1.msra.mxu0 0.0
        %561 = vmatprep.subr.mxu0 0.0
        %562 = vmatpush1.msra.mxu0 0.0
        %563 = vmatprep.subr.mxu0 0.0
        %564 = vmatpush1.msra.mxu0 0.0
        %565 = vmatprep.subr.mxu0 0.0
        %566 = vmatpush1.msra.mxu0 0.0
        %567 = vmatprep.subr.mxu0 0.0
        %568 = vmatpush1.msra.mxu0 0.0
        %569 = vmatprep.subr.mxu0 0.0
        %570 = vmatpush1.msra.mxu0 0.0
        %571 = vmatprep.subr.mxu0 0.0
        %572 = vmatpush1.msra.mxu0 0.0
        %573 = vmatprep.subr.mxu0 0.0
        %574 = vmatpush1.msra.mxu0 0.0
        %575 = vmatprep.subr.mxu0 0.0
        %576 = vmatpush1.msra.mxu0 0.0
        %577 = vmatprep.subr.mxu0 0.0
        %578 = vmatpush1.msra.mxu0 0.0
        %579 = vmatprep.subr.mxu0 0.0
        %580 = vmatpush1.msra.mxu0 0.0
        %581 = vmatprep.subr.mxu0 0.0
        %582 = vmatpush1.msra.mxu0 0.0
        %583 = vmatprep.subr.mxu0 0.0
        %584 = vmatpush1.msra.mxu0 0.0
        %585 = vmatprep.subr.mxu0 0.0
        %586 = vmatpush1.msra.mxu0 0.0
        %587 = vmatprep.subr.mxu0 0.0
        %588 = vmatpush1.msra.mxu0 0.0
        %589 = vmatprep.subr.mxu0 0.0
        %590 = vmatpush1.msra.mxu0 0.0
        %591 = vmatprep.mubr.f32.mxu0 0.0
        %592 = vmatmul.mubr.f32.gmra.mrb[0].mxu0 %v525
        %v593 = vpop.f32.mrb[0].mxu0
        %v594 = vadd.f32 0.0, %v593
        %v595 = vpop.f32.mrb[0].mxu0
        %596 = vdwg.mxu0
        %v597 = vld [vmem:[%s4] sm:$0xff]
        %v598 = vld [vmem:[%s4 + $0x8] sm:$0xff]
        %599 = vmatprep.subr.mxu0 0.0
        %600 = vmatpush1.msra.mxu0 %v597
        %601 = vmatprep.subr.mxu0 0.0
        %602 = vmatpush1.msra.mxu0 %v598
        %603 = vmatprep.subr.mxu0 0.0
        %604 = vmatpush1.msra.mxu0 0.0
        %605 = vmatprep.subr.mxu0 0.0
        %606 = vmatpush1.msra.mxu0 0.0
        %607 = vmatprep.subr.mxu0 0.0
        %608 = vmatpush1.msra.mxu0 0.0
        %609 = vmatprep.subr.mxu0 0.0
        %610 = vmatpush1.msra.mxu0 0.0
        %611 = vmatprep.subr.mxu0 0.0
        %612 = vmatpush1.msra.mxu0 0.0
        %613 = vmatprep.subr.mxu0 0.0
        %614 = vmatpush1.msra.mxu0 0.0
        %615 = vmatprep.subr.mxu0 0.0
        %616 = vmatpush1.msra.mxu0 0.0
        %617 = vmatprep.subr.mxu0 0.0
        %618 = vmatpush1.msra.mxu0 0.0
        %619 = vmatprep.subr.mxu0 0.0
        %620 = vmatpush1.msra.mxu0 0.0
        %621 = vmatprep.subr.mxu0 0.0
        %622 = vmatpush1.msra.mxu0 0.0
        %623 = vmatprep.subr.mxu0 0.0
        %624 = vmatpush1.msra.mxu0 0.0
        %625 = vmatprep.subr.mxu0 0.0
        %626 = vmatpush1.msra.mxu0 0.0
        %627 = vmatprep.subr.mxu0 0.0
        %628 = vmatpush1.msra.mxu0 0.0
        %629 = vmatprep.subr.mxu0 0.0
        %630 = vmatpush1.msra.mxu0 0.0
        %631 = vmatprep.subr.mxu0 0.0
        %632 = vmatpush1.msra.mxu0 0.0
        %633 = vmatprep.subr.mxu0 0.0
        %634 = vmatpush1.msra.mxu0 0.0
        %635 = vmatprep.subr.mxu0 0.0
        %636 = vmatpush1.msra.mxu0 0.0
        %637 = vmatprep.subr.mxu0 0.0
        %638 = vmatpush1.msra.mxu0 0.0
        %639 = vmatprep.subr.mxu0 0.0
        %640 = vmatpush1.msra.mxu0 0.0
        %641 = vmatprep.subr.mxu0 0.0
        %642 = vmatpush1.msra.mxu0 0.0
        %643 = vmatprep.subr.mxu0 0.0
        %644 = vmatpush1.msra.mxu0 0.0
        %645 = vmatprep.subr.mxu0 0.0
        %646 = vmatpush1.msra.mxu0 0.0
        %647 = vmatprep.subr.mxu0 0.0
        %648 = vmatpush1.msra.mxu0 0.0
        %649 = vmatprep.subr.mxu0 0.0
        %650 = vmatpush1.msra.mxu0 0.0
        %651 = vmatprep.subr.mxu0 0.0
        %652 = vmatpush1.msra.mxu0 0.0
        %653 = vmatprep.subr.mxu0 0.0
        %654 = vmatpush1.msra.mxu0 0.0
        %655 = vmatprep.subr.mxu0 0.0
        %656 = vmatpush1.msra.mxu0 0.0
        %657 = vmatprep.subr.mxu0 0.0
        %658 = vmatpush1.msra.mxu0 0.0
        %659 = vmatprep.subr.mxu0 0.0
        %660 = vmatpush1.msra.mxu0 0.0
        %661 = vmatprep.subr.mxu0 0.0
        %662 = vmatpush1.msra.mxu0 0.0
        %663 = vmatprep.mubr.f32.mxu0 0.0
        %664 = vmatmul.mubr.f32.gmra.mrb[0].mxu0 %v525
        %v665 = vpop.f32.mrb[0].mxu0
        %v666 = vadd.f32 0.0, %v665
        %v667 = vpop.f32.mrb[0].mxu0
        %668 = vdwg.mxu0
        %v669 = vld [vmem:[%s5] sm:$0xf]
        %v670 = vld [vmem:[%s6] sm:$0x1]
        %v672 = vrot.slane %v594, 5
        %vm674 = vcmask 1042432
        %v675 = vsel %vm674, 0.0, %v672
        %v676 = vsel %vm674, %v672, 0.0
        %v677 = vlaneseq
        %v678 = vshrl.u32 %v677, 7
        %v679 = vsub.s32 0, %v678
        %v680 = vrot.slane %v669, %v679
        %v681 = vmul.f32 %v675, %v680
        %v682 = vlaneseq
        %v683 = vshrl.u32 %v682, 7
        %v684 = vsub.s32 3, %v683
        %v685 = vrot.slane %v669, %v684
        %v686 = vmul.f32 %v675, %v685
        %v687 = vmul.f32 %v676, %v685
        %v688 = vlaneseq
        %v689 = vshrl.u32 %v688, 7
        %v690 = vsub.s32 1, %v689
        %v691 = vrot.slane %v669, %v690
        %v692 = vmul.f32 %v675, %v691
        %v693 = vmul.f32 %v676, %v691
        %vm696 = vcmask 1046528
        %v697 = vrot.slane %v692, 1
        %v698 = vrot.slane %v693, 1
        %v699 = vsel %vm696, %v697, %v698
        %v701 = vadd.f32 %v681, %v699
        %v702 = vlaneseq
        %v703 = vshrl.u32 %v702, 7
        %v704 = vsub.s32 2, %v703
        %v705 = vrot.slane %v669, %v704
        %v706 = vmul.f32 %v675, %v705
        %v707 = vmul.f32 %v676, %v705
        %v710 = vrot.slane %v706, 1
        %v711 = vrot.slane %v707, 1
        %v712 = vsel %vm696, %v710, %v711
        %v715 = vadd.f32 %v686, %v712
        %v716 = vadd.f32 %v687, %v711
        %vm717 = vcmask 1045504
        %v718 = vrot.slane %v706, 2
        %v719 = vrot.slane %v707, 2
        %v720 = vsel %vm717, %v718, %v719
        %v722 = vadd.f32 %v701, %v720
        %v723 = vrot.slane %v692, 2
        %v724 = vrot.slane %v693, 2
        %v725 = vsel %vm717, %v723, %v724
        %v728 = vadd.f32 %v715, %v725
        %v729 = vadd.f32 %v716, %v724
        %vm732 = vcmask 1044480
        %v733 = vrot.slane %v686, 3
        %v734 = vrot.slane %v687, 3
        %v735 = vsel %vm732, %v733, %v734
        %v737 = vadd.f32 %v722, %v735
        %v738 = vmul.f32 %v676, %v680
        %v741 = vrot.slane %v681, 3
        %v742 = vrot.slane %v738, 3
        %v743 = vsel %vm732, %v741, %v742
        %v746 = vadd.f32 %v728, %v743
        %v747 = vadd.f32 %v729, %v742
        %v749 = vlaneseq
        %v750 = vshrl.u32 %v749, 7
        %v751 = vsub.s32 0, %v750
        %v752 = vrot.slane %v670, %v751
        %v754 = vadd.f32 %v737, %v752
        %v755 = vadd.f32 %v746, %v752
        %v756 = vadd.f32 %v747, %v752
        %v759 = vrot.slane %v755, 3
        %v760 = vrot.slane %v756, 3
        %v761 = vsel %vm732, %v759, %v760
        %v763 = vmin.f32 %v754, 20.0
        %v764 = vmin.f32 %v761, 20.0
        %vm765 = vcmp.gt.f32.partialorder %v754, 20.0
        %vm766 = vcmp.gt.f32.partialorder %v761, 20.0
        %v767 = vmul.f32 %v763, 1.442695
        %v768 = vpow.pop %v767
        %v769 = vmul.f32 %v764, 1.442695
        %v770 = vpow.pop %v769
        %v771 = vadd.f32 %v768, 1.0
        %v772 = vadd.f32 %v770, 1.0
        %v773 = vlog2.pop %v771
        %v774 = vmul.f32 %v773, 0.6931472
        %v775 = vlog2.pop %v772
        %v776 = vmul.f32 %v775, 0.6931472
        %v777 = vsel %vm765, %v754, %v774
        %v778 = vsel %vm766, %v761, %v776
        %v779 = vld [vmem:[%s7] sm:$0xff]
        %v780 = vld [vmem:[%s7 + $0x8] sm:$0xff]
        %v781 = vld [vmem:[%s7 + $0x10] sm:$0xff]
        %v782 = vld [vmem:[%s7 + $0x18] sm:$0xff]
        %vm783 = vcmask 261120
        %v785 = vsel %vm783, %v777, 0
        %v788 = vsel %vm783, %v778, 0
        %790 = vmatprep.subr.mxu0 0.0
        %791 = vmatpush1.msra.mxu0 %v779
        %792 = vmatprep.subr.mxu0 0.0
        %793 = vmatpush1.msra.mxu0 %v780
        %794 = vmatprep.subr.mxu0 0.0
        %795 = vmatpush1.msra.mxu0 %v781
        %796 = vmatprep.subr.mxu0 0.0
        %797 = vmatpush1.msra.mxu0 %v782
        %798 = vmatprep.subr.mxu0 0.0
        %799 = vmatpush1.msra.mxu0 0.0
        %800 = vmatprep.subr.mxu0 0.0
        %801 = vmatpush1.msra.mxu0 0.0
        %802 = vmatprep.subr.mxu0 0.0
        %803 = vmatpush1.msra.mxu0 0.0
        %804 = vmatprep.subr.mxu0 0.0
        %805 = vmatpush1.msra.mxu0 0.0
        %806 = vmatprep.subr.mxu0 0.0
        %807 = vmatpush1.msra.mxu0 0.0
        %808 = vmatprep.subr.mxu0 0.0
        %809 = vmatpush1.msra.mxu0 0.0
        %810 = vmatprep.subr.mxu0 0.0
        %811 = vmatpush1.msra.mxu0 0.0
        %812 = vmatprep.subr.mxu0 0.0
        %813 = vmatpush1.msra.mxu0 0.0
        %814 = vmatprep.subr.mxu0 0.0
        %815 = vmatpush1.msra.mxu0 0.0
        %816 = vmatprep.subr.mxu0 0.0
        %817 = vmatpush1.msra.mxu0 0.0
        %818 = vmatprep.subr.mxu0 0.0
        %819 = vmatpush1.msra.mxu0 0.0
        %820 = vmatprep.subr.mxu0 0.0
        %821 = vmatpush1.msra.mxu0 0.0
        %822 = vmatprep.subr.mxu0 0.0
        %823 = vmatpush1.msra.mxu0 0.0
        %824 = vmatprep.subr.mxu0 0.0
        %825 = vmatpush1.msra.mxu0 0.0
        %826 = vmatprep.subr.mxu0 0.0
        %827 = vmatpush1.msra.mxu0 0.0
        %828 = vmatprep.subr.mxu0 0.0
        %829 = vmatpush1.msra.mxu0 0.0
        %830 = vmatprep.subr.mxu0 0.0
        %831 = vmatpush1.msra.mxu0 0.0
        %832 = vmatprep.subr.mxu0 0.0
        %833 = vmatpush1.msra.mxu0 0.0
        %834 = vmatprep.subr.mxu0 0.0
        %835 = vmatpush1.msra.mxu0 0.0
        %836 = vmatprep.subr.mxu0 0.0
        %837 = vmatpush1.msra.mxu0 0.0
        %838 = vmatprep.subr.mxu0 0.0
        %839 = vmatpush1.msra.mxu0 0.0
        %840 = vmatprep.subr.mxu0 0.0
        %841 = vmatpush1.msra.mxu0 0.0
        %842 = vmatprep.subr.mxu0 0.0
        %843 = vmatpush1.msra.mxu0 0.0
        %844 = vmatprep.subr.mxu0 0.0
        %845 = vmatpush1.msra.mxu0 0.0
        %846 = vmatprep.subr.mxu0 0.0
        %847 = vmatpush1.msra.mxu0 0.0
        %848 = vmatprep.subr.mxu0 0.0
        %849 = vmatpush1.msra.mxu0 0.0
        %850 = vmatprep.subr.mxu0 0.0
        %851 = vmatpush1.msra.mxu0 0.0
        %852 = vmatprep.subr.mxu0 0.0
        %853 = vmatpush1.msra.mxu0 0.0
        %854 = vmatprep.mubr.f32.mxu0 0.0
        %855 = vmatmul.mubr.f32.gmra.mrb[0].mxu0 %v785
        %v856 = vpop.f32.mrb[0].mxu0
        %v857 = vadd.f32 0.0, %v856
        %v858 = vpop.f32.mrb[0].mxu0
        %859 = vmatprep.mubr.f32.mxu0 0.0
        %860 = vmatmul.mubr.f32.gmra.mrb[0].mxu0 %v788
        %v861 = vpop.f32.mrb[0].mxu0
        %v862 = vadd.f32 0.0, %v861
        %v863 = vpop.f32.mrb[0].mxu0
        %864 = vdwg.mxu0
        %v865 = vld [vmem:[%s8] sm:$0xff]
        %v866 = vld [vmem:[%s8 + $0x8] sm:$0xff]
        %v867 = vld [vmem:[%s8 + $0x10] sm:$0xff]
        %v868 = vld [vmem:[%s8 + $0x18] sm:$0xff]
        %869 = vmatprep.subr.mxu0 0.0
        %870 = vmatpush1.msra.mxu0 %v865
        %871 = vmatprep.subr.mxu0 0.0
        %872 = vmatpush1.msra.mxu0 %v866
        %873 = vmatprep.subr.mxu0 0.0
        %874 = vmatpush1.msra.mxu0 %v867
        %875 = vmatprep.subr.mxu0 0.0
        %876 = vmatpush1.msra.mxu0 %v868
        %877 = vmatprep.subr.mxu0 0.0
        %878 = vmatpush1.msra.mxu0 0.0
        %879 = vmatprep.subr.mxu0 0.0
        %880 = vmatpush1.msra.mxu0 0.0
        %881 = vmatprep.subr.mxu0 0.0
        %882 = vmatpush1.msra.mxu0 0.0
        %883 = vmatprep.subr.mxu0 0.0
        %884 = vmatpush1.msra.mxu0 0.0
        %885 = vmatprep.subr.mxu0 0.0
        %886 = vmatpush1.msra.mxu0 0.0
        %887 = vmatprep.subr.mxu0 0.0
        %888 = vmatpush1.msra.mxu0 0.0
        %889 = vmatprep.subr.mxu0 0.0
        %890 = vmatpush1.msra.mxu0 0.0
        %891 = vmatprep.subr.mxu0 0.0
        %892 = vmatpush1.msra.mxu0 0.0
        %893 = vmatprep.subr.mxu0 0.0
        %894 = vmatpush1.msra.mxu0 0.0
        %895 = vmatprep.subr.mxu0 0.0
        %896 = vmatpush1.msra.mxu0 0.0
        %897 = vmatprep.subr.mxu0 0.0
        %898 = vmatpush1.msra.mxu0 0.0
        %899 = vmatprep.subr.mxu0 0.0
        %900 = vmatpush1.msra.mxu0 0.0
        %901 = vmatprep.subr.mxu0 0.0
        %902 = vmatpush1.msra.mxu0 0.0
        %903 = vmatprep.subr.mxu0 0.0
        %904 = vmatpush1.msra.mxu0 0.0
        %905 = vmatprep.subr.mxu0 0.0
        %906 = vmatpush1.msra.mxu0 0.0
        %907 = vmatprep.subr.mxu0 0.0
        %908 = vmatpush1.msra.mxu0 0.0
        %909 = vmatprep.subr.mxu0 0.0
        %910 = vmatpush1.msra.mxu0 0.0
        %911 = vmatprep.subr.mxu0 0.0
        %912 = vmatpush1.msra.mxu0 0.0
        %913 = vmatprep.subr.mxu0 0.0
        %914 = vmatpush1.msra.mxu0 0.0
        %915 = vmatprep.subr.mxu0 0.0
        %916 = vmatpush1.msra.mxu0 0.0
        %917 = vmatprep.subr.mxu0 0.0
        %918 = vmatpush1.msra.mxu0 0.0
        %919 = vmatprep.subr.mxu0 0.0
        %920 = vmatpush1.msra.mxu0 0.0
        %921 = vmatprep.subr.mxu0 0.0
        %922 = vmatpush1.msra.mxu0 0.0
        %923 = vmatprep.subr.mxu0 0.0
        %924 = vmatpush1.msra.mxu0 0.0
        %925 = vmatprep.subr.mxu0 0.0
        %926 = vmatpush1.msra.mxu0 0.0
        %927 = vmatprep.subr.mxu0 0.0
        %928 = vmatpush1.msra.mxu0 0.0
        %929 = vmatprep.subr.mxu0 0.0
        %930 = vmatpush1.msra.mxu0 0.0
        %931 = vmatprep.subr.mxu0 0.0
        %932 = vmatpush1.msra.mxu0 0.0
        %933 = vmatprep.mubr.f32.mxu0 0.0
        %934 = vmatmul.mubr.f32.gmra.mrb[0].mxu0 %v785
        %v935 = vpop.f32.mrb[0].mxu0
        %v936 = vadd.f32 0.0, %v935
        %v937 = vpop.f32.mrb[0].mxu0
        %938 = vmatprep.mubr.f32.mxu0 0.0
        %939 = vmatmul.mubr.f32.gmra.mrb[0].mxu0 %v788
        %v940 = vpop.f32.mrb[0].mxu0
        %v941 = vadd.f32 0.0, %v940
        %v942 = vpop.f32.mrb[0].mxu0
        %943 = vdwg.mxu0
        %v944 = vld [vmem:[%s9] sm:$0xff]
        %v945 = vld [vmem:[%s9 + $0x8] sm:$0xff]
        %v946 = vld [vmem:[%s9 + $0x10] sm:$0xff]
        %v947 = vld [vmem:[%s9 + $0x18] sm:$0xff]
        %948 = vmatprep.subr.mxu0 0.0
        %949 = vmatpush1.msra.mxu0 %v944
        %950 = vmatprep.subr.mxu0 0.0
        %951 = vmatpush1.msra.mxu0 %v945
        %952 = vmatprep.subr.mxu0 0.0
        %953 = vmatpush1.msra.mxu0 %v946
        %954 = vmatprep.subr.mxu0 0.0
        %955 = vmatpush1.msra.mxu0 %v947
        %956 = vmatprep.subr.mxu0 0.0
        %957 = vmatpush1.msra.mxu0 0.0
        %958 = vmatprep.subr.mxu0 0.0
        %959 = vmatpush1.msra.mxu0 0.0
        %960 = vmatprep.subr.mxu0 0.0
        %961 = vmatpush1.msra.mxu0 0.0
        %962 = vmatprep.subr.mxu0 0.0
        %963 = vmatpush1.msra.mxu0 0.0
        %964 = vmatprep.subr.mxu0 0.0
        %965 = vmatpush1.msra.mxu0 0.0
        %966 = vmatprep.subr.mxu0 0.0
        %967 = vmatpush1.msra.mxu0 0.0
        %968 = vmatprep.subr.mxu0 0.0
        %969 = vmatpush1.msra.mxu0 0.0
        %970 = vmatprep.subr.mxu0 0.0
        %971 = vmatpush1.msra.mxu0 0.0
        %972 = vmatprep.subr.mxu0 0.0
        %973 = vmatpush1.msra.mxu0 0.0
        %974 = vmatprep.subr.mxu0 0.0
        %975 = vmatpush1.msra.mxu0 0.0
        %976 = vmatprep.subr.mxu0 0.0
        %977 = vmatpush1.msra.mxu0 0.0
        %978 = vmatprep.subr.mxu0 0.0
        %979 = vmatpush1.msra.mxu0 0.0
        %980 = vmatprep.subr.mxu0 0.0
        %981 = vmatpush1.msra.mxu0 0.0
        %982 = vmatprep.subr.mxu0 0.0
        %983 = vmatpush1.msra.mxu0 0.0
        %984 = vmatprep.subr.mxu0 0.0
        %985 = vmatpush1.msra.mxu0 0.0
        %986 = vmatprep.subr.mxu0 0.0
        %987 = vmatpush1.msra.mxu0 0.0
        %988 = vmatprep.subr.mxu0 0.0
        %989 = vmatpush1.msra.mxu0 0.0
        %990 = vmatprep.subr.mxu0 0.0
        %991 = vmatpush1.msra.mxu0 0.0
        %992 = vmatprep.subr.mxu0 0.0
        %993 = vmatpush1.msra.mxu0 0.0
        %994 = vmatprep.subr.mxu0 0.0
        %995 = vmatpush1.msra.mxu0 0.0
        %996 = vmatprep.subr.mxu0 0.0
        %997 = vmatpush1.msra.mxu0 0.0
        %998 = vmatprep.subr.mxu0 0.0
        %999 = vmatpush1.msra.mxu0 0.0
        %1000 = vmatprep.subr.mxu0 0.0
        %1001 = vmatpush1.msra.mxu0 0.0
        %1002 = vmatprep.subr.mxu0 0.0
        %1003 = vmatpush1.msra.mxu0 0.0
        %1004 = vmatprep.subr.mxu0 0.0
        %1005 = vmatpush1.msra.mxu0 0.0
        %1006 = vmatprep.subr.mxu0 0.0
        %1007 = vmatpush1.msra.mxu0 0.0
        %1008 = vmatprep.subr.mxu0 0.0
        %1009 = vmatpush1.msra.mxu0 0.0
        %1010 = vmatprep.subr.mxu0 0.0
        %1011 = vmatpush1.msra.mxu0 0.0
        %1012 = vmatprep.mubr.f32.mxu0 0.0
        %1013 = vmatmul.mubr.f32.gmra.mrb[0].mxu0 %v785
        %v1014 = vpop.f32.mrb[0].mxu0
        %v1015 = vadd.f32 0.0, %v1014
        %v1016 = vpop.f32.mrb[0].mxu0
        %1017 = vmatprep.mubr.f32.mxu0 0.0
        %1018 = vmatmul.mubr.f32.gmra.mrb[0].mxu0 %v788
        %v1019 = vpop.f32.mrb[0].mxu0
        %v1020 = vadd.f32 0.0, %v1019
        %v1021 = vpop.f32.mrb[0].mxu0
        %1022 = vdwg.mxu0
        %v1023 = vld [vmem:[%s10] sm:$0x3]
        %v1024 = vld [vmem:[%s11] sm:$0x1]
        %v1026 = vlaneseq
        %v1027 = vshrl.u32 %v1026, 7
        %v1028 = vsub.s32 0, %v1027
        %v1029 = vrot.slane %v1024, %v1028
        %vm1031 = vcmask 15360
        %v1033 = vsel %vm1031, %v857, 0
        %v1036 = vsel %vm1031, %v862, 0
        %vm1038 = vcmask 1041408
        %v1040 = vsel %vm1038, %v1023, 0
        %1042 = vmatprep.subr.mxu0 0.0
        %1043 = vmatpush1.msra.mxu0 %v1040
        %1044 = vmatprep.subr.mxu0 0.0
        %1045 = vmatpush1.msra.mxu0 0.0
        %1046 = vmatprep.subr.mxu0 0.0
        %1047 = vmatpush1.msra.mxu0 0.0
        %1048 = vmatprep.subr.mxu0 0.0
        %1049 = vmatpush1.msra.mxu0 0.0
        %1050 = vmatprep.subr.mxu0 0.0
        %1051 = vmatpush1.msra.mxu0 0.0
        %1052 = vmatprep.subr.mxu0 0.0
        %1053 = vmatpush1.msra.mxu0 0.0
        %1054 = vmatprep.subr.mxu0 0.0
        %1055 = vmatpush1.msra.mxu0 0.0
        %1056 = vmatprep.subr.mxu0 0.0
        %1057 = vmatpush1.msra.mxu0 0.0
        %1058 = vmatprep.subr.mxu0 0.0
        %1059 = vmatpush1.msra.mxu0 0.0
        %1060 = vmatprep.subr.mxu0 0.0
        %1061 = vmatpush1.msra.mxu0 0.0
        %1062 = vmatprep.subr.mxu0 0.0
        %1063 = vmatpush1.msra.mxu0 0.0
        %1064 = vmatprep.subr.mxu0 0.0
        %1065 = vmatpush1.msra.mxu0 0.0
        %1066 = vmatprep.subr.mxu0 0.0
        %1067 = vmatpush1.msra.mxu0 0.0
        %1068 = vmatprep.subr.mxu0 0.0
        %1069 = vmatpush1.msra.mxu0 0.0
        %1070 = vmatprep.subr.mxu0 0.0
        %1071 = vmatpush1.msra.mxu0 0.0
        %1072 = vmatprep.subr.mxu0 0.0
        %1073 = vmatpush1.msra.mxu0 0.0
        %1074 = vmatprep.subr.mxu0 0.0
        %1075 = vmatpush1.msra.mxu0 0.0
        %1076 = vmatprep.subr.mxu0 0.0
        %1077 = vmatpush1.msra.mxu0 0.0
        %1078 = vmatprep.subr.mxu0 0.0
        %1079 = vmatpush1.msra.mxu0 0.0
        %1080 = vmatprep.subr.mxu0 0.0
        %1081 = vmatpush1.msra.mxu0 0.0
        %1082 = vmatprep.subr.mxu0 0.0
        %1083 = vmatpush1.msra.mxu0 0.0
        %1084 = vmatprep.subr.mxu0 0.0
        %1085 = vmatpush1.msra.mxu0 0.0
        %1086 = vmatprep.subr.mxu0 0.0
        %1087 = vmatpush1.msra.mxu0 0.0
        %1088 = vmatprep.subr.mxu0 0.0
        %1089 = vmatpush1.msra.mxu0 0.0
        %1090 = vmatprep.subr.mxu0 0.0
        %1091 = vmatpush1.msra.mxu0 0.0
        %1092 = vmatprep.subr.mxu0 0.0
        %1093 = vmatpush1.msra.mxu0 0.0
        %1094 = vmatprep.subr.mxu0 0.0
        %1095 = vmatpush1.msra.mxu0 0.0
        %1096 = vmatprep.subr.mxu0 0.0
        %1097 = vmatpush1.msra.mxu0 0.0
        %1098 = vmatprep.subr.mxu0 0.0
        %1099 = vmatpush1.msra.mxu0 0.0
        %1100 = vmatprep.subr.mxu0 0.0
        %1101 = vmatpush1.msra.mxu0 0.0
        %1102 = vmatprep.subr.mxu0 0.0
        %1103 = vmatpush1.msra.mxu0 0.0
        %1104 = vmatprep.subr.mxu0 0.0
        %1105 = vmatpush1.msra.mxu0 0.0
        %1106 = vmatprep.mubr.f32.mxu0 0.0
        %1107 = vmatmul.mubr.f32.gmra.mrb[0].mxu0 %v1033
        %v1108 = vpop.f32.mrb[0].mxu0
        %v1109 = vadd.f32 %v1029, %v1108
        %v1110 = vpop.f32.mrb[0].mxu0
        %1111 = vmatprep.mubr.f32.mxu0 0.0
        %1112 = vmatmul.mubr.f32.gmra.mrb[0].mxu0 %v1036
        %v1113 = vpop.f32.mrb[0].mxu0
        %v1114 = vadd.f32 %v1029, %v1113
        %v1115 = vpop.f32.mrb[0].mxu0
        %1116 = vdwg.mxu0
        %v1117 = vmin.f32 %v1109, 20.0
        %v1118 = vmin.f32 %v1114, 20.0
        %vm1119 = vcmp.gt.f32.partialorder %v1109, 20.0
        %vm1120 = vcmp.gt.f32.partialorder %v1114, 20.0
        %v1121 = vmul.f32 %v1117, 1.442695
        %v1122 = vpow.pop %v1121
        %v1123 = vmul.f32 %v1118, 1.442695
        %v1124 = vpow.pop %v1123
        %v1125 = vadd.f32 %v1122, 1.0
        %v1126 = vadd.f32 %v1124, 1.0
        %v1127 = vlog2.pop %v1125
        %v1128 = vmul.f32 %v1127, 0.6931472
        %v1129 = vlog2.pop %v1126
        %v1130 = vmul.f32 %v1129, 0.6931472
        %v1131 = vsel %vm1119, %v1109, %v1128
        %v1132 = vsel %vm1120, %v1114, %v1130
        %v1133 = vld [vmem:[%s12] sm:$0xff]
        %v1134 = vmul.f32 %v1133, 1.442695
        %v1135 = vpow.pop %v1134
        %v1136 = vsub.f32 0.0, %v1135
        %v1139 = vcombine.high %v1131, %v1131
        %v1141 = vunpack.c.l.s4 1966171168
        %v1142 = vunpack.c.0.s8 %v1141
        %v1143 = vlaneseq
        %v1144 = vshrl.u32 %v1143, 7
        %v1145 = vsub.s32 %v1142, %v1144
        %v1146 = vrot.slane %v1131, %v1145
        %v1148 = vunpack.c.l.s4 1966171168
        %v1149 = vunpack.c.0.s8 %v1148
        %v1150 = vlaneseq
        %v1151 = vshrl.u32 %v1150, 7
        %v1152 = vsub.s32 %v1149, %v1151
        %v1153 = vrot.slane %v1139, %v1152
        %v1154 = vcombine.high %v1146, %v1146
        %v1155 = vcombine.high %v1153, %v1153
        %v1157 = vunpack.c.l.s4 1966171168
        %v1158 = vunpack.c.0.s8 %v1157
        %v1159 = vlaneseq
        %v1160 = vshrl.u32 %v1159, 7
        %v1161 = vsub.s32 %v1158, %v1160
        %v1162 = vrot.slane %v1146, %v1161
        %v1164 = vunpack.c.l.s4 1966171168
        %v1165 = vunpack.c.0.s8 %v1164
        %v1166 = vlaneseq
        %v1167 = vshrl.u32 %v1166, 7
        %v1168 = vsub.s32 %v1165, %v1167
        %v1169 = vrot.slane %v1153, %v1168
        %v1171 = vunpack.c.l.s4 1966171168
        %v1172 = vunpack.c.0.s8 %v1171
        %v1173 = vlaneseq
        %v1174 = vshrl.u32 %v1173, 7
        %v1175 = vsub.s32 %v1172, %v1174
        %v1176 = vrot.slane %v1154, %v1175
        %v1178 = vunpack.c.l.s4 1966171168
        %v1179 = vunpack.c.0.s8 %v1178
        %v1180 = vlaneseq
        %v1181 = vshrl.u32 %v1180, 7
        %v1182 = vsub.s32 %v1179, %v1181
        %v1183 = vrot.slane %v1155, %v1182
        %v1184 = vcombine.high %v1162, %v1162
        %v1185 = vcombine.high %v1169, %v1169
        %v1186 = vcombine.high %v1176, %v1176
        %v1187 = vcombine.high %v1183, %v1183
        %v1188 = vcombine.high %v1132, %v1132
        %v1190 = vunpack.c.l.s4 1966171168
        %v1191 = vunpack.c.0.s8 %v1190
        %v1192 = vlaneseq
        %v1193 = vshrl.u32 %v1192, 7
        %v1194 = vsub.s32 %v1191, %v1193
        %v1195 = vrot.slane %v1132, %v1194
        %v1197 = vunpack.c.l.s4 1966171168
        %v1198 = vunpack.c.0.s8 %v1197
        %v1199 = vlaneseq
        %v1200 = vshrl.u32 %v1199, 7
        %v1201 = vsub.s32 %v1198, %v1200
        %v1202 = vrot.slane %v1188, %v1201
        %v1203 = vcombine.high %v1195, %v1195
        %v1204 = vcombine.high %v1202, %v1202
        %v1206 = vunpack.c.l.s4 1966171168
        %v1207 = vunpack.c.0.s8 %v1206
        %v1208 = vlaneseq
        %v1209 = vshrl.u32 %v1208, 7
        %v1210 = vsub.s32 %v1207, %v1209
        %v1211 = vrot.slane %v1195, %v1210
        %v1213 = vunpack.c.l.s4 1966171168
        %v1214 = vunpack.c.0.s8 %v1213
        %v1215 = vlaneseq
        %v1216 = vshrl.u32 %v1215, 7
        %v1217 = vsub.s32 %v1214, %v1216
        %v1218 = vrot.slane %v1202, %v1217
        %v1220 = vunpack.c.l.s4 1966171168
        %v1221 = vunpack.c.0.s8 %v1220
        %v1222 = vlaneseq
        %v1223 = vshrl.u32 %v1222, 7
        %v1224 = vsub.s32 %v1221, %v1223
        %v1225 = vrot.slane %v1203, %v1224
        %v1227 = vunpack.c.l.s4 1966171168
        %v1228 = vunpack.c.0.s8 %v1227
        %v1229 = vlaneseq
        %v1230 = vshrl.u32 %v1229, 7
        %v1231 = vsub.s32 %v1228, %v1230
        %v1232 = vrot.slane %v1204, %v1231
        %v1233 = vcombine.high %v1211, %v1211
        %v1234 = vcombine.high %v1218, %v1218
        %v1235 = vcombine.high %v1225, %v1225
        %v1236 = vcombine.high %v1232, %v1232
        %v1237 = vlaneseq
        %v1238 = vshrl.u32 %v1237, 7
        %v1239 = vsub.s32 0, %v1238
        %v1240 = vrot.slane %v1162, %v1239
        %v1241 = vlaneseq
        %v1242 = vshrl.u32 %v1241, 7
        %v1243 = vsub.s32 0, %v1242
        %v1244 = vrot.slane %v1176, %v1243
        %v1245 = vlaneseq
        %v1246 = vshrl.u32 %v1245, 7
        %v1247 = vsub.s32 0, %v1246
        %v1248 = vrot.slane %v1184, %v1247
        %v1249 = vlaneseq
        %v1250 = vshrl.u32 %v1249, 7
        %v1251 = vsub.s32 0, %v1250
        %v1252 = vrot.slane %v1186, %v1251
        %v1253 = vlaneseq
        %v1254 = vshrl.u32 %v1253, 7
        %v1255 = vsub.s32 0, %v1254
        %v1256 = vrot.slane %v1169, %v1255
        %v1257 = vlaneseq
        %v1258 = vshrl.u32 %v1257, 7
        %v1259 = vsub.s32 0, %v1258
        %v1260 = vrot.slane %v1183, %v1259
        %v1261 = vlaneseq
        %v1262 = vshrl.u32 %v1261, 7
        %v1263 = vsub.s32 0, %v1262
        %v1264 = vrot.slane %v1185, %v1263
        %v1265 = vlaneseq
        %v1266 = vshrl.u32 %v1265, 7
        %v1267 = vsub.s32 0, %v1266
        %v1268 = vrot.slane %v1187, %v1267
        %v1269 = vlaneseq
        %v1270 = vshrl.u32 %v1269, 7
        %v1271 = vsub.s32 0, %v1270
        %v1272 = vrot.slane %v1211, %v1271
        %v1273 = vlaneseq
        %v1274 = vshrl.u32 %v1273, 7
        %v1275 = vsub.s32 0, %v1274
        %v1276 = vrot.slane %v1225, %v1275
        %v1277 = vlaneseq
        %v1278 = vshrl.u32 %v1277, 7
        %v1279 = vsub.s32 0, %v1278
        %v1280 = vrot.slane %v1233, %v1279
        %v1281 = vlaneseq
        %v1282 = vshrl.u32 %v1281, 7
        %v1283 = vsub.s32 0, %v1282
        %v1284 = vrot.slane %v1235, %v1283
        %v1285 = vlaneseq
        %v1286 = vshrl.u32 %v1285, 7
        %v1287 = vsub.s32 0, %v1286
        %v1288 = vrot.slane %v1218, %v1287
        %v1289 = vlaneseq
        %v1290 = vshrl.u32 %v1289, 7
        %v1291 = vsub.s32 0, %v1290
        %v1292 = vrot.slane %v1232, %v1291
        %v1293 = vlaneseq
        %v1294 = vshrl.u32 %v1293, 7
        %v1295 = vsub.s32 0, %v1294
        %v1296 = vrot.slane %v1234, %v1295
        %v1297 = vlaneseq
        %v1298 = vshrl.u32 %v1297, 7
        %v1299 = vsub.s32 0, %v1298
        %v1300 = vrot.slane %v1236, %v1299
        %v1317 = vmul.f32 %v1240, %v1136
        %v1318 = vmul.f32 %v1244, %v1136
        %v1319 = vmul.f32 %v1248, %v1136
        %v1320 = vmul.f32 %v1252, %v1136
        %v1321 = vmul.f32 %v1256, %v1136
        %v1322 = vmul.f32 %v1260, %v1136
        %v1323 = vmul.f32 %v1264, %v1136
        %v1324 = vmul.f32 %v1268, %v1136
        %v1325 = vmul.f32 %v1272, %v1136
        %v1326 = vmul.f32 %v1276, %v1136
        %v1327 = vmul.f32 %v1280, %v1136
        %v1328 = vmul.f32 %v1284, %v1136
        %v1329 = vmul.f32 %v1288, %v1136
        %v1330 = vmul.f32 %v1292, %v1136
        %v1331 = vmul.f32 %v1296, %v1136
        %v1332 = vmul.f32 %v1300, %v1136
        %v1333 = vmul.f32 %v1317, 1.442695
        %v1334 = vpow.pop %v1333
        %v1335 = vmul.f32 %v1318, 1.442695
        %v1336 = vpow.pop %v1335
        %v1337 = vmul.f32 %v1319, 1.442695
        %v1338 = vpow.pop %v1337
        %v1339 = vmul.f32 %v1320, 1.442695
        %v1340 = vpow.pop %v1339
        %v1341 = vmul.f32 %v1321, 1.442695
        %v1342 = vpow.pop %v1341
        %v1343 = vmul.f32 %v1322, 1.442695
        %v1344 = vpow.pop %v1343
        %v1345 = vmul.f32 %v1323, 1.442695
        %v1346 = vpow.pop %v1345
        %v1347 = vmul.f32 %v1324, 1.442695
        %v1348 = vpow.pop %v1347
        %v1349 = vmul.f32 %v1325, 1.442695
        %v1350 = vpow.pop %v1349
        %v1351 = vmul.f32 %v1326, 1.442695
        %v1352 = vpow.pop %v1351
        %v1353 = vmul.f32 %v1327, 1.442695
        %v1354 = vpow.pop %v1353
        %v1355 = vmul.f32 %v1328, 1.442695
        %v1356 = vpow.pop %v1355
        %v1357 = vmul.f32 %v1329, 1.442695
        %v1358 = vpow.pop %v1357
        %v1359 = vmul.f32 %v1330, 1.442695
        %v1360 = vpow.pop %v1359
        %v1361 = vmul.f32 %v1331, 1.442695
        %v1362 = vpow.pop %v1361
        %v1363 = vmul.f32 %v1332, 1.442695
        %v1364 = vpow.pop %v1363
        %1365 = vst.msk [vmem:[#allocation2] sm:$0xff] %vm783, %v1334
        %1366 = vst.msk [vmem:[#allocation2 + $0x8] sm:$0xff] %vm783, %v1336
        %1367 = vst.msk [vmem:[#allocation2 + $0x10] sm:$0xff] %vm783, %v1338
        %1368 = vst.msk [vmem:[#allocation2 + $0x18] sm:$0xff] %vm783, %v1340
        %1369 = vst.msk [vmem:[#allocation2 + $0x20] sm:$0xff] %vm783, %v1342
        %1370 = vst.msk [vmem:[#allocation2 + $0x28] sm:$0xff] %vm783, %v1344
        %1371 = vst.msk [vmem:[#allocation2 + $0x30] sm:$0xff] %vm783, %v1346
        %1372 = vst.msk [vmem:[#allocation2 + $0x38] sm:$0xff] %vm783, %v1348
        %1373 = vst.msk [vmem:[#allocation2 + $0x40] sm:$0xff] %vm783, %v1350
        %1374 = vst.msk [vmem:[#allocation2 + $0x48] sm:$0xff] %vm783, %v1352
        %1375 = vst.msk [vmem:[#allocation2 + $0x50] sm:$0xff] %vm783, %v1354
        %1376 = vst.msk [vmem:[#allocation2 + $0x58] sm:$0xff] %vm783, %v1356
        %1377 = vst.msk [vmem:[#allocation2 + $0x60] sm:$0xff] %vm783, %v1358
        %1378 = vst.msk [vmem:[#allocation2 + $0x68] sm:$0xff] %vm783, %v1360
        %1379 = vst.msk [vmem:[#allocation2 + $0x70] sm:$0xff] %vm783, %v1362
        %1380 = vst.msk [vmem:[#allocation2 + $0x78] sm:$0xff] %vm783, %v1364
        %v1381 = vmul.f32 %v1131, %v777
        %v1382 = vmul.f32 %v1132, %v778
        %v1385 = vcombine.high %v1381, %v1381
        %v1387 = vunpack.c.l.s4 1966171168
        %v1388 = vunpack.c.0.s8 %v1387
        %v1389 = vlaneseq
        %v1390 = vshrl.u32 %v1389, 7
        %v1391 = vsub.s32 %v1388, %v1390
        %v1392 = vrot.slane %v1381, %v1391
        %v1394 = vunpack.c.l.s4 1966171168
        %v1395 = vunpack.c.0.s8 %v1394
        %v1396 = vlaneseq
        %v1397 = vshrl.u32 %v1396, 7
        %v1398 = vsub.s32 %v1395, %v1397
        %v1399 = vrot.slane %v1385, %v1398
        %v1400 = vcombine.high %v1392, %v1392
        %v1401 = vcombine.high %v1399, %v1399
        %v1403 = vunpack.c.l.s4 1966171168
        %v1404 = vunpack.c.0.s8 %v1403
        %v1405 = vlaneseq
        %v1406 = vshrl.u32 %v1405, 7
        %v1407 = vsub.s32 %v1404, %v1406
        %v1408 = vrot.slane %v1392, %v1407
        %v1410 = vunpack.c.l.s4 1966171168
        %v1411 = vunpack.c.0.s8 %v1410
        %v1412 = vlaneseq
        %v1413 = vshrl.u32 %v1412, 7
        %v1414 = vsub.s32 %v1411, %v1413
        %v1415 = vrot.slane %v1399, %v1414
        %v1417 = vunpack.c.l.s4 1966171168
        %v1418 = vunpack.c.0.s8 %v1417
        %v1419 = vlaneseq
        %v1420 = vshrl.u32 %v1419, 7
        %v1421 = vsub.s32 %v1418, %v1420
        %v1422 = vrot.slane %v1400, %v1421
        %v1424 = vunpack.c.l.s4 1966171168
        %v1425 = vunpack.c.0.s8 %v1424
        %v1426 = vlaneseq
        %v1427 = vshrl.u32 %v1426, 7
        %v1428 = vsub.s32 %v1425, %v1427
        %v1429 = vrot.slane %v1401, %v1428
        %v1430 = vcombine.high %v1408, %v1408
        %v1431 = vcombine.high %v1415, %v1415
        %v1432 = vcombine.high %v1422, %v1422
        %v1433 = vcombine.high %v1429, %v1429
        %v1434 = vcombine.high %v1382, %v1382
        %v1436 = vunpack.c.l.s4 1966171168
        %v1437 = vunpack.c.0.s8 %v1436
        %v1438 = vlaneseq
        %v1439 = vshrl.u32 %v1438, 7
        %v1440 = vsub.s32 %v1437, %v1439
        %v1441 = vrot.slane %v1382, %v1440
        %v1443 = vunpack.c.l.s4 1966171168
        %v1444 = vunpack.c.0.s8 %v1443
        %v1445 = vlaneseq
        %v1446 = vshrl.u32 %v1445, 7
        %v1447 = vsub.s32 %v1444, %v1446
        %v1448 = vrot.slane %v1434, %v1447
        %v1449 = vcombine.high %v1441, %v1441
        %v1450 = vcombine.high %v1448, %v1448
        %v1452 = vunpack.c.l.s4 1966171168
        %v1453 = vunpack.c.0.s8 %v1452
        %v1454 = vlaneseq
        %v1455 = vshrl.u32 %v1454, 7
        %v1456 = vsub.s32 %v1453, %v1455
        %v1457 = vrot.slane %v1441, %v1456
        %v1459 = vunpack.c.l.s4 1966171168
        %v1460 = vunpack.c.0.s8 %v1459
        %v1461 = vlaneseq
        %v1462 = vshrl.u32 %v1461, 7
        %v1463 = vsub.s32 %v1460, %v1462
        %v1464 = vrot.slane %v1448, %v1463
        %v1466 = vunpack.c.l.s4 1966171168
        %v1467 = vunpack.c.0.s8 %v1466
        %v1468 = vlaneseq
        %v1469 = vshrl.u32 %v1468, 7
        %v1470 = vsub.s32 %v1467, %v1469
        %v1471 = vrot.slane %v1449, %v1470
        %v1473 = vunpack.c.l.s4 1966171168
        %v1474 = vunpack.c.0.s8 %v1473
        %v1475 = vlaneseq
        %v1476 = vshrl.u32 %v1475, 7
        %v1477 = vsub.s32 %v1474, %v1476
        %v1478 = vrot.slane %v1450, %v1477
        %v1479 = vcombine.high %v1457, %v1457
        %v1480 = vcombine.high %v1464, %v1464
        %v1481 = vcombine.high %v1471, %v1471
        %v1482 = vcombine.high %v1478, %v1478
        %v1483 = vlaneseq
        %v1484 = vshrl.u32 %v1483, 7
        %v1485 = vsub.s32 0, %v1484
        %v1486 = vrot.slane %v936, %v1485
        %1488 = vbcast.lane.b32.xlu0 %v1486, 256
        %v1489 = vpop.permute.xlu0 %1488
        %v1490 = vlaneseq
        %v1491 = vshrl.u32 %v1490, 7
        %v1492 = vsub.s32 1, %v1491
        %v1493 = vrot.slane %v936, %v1492
        %1495 = vbcast.lane.b32.xlu0 %v1493, 256
        %v1496 = vpop.permute.xlu0 %1495
        %v1497 = vlaneseq
        %v1498 = vshrl.u32 %v1497, 7
        %v1499 = vsub.s32 2, %v1498
        %v1500 = vrot.slane %v936, %v1499
        %1502 = vbcast.lane.b32.xlu0 %v1500, 256
        %v1503 = vpop.permute.xlu0 %1502
        %v1504 = vlaneseq
        %v1505 = vshrl.u32 %v1504, 7
        %v1506 = vsub.s32 3, %v1505
        %v1507 = vrot.slane %v936, %v1506
        %1509 = vbcast.lane.b32.xlu0 %v1507, 256
        %v1510 = vpop.permute.xlu0 %1509
        %v1511 = vlaneseq
        %v1512 = vshrl.u32 %v1511, 7
        %v1513 = vsub.s32 4, %v1512
        %v1514 = vrot.slane %v936, %v1513
        %1516 = vbcast.lane.b32.xlu0 %v1514, 256
        %v1517 = vpop.permute.xlu0 %1516
        %v1518 = vlaneseq
        %v1519 = vshrl.u32 %v1518, 7
        %v1520 = vsub.s32 5, %v1519
        %v1521 = vrot.slane %v936, %v1520
        %1523 = vbcast.lane.b32.xlu0 %v1521, 256
        %v1524 = vpop.permute.xlu0 %1523
        %v1525 = vlaneseq
        %v1526 = vshrl.u32 %v1525, 7
        %v1527 = vsub.s32 6, %v1526
        %v1528 = vrot.slane %v936, %v1527
        %1530 = vbcast.lane.b32.xlu0 %v1528, 256
        %v1531 = vpop.permute.xlu0 %1530
        %v1532 = vlaneseq
        %v1533 = vshrl.u32 %v1532, 7
        %v1534 = vsub.s32 7, %v1533
        %v1535 = vrot.slane %v936, %v1534
        %1537 = vbcast.lane.b32.xlu0 %v1535, 256
        %v1538 = vpop.permute.xlu0 %1537
        %v1539 = vlaneseq
        %v1540 = vshrl.u32 %v1539, 7
        %v1541 = vsub.s32 0, %v1540
        %v1542 = vrot.slane %v941, %v1541
        %1544 = vbcast.lane.b32.xlu0 %v1542, 256
        %v1545 = vpop.permute.xlu0 %1544
        %v1546 = vlaneseq
        %v1547 = vshrl.u32 %v1546, 7
        %v1548 = vsub.s32 1, %v1547
        %v1549 = vrot.slane %v941, %v1548
        %1551 = vbcast.lane.b32.xlu0 %v1549, 256
        %v1552 = vpop.permute.xlu0 %1551
        %v1553 = vlaneseq
        %v1554 = vshrl.u32 %v1553, 7
        %v1555 = vsub.s32 2, %v1554
        %v1556 = vrot.slane %v941, %v1555
        %1558 = vbcast.lane.b32.xlu0 %v1556, 256
        %v1559 = vpop.permute.xlu0 %1558
        %v1560 = vlaneseq
        %v1561 = vshrl.u32 %v1560, 7
        %v1562 = vsub.s32 3, %v1561
        %v1563 = vrot.slane %v941, %v1562
        %1565 = vbcast.lane.b32.xlu0 %v1563, 256
        %v1566 = vpop.permute.xlu0 %1565
        %v1567 = vlaneseq
        %v1568 = vshrl.u32 %v1567, 7
        %v1569 = vsub.s32 4, %v1568
        %v1570 = vrot.slane %v941, %v1569
        %1572 = vbcast.lane.b32.xlu0 %v1570, 256
        %v1573 = vpop.permute.xlu0 %1572
        %v1574 = vlaneseq
        %v1575 = vshrl.u32 %v1574, 7
        %v1576 = vsub.s32 5, %v1575
        %v1577 = vrot.slane %v941, %v1576
        %1579 = vbcast.lane.b32.xlu0 %v1577, 256
        %v1580 = vpop.permute.xlu0 %1579
        %v1581 = vlaneseq
        %v1582 = vshrl.u32 %v1581, 7
        %v1583 = vsub.s32 6, %v1582
        %v1584 = vrot.slane %v941, %v1583
        %1586 = vbcast.lane.b32.xlu0 %v1584, 256
        %v1587 = vpop.permute.xlu0 %1586
        %v1588 = vlaneseq
        %v1589 = vshrl.u32 %v1588, 7
        %v1590 = vsub.s32 7, %v1589
        %v1591 = vrot.slane %v941, %v1590
        %1593 = vbcast.lane.b32.xlu0 %v1591, 256
        %v1594 = vpop.permute.xlu0 %1593
        %v1595 = vlaneseq
        %v1596 = vshrl.u32 %v1595, 7
        %v1597 = vsub.s32 0, %v1596
        %v1598 = vrot.slane %v1408, %v1597
        %v1599 = vlaneseq
        %v1600 = vshrl.u32 %v1599, 7
        %v1601 = vsub.s32 0, %v1600
        %v1602 = vrot.slane %v1422, %v1601
        %v1603 = vlaneseq
        %v1604 = vshrl.u32 %v1603, 7
        %v1605 = vsub.s32 0, %v1604
        %v1606 = vrot.slane %v1430, %v1605
        %v1607 = vlaneseq
        %v1608 = vshrl.u32 %v1607, 7
        %v1609 = vsub.s32 0, %v1608
        %v1610 = vrot.slane %v1432, %v1609
        %v1611 = vlaneseq
        %v1612 = vshrl.u32 %v1611, 7
        %v1613 = vsub.s32 0, %v1612
        %v1614 = vrot.slane %v1415, %v1613
        %v1615 = vlaneseq
        %v1616 = vshrl.u32 %v1615, 7
        %v1617 = vsub.s32 0, %v1616
        %v1618 = vrot.slane %v1429, %v1617
        %v1619 = vlaneseq
        %v1620 = vshrl.u32 %v1619, 7
        %v1621 = vsub.s32 0, %v1620
        %v1622 = vrot.slane %v1431, %v1621
        %v1623 = vlaneseq
        %v1624 = vshrl.u32 %v1623, 7
        %v1625 = vsub.s32 0, %v1624
        %v1626 = vrot.slane %v1433, %v1625
        %v1627 = vlaneseq
        %v1628 = vshrl.u32 %v1627, 7
        %v1629 = vsub.s32 0, %v1628
        %v1630 = vrot.slane %v1457, %v1629
        %v1631 = vlaneseq
        %v1632 = vshrl.u32 %v1631, 7
        %v1633 = vsub.s32 0, %v1632
        %v1634 = vrot.slane %v1471, %v1633
        %v1635 = vlaneseq
        %v1636 = vshrl.u32 %v1635, 7
        %v1637 = vsub.s32 0, %v1636
        %v1638 = vrot.slane %v1479, %v1637
        %v1639 = vlaneseq
        %v1640 = vshrl.u32 %v1639, 7
        %v1641 = vsub.s32 0, %v1640
        %v1642 = vrot.slane %v1481, %v1641
        %v1643 = vlaneseq
        %v1644 = vshrl.u32 %v1643, 7
        %v1645 = vsub.s32 0, %v1644
        %v1646 = vrot.slane %v1464, %v1645
        %v1647 = vlaneseq
        %v1648 = vshrl.u32 %v1647, 7
        %v1649 = vsub.s32 0, %v1648
        %v1650 = vrot.slane %v1478, %v1649
        %v1651 = vlaneseq
        %v1652 = vshrl.u32 %v1651, 7
        %v1653 = vsub.s32 0, %v1652
        %v1654 = vrot.slane %v1480, %v1653
        %v1655 = vlaneseq
        %v1656 = vshrl.u32 %v1655, 7
        %v1657 = vsub.s32 0, %v1656
        %v1658 = vrot.slane %v1482, %v1657
        %v1675 = vmul.f32 %v1598, %v1489
        %v1676 = vmul.f32 %v1602, %v1496
        %v1677 = vmul.f32 %v1606, %v1503
        %v1678 = vmul.f32 %v1610, %v1510
        %v1679 = vmul.f32 %v1614, %v1517
        %v1680 = vmul.f32 %v1618, %v1524
        %v1681 = vmul.f32 %v1622, %v1531
        %v1682 = vmul.f32 %v1626, %v1538
        %v1683 = vmul.f32 %v1630, %v1545
        %v1684 = vmul.f32 %v1634, %v1552
        %v1685 = vmul.f32 %v1638, %v1559
        %v1686 = vmul.f32 %v1642, %v1566
        %v1687 = vmul.f32 %v1646, %v1573
        %v1688 = vmul.f32 %v1650, %v1580
        %v1689 = vmul.f32 %v1654, %v1587
        %v1690 = vmul.f32 %v1658, %v1594
        %1691 = vst.msk [vmem:[#allocation3] sm:$0xff] %vm783, %v1675
        %1692 = vst.msk [vmem:[#allocation3 + $0x8] sm:$0xff] %vm783, %v1676
        %1693 = vst.msk [vmem:[#allocation3 + $0x10] sm:$0xff] %vm783, %v1677
        %1694 = vst.msk [vmem:[#allocation3 + $0x18] sm:$0xff] %vm783, %v1678
        %1695 = vst.msk [vmem:[#allocation3 + $0x20] sm:$0xff] %vm783, %v1679
        %1696 = vst.msk [vmem:[#allocation3 + $0x28] sm:$0xff] %vm783, %v1680
        %1697 = vst.msk [vmem:[#allocation3 + $0x30] sm:$0xff] %vm783, %v1681
        %1698 = vst.msk [vmem:[#allocation3 + $0x38] sm:$0xff] %vm783, %v1682
        %1699 = vst.msk [vmem:[#allocation3 + $0x40] sm:$0xff] %vm783, %v1683
        %1700 = vst.msk [vmem:[#allocation3 + $0x48] sm:$0xff] %vm783, %v1684
        %1701 = vst.msk [vmem:[#allocation3 + $0x50] sm:$0xff] %vm783, %v1685
        %1702 = vst.msk [vmem:[#allocation3 + $0x58] sm:$0xff] %vm783, %v1686
        %1703 = vst.msk [vmem:[#allocation3 + $0x60] sm:$0xff] %vm783, %v1687
        %1704 = vst.msk [vmem:[#allocation3 + $0x68] sm:$0xff] %vm783, %v1688
        %1705 = vst.msk [vmem:[#allocation3 + $0x70] sm:$0xff] %vm783, %v1689
        %1706 = vst.msk [vmem:[#allocation3 + $0x78] sm:$0xff] %vm783, %v1690
        %vm1707 = vcmask 64512
        %1708 = vst.msk [vmem:[#allocation4] sm:$0xff] %vm1707, %v1015
        %1709 = vst.msk [vmem:[#allocation4 + $0x8] sm:$0xff] %vm1707, %v1020
        %v1710 = vld [vmem:[#allocation2] sm:$0xff]
        %v1711 = vmul.f32 %v1710, 0.0
        %v1712 = vld [vmem:[#allocation3] sm:$0xff]
        %v1713 = vadd.f32 %v1711, %v1712
        %s1714 = scalar_lea.vmem [#allocation2], 120
        %v1715 = vld [vmem:[%s1714] sm:$0xff]
        %v1716 = vmul.f32 %v1715, 0.0
        %s1717 = scalar_lea.vmem [#allocation3], 120
        %v1718 = vld [vmem:[%s1717] sm:$0xff]
        %v1719 = vadd.f32 %v1716, %v1718
        %v1720 = vld [vmem:[#allocation4] sm:$0x1]
        %v1722 = vsel %vm1707, %v1720, 0
        %1724 = vmatprep.subr.mxu0 0.0
        %1725 = vmatpush1.msra.mxu0 %v1713
        %1726 = vmatprep.subr.mxu0 0.0
        %1727 = vmatpush1.msra.mxu0 0.0
        %1728 = vmatprep.subr.mxu0 0.0
        %1729 = vmatpush1.msra.mxu0 0.0
        %1730 = vmatprep.subr.mxu0 0.0
        %1731 = vmatpush1.msra.mxu0 0.0
        %1732 = vmatprep.subr.mxu0 0.0
        %1733 = vmatpush1.msra.mxu0 0.0
        %1734 = vmatprep.subr.mxu0 0.0
        %1735 = vmatpush1.msra.mxu0 0.0
        %1736 = vmatprep.subr.mxu0 0.0
        %1737 = vmatpush1.msra.mxu0 0.0
        %1738 = vmatprep.subr.mxu0 0.0
        %1739 = vmatpush1.msra.mxu0 0.0
        %1740 = vmatprep.subr.mxu0 0.0
        %1741 = vmatpush1.msra.mxu0 0.0
        %1742 = vmatprep.subr.mxu0 0.0
        %1743 = vmatpush1.msra.mxu0 0.0
        %1744 = vmatprep.subr.mxu0 0.0
        %1745 = vmatpush1.msra.mxu0 0.0
        %1746 = vmatprep.subr.mxu0 0.0
        %1747 = vmatpush1.msra.mxu0 0.0
        %1748 = vmatprep.subr.mxu0 0.0
        %1749 = vmatpush1.msra.mxu0 0.0
        %1750 = vmatprep.subr.mxu0 0.0
        %1751 = vmatpush1.msra.mxu0 0.0
        %1752 = vmatprep.subr.mxu0 0.0
        %1753 = vmatpush1.msra.mxu0 0.0
        %1754 = vmatprep.subr.mxu0 0.0
        %1755 = vmatpush1.msra.mxu0 0.0
        %1756 = vmatprep.subr.mxu0 0.0
        %1757 = vmatpush1.msra.mxu0 0.0
        %1758 = vmatprep.subr.mxu0 0.0
        %1759 = vmatpush1.msra.mxu0 0.0
        %1760 = vmatprep.subr.mxu0 0.0
        %1761 = vmatpush1.msra.mxu0 0.0
        %1762 = vmatprep.subr.mxu0 0.0
        %1763 = vmatpush1.msra.mxu0 0.0
        %1764 = vmatprep.subr.mxu0 0.0
        %1765 = vmatpush1.msra.mxu0 0.0
        %1766 = vmatprep.subr.mxu0 0.0
        %1767 = vmatpush1.msra.mxu0 0.0
        %1768 = vmatprep.subr.mxu0 0.0
        %1769 = vmatpush1.msra.mxu0 0.0
        %1770 = vmatprep.subr.mxu0 0.0
        %1771 = vmatpush1.msra.mxu0 0.0
        %1772 = vmatprep.subr.mxu0 0.0
        %1773 = vmatpush1.msra.mxu0 0.0
        %1774 = vmatprep.subr.mxu0 0.0
        %1775 = vmatpush1.msra.mxu0 0.0
        %1776 = vmatprep.subr.mxu0 0.0
        %1777 = vmatpush1.msra.mxu0 0.0
        %1778 = vmatprep.subr.mxu0 0.0
        %1779 = vmatpush1.msra.mxu0 0.0
        %1780 = vmatprep.subr.mxu0 0.0
        %1781 = vmatpush1.msra.mxu0 0.0
        %1782 = vmatprep.subr.mxu0 0.0
        %1783 = vmatpush1.msra.mxu0 0.0
        %1784 = vmatprep.subr.mxu0 0.0
        %1785 = vmatpush1.msra.mxu0 0.0
        %1786 = vmatprep.subr.mxu0 0.0
        %1787 = vmatpush1.msra.mxu0 0.0
        %1788 = vmatprep.mubr.f32.mxu0 0.0
        %1789 = vmatmul.mubr.f32.gmra.mrb[0].mxu0 %v1722
        %v1790 = vpop.f32.mrb[0].mxu0
        %v1791 = vadd.f32 0.0, %v1790
        %v1792 = vpop.f32.mrb[0].mxu0
        %1793 = vdwg.mxu0
        %vm1794 = vcmask 253952
        %1795 = vst.msk [vmem:[#allocation5] sm:$0x1] %vm1794, %v1791
        %v1796 = vld [vmem:[#allocation4 + $0xf] sm:$0x1]
        %v1798 = vsel %vm1707, %v1796, 0
        %1800 = vmatprep.subr.mxu0 0.0
        %1801 = vmatpush1.msra.mxu0 %v1719
        %1802 = vmatprep.subr.mxu0 0.0
        %1803 = vmatpush1.msra.mxu0 0.0
        %1804 = vmatprep.subr.mxu0 0.0
        %1805 = vmatpush1.msra.mxu0 0.0
        %1806 = vmatprep.subr.mxu0 0.0
        %1807 = vmatpush1.msra.mxu0 0.0
        %1808 = vmatprep.subr.mxu0 0.0
        %1809 = vmatpush1.msra.mxu0 0.0
        %1810 = vmatprep.subr.mxu0 0.0
        %1811 = vmatpush1.msra.mxu0 0.0
        %1812 = vmatprep.subr.mxu0 0.0
        %1813 = vmatpush1.msra.mxu0 0.0
        %1814 = vmatprep.subr.mxu0 0.0
        %1815 = vmatpush1.msra.mxu0 0.0
        %1816 = vmatprep.subr.mxu0 0.0
        %1817 = vmatpush1.msra.mxu0 0.0
        %1818 = vmatprep.subr.mxu0 0.0
        %1819 = vmatpush1.msra.mxu0 0.0
        %1820 = vmatprep.subr.mxu0 0.0
        %1821 = vmatpush1.msra.mxu0 0.0
        %1822 = vmatprep.subr.mxu0 0.0
        %1823 = vmatpush1.msra.mxu0 0.0
        %1824 = vmatprep.subr.mxu0 0.0
        %1825 = vmatpush1.msra.mxu0 0.0
        %1826 = vmatprep.subr.mxu0 0.0
        %1827 = vmatpush1.msra.mxu0 0.0
        %1828 = vmatprep.subr.mxu0 0.0
        %1829 = vmatpush1.msra.mxu0 0.0
        %1830 = vmatprep.subr.mxu0 0.0
        %1831 = vmatpush1.msra.mxu0 0.0
        %1832 = vmatprep.subr.mxu0 0.0
        %1833 = vmatpush1.msra.mxu0 0.0
        %1834 = vmatprep.subr.mxu0 0.0
        %1835 = vmatpush1.msra.mxu0 0.0
        %1836 = vmatprep.subr.mxu0 0.0
        %1837 = vmatpush1.msra.mxu0 0.0
        %1838 = vmatprep.subr.mxu0 0.0
        %1839 = vmatpush1.msra.mxu0 0.0
        %1840 = vmatprep.subr.mxu0 0.0
        %1841 = vmatpush1.msra.mxu0 0.0
        %1842 = vmatprep.subr.mxu0 0.0
        %1843 = vmatpush1.msra.mxu0 0.0
        %1844 = vmatprep.subr.mxu0 0.0
        %1845 = vmatpush1.msra.mxu0 0.0
        %1846 = vmatprep.subr.mxu0 0.0
        %1847 = vmatpush1.msra.mxu0 0.0
        %1848 = vmatprep.subr.mxu0 0.0
        %1849 = vmatpush1.msra.mxu0 0.0
        %1850 = vmatprep.subr.mxu0 0.0
        %1851 = vmatpush1.msra.mxu0 0.0
        %1852 = vmatprep.subr.mxu0 0.0
        %1853 = vmatpush1.msra.mxu0 0.0
        %1854 = vmatprep.subr.mxu0 0.0
        %1855 = vmatpush1.msra.mxu0 0.0
        %1856 = vmatprep.subr.mxu0 0.0
        %1857 = vmatpush1.msra.mxu0 0.0
        %1858 = vmatprep.subr.mxu0 0.0
        %1859 = vmatpush1.msra.mxu0 0.0
        %1860 = vmatprep.subr.mxu0 0.0
        %1861 = vmatpush1.msra.mxu0 0.0
        %1862 = vmatprep.subr.mxu0 0.0
        %1863 = vmatpush1.msra.mxu0 0.0
        %1864 = vmatprep.mubr.f32.mxu0 0.0
        %1865 = vmatmul.mubr.f32.gmra.mrb[0].mxu0 %v1798
        %v1866 = vpop.f32.mrb[0].mxu0
        %v1867 = vadd.f32 0.0, %v1866
        %v1868 = vpop.f32.mrb[0].mxu0
        %1869 = vdwg.mxu0
        %1870 = vst.msk [vmem:[#allocation5 + $0xf] sm:$0x1] %vm1794, %v1867
        %s1871 = scalar_lea.vmem [#allocation2], 8
        %v1872 = vld [vmem:[%s1871] sm:$0xff]
        %v1873 = vmul.f32 %v1872, %v1713
        %s1874 = scalar_lea.vmem [#allocation3], 8
        %v1875 = vld [vmem:[%s1874] sm:$0xff]
        %v1876 = vadd.f32 %v1873, %v1875
        %s1877 = scalar_lea.vmem [#allocation2], 112
        %v1878 = vld [vmem:[%s1877] sm:$0xff]
        %v1879 = vmul.f32 %v1878, %v1719
        %s1880 = scalar_lea.vmem [#allocation3], 112
        %v1881 = vld [vmem:[%s1880] sm:$0xff]
        %v1882 = vadd.f32 %v1879, %v1881
        %v1883 = vld [vmem:[#allocation4 + $0x1] sm:$0x1]
        %v1885 = vsel %vm1707, %v1883, 0
        %1887 = vmatprep.subr.mxu0 0.0
        %1888 = vmatpush1.msra.mxu0 %v1876
        %1889 = vmatprep.subr.mxu0 0.0
        %1890 = vmatpush1.msra.mxu0 0.0
        %1891 = vmatprep.subr.mxu0 0.0
        %1892 = vmatpush1.msra.mxu0 0.0
        %1893 = vmatprep.subr.mxu0 0.0
        %1894 = vmatpush1.msra.mxu0 0.0
        %1895 = vmatprep.subr.mxu0 0.0
        %1896 = vmatpush1.msra.mxu0 0.0
        %1897 = vmatprep.subr.mxu0 0.0
        %1898 = vmatpush1.msra.mxu0 0.0
        %1899 = vmatprep.subr.mxu0 0.0
        %1900 = vmatpush1.msra.mxu0 0.0
        %1901 = vmatprep.subr.mxu0 0.0
        %1902 = vmatpush1.msra.mxu0 0.0
        %1903 = vmatprep.subr.mxu0 0.0
        %1904 = vmatpush1.msra.mxu0 0.0
        %1905 = vmatprep.subr.mxu0 0.0
        %1906 = vmatpush1.msra.mxu0 0.0
        %1907 = vmatprep.subr.mxu0 0.0
        %1908 = vmatpush1.msra.mxu0 0.0
        %1909 = vmatprep.subr.mxu0 0.0
        %1910 = vmatpush1.msra.mxu0 0.0
        %1911 = vmatprep.subr.mxu0 0.0
        %1912 = vmatpush1.msra.mxu0 0.0
        %1913 = vmatprep.subr.mxu0 0.0
        %1914 = vmatpush1.msra.mxu0 0.0
        %1915 = vmatprep.subr.mxu0 0.0
        %1916 = vmatpush1.msra.mxu0 0.0
        %1917 = vmatprep.subr.mxu0 0.0
        %1918 = vmatpush1.msra.mxu0 0.0
        %1919 = vmatprep.subr.mxu0 0.0
        %1920 = vmatpush1.msra.mxu0 0.0
        %1921 = vmatprep.subr.mxu0 0.0
        %1922 = vmatpush1.msra.mxu0 0.0
        %1923 = vmatprep.subr.mxu0 0.0
        %1924 = vmatpush1.msra.mxu0 0.0
        %1925 = vmatprep.subr.mxu0 0.0
        %1926 = vmatpush1.msra.mxu0 0.0
        %1927 = vmatprep.subr.mxu0 0.0
        %1928 = vmatpush1.msra.mxu0 0.0
        %1929 = vmatprep.subr.mxu0 0.0
        %1930 = vmatpush1.msra.mxu0 0.0
        %1931 = vmatprep.subr.mxu0 0.0
        %1932 = vmatpush1.msra.mxu0 0.0
        %1933 = vmatprep.subr.mxu0 0.0
        %1934 = vmatpush1.msra.mxu0 0.0
        %1935 = vmatprep.subr.mxu0 0.0
        %1936 = vmatpush1.msra.mxu0 0.0
        %1937 = vmatprep.subr.mxu0 0.0
        %1938 = vmatpush1.msra.mxu0 0.0
        %1939 = vmatprep.subr.mxu0 0.0
        %1940 = vmatpush1.msra.mxu0 0.0
        %1941 = vmatprep.subr.mxu0 0.0
        %1942 = vmatpush1.msra.mxu0 0.0
        %1943 = vmatprep.subr.mxu0 0.0
        %1944 = vmatpush1.msra.mxu0 0.0
        %1945 = vmatprep.subr.mxu0 0.0
        %1946 = vmatpush1.msra.mxu0 0.0
        %1947 = vmatprep.subr.mxu0 0.0
        %1948 = vmatpush1.msra.mxu0 0.0
        %1949 = vmatprep.subr.mxu0 0.0
        %1950 = vmatpush1.msra.mxu0 0.0
        %1951 = vmatprep.mubr.f32.mxu0 0.0
        %1952 = vmatmul.mubr.f32.gmra.mrb[0].mxu0 %v1885
        %v1953 = vpop.f32.mrb[0].mxu0
        %v1954 = vadd.f32 0.0, %v1953
        %v1955 = vpop.f32.mrb[0].mxu0
        %1956 = vdwg.mxu0
        %1957 = vst.msk [vmem:[#allocation5 + $0x1] sm:$0x1] %vm1794, %v1954
        %v1958 = vld [vmem:[#allocation4 + $0xe] sm:$0x1]
        %v1960 = vsel %vm1707, %v1958, 0
        %1962 = vmatprep.subr.mxu0 0.0
        %1963 = vmatpush1.msra.mxu0 %v1882
        %1964 = vmatprep.subr.mxu0 0.0
        %1965 = vmatpush1.msra.mxu0 0.0
        %1966 = vmatprep.subr.mxu0 0.0
        %1967 = vmatpush1.msra.mxu0 0.0
        %1968 = vmatprep.subr.mxu0 0.0
        %1969 = vmatpush1.msra.mxu0 0.0
        %1970 = vmatprep.subr.mxu0 0.0
        %1971 = vmatpush1.msra.mxu0 0.0
        %1972 = vmatprep.subr.mxu0 0.0
        %1973 = vmatpush1.msra.mxu0 0.0
        %1974 = vmatprep.subr.mxu0 0.0
        %1975 = vmatpush1.msra.mxu0 0.0
        %1976 = vmatprep.subr.mxu0 0.0
        %1977 = vmatpush1.msra.mxu0 0.0
        %1978 = vmatprep.subr.mxu0 0.0
        %1979 = vmatpush1.msra.mxu0 0.0
        %1980 = vmatprep.subr.mxu0 0.0
        %1981 = vmatpush1.msra.mxu0 0.0
        %1982 = vmatprep.subr.mxu0 0.0
        %1983 = vmatpush1.msra.mxu0 0.0
        %1984 = vmatprep.subr.mxu0 0.0
        %1985 = vmatpush1.msra.mxu0 0.0
        %1986 = vmatprep.subr.mxu0 0.0
        %1987 = vmatpush1.msra.mxu0 0.0
        %1988 = vmatprep.subr.mxu0 0.0
        %1989 = vmatpush1.msra.mxu0 0.0
        %1990 = vmatprep.subr.mxu0 0.0
        %1991 = vmatpush1.msra.mxu0 0.0
        %1992 = vmatprep.subr.mxu0 0.0
        %1993 = vmatpush1.msra.mxu0 0.0
        %1994 = vmatprep.subr.mxu0 0.0
        %1995 = vmatpush1.msra.mxu0 0.0
        %1996 = vmatprep.subr.mxu0 0.0
        %1997 = vmatpush1.msra.mxu0 0.0
        %1998 = vmatprep.subr.mxu0 0.0
        %1999 = vmatpush1.msra.mxu0 0.0
        %2000 = vmatprep.subr.mxu0 0.0
        %2001 = vmatpush1.msra.mxu0 0.0
        %2002 = vmatprep.subr.mxu0 0.0
        %2003 = vmatpush1.msra.mxu0 0.0
        %2004 = vmatprep.subr.mxu0 0.0
        %2005 = vmatpush1.msra.mxu0 0.0
        %2006 = vmatprep.subr.mxu0 0.0
        %2007 = vmatpush1.msra.mxu0 0.0
        %2008 = vmatprep.subr.mxu0 0.0
        %2009 = vmatpush1.msra.mxu0 0.0
        %2010 = vmatprep.subr.mxu0 0.0
        %2011 = vmatpush1.msra.mxu0 0.0
        %2012 = vmatprep.subr.mxu0 0.0
        %2013 = vmatpush1.msra.mxu0 0.0
        %2014 = vmatprep.subr.mxu0 0.0
        %2015 = vmatpush1.msra.mxu0 0.0
        %2016 = vmatprep.subr.mxu0 0.0
        %2017 = vmatpush1.msra.mxu0 0.0
        %2018 = vmatprep.subr.mxu0 0.0
        %2019 = vmatpush1.msra.mxu0 0.0
        %2020 = vmatprep.subr.mxu0 0.0
        %2021 = vmatpush1.msra.mxu0 0.0
        %2022 = vmatprep.subr.mxu0 0.0
        %2023 = vmatpush1.msra.mxu0 0.0
        %2024 = vmatprep.subr.mxu0 0.0
        %2025 = vmatpush1.msra.mxu0 0.0
        %2026 = vmatprep.mubr.f32.mxu0 0.0
        %2027 = vmatmul.mubr.f32.gmra.mrb[0].mxu0 %v1960
        %v2028 = vpop.f32.mrb[0].mxu0
        %v2029 = vadd.f32 0.0, %v2028
        %v2030 = vpop.f32.mrb[0].mxu0
        %2031 = vdwg.mxu0
        %2032 = vst.msk [vmem:[#allocation5 + $0xe] sm:$0x1] %vm1794, %v2029
        %s2033 = scalar_lea.vmem [#allocation2], 16
        %v2034 = vld [vmem:[%s2033] sm:$0xff]
        %v2035 = vmul.f32 %v2034, %v1876
        %s2036 = scalar_lea.vmem [#allocation3], 16
        %v2037 = vld [vmem:[%s2036] sm:$0xff]
        %v2038 = vadd.f32 %v2035, %v2037
        %s2039 = scalar_lea.vmem [#allocation2], 104
        %v2040 = vld [vmem:[%s2039] sm:$0xff]
        %v2041 = vmul.f32 %v2040, %v1882
        %s2042 = scalar_lea.vmem [#allocation3], 104
        %v2043 = vld [vmem:[%s2042] sm:$0xff]
        %v2044 = vadd.f32 %v2041, %v2043
        %v2045 = vld [vmem:[#allocation4 + $0x2] sm:$0x1]
        %v2047 = vsel %vm1707, %v2045, 0
        %2049 = vmatprep.subr.mxu0 0.0
        %2050 = vmatpush1.msra.mxu0 %v2038
        %2051 = vmatprep.subr.mxu0 0.0
        %2052 = vmatpush1.msra.mxu0 0.0
        %2053 = vmatprep.subr.mxu0 0.0
        %2054 = vmatpush1.msra.mxu0 0.0
        %2055 = vmatprep.subr.mxu0 0.0
        %2056 = vmatpush1.msra.mxu0 0.0
        %2057 = vmatprep.subr.mxu0 0.0
        %2058 = vmatpush1.msra.mxu0 0.0
        %2059 = vmatprep.subr.mxu0 0.0
        %2060 = vmatpush1.msra.mxu0 0.0
        %2061 = vmatprep.subr.mxu0 0.0
        %2062 = vmatpush1.msra.mxu0 0.0
        %2063 = vmatprep.subr.mxu0 0.0
        %2064 = vmatpush1.msra.mxu0 0.0
        %2065 = vmatprep.subr.mxu0 0.0
        %2066 = vmatpush1.msra.mxu0 0.0
        %2067 = vmatprep.subr.mxu0 0.0
        %2068 = vmatpush1.msra.mxu0 0.0
        %2069 = vmatprep.subr.mxu0 0.0
        %2070 = vmatpush1.msra.mxu0 0.0
        %2071 = vmatprep.subr.mxu0 0.0
        %2072 = vmatpush1.msra.mxu0 0.0
        %2073 = vmatprep.subr.mxu0 0.0
        %2074 = vmatpush1.msra.mxu0 0.0
        %2075 = vmatprep.subr.mxu0 0.0
        %2076 = vmatpush1.msra.mxu0 0.0
        %2077 = vmatprep.subr.mxu0 0.0
        %2078 = vmatpush1.msra.mxu0 0.0
        %2079 = vmatprep.subr.mxu0 0.0
        %2080 = vmatpush1.msra.mxu0 0.0
        %2081 = vmatprep.subr.mxu0 0.0
        %2082 = vmatpush1.msra.mxu0 0.0
        %2083 = vmatprep.subr.mxu0 0.0
        %2084 = vmatpush1.msra.mxu0 0.0
        %2085 = vmatprep.subr.mxu0 0.0
        %2086 = vmatpush1.msra.mxu0 0.0
        %2087 = vmatprep.subr.mxu0 0.0
        %2088 = vmatpush1.msra.mxu0 0.0
        %2089 = vmatprep.subr.mxu0 0.0
        %2090 = vmatpush1.msra.mxu0 0.0
        %2091 = vmatprep.subr.mxu0 0.0
        %2092 = vmatpush1.msra.mxu0 0.0
        %2093 = vmatprep.subr.mxu0 0.0
        %2094 = vmatpush1.msra.mxu0 0.0
        %2095 = vmatprep.subr.mxu0 0.0
        %2096 = vmatpush1.msra.mxu0 0.0
        %2097 = vmatprep.subr.mxu0 0.0
        %2098 = vmatpush1.msra.mxu0 0.0
        %2099 = vmatprep.subr.mxu0 0.0
        %2100 = vmatpush1.msra.mxu0 0.0
        %2101 = vmatprep.subr.mxu0 0.0
        %2102 = vmatpush1.msra.mxu0 0.0
        %2103 = vmatprep.subr.mxu0 0.0
        %2104 = vmatpush1.msra.mxu0 0.0
        %2105 = vmatprep.subr.mxu0 0.0
        %2106 = vmatpush1.msra.mxu0 0.0
        %2107 = vmatprep.subr.mxu0 0.0
        %2108 = vmatpush1.msra.mxu0 0.0
        %2109 = vmatprep.subr.mxu0 0.0
        %2110 = vmatpush1.msra.mxu0 0.0
        %2111 = vmatprep.subr.mxu0 0.0
        %2112 = vmatpush1.msra.mxu0 0.0
        %2113 = vmatprep.mubr.f32.mxu0 0.0
        %2114 = vmatmul.mubr.f32.gmra.mrb[0].mxu0 %v2047
        %v2115 = vpop.f32.mrb[0].mxu0
        %v2116 = vadd.f32 0.0, %v2115
        %v2117 = vpop.f32.mrb[0].mxu0
        %2118 = vdwg.mxu0
        %2119 = vst.msk [vmem:[#allocation5 + $0x2] sm:$0x1] %vm1794, %v2116
        %v2120 = vld [vmem:[#allocation4 + $0xd] sm:$0x1]
        %v2122 = vsel %vm1707, %v2120, 0
        %2124 = vmatprep.subr.mxu0 0.0
        %2125 = vmatpush1.msra.mxu0 %v2044
        %2126 = vmatprep.subr.mxu0 0.0
        %2127 = vmatpush1.msra.mxu0 0.0
        %2128 = vmatprep.subr.mxu0 0.0
        %2129 = vmatpush1.msra.mxu0 0.0
        %2130 = vmatprep.subr.mxu0 0.0
        %2131 = vmatpush1.msra.mxu0 0.0
        %2132 = vmatprep.subr.mxu0 0.0
        %2133 = vmatpush1.msra.mxu0 0.0
        %2134 = vmatprep.subr.mxu0 0.0
        %2135 = vmatpush1.msra.mxu0 0.0
        %2136 = vmatprep.subr.mxu0 0.0
        %2137 = vmatpush1.msra.mxu0 0.0
        %2138 = vmatprep.subr.mxu0 0.0
        %2139 = vmatpush1.msra.mxu0 0.0
        %2140 = vmatprep.subr.mxu0 0.0
        %2141 = vmatpush1.msra.mxu0 0.0
        %2142 = vmatprep.subr.mxu0 0.0
        %2143 = vmatpush1.msra.mxu0 0.0
        %2144 = vmatprep.subr.mxu0 0.0
        %2145 = vmatpush1.msra.mxu0 0.0
        %2146 = vmatprep.subr.mxu0 0.0
        %2147 = vmatpush1.msra.mxu0 0.0
        %2148 = vmatprep.subr.mxu0 0.0
        %2149 = vmatpush1.msra.mxu0 0.0
        %2150 = vmatprep.subr.mxu0 0.0
        %2151 = vmatpush1.msra.mxu0 0.0
        %2152 = vmatprep.subr.mxu0 0.0
        %2153 = vmatpush1.msra.mxu0 0.0
        %2154 = vmatprep.subr.mxu0 0.0
        %2155 = vmatpush1.msra.mxu0 0.0
        %2156 = vmatprep.subr.mxu0 0.0
        %2157 = vmatpush1.msra.mxu0 0.0
        %2158 = vmatprep.subr.mxu0 0.0
        %2159 = vmatpush1.msra.mxu0 0.0
        %2160 = vmatprep.subr.mxu0 0.0
        %2161 = vmatpush1.msra.mxu0 0.0
        %2162 = vmatprep.subr.mxu0 0.0
        %2163 = vmatpush1.msra.mxu0 0.0
        %2164 = vmatprep.subr.mxu0 0.0
        %2165 = vmatpush1.msra.mxu0 0.0
        %2166 = vmatprep.subr.mxu0 0.0
        %2167 = vmatpush1.msra.mxu0 0.0
        %2168 = vmatprep.subr.mxu0 0.0
        %2169 = vmatpush1.msra.mxu0 0.0
        %2170 = vmatprep.subr.mxu0 0.0
        %2171 = vmatpush1.msra.mxu0 0.0
        %2172 = vmatprep.subr.mxu0 0.0
        %2173 = vmatpush1.msra.mxu0 0.0
        %2174 = vmatprep.subr.mxu0 0.0
        %2175 = vmatpush1.msra.mxu0 0.0
        %2176 = vmatprep.subr.mxu0 0.0
        %2177 = vmatpush1.msra.mxu0 0.0
        %2178 = vmatprep.subr.mxu0 0.0
        %2179 = vmatpush1.msra.mxu0 0.0
        %2180 = vmatprep.subr.mxu0 0.0
        %2181 = vmatpush1.msra.mxu0 0.0
        %2182 = vmatprep.subr.mxu0 0.0
        %2183 = vmatpush1.msra.mxu0 0.0
        %2184 = vmatprep.subr.mxu0 0.0
        %2185 = vmatpush1.msra.mxu0 0.0
        %2186 = vmatprep.subr.mxu0 0.0
        %2187 = vmatpush1.msra.mxu0 0.0
        %2188 = vmatprep.mubr.f32.mxu0 0.0
        %2189 = vmatmul.mubr.f32.gmra.mrb[0].mxu0 %v2122
        %v2190 = vpop.f32.mrb[0].mxu0
        %v2191 = vadd.f32 0.0, %v2190
        %v2192 = vpop.f32.mrb[0].mxu0
        %2193 = vdwg.mxu0
        %2194 = vst.msk [vmem:[#allocation5 + $0xd] sm:$0x1] %vm1794, %v2191
        %s2195 = scalar_lea.vmem [#allocation2], 24
        %v2196 = vld [vmem:[%s2195] sm:$0xff]
        %v2197 = vmul.f32 %v2196, %v2038
        %s2198 = scalar_lea.vmem [#allocation3], 24
        %v2199 = vld [vmem:[%s2198] sm:$0xff]
        %v2200 = vadd.f32 %v2197, %v2199
        %s2201 = scalar_lea.vmem [#allocation2], 96
        %v2202 = vld [vmem:[%s2201] sm:$0xff]
        %v2203 = vmul.f32 %v2202, %v2044
        %s2204 = scalar_lea.vmem [#allocation3], 96
        %v2205 = vld [vmem:[%s2204] sm:$0xff]
        %v2206 = vadd.f32 %v2203, %v2205
        %v2207 = vld [vmem:[#allocation4 + $0x3] sm:$0x1]
        %v2209 = vsel %vm1707, %v2207, 0
        %2211 = vmatprep.subr.mxu0 0.0
        %2212 = vmatpush1.msra.mxu0 %v2200
        %2213 = vmatprep.subr.mxu0 0.0
        %2214 = vmatpush1.msra.mxu0 0.0
        %2215 = vmatprep.subr.mxu0 0.0
        %2216 = vmatpush1.msra.mxu0 0.0
        %2217 = vmatprep.subr.mxu0 0.0
        %2218 = vmatpush1.msra.mxu0 0.0
        %2219 = vmatprep.subr.mxu0 0.0
        %2220 = vmatpush1.msra.mxu0 0.0
        %2221 = vmatprep.subr.mxu0 0.0
        %2222 = vmatpush1.msra.mxu0 0.0
        %2223 = vmatprep.subr.mxu0 0.0
        %2224 = vmatpush1.msra.mxu0 0.0
        %2225 = vmatprep.subr.mxu0 0.0
        %2226 = vmatpush1.msra.mxu0 0.0
        %2227 = vmatprep.subr.mxu0 0.0
        %2228 = vmatpush1.msra.mxu0 0.0
        %2229 = vmatprep.subr.mxu0 0.0
        %2230 = vmatpush1.msra.mxu0 0.0
        %2231 = vmatprep.subr.mxu0 0.0
        %2232 = vmatpush1.msra.mxu0 0.0
        %2233 = vmatprep.subr.mxu0 0.0
        %2234 = vmatpush1.msra.mxu0 0.0
        %2235 = vmatprep.subr.mxu0 0.0
        %2236 = vmatpush1.msra.mxu0 0.0
        %2237 = vmatprep.subr.mxu0 0.0
        %2238 = vmatpush1.msra.mxu0 0.0
        %2239 = vmatprep.subr.mxu0 0.0
        %2240 = vmatpush1.msra.mxu0 0.0
        %2241 = vmatprep.subr.mxu0 0.0
        %2242 = vmatpush1.msra.mxu0 0.0
        %2243 = vmatprep.subr.mxu0 0.0
        %2244 = vmatpush1.msra.mxu0 0.0
        %2245 = vmatprep.subr.mxu0 0.0
        %2246 = vmatpush1.msra.mxu0 0.0
        %2247 = vmatprep.subr.mxu0 0.0
        %2248 = vmatpush1.msra.mxu0 0.0
        %2249 = vmatprep.subr.mxu0 0.0
        %2250 = vmatpush1.msra.mxu0 0.0
        %2251 = vmatprep.subr.mxu0 0.0
        %2252 = vmatpush1.msra.mxu0 0.0
        %2253 = vmatprep.subr.mxu0 0.0
        %2254 = vmatpush1.msra.mxu0 0.0
        %2255 = vmatprep.subr.mxu0 0.0
        %2256 = vmatpush1.msra.mxu0 0.0
        %2257 = vmatprep.subr.mxu0 0.0
        %2258 = vmatpush1.msra.mxu0 0.0
        %2259 = vmatprep.subr.mxu0 0.0
        %2260 = vmatpush1.msra.mxu0 0.0
        %2261 = vmatprep.subr.mxu0 0.0
        %2262 = vmatpush1.msra.mxu0 0.0
        %2263 = vmatprep.subr.mxu0 0.0
        %2264 = vmatpush1.msra.mxu0 0.0
        %2265 = vmatprep.subr.mxu0 0.0
        %2266 = vmatpush1.msra.mxu0 0.0
        %2267 = vmatprep.subr.mxu0 0.0
        %2268 = vmatpush1.msra.mxu0 0.0
        %2269 = vmatprep.subr.mxu0 0.0
        %2270 = vmatpush1.msra.mxu0 0.0
        %2271 = vmatprep.subr.mxu0 0.0
        %2272 = vmatpush1.msra.mxu0 0.0
        %2273 = vmatprep.subr.mxu0 0.0
        %2274 = vmatpush1.msra.mxu0 0.0
        %2275 = vmatprep.mubr.f32.mxu0 0.0
        %2276 = vmatmul.mubr.f32.gmra.mrb[0].mxu0 %v2209
        %v2277 = vpop.f32.mrb[0].mxu0
        %v2278 = vadd.f32 0.0, %v2277
        %v2279 = vpop.f32.mrb[0].mxu0
        %2280 = vdwg.mxu0
        %2281 = vst.msk [vmem:[#allocation5 + $0x3] sm:$0x1] %vm1794, %v2278
        %v2282 = vld [vmem:[#allocation4 + $0xc] sm:$0x1]
        %v2284 = vsel %vm1707, %v2282, 0
        %2286 = vmatprep.subr.mxu0 0.0
        %2287 = vmatpush1.msra.mxu0 %v2206
        %2288 = vmatprep.subr.mxu0 0.0
        %2289 = vmatpush1.msra.mxu0 0.0
        %2290 = vmatprep.subr.mxu0 0.0
        %2291 = vmatpush1.msra.mxu0 0.0
        %2292 = vmatprep.subr.mxu0 0.0
        %2293 = vmatpush1.msra.mxu0 0.0
        %2294 = vmatprep.subr.mxu0 0.0
        %2295 = vmatpush1.msra.mxu0 0.0
        %2296 = vmatprep.subr.mxu0 0.0
        %2297 = vmatpush1.msra.mxu0 0.0
        %2298 = vmatprep.subr.mxu0 0.0
        %2299 = vmatpush1.msra.mxu0 0.0
        %2300 = vmatprep.subr.mxu0 0.0
        %2301 = vmatpush1.msra.mxu0 0.0
        %2302 = vmatprep.subr.mxu0 0.0
        %2303 = vmatpush1.msra.mxu0 0.0
        %2304 = vmatprep.subr.mxu0 0.0
        %2305 = vmatpush1.msra.mxu0 0.0
        %2306 = vmatprep.subr.mxu0 0.0
        %2307 = vmatpush1.msra.mxu0 0.0
        %2308 = vmatprep.subr.mxu0 0.0
        %2309 = vmatpush1.msra.mxu0 0.0
        %2310 = vmatprep.subr.mxu0 0.0
        %2311 = vmatpush1.msra.mxu0 0.0
        %2312 = vmatprep.subr.mxu0 0.0
        %2313 = vmatpush1.msra.mxu0 0.0
        %2314 = vmatprep.subr.mxu0 0.0
        %2315 = vmatpush1.msra.mxu0 0.0
        %2316 = vmatprep.subr.mxu0 0.0
        %2317 = vmatpush1.msra.mxu0 0.0
        %2318 = vmatprep.subr.mxu0 0.0
        %2319 = vmatpush1.msra.mxu0 0.0
        %2320 = vmatprep.subr.mxu0 0.0
        %2321 = vmatpush1.msra.mxu0 0.0
        %2322 = vmatprep.subr.mxu0 0.0
        %2323 = vmatpush1.msra.mxu0 0.0
        %2324 = vmatprep.subr.mxu0 0.0
        %2325 = vmatpush1.msra.mxu0 0.0
        %2326 = vmatprep.subr.mxu0 0.0
        %2327 = vmatpush1.msra.mxu0 0.0
        %2328 = vmatprep.subr.mxu0 0.0
        %2329 = vmatpush1.msra.mxu0 0.0
        %2330 = vmatprep.subr.mxu0 0.0
        %2331 = vmatpush1.msra.mxu0 0.0
        %2332 = vmatprep.subr.mxu0 0.0
        %2333 = vmatpush1.msra.mxu0 0.0
        %2334 = vmatprep.subr.mxu0 0.0
        %2335 = vmatpush1.msra.mxu0 0.0
        %2336 = vmatprep.subr.mxu0 0.0
        %2337 = vmatpush1.msra.mxu0 0.0
        %2338 = vmatprep.subr.mxu0 0.0
        %2339 = vmatpush1.msra.mxu0 0.0
        %2340 = vmatprep.subr.mxu0 0.0
        %2341 = vmatpush1.msra.mxu0 0.0
        %2342 = vmatprep.subr.mxu0 0.0
        %2343 = vmatpush1.msra.mxu0 0.0
        %2344 = vmatprep.subr.mxu0 0.0
        %2345 = vmatpush1.msra.mxu0 0.0
        %2346 = vmatprep.subr.mxu0 0.0
        %2347 = vmatpush1.msra.mxu0 0.0
        %2348 = vmatprep.subr.mxu0 0.0
        %2349 = vmatpush1.msra.mxu0 0.0
        %2350 = vmatprep.mubr.f32.mxu0 0.0
        %2351 = vmatmul.mubr.f32.gmra.mrb[0].mxu0 %v2284
        %v2352 = vpop.f32.mrb[0].mxu0
        %v2353 = vadd.f32 0.0, %v2352
        %v2354 = vpop.f32.mrb[0].mxu0
        %2355 = vdwg.mxu0
        %2356 = vst.msk [vmem:[#allocation5 + $0xc] sm:$0x1] %vm1794, %v2353
        %s2357 = scalar_lea.vmem [#allocation2], 32
        %v2358 = vld [vmem:[%s2357] sm:$0xff]
        %v2359 = vmul.f32 %v2358, %v2200
        %s2360 = scalar_lea.vmem [#allocation3], 32
        %v2361 = vld [vmem:[%s2360] sm:$0xff]
        %v2362 = vadd.f32 %v2359, %v2361
        %s2363 = scalar_lea.vmem [#allocation2], 88
        %v2364 = vld [vmem:[%s2363] sm:$0xff]
        %v2365 = vmul.f32 %v2364, %v2206
        %s2366 = scalar_lea.vmem [#allocation3], 88
        %v2367 = vld [vmem:[%s2366] sm:$0xff]
        %v2368 = vadd.f32 %v2365, %v2367
        %v2369 = vld [vmem:[#allocation4 + $0x4] sm:$0x1]
        %v2371 = vsel %vm1707, %v2369, 0
        %2373 = vmatprep.subr.mxu0 0.0
        %2374 = vmatpush1.msra.mxu0 %v2362
        %2375 = vmatprep.subr.mxu0 0.0
        %2376 = vmatpush1.msra.mxu0 0.0
        %2377 = vmatprep.subr.mxu0 0.0
        %2378 = vmatpush1.msra.mxu0 0.0
        %2379 = vmatprep.subr.mxu0 0.0
        %2380 = vmatpush1.msra.mxu0 0.0
        %2381 = vmatprep.subr.mxu0 0.0
        %2382 = vmatpush1.msra.mxu0 0.0
        %2383 = vmatprep.subr.mxu0 0.0
        %2384 = vmatpush1.msra.mxu0 0.0
        %2385 = vmatprep.subr.mxu0 0.0
        %2386 = vmatpush1.msra.mxu0 0.0
        %2387 = vmatprep.subr.mxu0 0.0
        %2388 = vmatpush1.msra.mxu0 0.0
        %2389 = vmatprep.subr.mxu0 0.0
        %2390 = vmatpush1.msra.mxu0 0.0
        %2391 = vmatprep.subr.mxu0 0.0
        %2392 = vmatpush1.msra.mxu0 0.0
        %2393 = vmatprep.subr.mxu0 0.0
        %2394 = vmatpush1.msra.mxu0 0.0
        %2395 = vmatprep.subr.mxu0 0.0
        %2396 = vmatpush1.msra.mxu0 0.0
        %2397 = vmatprep.subr.mxu0 0.0
        %2398 = vmatpush1.msra.mxu0 0.0
        %2399 = vmatprep.subr.mxu0 0.0
        %2400 = vmatpush1.msra.mxu0 0.0
        %2401 = vmatprep.subr.mxu0 0.0
        %2402 = vmatpush1.msra.mxu0 0.0
        %2403 = vmatprep.subr.mxu0 0.0
        %2404 = vmatpush1.msra.mxu0 0.0
        %2405 = vmatprep.subr.mxu0 0.0
        %2406 = vmatpush1.msra.mxu0 0.0
        %2407 = vmatprep.subr.mxu0 0.0
        %2408 = vmatpush1.msra.mxu0 0.0
        %2409 = vmatprep.subr.mxu0 0.0
        %2410 = vmatpush1.msra.mxu0 0.0
        %2411 = vmatprep.subr.mxu0 0.0
        %2412 = vmatpush1.msra.mxu0 0.0
        %2413 = vmatprep.subr.mxu0 0.0
        %2414 = vmatpush1.msra.mxu0 0.0
        %2415 = vmatprep.subr.mxu0 0.0
        %2416 = vmatpush1.msra.mxu0 0.0
        %2417 = vmatprep.subr.mxu0 0.0
        %2418 = vmatpush1.msra.mxu0 0.0
        %2419 = vmatprep.subr.mxu0 0.0
        %2420 = vmatpush1.msra.mxu0 0.0
        %2421 = vmatprep.subr.mxu0 0.0
        %2422 = vmatpush1.msra.mxu0 0.0
        %2423 = vmatprep.subr.mxu0 0.0
        %2424 = vmatpush1.msra.mxu0 0.0
        %2425 = vmatprep.subr.mxu0 0.0
        %2426 = vmatpush1.msra.mxu0 0.0
        %2427 = vmatprep.subr.mxu0 0.0
        %2428 = vmatpush1.msra.mxu0 0.0
        %2429 = vmatprep.subr.mxu0 0.0
        %2430 = vmatpush1.msra.mxu0 0.0
        %2431 = vmatprep.subr.mxu0 0.0
        %2432 = vmatpush1.msra.mxu0 0.0
        %2433 = vmatprep.subr.mxu0 0.0
        %2434 = vmatpush1.msra.mxu0 0.0
        %2435 = vmatprep.subr.mxu0 0.0
        %2436 = vmatpush1.msra.mxu0 0.0
        %2437 = vmatprep.mubr.f32.mxu0 0.0
        %2438 = vmatmul.mubr.f32.gmra.mrb[0].mxu0 %v2371
        %v2439 = vpop.f32.mrb[0].mxu0
        %v2440 = vadd.f32 0.0, %v2439
        %v2441 = vpop.f32.mrb[0].mxu0
        %2442 = vdwg.mxu0
        %2443 = vst.msk [vmem:[#allocation5 + $0x4] sm:$0x1] %vm1794, %v2440
        %v2444 = vld [vmem:[#allocation4 + $0xb] sm:$0x1]
        %v2446 = vsel %vm1707, %v2444, 0
        %2448 = vmatprep.subr.mxu0 0.0
        %2449 = vmatpush1.msra.mxu0 %v2368
        %2450 = vmatprep.subr.mxu0 0.0
        %2451 = vmatpush1.msra.mxu0 0.0
        %2452 = vmatprep.subr.mxu0 0.0
        %2453 = vmatpush1.msra.mxu0 0.0
        %2454 = vmatprep.subr.mxu0 0.0
        %2455 = vmatpush1.msra.mxu0 0.0
        %2456 = vmatprep.subr.mxu0 0.0
        %2457 = vmatpush1.msra.mxu0 0.0
        %2458 = vmatprep.subr.mxu0 0.0
        %2459 = vmatpush1.msra.mxu0 0.0
        %2460 = vmatprep.subr.mxu0 0.0
        %2461 = vmatpush1.msra.mxu0 0.0
        %2462 = vmatprep.subr.mxu0 0.0
        %2463 = vmatpush1.msra.mxu0 0.0
        %2464 = vmatprep.subr.mxu0 0.0
        %2465 = vmatpush1.msra.mxu0 0.0
        %2466 = vmatprep.subr.mxu0 0.0
        %2467 = vmatpush1.msra.mxu0 0.0
        %2468 = vmatprep.subr.mxu0 0.0
        %2469 = vmatpush1.msra.mxu0 0.0
        %2470 = vmatprep.subr.mxu0 0.0
        %2471 = vmatpush1.msra.mxu0 0.0
        %2472 = vmatprep.subr.mxu0 0.0
        %2473 = vmatpush1.msra.mxu0 0.0
        %2474 = vmatprep.subr.mxu0 0.0
        %2475 = vmatpush1.msra.mxu0 0.0
        %2476 = vmatprep.subr.mxu0 0.0
        %2477 = vmatpush1.msra.mxu0 0.0
        %2478 = vmatprep.subr.mxu0 0.0
        %2479 = vmatpush1.msra.mxu0 0.0
        %2480 = vmatprep.subr.mxu0 0.0
        %2481 = vmatpush1.msra.mxu0 0.0
        %2482 = vmatprep.subr.mxu0 0.0
        %2483 = vmatpush1.msra.mxu0 0.0
        %2484 = vmatprep.subr.mxu0 0.0
        %2485 = vmatpush1.msra.mxu0 0.0
        %2486 = vmatprep.subr.mxu0 0.0
        %2487 = vmatpush1.msra.mxu0 0.0
        %2488 = vmatprep.subr.mxu0 0.0
        %2489 = vmatpush1.msra.mxu0 0.0
        %2490 = vmatprep.subr.mxu0 0.0
        %2491 = vmatpush1.msra.mxu0 0.0
        %2492 = vmatprep.subr.mxu0 0.0
        %2493 = vmatpush1.msra.mxu0 0.0
        %2494 = vmatprep.subr.mxu0 0.0
        %2495 = vmatpush1.msra.mxu0 0.0
        %2496 = vmatprep.subr.mxu0 0.0
        %2497 = vmatpush1.msra.mxu0 0.0
        %2498 = vmatprep.subr.mxu0 0.0
        %2499 = vmatpush1.msra.mxu0 0.0
        %2500 = vmatprep.subr.mxu0 0.0
        %2501 = vmatpush1.msra.mxu0 0.0
        %2502 = vmatprep.subr.mxu0 0.0
        %2503 = vmatpush1.msra.mxu0 0.0
        %2504 = vmatprep.subr.mxu0 0.0
        %2505 = vmatpush1.msra.mxu0 0.0
        %2506 = vmatprep.subr.mxu0 0.0
        %2507 = vmatpush1.msra.mxu0 0.0
        %2508 = vmatprep.subr.mxu0 0.0
        %2509 = vmatpush1.msra.mxu0 0.0
        %2510 = vmatprep.subr.mxu0 0.0
        %2511 = vmatpush1.msra.mxu0 0.0
        %2512 = vmatprep.mubr.f32.mxu0 0.0
        %2513 = vmatmul.mubr.f32.gmra.mrb[0].mxu0 %v2446
        %v2514 = vpop.f32.mrb[0].mxu0
        %v2515 = vadd.f32 0.0, %v2514
        %v2516 = vpop.f32.mrb[0].mxu0
        %2517 = vdwg.mxu0
        %2518 = vst.msk [vmem:[#allocation5 + $0xb] sm:$0x1] %vm1794, %v2515
        %s2519 = scalar_lea.vmem [#allocation2], 40
        %v2520 = vld [vmem:[%s2519] sm:$0xff]
        %v2521 = vmul.f32 %v2520, %v2362
        %s2522 = scalar_lea.vmem [#allocation3], 40
        %v2523 = vld [vmem:[%s2522] sm:$0xff]
        %v2524 = vadd.f32 %v2521, %v2523
        %s2525 = scalar_lea.vmem [#allocation2], 80
        %v2526 = vld [vmem:[%s2525] sm:$0xff]
        %v2527 = vmul.f32 %v2526, %v2368
        %s2528 = scalar_lea.vmem [#allocation3], 80
        %v2529 = vld [vmem:[%s2528] sm:$0xff]
        %v2530 = vadd.f32 %v2527, %v2529
        %v2531 = vld [vmem:[#allocation4 + $0x5] sm:$0x1]
        %v2533 = vsel %vm1707, %v2531, 0
        %2535 = vmatprep.subr.mxu0 0.0
        %2536 = vmatpush1.msra.mxu0 %v2524
        %2537 = vmatprep.subr.mxu0 0.0
        %2538 = vmatpush1.msra.mxu0 0.0
        %2539 = vmatprep.subr.mxu0 0.0
        %2540 = vmatpush1.msra.mxu0 0.0
        %2541 = vmatprep.subr.mxu0 0.0
        %2542 = vmatpush1.msra.mxu0 0.0
        %2543 = vmatprep.subr.mxu0 0.0
        %2544 = vmatpush1.msra.mxu0 0.0
        %2545 = vmatprep.subr.mxu0 0.0
        %2546 = vmatpush1.msra.mxu0 0.0
        %2547 = vmatprep.subr.mxu0 0.0
        %2548 = vmatpush1.msra.mxu0 0.0
        %2549 = vmatprep.subr.mxu0 0.0
        %2550 = vmatpush1.msra.mxu0 0.0
        %2551 = vmatprep.subr.mxu0 0.0
        %2552 = vmatpush1.msra.mxu0 0.0
        %2553 = vmatprep.subr.mxu0 0.0
        %2554 = vmatpush1.msra.mxu0 0.0
        %2555 = vmatprep.subr.mxu0 0.0
        %2556 = vmatpush1.msra.mxu0 0.0
        %2557 = vmatprep.subr.mxu0 0.0
        %2558 = vmatpush1.msra.mxu0 0.0
        %2559 = vmatprep.subr.mxu0 0.0
        %2560 = vmatpush1.msra.mxu0 0.0
        %2561 = vmatprep.subr.mxu0 0.0
        %2562 = vmatpush1.msra.mxu0 0.0
        %2563 = vmatprep.subr.mxu0 0.0
        %2564 = vmatpush1.msra.mxu0 0.0
        %2565 = vmatprep.subr.mxu0 0.0
        %2566 = vmatpush1.msra.mxu0 0.0
        %2567 = vmatprep.subr.mxu0 0.0
        %2568 = vmatpush1.msra.mxu0 0.0
        %2569 = vmatprep.subr.mxu0 0.0
        %2570 = vmatpush1.msra.mxu0 0.0
        %2571 = vmatprep.subr.mxu0 0.0
        %2572 = vmatpush1.msra.mxu0 0.0
        %2573 = vmatprep.subr.mxu0 0.0
        %2574 = vmatpush1.msra.mxu0 0.0
        %2575 = vmatprep.subr.mxu0 0.0
        %2576 = vmatpush1.msra.mxu0 0.0
        %2577 = vmatprep.subr.mxu0 0.0
        %2578 = vmatpush1.msra.mxu0 0.0
        %2579 = vmatprep.subr.mxu0 0.0
        %2580 = vmatpush1.msra.mxu0 0.0
        %2581 = vmatprep.subr.mxu0 0.0
        %2582 = vmatpush1.msra.mxu0 0.0
        %2583 = vmatprep.subr.mxu0 0.0
        %2584 = vmatpush1.msra.mxu0 0.0
        %2585 = vmatprep.subr.mxu0 0.0
        %2586 = vmatpush1.msra.mxu0 0.0
        %2587 = vmatprep.subr.mxu0 0.0
        %2588 = vmatpush1.msra.mxu0 0.0
        %2589 = vmatprep.subr.mxu0 0.0
        %2590 = vmatpush1.msra.mxu0 0.0
        %2591 = vmatprep.subr.mxu0 0.0
        %2592 = vmatpush1.msra.mxu0 0.0
        %2593 = vmatprep.subr.mxu0 0.0
        %2594 = vmatpush1.msra.mxu0 0.0
        %2595 = vmatprep.subr.mxu0 0.0
        %2596 = vmatpush1.msra.mxu0 0.0
        %2597 = vmatprep.subr.mxu0 0.0
        %2598 = vmatpush1.msra.mxu0 0.0
        %2599 = vmatprep.mubr.f32.mxu0 0.0
        %2600 = vmatmul.mubr.f32.gmra.mrb[0].mxu0 %v2533
        %v2601 = vpop.f32.mrb[0].mxu0
        %v2602 = vadd.f32 0.0, %v2601
        %v2603 = vpop.f32.mrb[0].mxu0
        %2604 = vdwg.mxu0
        %2605 = vst.msk [vmem:[#allocation5 + $0x5] sm:$0x1] %vm1794, %v2602
        %v2606 = vld [vmem:[#allocation4 + $0xa] sm:$0x1]
        %v2608 = vsel %vm1707, %v2606, 0
        %2610 = vmatprep.subr.mxu0 0.0
        %2611 = vmatpush1.msra.mxu0 %v2530
        %2612 = vmatprep.subr.mxu0 0.0
        %2613 = vmatpush1.msra.mxu0 0.0
        %2614 = vmatprep.subr.mxu0 0.0
        %2615 = vmatpush1.msra.mxu0 0.0
        %2616 = vmatprep.subr.mxu0 0.0
        %2617 = vmatpush1.msra.mxu0 0.0
        %2618 = vmatprep.subr.mxu0 0.0
        %2619 = vmatpush1.msra.mxu0 0.0
        %2620 = vmatprep.subr.mxu0 0.0
        %2621 = vmatpush1.msra.mxu0 0.0
        %2622 = vmatprep.subr.mxu0 0.0
        %2623 = vmatpush1.msra.mxu0 0.0
        %2624 = vmatprep.subr.mxu0 0.0
        %2625 = vmatpush1.msra.mxu0 0.0
        %2626 = vmatprep.subr.mxu0 0.0
        %2627 = vmatpush1.msra.mxu0 0.0
        %2628 = vmatprep.subr.mxu0 0.0
        %2629 = vmatpush1.msra.mxu0 0.0
        %2630 = vmatprep.subr.mxu0 0.0
        %2631 = vmatpush1.msra.mxu0 0.0
        %2632 = vmatprep.subr.mxu0 0.0
        %2633 = vmatpush1.msra.mxu0 0.0
        %2634 = vmatprep.subr.mxu0 0.0
        %2635 = vmatpush1.msra.mxu0 0.0
        %2636 = vmatprep.subr.mxu0 0.0
        %2637 = vmatpush1.msra.mxu0 0.0
        %2638 = vmatprep.subr.mxu0 0.0
        %2639 = vmatpush1.msra.mxu0 0.0
        %2640 = vmatprep.subr.mxu0 0.0
        %2641 = vmatpush1.msra.mxu0 0.0
        %2642 = vmatprep.subr.mxu0 0.0
        %2643 = vmatpush1.msra.mxu0 0.0
        %2644 = vmatprep.subr.mxu0 0.0
        %2645 = vmatpush1.msra.mxu0 0.0
        %2646 = vmatprep.subr.mxu0 0.0
        %2647 = vmatpush1.msra.mxu0 0.0
        %2648 = vmatprep.subr.mxu0 0.0
        %2649 = vmatpush1.msra.mxu0 0.0
        %2650 = vmatprep.subr.mxu0 0.0
        %2651 = vmatpush1.msra.mxu0 0.0
        %2652 = vmatprep.subr.mxu0 0.0
        %2653 = vmatpush1.msra.mxu0 0.0
        %2654 = vmatprep.subr.mxu0 0.0
        %2655 = vmatpush1.msra.mxu0 0.0
        %2656 = vmatprep.subr.mxu0 0.0
        %2657 = vmatpush1.msra.mxu0 0.0
        %2658 = vmatprep.subr.mxu0 0.0
        %2659 = vmatpush1.msra.mxu0 0.0
        %2660 = vmatprep.subr.mxu0 0.0
        %2661 = vmatpush1.msra.mxu0 0.0
        %2662 = vmatprep.subr.mxu0 0.0
        %2663 = vmatpush1.msra.mxu0 0.0
        %2664 = vmatprep.subr.mxu0 0.0
        %2665 = vmatpush1.msra.mxu0 0.0
        %2666 = vmatprep.subr.mxu0 0.0
        %2667 = vmatpush1.msra.mxu0 0.0
        %2668 = vmatprep.subr.mxu0 0.0
        %2669 = vmatpush1.msra.mxu0 0.0
        %2670 = vmatprep.subr.mxu0 0.0
        %2671 = vmatpush1.msra.mxu0 0.0
        %2672 = vmatprep.subr.mxu0 0.0
        %2673 = vmatpush1.msra.mxu0 0.0
        %2674 = vmatprep.mubr.f32.mxu0 0.0
        %2675 = vmatmul.mubr.f32.gmra.mrb[0].mxu0 %v2608
        %v2676 = vpop.f32.mrb[0].mxu0
        %v2677 = vadd.f32 0.0, %v2676
        %v2678 = vpop.f32.mrb[0].mxu0
        %2679 = vdwg.mxu0
        %2680 = vst.msk [vmem:[#allocation5 + $0xa] sm:$0x1] %vm1794, %v2677
        %s2681 = scalar_lea.vmem [#allocation2], 48
        %v2682 = vld [vmem:[%s2681] sm:$0xff]
        %v2683 = vmul.f32 %v2682, %v2524
        %s2684 = scalar_lea.vmem [#allocation3], 48
        %v2685 = vld [vmem:[%s2684] sm:$0xff]
        %v2686 = vadd.f32 %v2683, %v2685
        %s2687 = scalar_lea.vmem [#allocation2], 72
        %v2688 = vld [vmem:[%s2687] sm:$0xff]
        %v2689 = vmul.f32 %v2688, %v2530
        %s2690 = scalar_lea.vmem [#allocation3], 72
        %v2691 = vld [vmem:[%s2690] sm:$0xff]
        %v2692 = vadd.f32 %v2689, %v2691
        %v2693 = vld [vmem:[#allocation4 + $0x6] sm:$0x1]
        %v2695 = vsel %vm1707, %v2693, 0
        %2697 = vmatprep.subr.mxu0 0.0
        %2698 = vmatpush1.msra.mxu0 %v2686
        %2699 = vmatprep.subr.mxu0 0.0
        %2700 = vmatpush1.msra.mxu0 0.0
        %2701 = vmatprep.subr.mxu0 0.0
        %2702 = vmatpush1.msra.mxu0 0.0
        %2703 = vmatprep.subr.mxu0 0.0
        %2704 = vmatpush1.msra.mxu0 0.0
        %2705 = vmatprep.subr.mxu0 0.0
        %2706 = vmatpush1.msra.mxu0 0.0
        %2707 = vmatprep.subr.mxu0 0.0
        %2708 = vmatpush1.msra.mxu0 0.0
        %2709 = vmatprep.subr.mxu0 0.0
        %2710 = vmatpush1.msra.mxu0 0.0
        %2711 = vmatprep.subr.mxu0 0.0
        %2712 = vmatpush1.msra.mxu0 0.0
        %2713 = vmatprep.subr.mxu0 0.0
        %2714 = vmatpush1.msra.mxu0 0.0
        %2715 = vmatprep.subr.mxu0 0.0
        %2716 = vmatpush1.msra.mxu0 0.0
        %2717 = vmatprep.subr.mxu0 0.0
        %2718 = vmatpush1.msra.mxu0 0.0
        %2719 = vmatprep.subr.mxu0 0.0
        %2720 = vmatpush1.msra.mxu0 0.0
        %2721 = vmatprep.subr.mxu0 0.0
        %2722 = vmatpush1.msra.mxu0 0.0
        %2723 = vmatprep.subr.mxu0 0.0
        %2724 = vmatpush1.msra.mxu0 0.0
        %2725 = vmatprep.subr.mxu0 0.0
        %2726 = vmatpush1.msra.mxu0 0.0
        %2727 = vmatprep.subr.mxu0 0.0
        %2728 = vmatpush1.msra.mxu0 0.0
        %2729 = vmatprep.subr.mxu0 0.0
        %2730 = vmatpush1.msra.mxu0 0.0
        %2731 = vmatprep.subr.mxu0 0.0
        %2732 = vmatpush1.msra.mxu0 0.0
        %2733 = vmatprep.subr.mxu0 0.0
        %2734 = vmatpush1.msra.mxu0 0.0
        %2735 = vmatprep.subr.mxu0 0.0
        %2736 = vmatpush1.msra.mxu0 0.0
        %2737 = vmatprep.subr.mxu0 0.0
        %2738 = vmatpush1.msra.mxu0 0.0
        %2739 = vmatprep.subr.mxu0 0.0
        %2740 = vmatpush1.msra.mxu0 0.0
        %2741 = vmatprep.subr.mxu0 0.0
        %2742 = vmatpush1.msra.mxu0 0.0
        %2743 = vmatprep.subr.mxu0 0.0
        %2744 = vmatpush1.msra.mxu0 0.0
        %2745 = vmatprep.subr.mxu0 0.0
        %2746 = vmatpush1.msra.mxu0 0.0
        %2747 = vmatprep.subr.mxu0 0.0
        %2748 = vmatpush1.msra.mxu0 0.0
        %2749 = vmatprep.subr.mxu0 0.0
        %2750 = vmatpush1.msra.mxu0 0.0
        %2751 = vmatprep.subr.mxu0 0.0
        %2752 = vmatpush1.msra.mxu0 0.0
        %2753 = vmatprep.subr.mxu0 0.0
        %2754 = vmatpush1.msra.mxu0 0.0
        %2755 = vmatprep.subr.mxu0 0.0
        %2756 = vmatpush1.msra.mxu0 0.0
        %2757 = vmatprep.subr.mxu0 0.0
        %2758 = vmatpush1.msra.mxu0 0.0
        %2759 = vmatprep.subr.mxu0 0.0
        %2760 = vmatpush1.msra.mxu0 0.0
        %2761 = vmatprep.mubr.f32.mxu0 0.0
        %2762 = vmatmul.mubr.f32.gmra.mrb[0].mxu0 %v2695
        %v2763 = vpop.f32.mrb[0].mxu0
        %v2764 = vadd.f32 0.0, %v2763
        %v2765 = vpop.f32.mrb[0].mxu0
        %2766 = vdwg.mxu0
        %2767 = vst.msk [vmem:[#allocation5 + $0x6] sm:$0x1] %vm1794, %v2764
        %v2768 = vld [vmem:[#allocation4 + $0x9] sm:$0x1]
        %v2770 = vsel %vm1707, %v2768, 0
        %2772 = vmatprep.subr.mxu0 0.0
        %2773 = vmatpush1.msra.mxu0 %v2692
        %2774 = vmatprep.subr.mxu0 0.0
        %2775 = vmatpush1.msra.mxu0 0.0
        %2776 = vmatprep.subr.mxu0 0.0
        %2777 = vmatpush1.msra.mxu0 0.0
        %2778 = vmatprep.subr.mxu0 0.0
        %2779 = vmatpush1.msra.mxu0 0.0
        %2780 = vmatprep.subr.mxu0 0.0
        %2781 = vmatpush1.msra.mxu0 0.0
        %2782 = vmatprep.subr.mxu0 0.0
        %2783 = vmatpush1.msra.mxu0 0.0
        %2784 = vmatprep.subr.mxu0 0.0
        %2785 = vmatpush1.msra.mxu0 0.0
        %2786 = vmatprep.subr.mxu0 0.0
        %2787 = vmatpush1.msra.mxu0 0.0
        %2788 = vmatprep.subr.mxu0 0.0
        %2789 = vmatpush1.msra.mxu0 0.0
        %2790 = vmatprep.subr.mxu0 0.0
        %2791 = vmatpush1.msra.mxu0 0.0
        %2792 = vmatprep.subr.mxu0 0.0
        %2793 = vmatpush1.msra.mxu0 0.0
        %2794 = vmatprep.subr.mxu0 0.0
        %2795 = vmatpush1.msra.mxu0 0.0
        %2796 = vmatprep.subr.mxu0 0.0
        %2797 = vmatpush1.msra.mxu0 0.0
        %2798 = vmatprep.subr.mxu0 0.0
        %2799 = vmatpush1.msra.mxu0 0.0
        %2800 = vmatprep.subr.mxu0 0.0
        %2801 = vmatpush1.msra.mxu0 0.0
        %2802 = vmatprep.subr.mxu0 0.0
        %2803 = vmatpush1.msra.mxu0 0.0
        %2804 = vmatprep.subr.mxu0 0.0
        %2805 = vmatpush1.msra.mxu0 0.0
        %2806 = vmatprep.subr.mxu0 0.0
        %2807 = vmatpush1.msra.mxu0 0.0
        %2808 = vmatprep.subr.mxu0 0.0
        %2809 = vmatpush1.msra.mxu0 0.0
        %2810 = vmatprep.subr.mxu0 0.0
        %2811 = vmatpush1.msra.mxu0 0.0
        %2812 = vmatprep.subr.mxu0 0.0
        %2813 = vmatpush1.msra.mxu0 0.0
        %2814 = vmatprep.subr.mxu0 0.0
        %2815 = vmatpush1.msra.mxu0 0.0
        %2816 = vmatprep.subr.mxu0 0.0
        %2817 = vmatpush1.msra.mxu0 0.0
        %2818 = vmatprep.subr.mxu0 0.0
        %2819 = vmatpush1.msra.mxu0 0.0
        %2820 = vmatprep.subr.mxu0 0.0
        %2821 = vmatpush1.msra.mxu0 0.0
        %2822 = vmatprep.subr.mxu0 0.0
        %2823 = vmatpush1.msra.mxu0 0.0
        %2824 = vmatprep.subr.mxu0 0.0
        %2825 = vmatpush1.msra.mxu0 0.0
        %2826 = vmatprep.subr.mxu0 0.0
        %2827 = vmatpush1.msra.mxu0 0.0
        %2828 = vmatprep.subr.mxu0 0.0
        %2829 = vmatpush1.msra.mxu0 0.0
        %2830 = vmatprep.subr.mxu0 0.0
        %2831 = vmatpush1.msra.mxu0 0.0
        %2832 = vmatprep.subr.mxu0 0.0
        %2833 = vmatpush1.msra.mxu0 0.0
        %2834 = vmatprep.subr.mxu0 0.0
        %2835 = vmatpush1.msra.mxu0 0.0
        %2836 = vmatprep.mubr.f32.mxu0 0.0
        %2837 = vmatmul.mubr.f32.gmra.mrb[0].mxu0 %v2770
        %v2838 = vpop.f32.mrb[0].mxu0
        %v2839 = vadd.f32 0.0, %v2838
        %v2840 = vpop.f32.mrb[0].mxu0
        %2841 = vdwg.mxu0
        %2842 = vst.msk [vmem:[#allocation5 + $0x9] sm:$0x1] %vm1794, %v2839
        %s2843 = scalar_lea.vmem [#allocation2], 56
        %v2844 = vld [vmem:[%s2843] sm:$0xff]
        %v2845 = vmul.f32 %v2844, %v2686
        %s2846 = scalar_lea.vmem [#allocation3], 56
        %v2847 = vld [vmem:[%s2846] sm:$0xff]
        %v2848 = vadd.f32 %v2845, %v2847
        %s2849 = scalar_lea.vmem [#allocation2], 64
        %v2850 = vld [vmem:[%s2849] sm:$0xff]
        %v2851 = vmul.f32 %v2850, %v2692
        %s2852 = scalar_lea.vmem [#allocation3], 64
        %v2853 = vld [vmem:[%s2852] sm:$0xff]
        %v2854 = vadd.f32 %v2851, %v2853
        %v2855 = vld [vmem:[#allocation4 + $0x7] sm:$0x1]
        %v2857 = vsel %vm1707, %v2855, 0
        %2859 = vmatprep.subr.mxu0 0.0
        %2860 = vmatpush1.msra.mxu0 %v2848
        %2861 = vmatprep.subr.mxu0 0.0
        %2862 = vmatpush1.msra.mxu0 0.0
        %2863 = vmatprep.subr.mxu0 0.0
        %2864 = vmatpush1.msra.mxu0 0.0
        %2865 = vmatprep.subr.mxu0 0.0
        %2866 = vmatpush1.msra.mxu0 0.0
        %2867 = vmatprep.subr.mxu0 0.0
        %2868 = vmatpush1.msra.mxu0 0.0
        %2869 = vmatprep.subr.mxu0 0.0
        %2870 = vmatpush1.msra.mxu0 0.0
        %2871 = vmatprep.subr.mxu0 0.0
        %2872 = vmatpush1.msra.mxu0 0.0
        %2873 = vmatprep.subr.mxu0 0.0
        %2874 = vmatpush1.msra.mxu0 0.0
        %2875 = vmatprep.subr.mxu0 0.0
        %2876 = vmatpush1.msra.mxu0 0.0
        %2877 = vmatprep.subr.mxu0 0.0
        %2878 = vmatpush1.msra.mxu0 0.0
        %2879 = vmatprep.subr.mxu0 0.0
        %2880 = vmatpush1.msra.mxu0 0.0
        %2881 = vmatprep.subr.mxu0 0.0
        %2882 = vmatpush1.msra.mxu0 0.0
        %2883 = vmatprep.subr.mxu0 0.0
        %2884 = vmatpush1.msra.mxu0 0.0
        %2885 = vmatprep.subr.mxu0 0.0
        %2886 = vmatpush1.msra.mxu0 0.0
        %2887 = vmatprep.subr.mxu0 0.0
        %2888 = vmatpush1.msra.mxu0 0.0
        %2889 = vmatprep.subr.mxu0 0.0
        %2890 = vmatpush1.msra.mxu0 0.0
        %2891 = vmatprep.subr.mxu0 0.0
        %2892 = vmatpush1.msra.mxu0 0.0
        %2893 = vmatprep.subr.mxu0 0.0
        %2894 = vmatpush1.msra.mxu0 0.0
        %2895 = vmatprep.subr.mxu0 0.0
        %2896 = vmatpush1.msra.mxu0 0.0
        %2897 = vmatprep.subr.mxu0 0.0
        %2898 = vmatpush1.msra.mxu0 0.0
        %2899 = vmatprep.subr.mxu0 0.0
        %2900 = vmatpush1.msra.mxu0 0.0
        %2901 = vmatprep.subr.mxu0 0.0
        %2902 = vmatpush1.msra.mxu0 0.0
        %2903 = vmatprep.subr.mxu0 0.0
        %2904 = vmatpush1.msra.mxu0 0.0
        %2905 = vmatprep.subr.mxu0 0.0
        %2906 = vmatpush1.msra.mxu0 0.0
        %2907 = vmatprep.subr.mxu0 0.0
        %2908 = vmatpush1.msra.mxu0 0.0
        %2909 = vmatprep.subr.mxu0 0.0
        %2910 = vmatpush1.msra.mxu0 0.0
        %2911 = vmatprep.subr.mxu0 0.0
        %2912 = vmatpush1.msra.mxu0 0.0
        %2913 = vmatprep.subr.mxu0 0.0
        %2914 = vmatpush1.msra.mxu0 0.0
        %2915 = vmatprep.subr.mxu0 0.0
        %2916 = vmatpush1.msra.mxu0 0.0
        %2917 = vmatprep.subr.mxu0 0.0
        %2918 = vmatpush1.msra.mxu0 0.0
        %2919 = vmatprep.subr.mxu0 0.0
        %2920 = vmatpush1.msra.mxu0 0.0
        %2921 = vmatprep.subr.mxu0 0.0
        %2922 = vmatpush1.msra.mxu0 0.0
        %2923 = vmatprep.mubr.f32.mxu0 0.0
        %2924 = vmatmul.mubr.f32.gmra.mrb[0].mxu0 %v2857
        %v2925 = vpop.f32.mrb[0].mxu0
        %v2926 = vadd.f32 0.0, %v2925
        %v2927 = vpop.f32.mrb[0].mxu0
        %2928 = vdwg.mxu0
        %2929 = vst.msk [vmem:[#allocation5 + $0x7] sm:$0x1] %vm1794, %v2926
        %v2930 = vld [vmem:[#allocation4 + $0x8] sm:$0x1]
        %v2932 = vsel %vm1707, %v2930, 0
        %2934 = vmatprep.subr.mxu0 0.0
        %2935 = vmatpush1.msra.mxu0 %v2854
        %2936 = vmatprep.subr.mxu0 0.0
        %2937 = vmatpush1.msra.mxu0 0.0
        %2938 = vmatprep.subr.mxu0 0.0
        %2939 = vmatpush1.msra.mxu0 0.0
        %2940 = vmatprep.subr.mxu0 0.0
        %2941 = vmatpush1.msra.mxu0 0.0
        %2942 = vmatprep.subr.mxu0 0.0
        %2943 = vmatpush1.msra.mxu0 0.0
        %2944 = vmatprep.subr.mxu0 0.0
        %2945 = vmatpush1.msra.mxu0 0.0
        %2946 = vmatprep.subr.mxu0 0.0
        %2947 = vmatpush1.msra.mxu0 0.0
        %2948 = vmatprep.subr.mxu0 0.0
        %2949 = vmatpush1.msra.mxu0 0.0
        %2950 = vmatprep.subr.mxu0 0.0
        %2951 = vmatpush1.msra.mxu0 0.0
        %2952 = vmatprep.subr.mxu0 0.0
        %2953 = vmatpush1.msra.mxu0 0.0
        %2954 = vmatprep.subr.mxu0 0.0
        %2955 = vmatpush1.msra.mxu0 0.0
        %2956 = vmatprep.subr.mxu0 0.0
        %2957 = vmatpush1.msra.mxu0 0.0
        %2958 = vmatprep.subr.mxu0 0.0
        %2959 = vmatpush1.msra.mxu0 0.0
        %2960 = vmatprep.subr.mxu0 0.0
        %2961 = vmatpush1.msra.mxu0 0.0
        %2962 = vmatprep.subr.mxu0 0.0
        %2963 = vmatpush1.msra.mxu0 0.0
        %2964 = vmatprep.subr.mxu0 0.0
        %2965 = vmatpush1.msra.mxu0 0.0
        %2966 = vmatprep.subr.mxu0 0.0
        %2967 = vmatpush1.msra.mxu0 0.0
        %2968 = vmatprep.subr.mxu0 0.0
        %2969 = vmatpush1.msra.mxu0 0.0
        %2970 = vmatprep.subr.mxu0 0.0
        %2971 = vmatpush1.msra.mxu0 0.0
        %2972 = vmatprep.subr.mxu0 0.0
        %2973 = vmatpush1.msra.mxu0 0.0
        %2974 = vmatprep.subr.mxu0 0.0
        %2975 = vmatpush1.msra.mxu0 0.0
        %2976 = vmatprep.subr.mxu0 0.0
        %2977 = vmatpush1.msra.mxu0 0.0
        %2978 = vmatprep.subr.mxu0 0.0
        %2979 = vmatpush1.msra.mxu0 0.0
        %2980 = vmatprep.subr.mxu0 0.0
        %2981 = vmatpush1.msra.mxu0 0.0
        %2982 = vmatprep.subr.mxu0 0.0
        %2983 = vmatpush1.msra.mxu0 0.0
        %2984 = vmatprep.subr.mxu0 0.0
        %2985 = vmatpush1.msra.mxu0 0.0
        %2986 = vmatprep.subr.mxu0 0.0
        %2987 = vmatpush1.msra.mxu0 0.0
        %2988 = vmatprep.subr.mxu0 0.0
        %2989 = vmatpush1.msra.mxu0 0.0
        %2990 = vmatprep.subr.mxu0 0.0
        %2991 = vmatpush1.msra.mxu0 0.0
        %2992 = vmatprep.subr.mxu0 0.0
        %2993 = vmatpush1.msra.mxu0 0.0
        %2994 = vmatprep.subr.mxu0 0.0
        %2995 = vmatpush1.msra.mxu0 0.0
        %2996 = vmatprep.subr.mxu0 0.0
        %2997 = vmatpush1.msra.mxu0 0.0
        %2998 = vmatprep.mubr.f32.mxu0 0.0
        %2999 = vmatmul.mubr.f32.gmra.mrb[0].mxu0 %v2932
        %v3000 = vpop.f32.mrb[0].mxu0
        %v3001 = vadd.f32 0.0, %v3000
        %v3002 = vpop.f32.mrb[0].mxu0
        %3003 = vdwg.mxu0
        %3004 = vst.msk [vmem:[#allocation5 + $0x8] sm:$0x1] %vm1794, %v3001
        %v3005 = vld [vmem:[#allocation5] sm:$0xff]
        %v3006 = vld [vmem:[#allocation5 + $0x8] sm:$0xff]
        %v3007 = vld [vmem:[%s13] sm:$0x1]
        %v3009 = vlaneseq
        %v3010 = vshrl.u32 %v3009, 7
        %v3011 = vsub.s32 0, %v3010
        %v3012 = vrot.slane %v3007, %v3011
        %v3014 = vmul.f32 %v3012, %v777
        %v3015 = vmul.f32 %v3012, %v778
        %v3016 = vadd.f32 %v3005, %v3014
        %v3017 = vadd.f32 %v3006, %v3015
        %v3018 = vadd.f32 %v3016, %v3017
        %v3019 = vsub.f32 0.0, %v666
        %v3020 = vmul.f32 %v3019, 1.442695
        %v3021 = vpow.pop %v3020
        %v3022 = vadd.f32 %v3021, 1.0
        %v3023 = vrcp.pop %v3022
        %v3024 = vmul.f32 1.0, %v3023
        %v3025 = vmul.f32 %v666, %v3024
        %v3026 = vmul.f32 %v3025, 0.5
        %v3027 = vmul.f32 %v3018, %v3026
        %v3028 = vld [vmem:[%s14] sm:$0xff]
        %v3029 = vld [vmem:[%s14 + $0x8] sm:$0xff]
        %v3030 = vld [vmem:[%s14 + $0x10] sm:$0xff]
        %v3031 = vld [vmem:[%s14 + $0x18] sm:$0xff]
        %v3033 = vsel %vm783, %v3027, 0
        %3035 = vmatprep.subr.mxu0 0.0
        %3036 = vmatpush1.msra.mxu0 %v3028
        %3037 = vmatprep.subr.mxu0 0.0
        %3038 = vmatpush1.msra.mxu0 %v3029
        %3039 = vmatprep.subr.mxu0 0.0
        %3040 = vmatpush1.msra.mxu0 %v3030
        %3041 = vmatprep.subr.mxu0 0.0
        %3042 = vmatpush1.msra.mxu0 %v3031
        %3043 = vmatprep.subr.mxu0 0.0
        %3044 = vmatpush1.msra.mxu0 0.0
        %3045 = vmatprep.subr.mxu0 0.0
        %3046 = vmatpush1.msra.mxu0 0.0
        %3047 = vmatprep.subr.mxu0 0.0
        %3048 = vmatpush1.msra.mxu0 0.0
        %3049 = vmatprep.subr.mxu0 0.0
        %3050 = vmatpush1.msra.mxu0 0.0
        %3051 = vmatprep.subr.mxu0 0.0
        %3052 = vmatpush1.msra.mxu0 0.0
        %3053 = vmatprep.subr.mxu0 0.0
        %3054 = vmatpush1.msra.mxu0 0.0
        %3055 = vmatprep.subr.mxu0 0.0
        %3056 = vmatpush1.msra.mxu0 0.0
        %3057 = vmatprep.subr.mxu0 0.0
        %3058 = vmatpush1.msra.mxu0 0.0
        %3059 = vmatprep.subr.mxu0 0.0
        %3060 = vmatpush1.msra.mxu0 0.0
        %3061 = vmatprep.subr.mxu0 0.0
        %3062 = vmatpush1.msra.mxu0 0.0
        %3063 = vmatprep.subr.mxu0 0.0
        %3064 = vmatpush1.msra.mxu0 0.0
        %3065 = vmatprep.subr.mxu0 0.0
        %3066 = vmatpush1.msra.mxu0 0.0
        %3067 = vmatprep.subr.mxu0 0.0
        %3068 = vmatpush1.msra.mxu0 0.0
        %3069 = vmatprep.subr.mxu0 0.0
        %3070 = vmatpush1.msra.mxu0 0.0
        %3071 = vmatprep.subr.mxu0 0.0
        %3072 = vmatpush1.msra.mxu0 0.0
        %3073 = vmatprep.subr.mxu0 0.0
        %3074 = vmatpush1.msra.mxu0 0.0
        %3075 = vmatprep.subr.mxu0 0.0
        %3076 = vmatpush1.msra.mxu0 0.0
        %3077 = vmatprep.subr.mxu0 0.0
        %3078 = vmatpush1.msra.mxu0 0.0
        %3079 = vmatprep.subr.mxu0 0.0
        %3080 = vmatpush1.msra.mxu0 0.0
        %3081 = vmatprep.subr.mxu0 0.0
        %3082 = vmatpush1.msra.mxu0 0.0
        %3083 = vmatprep.subr.mxu0 0.0
        %3084 = vmatpush1.msra.mxu0 0.0
        %3085 = vmatprep.subr.mxu0 0.0
        %3086 = vmatpush1.msra.mxu0 0.0
        %3087 = vmatprep.subr.mxu0 0.0
        %3088 = vmatpush1.msra.mxu0 0.0
        %3089 = vmatprep.subr.mxu0 0.0
        %3090 = vmatpush1.msra.mxu0 0.0
        %3091 = vmatprep.subr.mxu0 0.0
        %3092 = vmatpush1.msra.mxu0 0.0
        %3093 = vmatprep.subr.mxu0 0.0
        %3094 = vmatpush1.msra.mxu0 0.0
        %3095 = vmatprep.subr.mxu0 0.0
        %3096 = vmatpush1.msra.mxu0 0.0
        %3097 = vmatprep.subr.mxu0 0.0
        %3098 = vmatpush1.msra.mxu0 0.0
        %3099 = vmatprep.mubr.f32.mxu0 0.0
        %3100 = vmatmul.mubr.f32.gmra.mrb[0].mxu0 %v3033
        %v3101 = vpop.f32.mrb[0].mxu0
        %v3102 = vadd.f32 %v490, %v3101
        %v3103 = vpop.f32.mrb[0].mxu0
        %3104 = vdwg.mxu0
        %v3105 = vsel %vm491, %v3102, 0.0
        %3106 = vadd.xlane.f32.xlu0 %v3105
        %v3107 = vpop.xlane.xlu0 %3106
        %v3108 = vmul.f32 %v3107, %v495
        %v3109 = vsub.f32 %v3102, %v3108
        %v3110 = vmul.f32 %v3109, %v3109
        %v3111 = vsel %vm491, %v3110, 0.0
        %3112 = vadd.xlane.f32.xlu0 %v3111
        %v3113 = vpop.xlane.xlu0 %3112
        %v3114 = vmul.f32 %v3113, %v495
        %v3115 = vadd.f32 %v3114, 1e-05
        %v3116 = vrsqrt.pop %v3115
        %v3117 = vmul.f32 %v3109, %v3116
        %s3118 = scalar_lea.vmem %s1, 1
        %v3119 = vld [vmem:[%s3118] sm:$0x1]
        %v3121 = vlaneseq
        %v3122 = vshrl.u32 %v3121, 7
        %v3123 = vsub.s32 0, %v3122
        %v3124 = vrot.slane %v3119, %v3123
        %v3126 = vmul.f32 %v3117, %v3124
        %s3127 = scalar_lea.vmem %s2, 1
        %v3128 = vld [vmem:[%s3127] sm:$0x1]
        %v3130 = vlaneseq
        %v3131 = vshrl.u32 %v3130, 7
        %v3132 = vsub.s32 0, %v3131
        %v3133 = vrot.slane %v3128, %v3132
        %v3135 = vadd.f32 %v3126, %v3133
        %s3136 = scalar_lea.vmem %s3, 16
        %v3137 = vld [vmem:[%s3136] sm:$0xff]
        %v3138 = vld [vmem:[%s3136 + $0x8] sm:$0xff]
        %v3140 = vsel %vm491, %v3135, 0
        %3142 = vmatprep.subr.mxu0 0.0
        %3143 = vmatpush1.msra.mxu0 %v3137
        %3144 = vmatprep.subr.mxu0 0.0
        %3145 = vmatpush1.msra.mxu0 %v3138
        %3146 = vmatprep.subr.mxu0 0.0
        %3147 = vmatpush1.msra.mxu0 0.0
        %3148 = vmatprep.subr.mxu0 0.0
        %3149 = vmatpush1.msra.mxu0 0.0
        %3150 = vmatprep.subr.mxu0 0.0
        %3151 = vmatpush1.msra.mxu0 0.0
        %3152 = vmatprep.subr.mxu0 0.0
        %3153 = vmatpush1.msra.mxu0 0.0
        %3154 = vmatprep.subr.mxu0 0.0
        %3155 = vmatpush1.msra.mxu0 0.0
        %3156 = vmatprep.subr.mxu0 0.0
        %3157 = vmatpush1.msra.mxu0 0.0
        %3158 = vmatprep.subr.mxu0 0.0
        %3159 = vmatpush1.msra.mxu0 0.0
        %3160 = vmatprep.subr.mxu0 0.0
        %3161 = vmatpush1.msra.mxu0 0.0
        %3162 = vmatprep.subr.mxu0 0.0
        %3163 = vmatpush1.msra.mxu0 0.0
        %3164 = vmatprep.subr.mxu0 0.0
        %3165 = vmatpush1.msra.mxu0 0.0
        %3166 = vmatprep.subr.mxu0 0.0
        %3167 = vmatpush1.msra.mxu0 0.0
        %3168 = vmatprep.subr.mxu0 0.0
        %3169 = vmatpush1.msra.mxu0 0.0
        %3170 = vmatprep.subr.mxu0 0.0
        %3171 = vmatpush1.msra.mxu0 0.0
        %3172 = vmatprep.subr.mxu0 0.0
        %3173 = vmatpush1.msra.mxu0 0.0
        %3174 = vmatprep.subr.mxu0 0.0
        %3175 = vmatpush1.msra.mxu0 0.0
        %3176 = vmatprep.subr.mxu0 0.0
        %3177 = vmatpush1.msra.mxu0 0.0
        %3178 = vmatprep.subr.mxu0 0.0
        %3179 = vmatpush1.msra.mxu0 0.0
        %3180 = vmatprep.subr.mxu0 0.0
        %3181 = vmatpush1.msra.mxu0 0.0
        %3182 = vmatprep.subr.mxu0 0.0
        %3183 = vmatpush1.msra.mxu0 0.0
        %3184 = vmatprep.subr.mxu0 0.0
        %3185 = vmatpush1.msra.mxu0 0.0
        %3186 = vmatprep.subr.mxu0 0.0
        %3187 = vmatpush1.msra.mxu0 0.0
        %3188 = vmatprep.subr.mxu0 0.0
        %3189 = vmatpush1.msra.mxu0 0.0
        %3190 = vmatprep.subr.mxu0 0.0
        %3191 = vmatpush1.msra.mxu0 0.0
        %3192 = vmatprep.subr.mxu0 0.0
        %3193 = vmatpush1.msra.mxu0 0.0
        %3194 = vmatprep.subr.mxu0 0.0
        %3195 = vmatpush1.msra.mxu0 0.0
        %3196 = vmatprep.subr.mxu0 0.0
        %3197 = vmatpush1.msra.mxu0 0.0
        %3198 = vmatprep.subr.mxu0 0.0
        %3199 = vmatpush1.msra.mxu0 0.0
        %3200 = vmatprep.subr.mxu0 0.0
        %3201 = vmatpush1.msra.mxu0 0.0
        %3202 = vmatprep.subr.mxu0 0.0
        %3203 = vmatpush1.msra.mxu0 0.0
        %3204 = vmatprep.subr.mxu0 0.0
        %3205 = vmatpush1.msra.mxu0 0.0
        %3206 = vmatprep.mubr.f32.mxu0 0.0
        %3207 = vmatmul.mubr.f32.gmra.mrb[0].mxu0 %v3140
        %v3208 = vpop.f32.mrb[0].mxu0
        %v3209 = vadd.f32 0.0, %v3208
        %v3210 = vpop.f32.mrb[0].mxu0
        %3211 = vdwg.mxu0
        %s3212 = scalar_lea.vmem %s4, 16
        %v3213 = vld [vmem:[%s3212] sm:$0xff]
        %v3214 = vld [vmem:[%s3212 + $0x8] sm:$0xff]
        %3215 = vmatprep.subr.mxu0 0.0
        %3216 = vmatpush1.msra.mxu0 %v3213
        %3217 = vmatprep.subr.mxu0 0.0
        %3218 = vmatpush1.msra.mxu0 %v3214
        %3219 = vmatprep.subr.mxu0 0.0
        %3220 = vmatpush1.msra.mxu0 0.0
        %3221 = vmatprep.subr.mxu0 0.0
        %3222 = vmatpush1.msra.mxu0 0.0
        %3223 = vmatprep.subr.mxu0 0.0
        %3224 = vmatpush1.msra.mxu0 0.0
        %3225 = vmatprep.subr.mxu0 0.0
        %3226 = vmatpush1.msra.mxu0 0.0
        %3227 = vmatprep.subr.mxu0 0.0
        %3228 = vmatpush1.msra.mxu0 0.0
        %3229 = vmatprep.subr.mxu0 0.0
        %3230 = vmatpush1.msra.mxu0 0.0
        %3231 = vmatprep.subr.mxu0 0.0
        %3232 = vmatpush1.msra.mxu0 0.0
        %3233 = vmatprep.subr.mxu0 0.0
        %3234 = vmatpush1.msra.mxu0 0.0
        %3235 = vmatprep.subr.mxu0 0.0
        %3236 = vmatpush1.msra.mxu0 0.0
        %3237 = vmatprep.subr.mxu0 0.0
        %3238 = vmatpush1.msra.mxu0 0.0
        %3239 = vmatprep.subr.mxu0 0.0
        %3240 = vmatpush1.msra.mxu0 0.0
        %3241 = vmatprep.subr.mxu0 0.0
        %3242 = vmatpush1.msra.mxu0 0.0
        %3243 = vmatprep.subr.mxu0 0.0
        %3244 = vmatpush1.msra.mxu0 0.0
        %3245 = vmatprep.subr.mxu0 0.0
        %3246 = vmatpush1.msra.mxu0 0.0
        %3247 = vmatprep.subr.mxu0 0.0
        %3248 = vmatpush1.msra.mxu0 0.0
        %3249 = vmatprep.subr.mxu0 0.0
        %3250 = vmatpush1.msra.mxu0 0.0
        %3251 = vmatprep.subr.mxu0 0.0
        %3252 = vmatpush1.msra.mxu0 0.0
        %3253 = vmatprep.subr.mxu0 0.0
        %3254 = vmatpush1.msra.mxu0 0.0
        %3255 = vmatprep.subr.mxu0 0.0
        %3256 = vmatpush1.msra.mxu0 0.0
        %3257 = vmatprep.subr.mxu0 0.0
        %3258 = vmatpush1.msra.mxu0 0.0
        %3259 = vmatprep.subr.mxu0 0.0
        %3260 = vmatpush1.msra.mxu0 0.0
        %3261 = vmatprep.subr.mxu0 0.0
        %3262 = vmatpush1.msra.mxu0 0.0
        %3263 = vmatprep.subr.mxu0 0.0
        %3264 = vmatpush1.msra.mxu0 0.0
        %3265 = vmatprep.subr.mxu0 0.0
        %3266 = vmatpush1.msra.mxu0 0.0
        %3267 = vmatprep.subr.mxu0 0.0
        %3268 = vmatpush1.msra.mxu0 0.0
        %3269 = vmatprep.subr.mxu0 0.0
        %3270 = vmatpush1.msra.mxu0 0.0
        %3271 = vmatprep.subr.mxu0 0.0
        %3272 = vmatpush1.msra.mxu0 0.0
        %3273 = vmatprep.subr.mxu0 0.0
        %3274 = vmatpush1.msra.mxu0 0.0
        %3275 = vmatprep.subr.mxu0 0.0
        %3276 = vmatpush1.msra.mxu0 0.0
        %3277 = vmatprep.subr.mxu0 0.0
        %3278 = vmatpush1.msra.mxu0 0.0
        %3279 = vmatprep.mubr.f32.mxu0 0.0
        %3280 = vmatmul.mubr.f32.gmra.mrb[0].mxu0 %v3140
        %v3281 = vpop.f32.mrb[0].mxu0
        %v3282 = vadd.f32 0.0, %v3281
        %v3283 = vpop.f32.mrb[0].mxu0
        %3284 = vdwg.mxu0
        %s3285 = scalar_lea.vmem %s5, 4
        %v3286 = vld [vmem:[%s3285] sm:$0xf]
        %s3287 = scalar_lea.vmem %s6, 1
        %v3288 = vld [vmem:[%s3287] sm:$0x1]
        %v3290 = vrot.slane %v3209, 5
        %v3292 = vsel %vm674, 0.0, %v3290
        %v3293 = vsel %vm674, %v3290, 0.0
        %v3294 = vlaneseq
        %v3295 = vshrl.u32 %v3294, 7
        %v3296 = vsub.s32 0, %v3295
        %v3297 = vrot.slane %v3286, %v3296
        %v3298 = vmul.f32 %v3292, %v3297
        %v3299 = vlaneseq
        %v3300 = vshrl.u32 %v3299, 7
        %v3301 = vsub.s32 3, %v3300
        %v3302 = vrot.slane %v3286, %v3301
        %v3303 = vmul.f32 %v3292, %v3302
        %v3304 = vmul.f32 %v3293, %v3302
        %v3305 = vlaneseq
        %v3306 = vshrl.u32 %v3305, 7
        %v3307 = vsub.s32 1, %v3306
        %v3308 = vrot.slane %v3286, %v3307
        %v3309 = vmul.f32 %v3292, %v3308
        %v3310 = vmul.f32 %v3293, %v3308
        %v3313 = vrot.slane %v3309, 1
        %v3314 = vrot.slane %v3310, 1
        %v3315 = vsel %vm696, %v3313, %v3314
        %v3317 = vadd.f32 %v3298, %v3315
        %v3318 = vlaneseq
        %v3319 = vshrl.u32 %v3318, 7
        %v3320 = vsub.s32 2, %v3319
        %v3321 = vrot.slane %v3286, %v3320
        %v3322 = vmul.f32 %v3292, %v3321
        %v3323 = vmul.f32 %v3293, %v3321
        %v3326 = vrot.slane %v3322, 1
        %v3327 = vrot.slane %v3323, 1
        %v3328 = vsel %vm696, %v3326, %v3327
        %v3331 = vadd.f32 %v3303, %v3328
        %v3332 = vadd.f32 %v3304, %v3327
        %v3333 = vrot.slane %v3322, 2
        %v3334 = vrot.slane %v3323, 2
        %v3335 = vsel %vm717, %v3333, %v3334
        %v3337 = vadd.f32 %v3317, %v3335
        %v3338 = vrot.slane %v3309, 2
        %v3339 = vrot.slane %v3310, 2
        %v3340 = vsel %vm717, %v3338, %v3339
        %v3343 = vadd.f32 %v3331, %v3340
        %v3344 = vadd.f32 %v3332, %v3339
        %v3347 = vrot.slane %v3303, 3
        %v3348 = vrot.slane %v3304, 3
        %v3349 = vsel %vm732, %v3347, %v3348
        %v3351 = vadd.f32 %v3337, %v3349
        %v3352 = vmul.f32 %v3293, %v3297
        %v3355 = vrot.slane %v3298, 3
        %v3356 = vrot.slane %v3352, 3
        %v3357 = vsel %vm732, %v3355, %v3356
        %v3360 = vadd.f32 %v3343, %v3357
        %v3361 = vadd.f32 %v3344, %v3356
        %v3363 = vlaneseq
        %v3364 = vshrl.u32 %v3363, 7
        %v3365 = vsub.s32 0, %v3364
        %v3366 = vrot.slane %v3288, %v3365
        %v3368 = vadd.f32 %v3351, %v3366
        %v3369 = vadd.f32 %v3360, %v3366
        %v3370 = vadd.f32 %v3361, %v3366
        %v3373 = vrot.slane %v3369, 3
        %v3374 = vrot.slane %v3370, 3
        %v3375 = vsel %vm732, %v3373, %v3374
        %v3377 = vmin.f32 %v3368, 20.0
        %v3378 = vmin.f32 %v3375, 20.0
        %vm3379 = vcmp.gt.f32.partialorder %v3368, 20.0
        %vm3380 = vcmp.gt.f32.partialorder %v3375, 20.0
        %v3381 = vmul.f32 %v3377, 1.442695
        %v3382 = vpow.pop %v3381
        %v3383 = vmul.f32 %v3378, 1.442695
        %v3384 = vpow.pop %v3383
        %v3385 = vadd.f32 %v3382, 1.0
        %v3386 = vadd.f32 %v3384, 1.0
        %v3387 = vlog2.pop %v3385
        %v3388 = vmul.f32 %v3387, 0.6931472
        %v3389 = vlog2.pop %v3386
        %v3390 = vmul.f32 %v3389, 0.6931472
        %v3391 = vsel %vm3379, %v3368, %v3388
        %v3392 = vsel %vm3380, %v3375, %v3390
        %s3393 = scalar_lea.vmem %s7, 32
        %v3394 = vld [vmem:[%s3393] sm:$0xff]
        %v3395 = vld [vmem:[%s3393 + $0x8] sm:$0xff]
        %v3396 = vld [vmem:[%s3393 + $0x10] sm:$0xff]
        %v3397 = vld [vmem:[%s3393 + $0x18] sm:$0xff]
        %v3399 = vsel %vm783, %v3391, 0
        %v3402 = vsel %vm783, %v3392, 0
        %3404 = vmatprep.subr.mxu0 0.0
        %3405 = vmatpush1.msra.mxu0 %v3394
        %3406 = vmatprep.subr.mxu0 0.0
        %3407 = vmatpush1.msra.mxu0 %v3395
        %3408 = vmatprep.subr.mxu0 0.0
        %3409 = vmatpush1.msra.mxu0 %v3396
        %3410 = vmatprep.subr.mxu0 0.0
        %3411 = vmatpush1.msra.mxu0 %v3397
        %3412 = vmatprep.subr.mxu0 0.0
        %3413 = vmatpush1.msra.mxu0 0.0
        %3414 = vmatprep.subr.mxu0 0.0
        %3415 = vmatpush1.msra.mxu0 0.0
        %3416 = vmatprep.subr.mxu0 0.0
        %3417 = vmatpush1.msra.mxu0 0.0
        %3418 = vmatprep.subr.mxu0 0.0
        %3419 = vmatpush1.msra.mxu0 0.0
        %3420 = vmatprep.subr.mxu0 0.0
        %3421 = vmatpush1.msra.mxu0 0.0
        %3422 = vmatprep.subr.mxu0 0.0
        %3423 = vmatpush1.msra.mxu0 0.0
        %3424 = vmatprep.subr.mxu0 0.0
        %3425 = vmatpush1.msra.mxu0 0.0
        %3426 = vmatprep.subr.mxu0 0.0
        %3427 = vmatpush1.msra.mxu0 0.0
        %3428 = vmatprep.subr.mxu0 0.0
        %3429 = vmatpush1.msra.mxu0 0.0
        %3430 = vmatprep.subr.mxu0 0.0
        %3431 = vmatpush1.msra.mxu0 0.0
        %3432 = vmatprep.subr.mxu0 0.0
        %3433 = vmatpush1.msra.mxu0 0.0
        %3434 = vmatprep.subr.mxu0 0.0
        %3435 = vmatpush1.msra.mxu0 0.0
        %3436 = vmatprep.subr.mxu0 0.0
        %3437 = vmatpush1.msra.mxu0 0.0
        %3438 = vmatprep.subr.mxu0 0.0
        %3439 = vmatpush1.msra.mxu0 0.0
        %3440 = vmatprep.subr.mxu0 0.0
        %3441 = vmatpush1.msra.mxu0 0.0
        %3442 = vmatprep.subr.mxu0 0.0
        %3443 = vmatpush1.msra.mxu0 0.0
        %3444 = vmatprep.subr.mxu0 0.0
        %3445 = vmatpush1.msra.mxu0 0.0
        %3446 = vmatprep.subr.mxu0 0.0
        %3447 = vmatpush1.msra.mxu0 0.0
        %3448 = vmatprep.subr.mxu0 0.0
        %3449 = vmatpush1.msra.mxu0 0.0
        %3450 = vmatprep.subr.mxu0 0.0
        %3451 = vmatpush1.msra.mxu0 0.0
        %3452 = vmatprep.subr.mxu0 0.0
        %3453 = vmatpush1.msra.mxu0 0.0
        %3454 = vmatprep.subr.mxu0 0.0
        %3455 = vmatpush1.msra.mxu0 0.0
        %3456 = vmatprep.subr.mxu0 0.0
        %3457 = vmatpush1.msra.mxu0 0.0
        %3458 = vmatprep.subr.mxu0 0.0
        %3459 = vmatpush1.msra.mxu0 0.0
        %3460 = vmatprep.subr.mxu0 0.0
        %3461 = vmatpush1.msra.mxu0 0.0
        %3462 = vmatprep.subr.mxu0 0.0
        %3463 = vmatpush1.msra.mxu0 0.0
        %3464 = vmatprep.subr.mxu0 0.0
        %3465 = vmatpush1.msra.mxu0 0.0
        %3466 = vmatprep.subr.mxu0 0.0
        %3467 = vmatpush1.msra.mxu0 0.0
        %3468 = vmatprep.mubr.f32.mxu0 0.0
        %3469 = vmatmul.mubr.f32.gmra.mrb[0].mxu0 %v3399
        %v3470 = vpop.f32.mrb[0].mxu0
        %v3471 = vadd.f32 0.0, %v3470
        %v3472 = vpop.f32.mrb[0].mxu0
        %3473 = vmatprep.mubr.f32.mxu0 0.0
        %3474 = vmatmul.mubr.f32.gmra.mrb[0].mxu0 %v3402
        %v3475 = vpop.f32.mrb[0].mxu0
        %v3476 = vadd.f32 0.0, %v3475
        %v3477 = vpop.f32.mrb[0].mxu0
        %3478 = vdwg.mxu0
        %s3479 = scalar_lea.vmem %s8, 32
        %v3480 = vld [vmem:[%s3479] sm:$0xff]
        %v3481 = vld [vmem:[%s3479 + $0x8] sm:$0xff]
        %v3482 = vld [vmem:[%s3479 + $0x10] sm:$0xff]
        %v3483 = vld [vmem:[%s3479 + $0x18] sm:$0xff]
        %3484 = vmatprep.subr.mxu0 0.0
        %3485 = vmatpush1.msra.mxu0 %v3480
        %3486 = vmatprep.subr.mxu0 0.0
        %3487 = vmatpush1.msra.mxu0 %v3481
        %3488 = vmatprep.subr.mxu0 0.0
        %3489 = vmatpush1.msra.mxu0 %v3482
        %3490 = vmatprep.subr.mxu0 0.0
        %3491 = vmatpush1.msra.mxu0 %v3483
        %3492 = vmatprep.subr.mxu0 0.0
        %3493 = vmatpush1.msra.mxu0 0.0
        %3494 = vmatprep.subr.mxu0 0.0
        %3495 = vmatpush1.msra.mxu0 0.0
        %3496 = vmatprep.subr.mxu0 0.0
        %3497 = vmatpush1.msra.mxu0 0.0
        %3498 = vmatprep.subr.mxu0 0.0
        %3499 = vmatpush1.msra.mxu0 0.0
        %3500 = vmatprep.subr.mxu0 0.0
        %3501 = vmatpush1.msra.mxu0 0.0
        %3502 = vmatprep.subr.mxu0 0.0
        %3503 = vmatpush1.msra.mxu0 0.0
        %3504 = vmatprep.subr.mxu0 0.0
        %3505 = vmatpush1.msra.mxu0 0.0
        %3506 = vmatprep.subr.mxu0 0.0
        %3507 = vmatpush1.msra.mxu0 0.0
        %3508 = vmatprep.subr.mxu0 0.0
        %3509 = vmatpush1.msra.mxu0 0.0
        %3510 = vmatprep.subr.mxu0 0.0
        %3511 = vmatpush1.msra.mxu0 0.0
        %3512 = vmatprep.subr.mxu0 0.0
        %3513 = vmatpush1.msra.mxu0 0.0
        %3514 = vmatprep.subr.mxu0 0.0
        %3515 = vmatpush1.msra.mxu0 0.0
        %3516 = vmatprep.subr.mxu0 0.0
        %3517 = vmatpush1.msra.mxu0 0.0
        %3518 = vmatprep.subr.mxu0 0.0
        %3519 = vmatpush1.msra.mxu0 0.0
        %3520 = vmatprep.subr.mxu0 0.0
        %3521 = vmatpush1.msra.mxu0 0.0
        %3522 = vmatprep.subr.mxu0 0.0
        %3523 = vmatpush1.msra.mxu0 0.0
        %3524 = vmatprep.subr.mxu0 0.0
        %3525 = vmatpush1.msra.mxu0 0.0
        %3526 = vmatprep.subr.mxu0 0.0
        %3527 = vmatpush1.msra.mxu0 0.0
        %3528 = vmatprep.subr.mxu0 0.0
        %3529 = vmatpush1.msra.mxu0 0.0
        %3530 = vmatprep.subr.mxu0 0.0
        %3531 = vmatpush1.msra.mxu0 0.0
        %3532 = vmatprep.subr.mxu0 0.0
        %3533 = vmatpush1.msra.mxu0 0.0
        %3534 = vmatprep.subr.mxu0 0.0
        %3535 = vmatpush1.msra.mxu0 0.0
        %3536 = vmatprep.subr.mxu0 0.0
        %3537 = vmatpush1.msra.mxu0 0.0
        %3538 = vmatprep.subr.mxu0 0.0
        %3539 = vmatpush1.msra.mxu0 0.0
        %3540 = vmatprep.subr.mxu0 0.0
        %3541 = vmatpush1.msra.mxu0 0.0
        %3542 = vmatprep.subr.mxu0 0.0
        %3543 = vmatpush1.msra.mxu0 0.0
        %3544 = vmatprep.subr.mxu0 0.0
        %3545 = vmatpush1.msra.mxu0 0.0
        %3546 = vmatprep.subr.mxu0 0.0
        %3547 = vmatpush1.msra.mxu0 0.0
        %3548 = vmatprep.mubr.f32.mxu0 0.0
        %3549 = vmatmul.mubr.f32.gmra.mrb[0].mxu0 %v3399
        %v3550 = vpop.f32.mrb[0].mxu0
        %v3551 = vadd.f32 0.0, %v3550
        %v3552 = vpop.f32.mrb[0].mxu0
        %3553 = vmatprep.mubr.f32.mxu0 0.0
        %3554 = vmatmul.mubr.f32.gmra.mrb[0].mxu0 %v3402
        %v3555 = vpop.f32.mrb[0].mxu0
        %v3556 = vadd.f32 0.0, %v3555
        %v3557 = vpop.f32.mrb[0].mxu0
        %3558 = vdwg.mxu0
        %s3559 = scalar_lea.vmem %s9, 32
        %v3560 = vld [vmem:[%s3559] sm:$0xff]
        %v3561 = vld [vmem:[%s3559 + $0x8] sm:$0xff]
        %v3562 = vld [vmem:[%s3559 + $0x10] sm:$0xff]
        %v3563 = vld [vmem:[%s3559 + $0x18] sm:$0xff]
        %3564 = vmatprep.subr.mxu0 0.0
        %3565 = vmatpush1.msra.mxu0 %v3560
        %3566 = vmatprep.subr.mxu0 0.0
        %3567 = vmatpush1.msra.mxu0 %v3561
        %3568 = vmatprep.subr.mxu0 0.0
        %3569 = vmatpush1.msra.mxu0 %v3562
        %3570 = vmatprep.subr.mxu0 0.0
        %3571 = vmatpush1.msra.mxu0 %v3563
        %3572 = vmatprep.subr.mxu0 0.0
        %3573 = vmatpush1.msra.mxu0 0.0
        %3574 = vmatprep.subr.mxu0 0.0
        %3575 = vmatpush1.msra.mxu0 0.0
        %3576 = vmatprep.subr.mxu0 0.0
        %3577 = vmatpush1.msra.mxu0 0.0
        %3578 = vmatprep.subr.mxu0 0.0
        %3579 = vmatpush1.msra.mxu0 0.0
        %3580 = vmatprep.subr.mxu0 0.0
        %3581 = vmatpush1.msra.mxu0 0.0
        %3582 = vmatprep.subr.mxu0 0.0
        %3583 = vmatpush1.msra.mxu0 0.0
        %3584 = vmatprep.subr.mxu0 0.0
        %3585 = vmatpush1.msra.mxu0 0.0
        %3586 = vmatprep.subr.mxu0 0.0
        %3587 = vmatpush1.msra.mxu0 0.0
        %3588 = vmatprep.subr.mxu0 0.0
        %3589 = vmatpush1.msra.mxu0 0.0
        %3590 = vmatprep.subr.mxu0 0.0
        %3591 = vmatpush1.msra.mxu0 0.0
        %3592 = vmatprep.subr.mxu0 0.0
        %3593 = vmatpush1.msra.mxu0 0.0
        %3594 = vmatprep.subr.mxu0 0.0
        %3595 = vmatpush1.msra.mxu0 0.0
        %3596 = vmatprep.subr.mxu0 0.0
        %3597 = vmatpush1.msra.mxu0 0.0
        %3598 = vmatprep.subr.mxu0 0.0
        %3599 = vmatpush1.msra.mxu0 0.0
        %3600 = vmatprep.subr.mxu0 0.0
        %3601 = vmatpush1.msra.mxu0 0.0
        %3602 = vmatprep.subr.mxu0 0.0
        %3603 = vmatpush1.msra.mxu0 0.0
        %3604 = vmatprep.subr.mxu0 0.0
        %3605 = vmatpush1.msra.mxu0 0.0
        %3606 = vmatprep.subr.mxu0 0.0
        %3607 = vmatpush1.msra.mxu0 0.0
        %3608 = vmatprep.subr.mxu0 0.0
        %3609 = vmatpush1.msra.mxu0 0.0
        %3610 = vmatprep.subr.mxu0 0.0
        %3611 = vmatpush1.msra.mxu0 0.0
        %3612 = vmatprep.subr.mxu0 0.0
        %3613 = vmatpush1.msra.mxu0 0.0
        %3614 = vmatprep.subr.mxu0 0.0
        %3615 = vmatpush1.msra.mxu0 0.0
        %3616 = vmatprep.subr.mxu0 0.0
        %3617 = vmatpush1.msra.mxu0 0.0
        %3618 = vmatprep.subr.mxu0 0.0
        %3619 = vmatpush1.msra.mxu0 0.0
        %3620 = vmatprep.subr.mxu0 0.0
        %3621 = vmatpush1.msra.mxu0 0.0
        %3622 = vmatprep.subr.mxu0 0.0
        %3623 = vmatpush1.msra.mxu0 0.0
        %3624 = vmatprep.subr.mxu0 0.0
        %3625 = vmatpush1.msra.mxu0 0.0
        %3626 = vmatprep.subr.mxu0 0.0
        %3627 = vmatpush1.msra.mxu0 0.0
        %3628 = vmatprep.mubr.f32.mxu0 0.0
        %3629 = vmatmul.mubr.f32.gmra.mrb[0].mxu0 %v3399
        %v3630 = vpop.f32.mrb[0].mxu0
        %v3631 = vadd.f32 0.0, %v3630
        %v3632 = vpop.f32.mrb[0].mxu0
        %3633 = vmatprep.mubr.f32.mxu0 0.0
        %3634 = vmatmul.mubr.f32.gmra.mrb[0].mxu0 %v3402
        %v3635 = vpop.f32.mrb[0].mxu0
        %v3636 = vadd.f32 0.0, %v3635
        %v3637 = vpop.f32.mrb[0].mxu0
        %3638 = vdwg.mxu0
        %s3639 = scalar_lea.vmem %s10, 2
        %v3640 = vld [vmem:[%s3639] sm:$0x3]
        %s3641 = scalar_lea.vmem %s11, 1
        %v3642 = vld [vmem:[%s3641] sm:$0x1]
        %v3644 = vlaneseq
        %v3645 = vshrl.u32 %v3644, 7
        %v3646 = vsub.s32 0, %v3645
        %v3647 = vrot.slane %v3642, %v3646
        %v3650 = vsel %vm1031, %v3471, 0
        %v3653 = vsel %vm1031, %v3476, 0
        %v3656 = vsel %vm1038, %v3640, 0
        %3658 = vmatprep.subr.mxu0 0.0
        %3659 = vmatpush1.msra.mxu0 %v3656
        %3660 = vmatprep.subr.mxu0 0.0
        %3661 = vmatpush1.msra.mxu0 0.0
        %3662 = vmatprep.subr.mxu0 0.0
        %3663 = vmatpush1.msra.mxu0 0.0
        %3664 = vmatprep.subr.mxu0 0.0
        %3665 = vmatpush1.msra.mxu0 0.0
        %3666 = vmatprep.subr.mxu0 0.0
        %3667 = vmatpush1.msra.mxu0 0.0
        %3668 = vmatprep.subr.mxu0 0.0
        %3669 = vmatpush1.msra.mxu0 0.0
        %3670 = vmatprep.subr.mxu0 0.0
        %3671 = vmatpush1.msra.mxu0 0.0
        %3672 = vmatprep.subr.mxu0 0.0
        %3673 = vmatpush1.msra.mxu0 0.0
        %3674 = vmatprep.subr.mxu0 0.0
        %3675 = vmatpush1.msra.mxu0 0.0
        %3676 = vmatprep.subr.mxu0 0.0
        %3677 = vmatpush1.msra.mxu0 0.0
        %3678 = vmatprep.subr.mxu0 0.0
        %3679 = vmatpush1.msra.mxu0 0.0
        %3680 = vmatprep.subr.mxu0 0.0
        %3681 = vmatpush1.msra.mxu0 0.0
        %3682 = vmatprep.subr.mxu0 0.0
        %3683 = vmatpush1.msra.mxu0 0.0
        %3684 = vmatprep.subr.mxu0 0.0
        %3685 = vmatpush1.msra.mxu0 0.0
        %3686 = vmatprep.subr.mxu0 0.0
        %3687 = vmatpush1.msra.mxu0 0.0
        %3688 = vmatprep.subr.mxu0 0.0
        %3689 = vmatpush1.msra.mxu0 0.0
        %3690 = vmatprep.subr.mxu0 0.0
        %3691 = vmatpush1.msra.mxu0 0.0
        %3692 = vmatprep.subr.mxu0 0.0
        %3693 = vmatpush1.msra.mxu0 0.0
        %3694 = vmatprep.subr.mxu0 0.0
        %3695 = vmatpush1.msra.mxu0 0.0
        %3696 = vmatprep.subr.mxu0 0.0
        %3697 = vmatpush1.msra.mxu0 0.0
        %3698 = vmatprep.subr.mxu0 0.0
        %3699 = vmatpush1.msra.mxu0 0.0
        %3700 = vmatprep.subr.mxu0 0.0
        %3701 = vmatpush1.msra.mxu0 0.0
        %3702 = vmatprep.subr.mxu0 0.0
        %3703 = vmatpush1.msra.mxu0 0.0
        %3704 = vmatprep.subr.mxu0 0.0
        %3705 = vmatpush1.msra.mxu0 0.0
        %3706 = vmatprep.subr.mxu0 0.0
        %3707 = vmatpush1.msra.mxu0 0.0
        %3708 = vmatprep.subr.mxu0 0.0
        %3709 = vmatpush1.msra.mxu0 0.0
        %3710 = vmatprep.subr.mxu0 0.0
        %3711 = vmatpush1.msra.mxu0 0.0
        %3712 = vmatprep.subr.mxu0 0.0
        %3713 = vmatpush1.msra.mxu0 0.0
        %3714 = vmatprep.subr.mxu0 0.0
        %3715 = vmatpush1.msra.mxu0 0.0
        %3716 = vmatprep.subr.mxu0 0.0
        %3717 = vmatpush1.msra.mxu0 0.0
        %3718 = vmatprep.subr.mxu0 0.0
        %3719 = vmatpush1.msra.mxu0 0.0
        %3720 = vmatprep.subr.mxu0 0.0
        %3721 = vmatpush1.msra.mxu0 0.0
        %3722 = vmatprep.mubr.f32.mxu0 0.0
        %3723 = vmatmul.mubr.f32.gmra.mrb[0].mxu0 %v3650
        %v3724 = vpop.f32.mrb[0].mxu0
        %v3725 = vadd.f32 %v3647, %v3724
        %v3726 = vpop.f32.mrb[0].mxu0
        %3727 = vmatprep.mubr.f32.mxu0 0.0
        %3728 = vmatmul.mubr.f32.gmra.mrb[0].mxu0 %v3653
        %v3729 = vpop.f32.mrb[0].mxu0
        %v3730 = vadd.f32 %v3647, %v3729
        %v3731 = vpop.f32.mrb[0].mxu0
        %3732 = vdwg.mxu0
        %v3733 = vmin.f32 %v3725, 20.0
        %v3734 = vmin.f32 %v3730, 20.0
        %vm3735 = vcmp.gt.f32.partialorder %v3725, 20.0
        %vm3736 = vcmp.gt.f32.partialorder %v3730, 20.0
        %v3737 = vmul.f32 %v3733, 1.442695
        %v3738 = vpow.pop %v3737
        %v3739 = vmul.f32 %v3734, 1.442695
        %v3740 = vpow.pop %v3739
        %v3741 = vadd.f32 %v3738, 1.0
        %v3742 = vadd.f32 %v3740, 1.0
        %v3743 = vlog2.pop %v3741
        %v3744 = vmul.f32 %v3743, 0.6931472
        %v3745 = vlog2.pop %v3742
        %v3746 = vmul.f32 %v3745, 0.6931472
        %v3747 = vsel %vm3735, %v3725, %v3744
        %v3748 = vsel %vm3736, %v3730, %v3746
        %s3749 = scalar_lea.vmem %s12, 8
        %v3750 = vld [vmem:[%s3749] sm:$0xff]
        %v3751 = vmul.f32 %v3750, 1.442695
        %v3752 = vpow.pop %v3751
        %v3753 = vsub.f32 0.0, %v3752
        %v3756 = vcombine.high %v3747, %v3747
        %v3758 = vunpack.c.l.s4 1966171168
        %v3759 = vunpack.c.0.s8 %v3758
        %v3760 = vlaneseq
        %v3761 = vshrl.u32 %v3760, 7
        %v3762 = vsub.s32 %v3759, %v3761
        %v3763 = vrot.slane %v3747, %v3762
        %v3765 = vunpack.c.l.s4 1966171168
        %v3766 = vunpack.c.0.s8 %v3765
        %v3767 = vlaneseq
        %v3768 = vshrl.u32 %v3767, 7
        %v3769 = vsub.s32 %v3766, %v3768
        %v3770 = vrot.slane %v3756, %v3769
        %v3771 = vcombine.high %v3763, %v3763
        %v3772 = vcombine.high %v3770, %v3770
        %v3774 = vunpack.c.l.s4 1966171168
        %v3775 = vunpack.c.0.s8 %v3774
        %v3776 = vlaneseq
        %v3777 = vshrl.u32 %v3776, 7
        %v3778 = vsub.s32 %v3775, %v3777
        %v3779 = vrot.slane %v3763, %v3778
        %v3781 = vunpack.c.l.s4 1966171168
        %v3782 = vunpack.c.0.s8 %v3781
        %v3783 = vlaneseq
        %v3784 = vshrl.u32 %v3783, 7
        %v3785 = vsub.s32 %v3782, %v3784
        %v3786 = vrot.slane %v3770, %v3785
        %v3788 = vunpack.c.l.s4 1966171168
        %v3789 = vunpack.c.0.s8 %v3788
        %v3790 = vlaneseq
        %v3791 = vshrl.u32 %v3790, 7
        %v3792 = vsub.s32 %v3789, %v3791
        %v3793 = vrot.slane %v3771, %v3792
        %v3795 = vunpack.c.l.s4 1966171168
        %v3796 = vunpack.c.0.s8 %v3795
        %v3797 = vlaneseq
        %v3798 = vshrl.u32 %v3797, 7
        %v3799 = vsub.s32 %v3796, %v3798
        %v3800 = vrot.slane %v3772, %v3799
        %v3801 = vcombine.high %v3779, %v3779
        %v3802 = vcombine.high %v3786, %v3786
        %v3803 = vcombine.high %v3793, %v3793
        %v3804 = vcombine.high %v3800, %v3800
        %v3805 = vcombine.high %v3748, %v3748
        %v3807 = vunpack.c.l.s4 1966171168
        %v3808 = vunpack.c.0.s8 %v3807
        %v3809 = vlaneseq
        %v3810 = vshrl.u32 %v3809, 7
        %v3811 = vsub.s32 %v3808, %v3810
        %v3812 = vrot.slane %v3748, %v3811
        %v3814 = vunpack.c.l.s4 1966171168
        %v3815 = vunpack.c.0.s8 %v3814
        %v3816 = vlaneseq
        %v3817 = vshrl.u32 %v3816, 7
        %v3818 = vsub.s32 %v3815, %v3817
        %v3819 = vrot.slane %v3805, %v3818
        %v3820 = vcombine.high %v3812, %v3812
        %v3821 = vcombine.high %v3819, %v3819
        %v3823 = vunpack.c.l.s4 1966171168
        %v3824 = vunpack.c.0.s8 %v3823
        %v3825 = vlaneseq
        %v3826 = vshrl.u32 %v3825, 7
        %v3827 = vsub.s32 %v3824, %v3826
        %v3828 = vrot.slane %v3812, %v3827
        %v3830 = vunpack.c.l.s4 1966171168
        %v3831 = vunpack.c.0.s8 %v3830
        %v3832 = vlaneseq
        %v3833 = vshrl.u32 %v3832, 7
        %v3834 = vsub.s32 %v3831, %v3833
        %v3835 = vrot.slane %v3819, %v3834
        %v3837 = vunpack.c.l.s4 1966171168
        %v3838 = vunpack.c.0.s8 %v3837
        %v3839 = vlaneseq
        %v3840 = vshrl.u32 %v3839, 7
        %v3841 = vsub.s32 %v3838, %v3840
        %v3842 = vrot.slane %v3820, %v3841
        %v3844 = vunpack.c.l.s4 1966171168
        %v3845 = vunpack.c.0.s8 %v3844
        %v3846 = vlaneseq
        %v3847 = vshrl.u32 %v3846, 7
        %v3848 = vsub.s32 %v3845, %v3847
        %v3849 = vrot.slane %v3821, %v3848
        %v3850 = vcombine.high %v3828, %v3828
        %v3851 = vcombine.high %v3835, %v3835
        %v3852 = vcombine.high %v3842, %v3842
        %v3853 = vcombine.high %v3849, %v3849
        %v3854 = vlaneseq
        %v3855 = vshrl.u32 %v3854, 7
        %v3856 = vsub.s32 0, %v3855
        %v3857 = vrot.slane %v3779, %v3856
        %v3858 = vlaneseq
        %v3859 = vshrl.u32 %v3858, 7
        %v3860 = vsub.s32 0, %v3859
        %v3861 = vrot.slane %v3793, %v3860
        %v3862 = vlaneseq
        %v3863 = vshrl.u32 %v3862, 7
        %v3864 = vsub.s32 0, %v3863
        %v3865 = vrot.slane %v3801, %v3864
        %v3866 = vlaneseq
        %v3867 = vshrl.u32 %v3866, 7
        %v3868 = vsub.s32 0, %v3867
        %v3869 = vrot.slane %v3803, %v3868
        %v3870 = vlaneseq
        %v3871 = vshrl.u32 %v3870, 7
        %v3872 = vsub.s32 0, %v3871
        %v3873 = vrot.slane %v3786, %v3872
        %v3874 = vlaneseq
        %v3875 = vshrl.u32 %v3874, 7
        %v3876 = vsub.s32 0, %v3875
        %v3877 = vrot.slane %v3800, %v3876
        %v3878 = vlaneseq
        %v3879 = vshrl.u32 %v3878, 7
        %v3880 = vsub.s32 0, %v3879
        %v3881 = vrot.slane %v3802, %v3880
        %v3882 = vlaneseq
        %v3883 = vshrl.u32 %v3882, 7
        %v3884 = vsub.s32 0, %v3883
        %v3885 = vrot.slane %v3804, %v3884
        %v3886 = vlaneseq
        %v3887 = vshrl.u32 %v3886, 7
        %v3888 = vsub.s32 0, %v3887
        %v3889 = vrot.slane %v3828, %v3888
        %v3890 = vlaneseq
        %v3891 = vshrl.u32 %v3890, 7
        %v3892 = vsub.s32 0, %v3891
        %v3893 = vrot.slane %v3842, %v3892
        %v3894 = vlaneseq
        %v3895 = vshrl.u32 %v3894, 7
        %v3896 = vsub.s32 0, %v3895
        %v3897 = vrot.slane %v3850, %v3896
        %v3898 = vlaneseq
        %v3899 = vshrl.u32 %v3898, 7
        %v3900 = vsub.s32 0, %v3899
        %v3901 = vrot.slane %v3852, %v3900
        %v3902 = vlaneseq
        %v3903 = vshrl.u32 %v3902, 7
        %v3904 = vsub.s32 0, %v3903
        %v3905 = vrot.slane %v3835, %v3904
        %v3906 = vlaneseq
        %v3907 = vshrl.u32 %v3906, 7
        %v3908 = vsub.s32 0, %v3907
        %v3909 = vrot.slane %v3849, %v3908
        %v3910 = vlaneseq
        %v3911 = vshrl.u32 %v3910, 7
        %v3912 = vsub.s32 0, %v3911
        %v3913 = vrot.slane %v3851, %v3912
        %v3914 = vlaneseq
        %v3915 = vshrl.u32 %v3914, 7
        %v3916 = vsub.s32 0, %v3915
        %v3917 = vrot.slane %v3853, %v3916
        %v3934 = vmul.f32 %v3857, %v3753
        %v3935 = vmul.f32 %v3861, %v3753
        %v3936 = vmul.f32 %v3865, %v3753
        %v3937 = vmul.f32 %v3869, %v3753
        %v3938 = vmul.f32 %v3873, %v3753
        %v3939 = vmul.f32 %v3877, %v3753
        %v3940 = vmul.f32 %v3881, %v3753
        %v3941 = vmul.f32 %v3885, %v3753
        %v3942 = vmul.f32 %v3889, %v3753
        %v3943 = vmul.f32 %v3893, %v3753
        %v3944 = vmul.f32 %v3897, %v3753
        %v3945 = vmul.f32 %v3901, %v3753
        %v3946 = vmul.f32 %v3905, %v3753
        %v3947 = vmul.f32 %v3909, %v3753
        %v3948 = vmul.f32 %v3913, %v3753
        %v3949 = vmul.f32 %v3917, %v3753
        %v3950 = vmul.f32 %v3934, 1.442695
        %v3951 = vpow.pop %v3950
        %v3952 = vmul.f32 %v3935, 1.442695
        %v3953 = vpow.pop %v3952
        %v3954 = vmul.f32 %v3936, 1.442695
        %v3955 = vpow.pop %v3954
        %v3956 = vmul.f32 %v3937, 1.442695
        %v3957 = vpow.pop %v3956
        %v3958 = vmul.f32 %v3938, 1.442695
        %v3959 = vpow.pop %v3958
        %v3960 = vmul.f32 %v3939, 1.442695
        %v3961 = vpow.pop %v3960
        %v3962 = vmul.f32 %v3940, 1.442695
        %v3963 = vpow.pop %v3962
        %v3964 = vmul.f32 %v3941, 1.442695
        %v3965 = vpow.pop %v3964
        %v3966 = vmul.f32 %v3942, 1.442695
        %v3967 = vpow.pop %v3966
        %v3968 = vmul.f32 %v3943, 1.442695
        %v3969 = vpow.pop %v3968
        %v3970 = vmul.f32 %v3944, 1.442695
        %v3971 = vpow.pop %v3970
        %v3972 = vmul.f32 %v3945, 1.442695
        %v3973 = vpow.pop %v3972
        %v3974 = vmul.f32 %v3946, 1.442695
        %v3975 = vpow.pop %v3974
        %v3976 = vmul.f32 %v3947, 1.442695
        %v3977 = vpow.pop %v3976
        %v3978 = vmul.f32 %v3948, 1.442695
        %v3979 = vpow.pop %v3978
        %v3980 = vmul.f32 %v3949, 1.442695
        %v3981 = vpow.pop %v3980
        %3982 = vst.msk [vmem:[#allocation2] sm:$0xff] %vm783, %v3951
        %3983 = vst.msk [vmem:[#allocation2 + $0x8] sm:$0xff] %vm783, %v3953
        %3984 = vst.msk [vmem:[#allocation2 + $0x10] sm:$0xff] %vm783, %v3955
        %3985 = vst.msk [vmem:[#allocation2 + $0x18] sm:$0xff] %vm783, %v3957
        %3986 = vst.msk [vmem:[#allocation2 + $0x20] sm:$0xff] %vm783, %v3959
        %3987 = vst.msk [vmem:[#allocation2 + $0x28] sm:$0xff] %vm783, %v3961
        %3988 = vst.msk [vmem:[#allocation2 + $0x30] sm:$0xff] %vm783, %v3963
        %3989 = vst.msk [vmem:[#allocation2 + $0x38] sm:$0xff] %vm783, %v3965
        %3990 = vst.msk [vmem:[#allocation2 + $0x40] sm:$0xff] %vm783, %v3967
        %3991 = vst.msk [vmem:[#allocation2 + $0x48] sm:$0xff] %vm783, %v3969
        %3992 = vst.msk [vmem:[#allocation2 + $0x50] sm:$0xff] %vm783, %v3971
        %3993 = vst.msk [vmem:[#allocation2 + $0x58] sm:$0xff] %vm783, %v3973
        %3994 = vst.msk [vmem:[#allocation2 + $0x60] sm:$0xff] %vm783, %v3975
        %3995 = vst.msk [vmem:[#allocation2 + $0x68] sm:$0xff] %vm783, %v3977
        %3996 = vst.msk [vmem:[#allocation2 + $0x70] sm:$0xff] %vm783, %v3979
        %3997 = vst.msk [vmem:[#allocation2 + $0x78] sm:$0xff] %vm783, %v3981
        %v3998 = vmul.f32 %v3747, %v3391
        %v3999 = vmul.f32 %v3748, %v3392
        %v4002 = vcombine.high %v3998, %v3998
        %v4004 = vunpack.c.l.s4 1966171168
        %v4005 = vunpack.c.0.s8 %v4004
        %v4006 = vlaneseq
        %v4007 = vshrl.u32 %v4006, 7
        %v4008 = vsub.s32 %v4005, %v4007
        %v4009 = vrot.slane %v3998, %v4008
        %v4011 = vunpack.c.l.s4 1966171168
        %v4012 = vunpack.c.0.s8 %v4011
        %v4013 = vlaneseq
        %v4014 = vshrl.u32 %v4013, 7
        %v4015 = vsub.s32 %v4012, %v4014
        %v4016 = vrot.slane %v4002, %v4015
        %v4017 = vcombine.high %v4009, %v4009
        %v4018 = vcombine.high %v4016, %v4016
        %v4020 = vunpack.c.l.s4 1966171168
        %v4021 = vunpack.c.0.s8 %v4020
        %v4022 = vlaneseq
        %v4023 = vshrl.u32 %v4022, 7
        %v4024 = vsub.s32 %v4021, %v4023
        %v4025 = vrot.slane %v4009, %v4024
        %v4027 = vunpack.c.l.s4 1966171168
        %v4028 = vunpack.c.0.s8 %v4027
        %v4029 = vlaneseq
        %v4030 = vshrl.u32 %v4029, 7
        %v4031 = vsub.s32 %v4028, %v4030
        %v4032 = vrot.slane %v4016, %v4031
        %v4034 = vunpack.c.l.s4 1966171168
        %v4035 = vunpack.c.0.s8 %v4034
        %v4036 = vlaneseq
        %v4037 = vshrl.u32 %v4036, 7
        %v4038 = vsub.s32 %v4035, %v4037
        %v4039 = vrot.slane %v4017, %v4038
        %v4041 = vunpack.c.l.s4 1966171168
        %v4042 = vunpack.c.0.s8 %v4041
        %v4043 = vlaneseq
        %v4044 = vshrl.u32 %v4043, 7
        %v4045 = vsub.s32 %v4042, %v4044
        %v4046 = vrot.slane %v4018, %v4045
        %v4047 = vcombine.high %v4025, %v4025
        %v4048 = vcombine.high %v4032, %v4032
        %v4049 = vcombine.high %v4039, %v4039
        %v4050 = vcombine.high %v4046, %v4046
        %v4051 = vcombine.high %v3999, %v3999
        %v4053 = vunpack.c.l.s4 1966171168
        %v4054 = vunpack.c.0.s8 %v4053
        %v4055 = vlaneseq
        %v4056 = vshrl.u32 %v4055, 7
        %v4057 = vsub.s32 %v4054, %v4056
        %v4058 = vrot.slane %v3999, %v4057
        %v4060 = vunpack.c.l.s4 1966171168
        %v4061 = vunpack.c.0.s8 %v4060
        %v4062 = vlaneseq
        %v4063 = vshrl.u32 %v4062, 7
        %v4064 = vsub.s32 %v4061, %v4063
        %v4065 = vrot.slane %v4051, %v4064
        %v4066 = vcombine.high %v4058, %v4058
        %v4067 = vcombine.high %v4065, %v4065
        %v4069 = vunpack.c.l.s4 1966171168
        %v4070 = vunpack.c.0.s8 %v4069
        %v4071 = vlaneseq
        %v4072 = vshrl.u32 %v4071, 7
        %v4073 = vsub.s32 %v4070, %v4072
        %v4074 = vrot.slane %v4058, %v4073
        %v4076 = vunpack.c.l.s4 1966171168
        %v4077 = vunpack.c.0.s8 %v4076
        %v4078 = vlaneseq
        %v4079 = vshrl.u32 %v4078, 7
        %v4080 = vsub.s32 %v4077, %v4079
        %v4081 = vrot.slane %v4065, %v4080
        %v4083 = vunpack.c.l.s4 1966171168
        %v4084 = vunpack.c.0.s8 %v4083
        %v4085 = vlaneseq
        %v4086 = vshrl.u32 %v4085, 7
        %v4087 = vsub.s32 %v4084, %v4086
        %v4088 = vrot.slane %v4066, %v4087
        %v4090 = vunpack.c.l.s4 1966171168
        %v4091 = vunpack.c.0.s8 %v4090
        %v4092 = vlaneseq
        %v4093 = vshrl.u32 %v4092, 7
        %v4094 = vsub.s32 %v4091, %v4093
        %v4095 = vrot.slane %v4067, %v4094
        %v4096 = vcombine.high %v4074, %v4074
        %v4097 = vcombine.high %v4081, %v4081
        %v4098 = vcombine.high %v4088, %v4088
        %v4099 = vcombine.high %v4095, %v4095
        %v4100 = vlaneseq
        %v4101 = vshrl.u32 %v4100, 7
        %v4102 = vsub.s32 0, %v4101
        %v4103 = vrot.slane %v3551, %v4102
        %4105 = vbcast.lane.b32.xlu0 %v4103, 256
        %v4106 = vpop.permute.xlu0 %4105
        %v4107 = vlaneseq
        %v4108 = vshrl.u32 %v4107, 7
        %v4109 = vsub.s32 1, %v4108
        %v4110 = vrot.slane %v3551, %v4109
        %4112 = vbcast.lane.b32.xlu0 %v4110, 256
        %v4113 = vpop.permute.xlu0 %4112
        %v4114 = vlaneseq
        %v4115 = vshrl.u32 %v4114, 7
        %v4116 = vsub.s32 2, %v4115
        %v4117 = vrot.slane %v3551, %v4116
        %4119 = vbcast.lane.b32.xlu0 %v4117, 256
        %v4120 = vpop.permute.xlu0 %4119
        %v4121 = vlaneseq
        %v4122 = vshrl.u32 %v4121, 7
        %v4123 = vsub.s32 3, %v4122
        %v4124 = vrot.slane %v3551, %v4123
        %4126 = vbcast.lane.b32.xlu0 %v4124, 256
        %v4127 = vpop.permute.xlu0 %4126
        %v4128 = vlaneseq
        %v4129 = vshrl.u32 %v4128, 7
        %v4130 = vsub.s32 4, %v4129
        %v4131 = vrot.slane %v3551, %v4130
        %4133 = vbcast.lane.b32.xlu0 %v4131, 256
        %v4134 = vpop.permute.xlu0 %4133
        %v4135 = vlaneseq
        %v4136 = vshrl.u32 %v4135, 7
        %v4137 = vsub.s32 5, %v4136
        %v4138 = vrot.slane %v3551, %v4137
        %4140 = vbcast.lane.b32.xlu0 %v4138, 256
        %v4141 = vpop.permute.xlu0 %4140
        %v4142 = vlaneseq
        %v4143 = vshrl.u32 %v4142, 7
        %v4144 = vsub.s32 6, %v4143
        %v4145 = vrot.slane %v3551, %v4144
        %4147 = vbcast.lane.b32.xlu0 %v4145, 256
        %v4148 = vpop.permute.xlu0 %4147
        %v4149 = vlaneseq
        %v4150 = vshrl.u32 %v4149, 7
        %v4151 = vsub.s32 7, %v4150
        %v4152 = vrot.slane %v3551, %v4151
        %4154 = vbcast.lane.b32.xlu0 %v4152, 256
        %v4155 = vpop.permute.xlu0 %4154
        %v4156 = vlaneseq
        %v4157 = vshrl.u32 %v4156, 7
        %v4158 = vsub.s32 0, %v4157
        %v4159 = vrot.slane %v3556, %v4158
        %4161 = vbcast.lane.b32.xlu0 %v4159, 256
        %v4162 = vpop.permute.xlu0 %4161
        %v4163 = vlaneseq
        %v4164 = vshrl.u32 %v4163, 7
        %v4165 = vsub.s32 1, %v4164
        %v4166 = vrot.slane %v3556, %v4165
        %4168 = vbcast.lane.b32.xlu0 %v4166, 256
        %v4169 = vpop.permute.xlu0 %4168
        %v4170 = vlaneseq
        %v4171 = vshrl.u32 %v4170, 7
        %v4172 = vsub.s32 2, %v4171
        %v4173 = vrot.slane %v3556, %v4172
        %4175 = vbcast.lane.b32.xlu0 %v4173, 256
        %v4176 = vpop.permute.xlu0 %4175
        %v4177 = vlaneseq
        %v4178 = vshrl.u32 %v4177, 7
        %v4179 = vsub.s32 3, %v4178
        %v4180 = vrot.slane %v3556, %v4179
        %4182 = vbcast.lane.b32.xlu0 %v4180, 256
        %v4183 = vpop.permute.xlu0 %4182
        %v4184 = vlaneseq
        %v4185 = vshrl.u32 %v4184, 7
        %v4186 = vsub.s32 4, %v4185
        %v4187 = vrot.slane %v3556, %v4186
        %4189 = vbcast.lane.b32.xlu0 %v4187, 256
        %v4190 = vpop.permute.xlu0 %4189
        %v4191 = vlaneseq
        %v4192 = vshrl.u32 %v4191, 7
        %v4193 = vsub.s32 5, %v4192
        %v4194 = vrot.slane %v3556, %v4193
        %4196 = vbcast.lane.b32.xlu0 %v4194, 256
        %v4197 = vpop.permute.xlu0 %4196
        %v4198 = vlaneseq
        %v4199 = vshrl.u32 %v4198, 7
        %v4200 = vsub.s32 6, %v4199
        %v4201 = vrot.slane %v3556, %v4200
        %4203 = vbcast.lane.b32.xlu0 %v4201, 256
        %v4204 = vpop.permute.xlu0 %4203
        %v4205 = vlaneseq
        %v4206 = vshrl.u32 %v4205, 7
        %v4207 = vsub.s32 7, %v4206
        %v4208 = vrot.slane %v3556, %v4207
        %4210 = vbcast.lane.b32.xlu0 %v4208, 256
        %v4211 = vpop.permute.xlu0 %4210
        %v4212 = vlaneseq
        %v4213 = vshrl.u32 %v4212, 7
        %v4214 = vsub.s32 0, %v4213
        %v4215 = vrot.slane %v4025, %v4214
        %v4216 = vlaneseq
        %v4217 = vshrl.u32 %v4216, 7
        %v4218 = vsub.s32 0, %v4217
        %v4219 = vrot.slane %v4039, %v4218
        %v4220 = vlaneseq
        %v4221 = vshrl.u32 %v4220, 7
        %v4222 = vsub.s32 0, %v4221
        %v4223 = vrot.slane %v4047, %v4222
        %v4224 = vlaneseq
        %v4225 = vshrl.u32 %v4224, 7
        %v4226 = vsub.s32 0, %v4225
        %v4227 = vrot.slane %v4049, %v4226
        %v4228 = vlaneseq
        %v4229 = vshrl.u32 %v4228, 7
        %v4230 = vsub.s32 0, %v4229
        %v4231 = vrot.slane %v4032, %v4230
        %v4232 = vlaneseq
        %v4233 = vshrl.u32 %v4232, 7
        %v4234 = vsub.s32 0, %v4233
        %v4235 = vrot.slane %v4046, %v4234
        %v4236 = vlaneseq
        %v4237 = vshrl.u32 %v4236, 7
        %v4238 = vsub.s32 0, %v4237
        %v4239 = vrot.slane %v4048, %v4238
        %v4240 = vlaneseq
        %v4241 = vshrl.u32 %v4240, 7
        %v4242 = vsub.s32 0, %v4241
        %v4243 = vrot.slane %v4050, %v4242
        %v4244 = vlaneseq
        %v4245 = vshrl.u32 %v4244, 7
        %v4246 = vsub.s32 0, %v4245
        %v4247 = vrot.slane %v4074, %v4246
        %v4248 = vlaneseq
        %v4249 = vshrl.u32 %v4248, 7
        %v4250 = vsub.s32 0, %v4249
        %v4251 = vrot.slane %v4088, %v4250
        %v4252 = vlaneseq
        %v4253 = vshrl.u32 %v4252, 7
        %v4254 = vsub.s32 0, %v4253
        %v4255 = vrot.slane %v4096, %v4254
        %v4256 = vlaneseq
        %v4257 = vshrl.u32 %v4256, 7
        %v4258 = vsub.s32 0, %v4257
        %v4259 = vrot.slane %v4098, %v4258
        %v4260 = vlaneseq
        %v4261 = vshrl.u32 %v4260, 7
        %v4262 = vsub.s32 0, %v4261
        %v4263 = vrot.slane %v4081, %v4262
        %v4264 = vlaneseq
        %v4265 = vshrl.u32 %v4264, 7
        %v4266 = vsub.s32 0, %v4265
        %v4267 = vrot.slane %v4095, %v4266
        %v4268 = vlaneseq
        %v4269 = vshrl.u32 %v4268, 7
        %v4270 = vsub.s32 0, %v4269
        %v4271 = vrot.slane %v4097, %v4270
        %v4272 = vlaneseq
        %v4273 = vshrl.u32 %v4272, 7
        %v4274 = vsub.s32 0, %v4273
        %v4275 = vrot.slane %v4099, %v4274
        %v4292 = vmul.f32 %v4215, %v4106
        %v4293 = vmul.f32 %v4219, %v4113
        %v4294 = vmul.f32 %v4223, %v4120
        %v4295 = vmul.f32 %v4227, %v4127
        %v4296 = vmul.f32 %v4231, %v4134
        %v4297 = vmul.f32 %v4235, %v4141
        %v4298 = vmul.f32 %v4239, %v4148
        %v4299 = vmul.f32 %v4243, %v4155
        %v4300 = vmul.f32 %v4247, %v4162
        %v4301 = vmul.f32 %v4251, %v4169
        %v4302 = vmul.f32 %v4255, %v4176
        %v4303 = vmul.f32 %v4259, %v4183
        %v4304 = vmul.f32 %v4263, %v4190
        %v4305 = vmul.f32 %v4267, %v4197
        %v4306 = vmul.f32 %v4271, %v4204
        %v4307 = vmul.f32 %v4275, %v4211
        %4308 = vst.msk [vmem:[#allocation3] sm:$0xff] %vm783, %v4292
        %4309 = vst.msk [vmem:[#allocation3 + $0x8] sm:$0xff] %vm783, %v4293
        %4310 = vst.msk [vmem:[#allocation3 + $0x10] sm:$0xff] %vm783, %v4294
        %4311 = vst.msk [vmem:[#allocation3 + $0x18] sm:$0xff] %vm783, %v4295
        %4312 = vst.msk [vmem:[#allocation3 + $0x20] sm:$0xff] %vm783, %v4296
        %4313 = vst.msk [vmem:[#allocation3 + $0x28] sm:$0xff] %vm783, %v4297
        %4314 = vst.msk [vmem:[#allocation3 + $0x30] sm:$0xff] %vm783, %v4298
        %4315 = vst.msk [vmem:[#allocation3 + $0x38] sm:$0xff] %vm783, %v4299
        %4316 = vst.msk [vmem:[#allocation3 + $0x40] sm:$0xff] %vm783, %v4300
        %4317 = vst.msk [vmem:[#allocation3 + $0x48] sm:$0xff] %vm783, %v4301
        %4318 = vst.msk [vmem:[#allocation3 + $0x50] sm:$0xff] %vm783, %v4302
        %4319 = vst.msk [vmem:[#allocation3 + $0x58] sm:$0xff] %vm783, %v4303
        %4320 = vst.msk [vmem:[#allocation3 + $0x60] sm:$0xff] %vm783, %v4304
        %4321 = vst.msk [vmem:[#allocation3 + $0x68] sm:$0xff] %vm783, %v4305
        %4322 = vst.msk [vmem:[#allocation3 + $0x70] sm:$0xff] %vm783, %v4306
        %4323 = vst.msk [vmem:[#allocation3 + $0x78] sm:$0xff] %vm783, %v4307
        %4324 = vst.msk [vmem:[#allocation4] sm:$0xff] %vm1707, %v3631
        %4325 = vst.msk [vmem:[#allocation4 + $0x8] sm:$0xff] %vm1707, %v3636
        %v4326 = vld [vmem:[#allocation2] sm:$0xff]
        %v4327 = vmul.f32 %v4326, 0.0
        %v4328 = vld [vmem:[#allocation3] sm:$0xff]
        %v4329 = vadd.f32 %v4327, %v4328
        %v4330 = vld [vmem:[%s1714] sm:$0xff]
        %v4331 = vmul.f32 %v4330, 0.0
        %v4332 = vld [vmem:[%s1717] sm:$0xff]
        %v4333 = vadd.f32 %v4331, %v4332
        %v4334 = vld [vmem:[#allocation4] sm:$0x1]
        %v4336 = vsel %vm1707, %v4334, 0
        %4338 = vmatprep.subr.mxu0 0.0
        %4339 = vmatpush1.msra.mxu0 %v4329
        %4340 = vmatprep.subr.mxu0 0.0
        %4341 = vmatpush1.msra.mxu0 0.0
        %4342 = vmatprep.subr.mxu0 0.0
        %4343 = vmatpush1.msra.mxu0 0.0
        %4344 = vmatprep.subr.mxu0 0.0
        %4345 = vmatpush1.msra.mxu0 0.0
        %4346 = vmatprep.subr.mxu0 0.0
        %4347 = vmatpush1.msra.mxu0 0.0
        %4348 = vmatprep.subr.mxu0 0.0
        %4349 = vmatpush1.msra.mxu0 0.0
        %4350 = vmatprep.subr.mxu0 0.0
        %4351 = vmatpush1.msra.mxu0 0.0
        %4352 = vmatprep.subr.mxu0 0.0
        %4353 = vmatpush1.msra.mxu0 0.0
        %4354 = vmatprep.subr.mxu0 0.0
        %4355 = vmatpush1.msra.mxu0 0.0
        %4356 = vmatprep.subr.mxu0 0.0
        %4357 = vmatpush1.msra.mxu0 0.0
        %4358 = vmatprep.subr.mxu0 0.0
        %4359 = vmatpush1.msra.mxu0 0.0
        %4360 = vmatprep.subr.mxu0 0.0
        %4361 = vmatpush1.msra.mxu0 0.0
        %4362 = vmatprep.subr.mxu0 0.0
        %4363 = vmatpush1.msra.mxu0 0.0
        %4364 = vmatprep.subr.mxu0 0.0
        %4365 = vmatpush1.msra.mxu0 0.0
        %4366 = vmatprep.subr.mxu0 0.0
        %4367 = vmatpush1.msra.mxu0 0.0
        %4368 = vmatprep.subr.mxu0 0.0
        %4369 = vmatpush1.msra.mxu0 0.0
        %4370 = vmatprep.subr.mxu0 0.0
        %4371 = vmatpush1.msra.mxu0 0.0
        %4372 = vmatprep.subr.mxu0 0.0
        %4373 = vmatpush1.msra.mxu0 0.0
        %4374 = vmatprep.subr.mxu0 0.0
        %4375 = vmatpush1.msra.mxu0 0.0
        %4376 = vmatprep.subr.mxu0 0.0
        %4377 = vmatpush1.msra.mxu0 0.0
        %4378 = vmatprep.subr.mxu0 0.0
        %4379 = vmatpush1.msra.mxu0 0.0
        %4380 = vmatprep.subr.mxu0 0.0
        %4381 = vmatpush1.msra.mxu0 0.0
        %4382 = vmatprep.subr.mxu0 0.0
        %4383 = vmatpush1.msra.mxu0 0.0
        %4384 = vmatprep.subr.mxu0 0.0
        %4385 = vmatpush1.msra.mxu0 0.0
        %4386 = vmatprep.subr.mxu0 0.0
        %4387 = vmatpush1.msra.mxu0 0.0
        %4388 = vmatprep.subr.mxu0 0.0
        %4389 = vmatpush1.msra.mxu0 0.0
        %4390 = vmatprep.subr.mxu0 0.0
        %4391 = vmatpush1.msra.mxu0 0.0
        %4392 = vmatprep.subr.mxu0 0.0
        %4393 = vmatpush1.msra.mxu0 0.0
        %4394 = vmatprep.subr.mxu0 0.0
        %4395 = vmatpush1.msra.mxu0 0.0
        %4396 = vmatprep.subr.mxu0 0.0
        %4397 = vmatpush1.msra.mxu0 0.0
        %4398 = vmatprep.subr.mxu0 0.0
        %4399 = vmatpush1.msra.mxu0 0.0
        %4400 = vmatprep.subr.mxu0 0.0
        %4401 = vmatpush1.msra.mxu0 0.0
        %4402 = vmatprep.mubr.f32.mxu0 0.0
        %4403 = vmatmul.mubr.f32.gmra.mrb[0].mxu0 %v4336
        %v4404 = vpop.f32.mrb[0].mxu0
        %v4405 = vadd.f32 0.0, %v4404
        %v4406 = vpop.f32.mrb[0].mxu0
        %4407 = vdwg.mxu0
        %4408 = vst.msk [vmem:[#allocation5] sm:$0x1] %vm1794, %v4405
        %v4409 = vld [vmem:[#allocation4 + $0xf] sm:$0x1]
        %v4411 = vsel %vm1707, %v4409, 0
        %4413 = vmatprep.subr.mxu0 0.0
        %4414 = vmatpush1.msra.mxu0 %v4333
        %4415 = vmatprep.subr.mxu0 0.0
        %4416 = vmatpush1.msra.mxu0 0.0
        %4417 = vmatprep.subr.mxu0 0.0
        %4418 = vmatpush1.msra.mxu0 0.0
        %4419 = vmatprep.subr.mxu0 0.0
        %4420 = vmatpush1.msra.mxu0 0.0
        %4421 = vmatprep.subr.mxu0 0.0
        %4422 = vmatpush1.msra.mxu0 0.0
        %4423 = vmatprep.subr.mxu0 0.0
        %4424 = vmatpush1.msra.mxu0 0.0
        %4425 = vmatprep.subr.mxu0 0.0
        %4426 = vmatpush1.msra.mxu0 0.0
        %4427 = vmatprep.subr.mxu0 0.0
        %4428 = vmatpush1.msra.mxu0 0.0
        %4429 = vmatprep.subr.mxu0 0.0
        %4430 = vmatpush1.msra.mxu0 0.0
        %4431 = vmatprep.subr.mxu0 0.0
        %4432 = vmatpush1.msra.mxu0 0.0
        %4433 = vmatprep.subr.mxu0 0.0
        %4434 = vmatpush1.msra.mxu0 0.0
        %4435 = vmatprep.subr.mxu0 0.0
        %4436 = vmatpush1.msra.mxu0 0.0
        %4437 = vmatprep.subr.mxu0 0.0
        %4438 = vmatpush1.msra.mxu0 0.0
        %4439 = vmatprep.subr.mxu0 0.0
        %4440 = vmatpush1.msra.mxu0 0.0
        %4441 = vmatprep.subr.mxu0 0.0
        %4442 = vmatpush1.msra.mxu0 0.0
        %4443 = vmatprep.subr.mxu0 0.0
        %4444 = vmatpush1.msra.mxu0 0.0
        %4445 = vmatprep.subr.mxu0 0.0
        %4446 = vmatpush1.msra.mxu0 0.0
        %4447 = vmatprep.subr.mxu0 0.0
        %4448 = vmatpush1.msra.mxu0 0.0
        %4449 = vmatprep.subr.mxu0 0.0
        %4450 = vmatpush1.msra.mxu0 0.0
        %4451 = vmatprep.subr.mxu0 0.0
        %4452 = vmatpush1.msra.mxu0 0.0
        %4453 = vmatprep.subr.mxu0 0.0
        %4454 = vmatpush1.msra.mxu0 0.0
        %4455 = vmatprep.subr.mxu0 0.0
        %4456 = vmatpush1.msra.mxu0 0.0
        %4457 = vmatprep.subr.mxu0 0.0
        %4458 = vmatpush1.msra.mxu0 0.0
        %4459 = vmatprep.subr.mxu0 0.0
        %4460 = vmatpush1.msra.mxu0 0.0
        %4461 = vmatprep.subr.mxu0 0.0
        %4462 = vmatpush1.msra.mxu0 0.0
        %4463 = vmatprep.subr.mxu0 0.0
        %4464 = vmatpush1.msra.mxu0 0.0
        %4465 = vmatprep.subr.mxu0 0.0
        %4466 = vmatpush1.msra.mxu0 0.0
        %4467 = vmatprep.subr.mxu0 0.0
        %4468 = vmatpush1.msra.mxu0 0.0
        %4469 = vmatprep.subr.mxu0 0.0
        %4470 = vmatpush1.msra.mxu0 0.0
        %4471 = vmatprep.subr.mxu0 0.0
        %4472 = vmatpush1.msra.mxu0 0.0
        %4473 = vmatprep.subr.mxu0 0.0
        %4474 = vmatpush1.msra.mxu0 0.0
        %4475 = vmatprep.subr.mxu0 0.0
        %4476 = vmatpush1.msra.mxu0 0.0
        %4477 = vmatprep.mubr.f32.mxu0 0.0
        %4478 = vmatmul.mubr.f32.gmra.mrb[0].mxu0 %v4411
        %v4479 = vpop.f32.mrb[0].mxu0
        %v4480 = vadd.f32 0.0, %v4479
        %v4481 = vpop.f32.mrb[0].mxu0
        %4482 = vdwg.mxu0
        %4483 = vst.msk [vmem:[#allocation5 + $0xf] sm:$0x1] %vm1794, %v4480
        %v4484 = vld [vmem:[%s1871] sm:$0xff]
        %v4485 = vmul.f32 %v4484, %v4329
        %v4486 = vld [vmem:[%s1874] sm:$0xff]
        %v4487 = vadd.f32 %v4485, %v4486
        %v4488 = vld [vmem:[%s1877] sm:$0xff]
        %v4489 = vmul.f32 %v4488, %v4333
        %v4490 = vld [vmem:[%s1880] sm:$0xff]
        %v4491 = vadd.f32 %v4489, %v4490
        %v4492 = vld [vmem:[#allocation4 + $0x1] sm:$0x1]
        %v4494 = vsel %vm1707, %v4492, 0
        %4496 = vmatprep.subr.mxu0 0.0
        %4497 = vmatpush1.msra.mxu0 %v4487
        %4498 = vmatprep.subr.mxu0 0.0
        %4499 = vmatpush1.msra.mxu0 0.0
        %4500 = vmatprep.subr.mxu0 0.0
        %4501 = vmatpush1.msra.mxu0 0.0
        %4502 = vmatprep.subr.mxu0 0.0
        %4503 = vmatpush1.msra.mxu0 0.0
        %4504 = vmatprep.subr.mxu0 0.0
        %4505 = vmatpush1.msra.mxu0 0.0
        %4506 = vmatprep.subr.mxu0 0.0
        %4507 = vmatpush1.msra.mxu0 0.0
        %4508 = vmatprep.subr.mxu0 0.0
        %4509 = vmatpush1.msra.mxu0 0.0
        %4510 = vmatprep.subr.mxu0 0.0
        %4511 = vmatpush1.msra.mxu0 0.0
        %4512 = vmatprep.subr.mxu0 0.0
        %4513 = vmatpush1.msra.mxu0 0.0
        %4514 = vmatprep.subr.mxu0 0.0
        %4515 = vmatpush1.msra.mxu0 0.0
        %4516 = vmatprep.subr.mxu0 0.0
        %4517 = vmatpush1.msra.mxu0 0.0
        %4518 = vmatprep.subr.mxu0 0.0
        %4519 = vmatpush1.msra.mxu0 0.0
        %4520 = vmatprep.subr.mxu0 0.0
        %4521 = vmatpush1.msra.mxu0 0.0
        %4522 = vmatprep.subr.mxu0 0.0
        %4523 = vmatpush1.msra.mxu0 0.0
        %4524 = vmatprep.subr.mxu0 0.0
        %4525 = vmatpush1.msra.mxu0 0.0
        %4526 = vmatprep.subr.mxu0 0.0
        %4527 = vmatpush1.msra.mxu0 0.0
        %4528 = vmatprep.subr.mxu0 0.0
        %4529 = vmatpush1.msra.mxu0 0.0
        %4530 = vmatprep.subr.mxu0 0.0
        %4531 = vmatpush1.msra.mxu0 0.0
        %4532 = vmatprep.subr.mxu0 0.0
        %4533 = vmatpush1.msra.mxu0 0.0
        %4534 = vmatprep.subr.mxu0 0.0
        %4535 = vmatpush1.msra.mxu0 0.0
        %4536 = vmatprep.subr.mxu0 0.0
        %4537 = vmatpush1.msra.mxu0 0.0
        %4538 = vmatprep.subr.mxu0 0.0
        %4539 = vmatpush1.msra.mxu0 0.0
        %4540 = vmatprep.subr.mxu0 0.0
        %4541 = vmatpush1.msra.mxu0 0.0
        %4542 = vmatprep.subr.mxu0 0.0
        %4543 = vmatpush1.msra.mxu0 0.0
        %4544 = vmatprep.subr.mxu0 0.0
        %4545 = vmatpush1.msra.mxu0 0.0
        %4546 = vmatprep.subr.mxu0 0.0
        %4547 = vmatpush1.msra.mxu0 0.0
        %4548 = vmatprep.subr.mxu0 0.0
        %4549 = vmatpush1.msra.mxu0 0.0
        %4550 = vmatprep.subr.mxu0 0.0
        %4551 = vmatpush1.msra.mxu0 0.0
        %4552 = vmatprep.subr.mxu0 0.0
        %4553 = vmatpush1.msra.mxu0 0.0
        %4554 = vmatprep.subr.mxu0 0.0
        %4555 = vmatpush1.msra.mxu0 0.0
        %4556 = vmatprep.subr.mxu0 0.0
        %4557 = vmatpush1.msra.mxu0 0.0
        %4558 = vmatprep.subr.mxu0 0.0
        %4559 = vmatpush1.msra.mxu0 0.0
        %4560 = vmatprep.mubr.f32.mxu0 0.0
        %4561 = vmatmul.mubr.f32.gmra.mrb[0].mxu0 %v4494
        %v4562 = vpop.f32.mrb[0].mxu0
        %v4563 = vadd.f32 0.0, %v4562
        %v4564 = vpop.f32.mrb[0].mxu0
        %4565 = vdwg.mxu0
        %4566 = vst.msk [vmem:[#allocation5 + $0x1] sm:$0x1] %vm1794, %v4563
        %v4567 = vld [vmem:[#allocation4 + $0xe] sm:$0x1]
        %v4569 = vsel %vm1707, %v4567, 0
        %4571 = vmatprep.subr.mxu0 0.0
        %4572 = vmatpush1.msra.mxu0 %v4491
        %4573 = vmatprep.subr.mxu0 0.0
        %4574 = vmatpush1.msra.mxu0 0.0
        %4575 = vmatprep.subr.mxu0 0.0
        %4576 = vmatpush1.msra.mxu0 0.0
        %4577 = vmatprep.subr.mxu0 0.0
        %4578 = vmatpush1.msra.mxu0 0.0
        %4579 = vmatprep.subr.mxu0 0.0
        %4580 = vmatpush1.msra.mxu0 0.0
        %4581 = vmatprep.subr.mxu0 0.0
        %4582 = vmatpush1.msra.mxu0 0.0
        %4583 = vmatprep.subr.mxu0 0.0
        %4584 = vmatpush1.msra.mxu0 0.0
        %4585 = vmatprep.subr.mxu0 0.0
        %4586 = vmatpush1.msra.mxu0 0.0
        %4587 = vmatprep.subr.mxu0 0.0
        %4588 = vmatpush1.msra.mxu0 0.0
        %4589 = vmatprep.subr.mxu0 0.0
        %4590 = vmatpush1.msra.mxu0 0.0
        %4591 = vmatprep.subr.mxu0 0.0
        %4592 = vmatpush1.msra.mxu0 0.0
        %4593 = vmatprep.subr.mxu0 0.0
        %4594 = vmatpush1.msra.mxu0 0.0
        %4595 = vmatprep.subr.mxu0 0.0
        %4596 = vmatpush1.msra.mxu0 0.0
        %4597 = vmatprep.subr.mxu0 0.0
        %4598 = vmatpush1.msra.mxu0 0.0
        %4599 = vmatprep.subr.mxu0 0.0
        %4600 = vmatpush1.msra.mxu0 0.0
        %4601 = vmatprep.subr.mxu0 0.0
        %4602 = vmatpush1.msra.mxu0 0.0
        %4603 = vmatprep.subr.mxu0 0.0
        %4604 = vmatpush1.msra.mxu0 0.0
        %4605 = vmatprep.subr.mxu0 0.0
        %4606 = vmatpush1.msra.mxu0 0.0
        %4607 = vmatprep.subr.mxu0 0.0
        %4608 = vmatpush1.msra.mxu0 0.0
        %4609 = vmatprep.subr.mxu0 0.0
        %4610 = vmatpush1.msra.mxu0 0.0
        %4611 = vmatprep.subr.mxu0 0.0
        %4612 = vmatpush1.msra.mxu0 0.0
        %4613 = vmatprep.subr.mxu0 0.0
        %4614 = vmatpush1.msra.mxu0 0.0
        %4615 = vmatprep.subr.mxu0 0.0
        %4616 = vmatpush1.msra.mxu0 0.0
        %4617 = vmatprep.subr.mxu0 0.0
        %4618 = vmatpush1.msra.mxu0 0.0
        %4619 = vmatprep.subr.mxu0 0.0
        %4620 = vmatpush1.msra.mxu0 0.0
        %4621 = vmatprep.subr.mxu0 0.0
        %4622 = vmatpush1.msra.mxu0 0.0
        %4623 = vmatprep.subr.mxu0 0.0
        %4624 = vmatpush1.msra.mxu0 0.0
        %4625 = vmatprep.subr.mxu0 0.0
        %4626 = vmatpush1.msra.mxu0 0.0
        %4627 = vmatprep.subr.mxu0 0.0
        %4628 = vmatpush1.msra.mxu0 0.0
        %4629 = vmatprep.subr.mxu0 0.0
        %4630 = vmatpush1.msra.mxu0 0.0
        %4631 = vmatprep.subr.mxu0 0.0
        %4632 = vmatpush1.msra.mxu0 0.0
        %4633 = vmatprep.subr.mxu0 0.0
        %4634 = vmatpush1.msra.mxu0 0.0
        %4635 = vmatprep.mubr.f32.mxu0 0.0
        %4636 = vmatmul.mubr.f32.gmra.mrb[0].mxu0 %v4569
        %v4637 = vpop.f32.mrb[0].mxu0
        %v4638 = vadd.f32 0.0, %v4637
        %v4639 = vpop.f32.mrb[0].mxu0
        %4640 = vdwg.mxu0
        %4641 = vst.msk [vmem:[#allocation5 + $0xe] sm:$0x1] %vm1794, %v4638
        %v4642 = vld [vmem:[%s2033] sm:$0xff]
        %v4643 = vmul.f32 %v4642, %v4487
        %v4644 = vld [vmem:[%s2036] sm:$0xff]
        %v4645 = vadd.f32 %v4643, %v4644
        %v4646 = vld [vmem:[%s2039] sm:$0xff]
        %v4647 = vmul.f32 %v4646, %v4491
        %v4648 = vld [vmem:[%s2042] sm:$0xff]
        %v4649 = vadd.f32 %v4647, %v4648
        %v4650 = vld [vmem:[#allocation4 + $0x2] sm:$0x1]
        %v4652 = vsel %vm1707, %v4650, 0
        %4654 = vmatprep.subr.mxu0 0.0
        %4655 = vmatpush1.msra.mxu0 %v4645
        %4656 = vmatprep.subr.mxu0 0.0
        %4657 = vmatpush1.msra.mxu0 0.0
        %4658 = vmatprep.subr.mxu0 0.0
        %4659 = vmatpush1.msra.mxu0 0.0
        %4660 = vmatprep.subr.mxu0 0.0
        %4661 = vmatpush1.msra.mxu0 0.0
        %4662 = vmatprep.subr.mxu0 0.0
        %4663 = vmatpush1.msra.mxu0 0.0
        %4664 = vmatprep.subr.mxu0 0.0
        %4665 = vmatpush1.msra.mxu0 0.0
        %4666 = vmatprep.subr.mxu0 0.0
        %4667 = vmatpush1.msra.mxu0 0.0
        %4668 = vmatprep.subr.mxu0 0.0
        %4669 = vmatpush1.msra.mxu0 0.0
        %4670 = vmatprep.subr.mxu0 0.0
        %4671 = vmatpush1.msra.mxu0 0.0
        %4672 = vmatprep.subr.mxu0 0.0
        %4673 = vmatpush1.msra.mxu0 0.0
        %4674 = vmatprep.subr.mxu0 0.0
        %4675 = vmatpush1.msra.mxu0 0.0
        %4676 = vmatprep.subr.mxu0 0.0
        %4677 = vmatpush1.msra.mxu0 0.0
        %4678 = vmatprep.subr.mxu0 0.0
        %4679 = vmatpush1.msra.mxu0 0.0
        %4680 = vmatprep.subr.mxu0 0.0
        %4681 = vmatpush1.msra.mxu0 0.0
        %4682 = vmatprep.subr.mxu0 0.0
        %4683 = vmatpush1.msra.mxu0 0.0
        %4684 = vmatprep.subr.mxu0 0.0
        %4685 = vmatpush1.msra.mxu0 0.0
        %4686 = vmatprep.subr.mxu0 0.0
        %4687 = vmatpush1.msra.mxu0 0.0
        %4688 = vmatprep.subr.mxu0 0.0
        %4689 = vmatpush1.msra.mxu0 0.0
        %4690 = vmatprep.subr.mxu0 0.0
        %4691 = vmatpush1.msra.mxu0 0.0
        %4692 = vmatprep.subr.mxu0 0.0
        %4693 = vmatpush1.msra.mxu0 0.0
        %4694 = vmatprep.subr.mxu0 0.0
        %4695 = vmatpush1.msra.mxu0 0.0
        %4696 = vmatprep.subr.mxu0 0.0
        %4697 = vmatpush1.msra.mxu0 0.0
        %4698 = vmatprep.subr.mxu0 0.0
        %4699 = vmatpush1.msra.mxu0 0.0
        %4700 = vmatprep.subr.mxu0 0.0
        %4701 = vmatpush1.msra.mxu0 0.0
        %4702 = vmatprep.subr.mxu0 0.0
        %4703 = vmatpush1.msra.mxu0 0.0
        %4704 = vmatprep.subr.mxu0 0.0
        %4705 = vmatpush1.msra.mxu0 0.0
        %4706 = vmatprep.subr.mxu0 0.0
        %4707 = vmatpush1.msra.mxu0 0.0
        %4708 = vmatprep.subr.mxu0 0.0
        %4709 = vmatpush1.msra.mxu0 0.0
        %4710 = vmatprep.subr.mxu0 0.0
        %4711 = vmatpush1.msra.mxu0 0.0
        %4712 = vmatprep.subr.mxu0 0.0
        %4713 = vmatpush1.msra.mxu0 0.0
        %4714 = vmatprep.subr.mxu0 0.0
        %4715 = vmatpush1.msra.mxu0 0.0
        %4716 = vmatprep.subr.mxu0 0.0
        %4717 = vmatpush1.msra.mxu0 0.0
        %4718 = vmatprep.mubr.f32.mxu0 0.0
        %4719 = vmatmul.mubr.f32.gmra.mrb[0].mxu0 %v4652
        %v4720 = vpop.f32.mrb[0].mxu0
        %v4721 = vadd.f32 0.0, %v4720
        %v4722 = vpop.f32.mrb[0].mxu0
        %4723 = vdwg.mxu0
        %4724 = vst.msk [vmem:[#allocation5 + $0x2] sm:$0x1] %vm1794, %v4721
        %v4725 = vld [vmem:[#allocation4 + $0xd] sm:$0x1]
        %v4727 = vsel %vm1707, %v4725, 0
        %4729 = vmatprep.subr.mxu0 0.0
        %4730 = vmatpush1.msra.mxu0 %v4649
        %4731 = vmatprep.subr.mxu0 0.0
        %4732 = vmatpush1.msra.mxu0 0.0
        %4733 = vmatprep.subr.mxu0 0.0
        %4734 = vmatpush1.msra.mxu0 0.0
        %4735 = vmatprep.subr.mxu0 0.0
        %4736 = vmatpush1.msra.mxu0 0.0
        %4737 = vmatprep.subr.mxu0 0.0
        %4738 = vmatpush1.msra.mxu0 0.0
        %4739 = vmatprep.subr.mxu0 0.0
        %4740 = vmatpush1.msra.mxu0 0.0
        %4741 = vmatprep.subr.mxu0 0.0
        %4742 = vmatpush1.msra.mxu0 0.0
        %4743 = vmatprep.subr.mxu0 0.0
        %4744 = vmatpush1.msra.mxu0 0.0
        %4745 = vmatprep.subr.mxu0 0.0
        %4746 = vmatpush1.msra.mxu0 0.0
        %4747 = vmatprep.subr.mxu0 0.0
        %4748 = vmatpush1.msra.mxu0 0.0
        %4749 = vmatprep.subr.mxu0 0.0
        %4750 = vmatpush1.msra.mxu0 0.0
        %4751 = vmatprep.subr.mxu0 0.0
        %4752 = vmatpush1.msra.mxu0 0.0
        %4753 = vmatprep.subr.mxu0 0.0
        %4754 = vmatpush1.msra.mxu0 0.0
        %4755 = vmatprep.subr.mxu0 0.0
        %4756 = vmatpush1.msra.mxu0 0.0
        %4757 = vmatprep.subr.mxu0 0.0
        %4758 = vmatpush1.msra.mxu0 0.0
        %4759 = vmatprep.subr.mxu0 0.0
        %4760 = vmatpush1.msra.mxu0 0.0
        %4761 = vmatprep.subr.mxu0 0.0
        %4762 = vmatpush1.msra.mxu0 0.0
        %4763 = vmatprep.subr.mxu0 0.0
        %4764 = vmatpush1.msra.mxu0 0.0
        %4765 = vmatprep.subr.mxu0 0.0
        %4766 = vmatpush1.msra.mxu0 0.0
        %4767 = vmatprep.subr.mxu0 0.0
        %4768 = vmatpush1.msra.mxu0 0.0
        %4769 = vmatprep.subr.mxu0 0.0
        %4770 = vmatpush1.msra.mxu0 0.0
        %4771 = vmatprep.subr.mxu0 0.0
        %4772 = vmatpush1.msra.mxu0 0.0
        %4773 = vmatprep.subr.mxu0 0.0
        %4774 = vmatpush1.msra.mxu0 0.0
        %4775 = vmatprep.subr.mxu0 0.0
        %4776 = vmatpush1.msra.mxu0 0.0
        %4777 = vmatprep.subr.mxu0 0.0
        %4778 = vmatpush1.msra.mxu0 0.0
        %4779 = vmatprep.subr.mxu0 0.0
        %4780 = vmatpush1.msra.mxu0 0.0
        %4781 = vmatprep.subr.mxu0 0.0
        %4782 = vmatpush1.msra.mxu0 0.0
        %4783 = vmatprep.subr.mxu0 0.0
        %4784 = vmatpush1.msra.mxu0 0.0
        %4785 = vmatprep.subr.mxu0 0.0
        %4786 = vmatpush1.msra.mxu0 0.0
        %4787 = vmatprep.subr.mxu0 0.0
        %4788 = vmatpush1.msra.mxu0 0.0
        %4789 = vmatprep.subr.mxu0 0.0
        %4790 = vmatpush1.msra.mxu0 0.0
        %4791 = vmatprep.subr.mxu0 0.0
        %4792 = vmatpush1.msra.mxu0 0.0
        %4793 = vmatprep.mubr.f32.mxu0 0.0
        %4794 = vmatmul.mubr.f32.gmra.mrb[0].mxu0 %v4727
        %v4795 = vpop.f32.mrb[0].mxu0
        %v4796 = vadd.f32 0.0, %v4795
        %v4797 = vpop.f32.mrb[0].mxu0
        %4798 = vdwg.mxu0
        %4799 = vst.msk [vmem:[#allocation5 + $0xd] sm:$0x1] %vm1794, %v4796
        %v4800 = vld [vmem:[%s2195] sm:$0xff]
        %v4801 = vmul.f32 %v4800, %v4645
        %v4802 = vld [vmem:[%s2198] sm:$0xff]
        %v4803 = vadd.f32 %v4801, %v4802
        %v4804 = vld [vmem:[%s2201] sm:$0xff]
        %v4805 = vmul.f32 %v4804, %v4649
        %v4806 = vld [vmem:[%s2204] sm:$0xff]
        %v4807 = vadd.f32 %v4805, %v4806
        %v4808 = vld [vmem:[#allocation4 + $0x3] sm:$0x1]
        %v4810 = vsel %vm1707, %v4808, 0
        %4812 = vmatprep.subr.mxu0 0.0
        %4813 = vmatpush1.msra.mxu0 %v4803
        %4814 = vmatprep.subr.mxu0 0.0
        %4815 = vmatpush1.msra.mxu0 0.0
        %4816 = vmatprep.subr.mxu0 0.0
        %4817 = vmatpush1.msra.mxu0 0.0
        %4818 = vmatprep.subr.mxu0 0.0
        %4819 = vmatpush1.msra.mxu0 0.0
        %4820 = vmatprep.subr.mxu0 0.0
        %4821 = vmatpush1.msra.mxu0 0.0
        %4822 = vmatprep.subr.mxu0 0.0
        %4823 = vmatpush1.msra.mxu0 0.0
        %4824 = vmatprep.subr.mxu0 0.0
        %4825 = vmatpush1.msra.mxu0 0.0
        %4826 = vmatprep.subr.mxu0 0.0
        %4827 = vmatpush1.msra.mxu0 0.0
        %4828 = vmatprep.subr.mxu0 0.0
        %4829 = vmatpush1.msra.mxu0 0.0
        %4830 = vmatprep.subr.mxu0 0.0
        %4831 = vmatpush1.msra.mxu0 0.0
        %4832 = vmatprep.subr.mxu0 0.0
        %4833 = vmatpush1.msra.mxu0 0.0
        %4834 = vmatprep.subr.mxu0 0.0
        %4835 = vmatpush1.msra.mxu0 0.0
        %4836 = vmatprep.subr.mxu0 0.0
        %4837 = vmatpush1.msra.mxu0 0.0
        %4838 = vmatprep.subr.mxu0 0.0
        %4839 = vmatpush1.msra.mxu0 0.0
        %4840 = vmatprep.subr.mxu0 0.0
        %4841 = vmatpush1.msra.mxu0 0.0
        %4842 = vmatprep.subr.mxu0 0.0
        %4843 = vmatpush1.msra.mxu0 0.0
        %4844 = vmatprep.subr.mxu0 0.0
        %4845 = vmatpush1.msra.mxu0 0.0
        %4846 = vmatprep.subr.mxu0 0.0
        %4847 = vmatpush1.msra.mxu0 0.0
        %4848 = vmatprep.subr.mxu0 0.0
        %4849 = vmatpush1.msra.mxu0 0.0
        %4850 = vmatprep.subr.mxu0 0.0
        %4851 = vmatpush1.msra.mxu0 0.0
        %4852 = vmatprep.subr.mxu0 0.0
        %4853 = vmatpush1.msra.mxu0 0.0
        %4854 = vmatprep.subr.mxu0 0.0
        %4855 = vmatpush1.msra.mxu0 0.0
        %4856 = vmatprep.subr.mxu0 0.0
        %4857 = vmatpush1.msra.mxu0 0.0
        %4858 = vmatprep.subr.mxu0 0.0
        %4859 = vmatpush1.msra.mxu0 0.0
        %4860 = vmatprep.subr.mxu0 0.0
        %4861 = vmatpush1.msra.mxu0 0.0
        %4862 = vmatprep.subr.mxu0 0.0
        %4863 = vmatpush1.msra.mxu0 0.0
        %4864 = vmatprep.subr.mxu0 0.0
        %4865 = vmatpush1.msra.mxu0 0.0
        %4866 = vmatprep.subr.mxu0 0.0
        %4867 = vmatpush1.msra.mxu0 0.0
        %4868 = vmatprep.subr.mxu0 0.0
        %4869 = vmatpush1.msra.mxu0 0.0
        %4870 = vmatprep.subr.mxu0 0.0
        %4871 = vmatpush1.msra.mxu0 0.0
        %4872 = vmatprep.subr.mxu0 0.0
        %4873 = vmatpush1.msra.mxu0 0.0
        %4874 = vmatprep.subr.mxu0 0.0
        %4875 = vmatpush1.msra.mxu0 0.0
        %4876 = vmatprep.mubr.f32.mxu0 0.0
        %4877 = vmatmul.mubr.f32.gmra.mrb[0].mxu0 %v4810
        %v4878 = vpop.f32.mrb[0].mxu0
        %v4879 = vadd.f32 0.0, %v4878
        %v4880 = vpop.f32.mrb[0].mxu0
        %4881 = vdwg.mxu0
        %4882 = vst.msk [vmem:[#allocation5 + $0x3] sm:$0x1] %vm1794, %v4879
        %v4883 = vld [vmem:[#allocation4 + $0xc] sm:$0x1]
        %v4885 = vsel %vm1707, %v4883, 0
        %4887 = vmatprep.subr.mxu0 0.0
        %4888 = vmatpush1.msra.mxu0 %v4807
        %4889 = vmatprep.subr.mxu0 0.0
        %4890 = vmatpush1.msra.mxu0 0.0
        %4891 = vmatprep.subr.mxu0 0.0
        %4892 = vmatpush1.msra.mxu0 0.0
        %4893 = vmatprep.subr.mxu0 0.0
        %4894 = vmatpush1.msra.mxu0 0.0
        %4895 = vmatprep.subr.mxu0 0.0
        %4896 = vmatpush1.msra.mxu0 0.0
        %4897 = vmatprep.subr.mxu0 0.0
        %4898 = vmatpush1.msra.mxu0 0.0
        %4899 = vmatprep.subr.mxu0 0.0
        %4900 = vmatpush1.msra.mxu0 0.0
        %4901 = vmatprep.subr.mxu0 0.0
        %4902 = vmatpush1.msra.mxu0 0.0
        %4903 = vmatprep.subr.mxu0 0.0
        %4904 = vmatpush1.msra.mxu0 0.0
        %4905 = vmatprep.subr.mxu0 0.0
        %4906 = vmatpush1.msra.mxu0 0.0
        %4907 = vmatprep.subr.mxu0 0.0
        %4908 = vmatpush1.msra.mxu0 0.0
        %4909 = vmatprep.subr.mxu0 0.0
        %4910 = vmatpush1.msra.mxu0 0.0
        %4911 = vmatprep.subr.mxu0 0.0
        %4912 = vmatpush1.msra.mxu0 0.0
        %4913 = vmatprep.subr.mxu0 0.0
        %4914 = vmatpush1.msra.mxu0 0.0
        %4915 = vmatprep.subr.mxu0 0.0
        %4916 = vmatpush1.msra.mxu0 0.0
        %4917 = vmatprep.subr.mxu0 0.0
        %4918 = vmatpush1.msra.mxu0 0.0
        %4919 = vmatprep.subr.mxu0 0.0
        %4920 = vmatpush1.msra.mxu0 0.0
        %4921 = vmatprep.subr.mxu0 0.0
        %4922 = vmatpush1.msra.mxu0 0.0
        %4923 = vmatprep.subr.mxu0 0.0
        %4924 = vmatpush1.msra.mxu0 0.0
        %4925 = vmatprep.subr.mxu0 0.0
        %4926 = vmatpush1.msra.mxu0 0.0
        %4927 = vmatprep.subr.mxu0 0.0
        %4928 = vmatpush1.msra.mxu0 0.0
        %4929 = vmatprep.subr.mxu0 0.0
        %4930 = vmatpush1.msra.mxu0 0.0
        %4931 = vmatprep.subr.mxu0 0.0
        %4932 = vmatpush1.msra.mxu0 0.0
        %4933 = vmatprep.subr.mxu0 0.0
        %4934 = vmatpush1.msra.mxu0 0.0
        %4935 = vmatprep.subr.mxu0 0.0
        %4936 = vmatpush1.msra.mxu0 0.0
        %4937 = vmatprep.subr.mxu0 0.0
        %4938 = vmatpush1.msra.mxu0 0.0
        %4939 = vmatprep.subr.mxu0 0.0
        %4940 = vmatpush1.msra.mxu0 0.0
        %4941 = vmatprep.subr.mxu0 0.0
        %4942 = vmatpush1.msra.mxu0 0.0
        %4943 = vmatprep.subr.mxu0 0.0
        %4944 = vmatpush1.msra.mxu0 0.0
        %4945 = vmatprep.subr.mxu0 0.0
        %4946 = vmatpush1.msra.mxu0 0.0
        %4947 = vmatprep.subr.mxu0 0.0
        %4948 = vmatpush1.msra.mxu0 0.0
        %4949 = vmatprep.subr.mxu0 0.0
        %4950 = vmatpush1.msra.mxu0 0.0
        %4951 = vmatprep.mubr.f32.mxu0 0.0
        %4952 = vmatmul.mubr.f32.gmra.mrb[0].mxu0 %v4885
        %v4953 = vpop.f32.mrb[0].mxu0
        %v4954 = vadd.f32 0.0, %v4953
        %v4955 = vpop.f32.mrb[0].mxu0
        %4956 = vdwg.mxu0
        %4957 = vst.msk [vmem:[#allocation5 + $0xc] sm:$0x1] %vm1794, %v4954
        %v4958 = vld [vmem:[%s2357] sm:$0xff]
        %v4959 = vmul.f32 %v4958, %v4803
        %v4960 = vld [vmem:[%s2360] sm:$0xff]
        %v4961 = vadd.f32 %v4959, %v4960
        %v4962 = vld [vmem:[%s2363] sm:$0xff]
        %v4963 = vmul.f32 %v4962, %v4807
        %v4964 = vld [vmem:[%s2366] sm:$0xff]
        %v4965 = vadd.f32 %v4963, %v4964
        %v4966 = vld [vmem:[#allocation4 + $0x4] sm:$0x1]
        %v4968 = vsel %vm1707, %v4966, 0
        %4970 = vmatprep.subr.mxu0 0.0
        %4971 = vmatpush1.msra.mxu0 %v4961
        %4972 = vmatprep.subr.mxu0 0.0
        %4973 = vmatpush1.msra.mxu0 0.0
        %4974 = vmatprep.subr.mxu0 0.0
        %4975 = vmatpush1.msra.mxu0 0.0
        %4976 = vmatprep.subr.mxu0 0.0
        %4977 = vmatpush1.msra.mxu0 0.0
        %4978 = vmatprep.subr.mxu0 0.0
        %4979 = vmatpush1.msra.mxu0 0.0
        %4980 = vmatprep.subr.mxu0 0.0
        %4981 = vmatpush1.msra.mxu0 0.0
        %4982 = vmatprep.subr.mxu0 0.0
        %4983 = vmatpush1.msra.mxu0 0.0
        %4984 = vmatprep.subr.mxu0 0.0
        %4985 = vmatpush1.msra.mxu0 0.0
        %4986 = vmatprep.subr.mxu0 0.0
        %4987 = vmatpush1.msra.mxu0 0.0
        %4988 = vmatprep.subr.mxu0 0.0
        %4989 = vmatpush1.msra.mxu0 0.0
        %4990 = vmatprep.subr.mxu0 0.0
        %4991 = vmatpush1.msra.mxu0 0.0
        %4992 = vmatprep.subr.mxu0 0.0
        %4993 = vmatpush1.msra.mxu0 0.0
        %4994 = vmatprep.subr.mxu0 0.0
        %4995 = vmatpush1.msra.mxu0 0.0
        %4996 = vmatprep.subr.mxu0 0.0
        %4997 = vmatpush1.msra.mxu0 0.0
        %4998 = vmatprep.subr.mxu0 0.0
        %4999 = vmatpush1.msra.mxu0 0.0
        %5000 = vmatprep.subr.mxu0 0.0
        %5001 = vmatpush1.msra.mxu0 0.0
        %5002 = vmatprep.subr.mxu0 0.0
        %5003 = vmatpush1.msra.mxu0 0.0
        %5004 = vmatprep.subr.mxu0 0.0
        %5005 = vmatpush1.msra.mxu0 0.0
        %5006 = vmatprep.subr.mxu0 0.0
        %5007 = vmatpush1.msra.mxu0 0.0
        %5008 = vmatprep.subr.mxu0 0.0
        %5009 = vmatpush1.msra.mxu0 0.0
        %5010 = vmatprep.subr.mxu0 0.0
        %5011 = vmatpush1.msra.mxu0 0.0
        %5012 = vmatprep.subr.mxu0 0.0
        %5013 = vmatpush1.msra.mxu0 0.0
        %5014 = vmatprep.subr.mxu0 0.0
        %5015 = vmatpush1.msra.mxu0 0.0
        %5016 = vmatprep.subr.mxu0 0.0
        %5017 = vmatpush1.msra.mxu0 0.0
        %5018 = vmatprep.subr.mxu0 0.0
        %5019 = vmatpush1.msra.mxu0 0.0
        %5020 = vmatprep.subr.mxu0 0.0
        %5021 = vmatpush1.msra.mxu0 0.0
        %5022 = vmatprep.subr.mxu0 0.0
        %5023 = vmatpush1.msra.mxu0 0.0
        %5024 = vmatprep.subr.mxu0 0.0
        %5025 = vmatpush1.msra.mxu0 0.0
        %5026 = vmatprep.subr.mxu0 0.0
        %5027 = vmatpush1.msra.mxu0 0.0
        %5028 = vmatprep.subr.mxu0 0.0
        %5029 = vmatpush1.msra.mxu0 0.0
        %5030 = vmatprep.subr.mxu0 0.0
        %5031 = vmatpush1.msra.mxu0 0.0
        %5032 = vmatprep.subr.mxu0 0.0
        %5033 = vmatpush1.msra.mxu0 0.0
        %5034 = vmatprep.mubr.f32.mxu0 0.0
        %5035 = vmatmul.mubr.f32.gmra.mrb[0].mxu0 %v4968
        %v5036 = vpop.f32.mrb[0].mxu0
        %v5037 = vadd.f32 0.0, %v5036
        %v5038 = vpop.f32.mrb[0].mxu0
        %5039 = vdwg.mxu0
        %5040 = vst.msk [vmem:[#allocation5 + $0x4] sm:$0x1] %vm1794, %v5037
        %v5041 = vld [vmem:[#allocation4 + $0xb] sm:$0x1]
        %v5043 = vsel %vm1707, %v5041, 0
        %5045 = vmatprep.subr.mxu0 0.0
        %5046 = vmatpush1.msra.mxu0 %v4965
        %5047 = vmatprep.subr.mxu0 0.0
        %5048 = vmatpush1.msra.mxu0 0.0
        %5049 = vmatprep.subr.mxu0 0.0
        %5050 = vmatpush1.msra.mxu0 0.0
        %5051 = vmatprep.subr.mxu0 0.0
        %5052 = vmatpush1.msra.mxu0 0.0
        %5053 = vmatprep.subr.mxu0 0.0
        %5054 = vmatpush1.msra.mxu0 0.0
        %5055 = vmatprep.subr.mxu0 0.0
        %5056 = vmatpush1.msra.mxu0 0.0
        %5057 = vmatprep.subr.mxu0 0.0
        %5058 = vmatpush1.msra.mxu0 0.0
        %5059 = vmatprep.subr.mxu0 0.0
        %5060 = vmatpush1.msra.mxu0 0.0
        %5061 = vmatprep.subr.mxu0 0.0
        %5062 = vmatpush1.msra.mxu0 0.0
        %5063 = vmatprep.subr.mxu0 0.0
        %5064 = vmatpush1.msra.mxu0 0.0
        %5065 = vmatprep.subr.mxu0 0.0
        %5066 = vmatpush1.msra.mxu0 0.0
        %5067 = vmatprep.subr.mxu0 0.0
        %5068 = vmatpush1.msra.mxu0 0.0
        %5069 = vmatprep.subr.mxu0 0.0
        %5070 = vmatpush1.msra.mxu0 0.0
        %5071 = vmatprep.subr.mxu0 0.0
        %5072 = vmatpush1.msra.mxu0 0.0
        %5073 = vmatprep.subr.mxu0 0.0
        %5074 = vmatpush1.msra.mxu0 0.0
        %5075 = vmatprep.subr.mxu0 0.0
        %5076 = vmatpush1.msra.mxu0 0.0
        %5077 = vmatprep.subr.mxu0 0.0
        %5078 = vmatpush1.msra.mxu0 0.0
        %5079 = vmatprep.subr.mxu0 0.0
        %5080 = vmatpush1.msra.mxu0 0.0
        %5081 = vmatprep.subr.mxu0 0.0
        %5082 = vmatpush1.msra.mxu0 0.0
        %5083 = vmatprep.subr.mxu0 0.0
        %5084 = vmatpush1.msra.mxu0 0.0
        %5085 = vmatprep.subr.mxu0 0.0
        %5086 = vmatpush1.msra.mxu0 0.0
        %5087 = vmatprep.subr.mxu0 0.0
        %5088 = vmatpush1.msra.mxu0 0.0
        %5089 = vmatprep.subr.mxu0 0.0
        %5090 = vmatpush1.msra.mxu0 0.0
        %5091 = vmatprep.subr.mxu0 0.0
        %5092 = vmatpush1.msra.mxu0 0.0
        %5093 = vmatprep.subr.mxu0 0.0
        %5094 = vmatpush1.msra.mxu0 0.0
        %5095 = vmatprep.subr.mxu0 0.0
        %5096 = vmatpush1.msra.mxu0 0.0
        %5097 = vmatprep.subr.mxu0 0.0
        %5098 = vmatpush1.msra.mxu0 0.0
        %5099 = vmatprep.subr.mxu0 0.0
        %5100 = vmatpush1.msra.mxu0 0.0
        %5101 = vmatprep.subr.mxu0 0.0
        %5102 = vmatpush1.msra.mxu0 0.0
        %5103 = vmatprep.subr.mxu0 0.0
        %5104 = vmatpush1.msra.mxu0 0.0
        %5105 = vmatprep.subr.mxu0 0.0
        %5106 = vmatpush1.msra.mxu0 0.0
        %5107 = vmatprep.subr.mxu0 0.0
        %5108 = vmatpush1.msra.mxu0 0.0
        %5109 = vmatprep.mubr.f32.mxu0 0.0
        %5110 = vmatmul.mubr.f32.gmra.mrb[0].mxu0 %v5043
        %v5111 = vpop.f32.mrb[0].mxu0
        %v5112 = vadd.f32 0.0, %v5111
        %v5113 = vpop.f32.mrb[0].mxu0
        %5114 = vdwg.mxu0
        %5115 = vst.msk [vmem:[#allocation5 + $0xb] sm:$0x1] %vm1794, %v5112
        %v5116 = vld [vmem:[%s2519] sm:$0xff]
        %v5117 = vmul.f32 %v5116, %v4961
        %v5118 = vld [vmem:[%s2522] sm:$0xff]
        %v5119 = vadd.f32 %v5117, %v5118
        %v5120 = vld [vmem:[%s2525] sm:$0xff]
        %v5121 = vmul.f32 %v5120, %v4965
        %v5122 = vld [vmem:[%s2528] sm:$0xff]
        %v5123 = vadd.f32 %v5121, %v5122
        %v5124 = vld [vmem:[#allocation4 + $0x5] sm:$0x1]
        %v5126 = vsel %vm1707, %v5124, 0
        %5128 = vmatprep.subr.mxu0 0.0
        %5129 = vmatpush1.msra.mxu0 %v5119
        %5130 = vmatprep.subr.mxu0 0.0
        %5131 = vmatpush1.msra.mxu0 0.0
        %5132 = vmatprep.subr.mxu0 0.0
        %5133 = vmatpush1.msra.mxu0 0.0
        %5134 = vmatprep.subr.mxu0 0.0
        %5135 = vmatpush1.msra.mxu0 0.0
        %5136 = vmatprep.subr.mxu0 0.0
        %5137 = vmatpush1.msra.mxu0 0.0
        %5138 = vmatprep.subr.mxu0 0.0
        %5139 = vmatpush1.msra.mxu0 0.0
        %5140 = vmatprep.subr.mxu0 0.0
        %5141 = vmatpush1.msra.mxu0 0.0
        %5142 = vmatprep.subr.mxu0 0.0
        %5143 = vmatpush1.msra.mxu0 0.0
        %5144 = vmatprep.subr.mxu0 0.0
        %5145 = vmatpush1.msra.mxu0 0.0
        %5146 = vmatprep.subr.mxu0 0.0
        %5147 = vmatpush1.msra.mxu0 0.0
        %5148 = vmatprep.subr.mxu0 0.0
        %5149 = vmatpush1.msra.mxu0 0.0
        %5150 = vmatprep.subr.mxu0 0.0
        %5151 = vmatpush1.msra.mxu0 0.0
        %5152 = vmatprep.subr.mxu0 0.0
        %5153 = vmatpush1.msra.mxu0 0.0
        %5154 = vmatprep.subr.mxu0 0.0
        %5155 = vmatpush1.msra.mxu0 0.0
        %5156 = vmatprep.subr.mxu0 0.0
        %5157 = vmatpush1.msra.mxu0 0.0
        %5158 = vmatprep.subr.mxu0 0.0
        %5159 = vmatpush1.msra.mxu0 0.0
        %5160 = vmatprep.subr.mxu0 0.0
        %5161 = vmatpush1.msra.mxu0 0.0
        %5162 = vmatprep.subr.mxu0 0.0
        %5163 = vmatpush1.msra.mxu0 0.0
        %5164 = vmatprep.subr.mxu0 0.0
        %5165 = vmatpush1.msra.mxu0 0.0
        %5166 = vmatprep.subr.mxu0 0.0
        %5167 = vmatpush1.msra.mxu0 0.0
        %5168 = vmatprep.subr.mxu0 0.0
        %5169 = vmatpush1.msra.mxu0 0.0
        %5170 = vmatprep.subr.mxu0 0.0
        %5171 = vmatpush1.msra.mxu0 0.0
        %5172 = vmatprep.subr.mxu0 0.0
        %5173 = vmatpush1.msra.mxu0 0.0
        %5174 = vmatprep.subr.mxu0 0.0
        %5175 = vmatpush1.msra.mxu0 0.0
        %5176 = vmatprep.subr.mxu0 0.0
        %5177 = vmatpush1.msra.mxu0 0.0
        %5178 = vmatprep.subr.mxu0 0.0
        %5179 = vmatpush1.msra.mxu0 0.0
        %5180 = vmatprep.subr.mxu0 0.0
        %5181 = vmatpush1.msra.mxu0 0.0
        %5182 = vmatprep.subr.mxu0 0.0
        %5183 = vmatpush1.msra.mxu0 0.0
        %5184 = vmatprep.subr.mxu0 0.0
        %5185 = vmatpush1.msra.mxu0 0.0
        %5186 = vmatprep.subr.mxu0 0.0
        %5187 = vmatpush1.msra.mxu0 0.0
        %5188 = vmatprep.subr.mxu0 0.0
        %5189 = vmatpush1.msra.mxu0 0.0
        %5190 = vmatprep.subr.mxu0 0.0
        %5191 = vmatpush1.msra.mxu0 0.0
        %5192 = vmatprep.mubr.f32.mxu0 0.0
        %5193 = vmatmul.mubr.f32.gmra.mrb[0].mxu0 %v5126
        %v5194 = vpop.f32.mrb[0].mxu0
        %v5195 = vadd.f32 0.0, %v5194
        %v5196 = vpop.f32.mrb[0].mxu0
        %5197 = vdwg.mxu0
        %5198 = vst.msk [vmem:[#allocation5 + $0x5] sm:$0x1] %vm1794, %v5195
        %v5199 = vld [vmem:[#allocation4 + $0xa] sm:$0x1]
        %v5201 = vsel %vm1707, %v5199, 0
        %5203 = vmatprep.subr.mxu0 0.0
        %5204 = vmatpush1.msra.mxu0 %v5123
        %5205 = vmatprep.subr.mxu0 0.0
        %5206 = vmatpush1.msra.mxu0 0.0
        %5207 = vmatprep.subr.mxu0 0.0
        %5208 = vmatpush1.msra.mxu0 0.0
        %5209 = vmatprep.subr.mxu0 0.0
        %5210 = vmatpush1.msra.mxu0 0.0
        %5211 = vmatprep.subr.mxu0 0.0
        %5212 = vmatpush1.msra.mxu0 0.0
        %5213 = vmatprep.subr.mxu0 0.0
        %5214 = vmatpush1.msra.mxu0 0.0
        %5215 = vmatprep.subr.mxu0 0.0
        %5216 = vmatpush1.msra.mxu0 0.0
        %5217 = vmatprep.subr.mxu0 0.0
        %5218 = vmatpush1.msra.mxu0 0.0
        %5219 = vmatprep.subr.mxu0 0.0
        %5220 = vmatpush1.msra.mxu0 0.0
        %5221 = vmatprep.subr.mxu0 0.0
        %5222 = vmatpush1.msra.mxu0 0.0
        %5223 = vmatprep.subr.mxu0 0.0
        %5224 = vmatpush1.msra.mxu0 0.0
        %5225 = vmatprep.subr.mxu0 0.0
        %5226 = vmatpush1.msra.mxu0 0.0
        %5227 = vmatprep.subr.mxu0 0.0
        %5228 = vmatpush1.msra.mxu0 0.0
        %5229 = vmatprep.subr.mxu0 0.0
        %5230 = vmatpush1.msra.mxu0 0.0
        %5231 = vmatprep.subr.mxu0 0.0
        %5232 = vmatpush1.msra.mxu0 0.0
        %5233 = vmatprep.subr.mxu0 0.0
        %5234 = vmatpush1.msra.mxu0 0.0
        %5235 = vmatprep.subr.mxu0 0.0
        %5236 = vmatpush1.msra.mxu0 0.0
        %5237 = vmatprep.subr.mxu0 0.0
        %5238 = vmatpush1.msra.mxu0 0.0
        %5239 = vmatprep.subr.mxu0 0.0
        %5240 = vmatpush1.msra.mxu0 0.0
        %5241 = vmatprep.subr.mxu0 0.0
        %5242 = vmatpush1.msra.mxu0 0.0
        %5243 = vmatprep.subr.mxu0 0.0
        %5244 = vmatpush1.msra.mxu0 0.0
        %5245 = vmatprep.subr.mxu0 0.0
        %5246 = vmatpush1.msra.mxu0 0.0
        %5247 = vmatprep.subr.mxu0 0.0
        %5248 = vmatpush1.msra.mxu0 0.0
        %5249 = vmatprep.subr.mxu0 0.0
        %5250 = vmatpush1.msra.mxu0 0.0
        %5251 = vmatprep.subr.mxu0 0.0
        %5252 = vmatpush1.msra.mxu0 0.0
        %5253 = vmatprep.subr.mxu0 0.0
        %5254 = vmatpush1.msra.mxu0 0.0
        %5255 = vmatprep.subr.mxu0 0.0
        %5256 = vmatpush1.msra.mxu0 0.0
        %5257 = vmatprep.subr.mxu0 0.0
        %5258 = vmatpush1.msra.mxu0 0.0
        %5259 = vmatprep.subr.mxu0 0.0
        %5260 = vmatpush1.msra.mxu0 0.0
        %5261 = vmatprep.subr.mxu0 0.0
        %5262 = vmatpush1.msra.mxu0 0.0
        %5263 = vmatprep.subr.mxu0 0.0
        %5264 = vmatpush1.msra.mxu0 0.0
        %5265 = vmatprep.subr.mxu0 0.0
        %5266 = vmatpush1.msra.mxu0 0.0
        %5267 = vmatprep.mubr.f32.mxu0 0.0
        %5268 = vmatmul.mubr.f32.gmra.mrb[0].mxu0 %v5201
        %v5269 = vpop.f32.mrb[0].mxu0
        %v5270 = vadd.f32 0.0, %v5269
        %v5271 = vpop.f32.mrb[0].mxu0
        %5272 = vdwg.mxu0
        %5273 = vst.msk [vmem:[#allocation5 + $0xa] sm:$0x1] %vm1794, %v5270
        %v5274 = vld [vmem:[%s2681] sm:$0xff]
        %v5275 = vmul.f32 %v5274, %v5119
        %v5276 = vld [vmem:[%s2684] sm:$0xff]
        %v5277 = vadd.f32 %v5275, %v5276
        %v5278 = vld [vmem:[%s2687] sm:$0xff]
        %v5279 = vmul.f32 %v5278, %v5123
        %v5280 = vld [vmem:[%s2690] sm:$0xff]
        %v5281 = vadd.f32 %v5279, %v5280
        %v5282 = vld [vmem:[#allocation4 + $0x6] sm:$0x1]
        %v5284 = vsel %vm1707, %v5282, 0
        %5286 = vmatprep.subr.mxu0 0.0
        %5287 = vmatpush1.msra.mxu0 %v5277
        %5288 = vmatprep.subr.mxu0 0.0
        %5289 = vmatpush1.msra.mxu0 0.0
        %5290 = vmatprep.subr.mxu0 0.0
        %5291 = vmatpush1.msra.mxu0 0.0
        %5292 = vmatprep.subr.mxu0 0.0
        %5293 = vmatpush1.msra.mxu0 0.0
        %5294 = vmatprep.subr.mxu0 0.0
        %5295 = vmatpush1.msra.mxu0 0.0
        %5296 = vmatprep.subr.mxu0 0.0
        %5297 = vmatpush1.msra.mxu0 0.0
        %5298 = vmatprep.subr.mxu0 0.0
        %5299 = vmatpush1.msra.mxu0 0.0
        %5300 = vmatprep.subr.mxu0 0.0
        %5301 = vmatpush1.msra.mxu0 0.0
        %5302 = vmatprep.subr.mxu0 0.0
        %5303 = vmatpush1.msra.mxu0 0.0
        %5304 = vmatprep.subr.mxu0 0.0
        %5305 = vmatpush1.msra.mxu0 0.0
        %5306 = vmatprep.subr.mxu0 0.0
        %5307 = vmatpush1.msra.mxu0 0.0
        %5308 = vmatprep.subr.mxu0 0.0
        %5309 = vmatpush1.msra.mxu0 0.0
        %5310 = vmatprep.subr.mxu0 0.0
        %5311 = vmatpush1.msra.mxu0 0.0
        %5312 = vmatprep.subr.mxu0 0.0
        %5313 = vmatpush1.msra.mxu0 0.0
        %5314 = vmatprep.subr.mxu0 0.0
        %5315 = vmatpush1.msra.mxu0 0.0
        %5316 = vmatprep.subr.mxu0 0.0
        %5317 = vmatpush1.msra.mxu0 0.0
        %5318 = vmatprep.subr.mxu0 0.0
        %5319 = vmatpush1.msra.mxu0 0.0
        %5320 = vmatprep.subr.mxu0 0.0
        %5321 = vmatpush1.msra.mxu0 0.0
        %5322 = vmatprep.subr.mxu0 0.0
        %5323 = vmatpush1.msra.mxu0 0.0
        %5324 = vmatprep.subr.mxu0 0.0
        %5325 = vmatpush1.msra.mxu0 0.0
        %5326 = vmatprep.subr.mxu0 0.0
        %5327 = vmatpush1.msra.mxu0 0.0
        %5328 = vmatprep.subr.mxu0 0.0
        %5329 = vmatpush1.msra.mxu0 0.0
        %5330 = vmatprep.subr.mxu0 0.0
        %5331 = vmatpush1.msra.mxu0 0.0
        %5332 = vmatprep.subr.mxu0 0.0
        %5333 = vmatpush1.msra.mxu0 0.0
        %5334 = vmatprep.subr.mxu0 0.0
        %5335 = vmatpush1.msra.mxu0 0.0
        %5336 = vmatprep.subr.mxu0 0.0
        %5337 = vmatpush1.msra.mxu0 0.0
        %5338 = vmatprep.subr.mxu0 0.0
        %5339 = vmatpush1.msra.mxu0 0.0
        %5340 = vmatprep.subr.mxu0 0.0
        %5341 = vmatpush1.msra.mxu0 0.0
        %5342 = vmatprep.subr.mxu0 0.0
        %5343 = vmatpush1.msra.mxu0 0.0
        %5344 = vmatprep.subr.mxu0 0.0
        %5345 = vmatpush1.msra.mxu0 0.0
        %5346 = vmatprep.subr.mxu0 0.0
        %5347 = vmatpush1.msra.mxu0 0.0
        %5348 = vmatprep.subr.mxu0 0.0
        %5349 = vmatpush1.msra.mxu0 0.0
        %5350 = vmatprep.mubr.f32.mxu0 0.0
        %5351 = vmatmul.mubr.f32.gmra.mrb[0].mxu0 %v5284
        %v5352 = vpop.f32.mrb[0].mxu0
        %v5353 = vadd.f32 0.0, %v5352
        %v5354 = vpop.f32.mrb[0].mxu0
        %5355 = vdwg.mxu0
        %5356 = vst.msk [vmem:[#allocation5 + $0x6] sm:$0x1] %vm1794, %v5353
        %v5357 = vld [vmem:[#allocation4 + $0x9] sm:$0x1]
        %v5359 = vsel %vm1707, %v5357, 0
        %5361 = vmatprep.subr.mxu0 0.0
        %5362 = vmatpush1.msra.mxu0 %v5281
        %5363 = vmatprep.subr.mxu0 0.0
        %5364 = vmatpush1.msra.mxu0 0.0
        %5365 = vmatprep.subr.mxu0 0.0
        %5366 = vmatpush1.msra.mxu0 0.0
        %5367 = vmatprep.subr.mxu0 0.0
        %5368 = vmatpush1.msra.mxu0 0.0
        %5369 = vmatprep.subr.mxu0 0.0
        %5370 = vmatpush1.msra.mxu0 0.0
        %5371 = vmatprep.subr.mxu0 0.0
        %5372 = vmatpush1.msra.mxu0 0.0
        %5373 = vmatprep.subr.mxu0 0.0
        %5374 = vmatpush1.msra.mxu0 0.0
        %5375 = vmatprep.subr.mxu0 0.0
        %5376 = vmatpush1.msra.mxu0 0.0
        %5377 = vmatprep.subr.mxu0 0.0
        %5378 = vmatpush1.msra.mxu0 0.0
        %5379 = vmatprep.subr.mxu0 0.0
        %5380 = vmatpush1.msra.mxu0 0.0
        %5381 = vmatprep.subr.mxu0 0.0
        %5382 = vmatpush1.msra.mxu0 0.0
        %5383 = vmatprep.subr.mxu0 0.0
        %5384 = vmatpush1.msra.mxu0 0.0
        %5385 = vmatprep.subr.mxu0 0.0
        %5386 = vmatpush1.msra.mxu0 0.0
        %5387 = vmatprep.subr.mxu0 0.0
        %5388 = vmatpush1.msra.mxu0 0.0
        %5389 = vmatprep.subr.mxu0 0.0
        %5390 = vmatpush1.msra.mxu0 0.0
        %5391 = vmatprep.subr.mxu0 0.0
        %5392 = vmatpush1.msra.mxu0 0.0
        %5393 = vmatprep.subr.mxu0 0.0
        %5394 = vmatpush1.msra.mxu0 0.0
        %5395 = vmatprep.subr.mxu0 0.0
        %5396 = vmatpush1.msra.mxu0 0.0
        %5397 = vmatprep.subr.mxu0 0.0
        %5398 = vmatpush1.msra.mxu0 0.0
        %5399 = vmatprep.subr.mxu0 0.0
        %5400 = vmatpush1.msra.mxu0 0.0
        %5401 = vmatprep.subr.mxu0 0.0
        %5402 = vmatpush1.msra.mxu0 0.0
        %5403 = vmatprep.subr.mxu0 0.0
        %5404 = vmatpush1.msra.mxu0 0.0
        %5405 = vmatprep.subr.mxu0 0.0
        %5406 = vmatpush1.msra.mxu0 0.0
        %5407 = vmatprep.subr.mxu0 0.0
        %5408 = vmatpush1.msra.mxu0 0.0
        %5409 = vmatprep.subr.mxu0 0.0
        %5410 = vmatpush1.msra.mxu0 0.0
        %5411 = vmatprep.subr.mxu0 0.0
        %5412 = vmatpush1.msra.mxu0 0.0
        %5413 = vmatprep.subr.mxu0 0.0
        %5414 = vmatpush1.msra.mxu0 0.0
        %5415 = vmatprep.subr.mxu0 0.0
        %5416 = vmatpush1.msra.mxu0 0.0
        %5417 = vmatprep.subr.mxu0 0.0
        %5418 = vmatpush1.msra.mxu0 0.0
        %5419 = vmatprep.subr.mxu0 0.0
        %5420 = vmatpush1.msra.mxu0 0.0
        %5421 = vmatprep.subr.mxu0 0.0
        %5422 = vmatpush1.msra.mxu0 0.0
        %5423 = vmatprep.subr.mxu0 0.0
        %5424 = vmatpush1.msra.mxu0 0.0
        %5425 = vmatprep.mubr.f32.mxu0 0.0
        %5426 = vmatmul.mubr.f32.gmra.mrb[0].mxu0 %v5359
        %v5427 = vpop.f32.mrb[0].mxu0
        %v5428 = vadd.f32 0.0, %v5427
        %v5429 = vpop.f32.mrb[0].mxu0
        %5430 = vdwg.mxu0
        %5431 = vst.msk [vmem:[#allocation5 + $0x9] sm:$0x1] %vm1794, %v5428
        %v5432 = vld [vmem:[%s2843] sm:$0xff]
        %v5433 = vmul.f32 %v5432, %v5277
        %v5434 = vld [vmem:[%s2846] sm:$0xff]
        %v5435 = vadd.f32 %v5433, %v5434
        %v5436 = vld [vmem:[%s2849] sm:$0xff]
        %v5437 = vmul.f32 %v5436, %v5281
        %v5438 = vld [vmem:[%s2852] sm:$0xff]
        %v5439 = vadd.f32 %v5437, %v5438
        %v5440 = vld [vmem:[#allocation4 + $0x7] sm:$0x1]
        %v5442 = vsel %vm1707, %v5440, 0
        %5444 = vmatprep.subr.mxu0 0.0
        %5445 = vmatpush1.msra.mxu0 %v5435
        %5446 = vmatprep.subr.mxu0 0.0
        %5447 = vmatpush1.msra.mxu0 0.0
        %5448 = vmatprep.subr.mxu0 0.0
        %5449 = vmatpush1.msra.mxu0 0.0
        %5450 = vmatprep.subr.mxu0 0.0
        %5451 = vmatpush1.msra.mxu0 0.0
        %5452 = vmatprep.subr.mxu0 0.0
        %5453 = vmatpush1.msra.mxu0 0.0
        %5454 = vmatprep.subr.mxu0 0.0
        %5455 = vmatpush1.msra.mxu0 0.0
        %5456 = vmatprep.subr.mxu0 0.0
        %5457 = vmatpush1.msra.mxu0 0.0
        %5458 = vmatprep.subr.mxu0 0.0
        %5459 = vmatpush1.msra.mxu0 0.0
        %5460 = vmatprep.subr.mxu0 0.0
        %5461 = vmatpush1.msra.mxu0 0.0
        %5462 = vmatprep.subr.mxu0 0.0
        %5463 = vmatpush1.msra.mxu0 0.0
        %5464 = vmatprep.subr.mxu0 0.0
        %5465 = vmatpush1.msra.mxu0 0.0
        %5466 = vmatprep.subr.mxu0 0.0
        %5467 = vmatpush1.msra.mxu0 0.0
        %5468 = vmatprep.subr.mxu0 0.0
        %5469 = vmatpush1.msra.mxu0 0.0
        %5470 = vmatprep.subr.mxu0 0.0
        %5471 = vmatpush1.msra.mxu0 0.0
        %5472 = vmatprep.subr.mxu0 0.0
        %5473 = vmatpush1.msra.mxu0 0.0
        %5474 = vmatprep.subr.mxu0 0.0
        %5475 = vmatpush1.msra.mxu0 0.0
        %5476 = vmatprep.subr.mxu0 0.0
        %5477 = vmatpush1.msra.mxu0 0.0
        %5478 = vmatprep.subr.mxu0 0.0
        %5479 = vmatpush1.msra.mxu0 0.0
        %5480 = vmatprep.subr.mxu0 0.0
        %5481 = vmatpush1.msra.mxu0 0.0
        %5482 = vmatprep.subr.mxu0 0.0
        %5483 = vmatpush1.msra.mxu0 0.0
        %5484 = vmatprep.subr.mxu0 0.0
        %5485 = vmatpush1.msra.mxu0 0.0
        %5486 = vmatprep.subr.mxu0 0.0
        %5487 = vmatpush1.msra.mxu0 0.0
        %5488 = vmatprep.subr.mxu0 0.0
        %5489 = vmatpush1.msra.mxu0 0.0
        %5490 = vmatprep.subr.mxu0 0.0
        %5491 = vmatpush1.msra.mxu0 0.0
        %5492 = vmatprep.subr.mxu0 0.0
        %5493 = vmatpush1.msra.mxu0 0.0
        %5494 = vmatprep.subr.mxu0 0.0
        %5495 = vmatpush1.msra.mxu0 0.0
        %5496 = vmatprep.subr.mxu0 0.0
        %5497 = vmatpush1.msra.mxu0 0.0
        %5498 = vmatprep.subr.mxu0 0.0
        %5499 = vmatpush1.msra.mxu0 0.0
        %5500 = vmatprep.subr.mxu0 0.0
        %5501 = vmatpush1.msra.mxu0 0.0
        %5502 = vmatprep.subr.mxu0 0.0
        %5503 = vmatpush1.msra.mxu0 0.0
        %5504 = vmatprep.subr.mxu0 0.0
        %5505 = vmatpush1.msra.mxu0 0.0
        %5506 = vmatprep.subr.mxu0 0.0
        %5507 = vmatpush1.msra.mxu0 0.0
        %5508 = vmatprep.mubr.f32.mxu0 0.0
        %5509 = vmatmul.mubr.f32.gmra.mrb[0].mxu0 %v5442
        %v5510 = vpop.f32.mrb[0].mxu0
        %v5511 = vadd.f32 0.0, %v5510
        %v5512 = vpop.f32.mrb[0].mxu0
        %5513 = vdwg.mxu0
        %5514 = vst.msk [vmem:[#allocation5 + $0x7] sm:$0x1] %vm1794, %v5511
        %v5515 = vld [vmem:[#allocation4 + $0x8] sm:$0x1]
        %v5517 = vsel %vm1707, %v5515, 0
        %5519 = vmatprep.subr.mxu0 0.0
        %5520 = vmatpush1.msra.mxu0 %v5439
        %5521 = vmatprep.subr.mxu0 0.0
        %5522 = vmatpush1.msra.mxu0 0.0
        %5523 = vmatprep.subr.mxu0 0.0
        %5524 = vmatpush1.msra.mxu0 0.0
        %5525 = vmatprep.subr.mxu0 0.0
        %5526 = vmatpush1.msra.mxu0 0.0
        %5527 = vmatprep.subr.mxu0 0.0
        %5528 = vmatpush1.msra.mxu0 0.0
        %5529 = vmatprep.subr.mxu0 0.0
        %5530 = vmatpush1.msra.mxu0 0.0
        %5531 = vmatprep.subr.mxu0 0.0
        %5532 = vmatpush1.msra.mxu0 0.0
        %5533 = vmatprep.subr.mxu0 0.0
        %5534 = vmatpush1.msra.mxu0 0.0
        %5535 = vmatprep.subr.mxu0 0.0
        %5536 = vmatpush1.msra.mxu0 0.0
        %5537 = vmatprep.subr.mxu0 0.0
        %5538 = vmatpush1.msra.mxu0 0.0
        %5539 = vmatprep.subr.mxu0 0.0
        %5540 = vmatpush1.msra.mxu0 0.0
        %5541 = vmatprep.subr.mxu0 0.0
        %5542 = vmatpush1.msra.mxu0 0.0
        %5543 = vmatprep.subr.mxu0 0.0
        %5544 = vmatpush1.msra.mxu0 0.0
        %5545 = vmatprep.subr.mxu0 0.0
        %5546 = vmatpush1.msra.mxu0 0.0
        %5547 = vmatprep.subr.mxu0 0.0
        %5548 = vmatpush1.msra.mxu0 0.0
        %5549 = vmatprep.subr.mxu0 0.0
        %5550 = vmatpush1.msra.mxu0 0.0
        %5551 = vmatprep.subr.mxu0 0.0
        %5552 = vmatpush1.msra.mxu0 0.0
        %5553 = vmatprep.subr.mxu0 0.0
        %5554 = vmatpush1.msra.mxu0 0.0
        %5555 = vmatprep.subr.mxu0 0.0
        %5556 = vmatpush1.msra.mxu0 0.0
        %5557 = vmatprep.subr.mxu0 0.0
        %5558 = vmatpush1.msra.mxu0 0.0
        %5559 = vmatprep.subr.mxu0 0.0
        %5560 = vmatpush1.msra.mxu0 0.0
        %5561 = vmatprep.subr.mxu0 0.0
        %5562 = vmatpush1.msra.mxu0 0.0
        %5563 = vmatprep.subr.mxu0 0.0
        %5564 = vmatpush1.msra.mxu0 0.0
        %5565 = vmatprep.subr.mxu0 0.0
        %5566 = vmatpush1.msra.mxu0 0.0
        %5567 = vmatprep.subr.mxu0 0.0
        %5568 = vmatpush1.msra.mxu0 0.0
        %5569 = vmatprep.subr.mxu0 0.0
        %5570 = vmatpush1.msra.mxu0 0.0
        %5571 = vmatprep.subr.mxu0 0.0
        %5572 = vmatpush1.msra.mxu0 0.0
        %5573 = vmatprep.subr.mxu0 0.0
        %5574 = vmatpush1.msra.mxu0 0.0
        %5575 = vmatprep.subr.mxu0 0.0
        %5576 = vmatpush1.msra.mxu0 0.0
        %5577 = vmatprep.subr.mxu0 0.0
        %5578 = vmatpush1.msra.mxu0 0.0
        %5579 = vmatprep.subr.mxu0 0.0
        %5580 = vmatpush1.msra.mxu0 0.0
        %5581 = vmatprep.subr.mxu0 0.0
        %5582 = vmatpush1.msra.mxu0 0.0
        %5583 = vmatprep.mubr.f32.mxu0 0.0
        %5584 = vmatmul.mubr.f32.gmra.mrb[0].mxu0 %v5517
        %v5585 = vpop.f32.mrb[0].mxu0
        %v5586 = vadd.f32 0.0, %v5585
        %v5587 = vpop.f32.mrb[0].mxu0
        %5588 = vdwg.mxu0
        %5589 = vst.msk [vmem:[#allocation5 + $0x8] sm:$0x1] %vm1794, %v5586
        %v5590 = vld [vmem:[#allocation5] sm:$0xff]
        %v5591 = vld [vmem:[#allocation5 + $0x8] sm:$0xff]
        %s5592 = scalar_lea.vmem %s13, 1
        %v5593 = vld [vmem:[%s5592] sm:$0x1]
        %v5595 = vlaneseq
        %v5596 = vshrl.u32 %v5595, 7
        %v5597 = vsub.s32 0, %v5596
        %v5598 = vrot.slane %v5593, %v5597
        %v5600 = vmul.f32 %v5598, %v3391
        %v5601 = vmul.f32 %v5598, %v3392
        %v5602 = vadd.f32 %v5590, %v5600
        %v5603 = vadd.f32 %v5591, %v5601
        %v5604 = vadd.f32 %v5602, %v5603
        %v5605 = vsub.f32 0.0, %v3282
        %v5606 = vmul.f32 %v5605, 1.442695
        %v5607 = vpow.pop %v5606
        %v5608 = vadd.f32 %v5607, 1.0
        %v5609 = vrcp.pop %v5608
        %v5610 = vmul.f32 1.0, %v5609
        %v5611 = vmul.f32 %v3282, %v5610
        %v5612 = vmul.f32 %v5611, 0.5
        %v5613 = vmul.f32 %v5604, %v5612
        %s5614 = scalar_lea.vmem %s14, 32
        %v5615 = vld [vmem:[%s5614] sm:$0xff]
        %v5616 = vld [vmem:[%s5614 + $0x8] sm:$0xff]
        %v5617 = vld [vmem:[%s5614 + $0x10] sm:$0xff]
        %v5618 = vld [vmem:[%s5614 + $0x18] sm:$0xff]
        %v5620 = vsel %vm783, %v5613, 0
        %5622 = vmatprep.subr.mxu0 0.0
        %5623 = vmatpush1.msra.mxu0 %v5615
        %5624 = vmatprep.subr.mxu0 0.0
        %5625 = vmatpush1.msra.mxu0 %v5616
        %5626 = vmatprep.subr.mxu0 0.0
        %5627 = vmatpush1.msra.mxu0 %v5617
        %5628 = vmatprep.subr.mxu0 0.0
        %5629 = vmatpush1.msra.mxu0 %v5618
        %5630 = vmatprep.subr.mxu0 0.0
        %5631 = vmatpush1.msra.mxu0 0.0
        %5632 = vmatprep.subr.mxu0 0.0
        %5633 = vmatpush1.msra.mxu0 0.0
        %5634 = vmatprep.subr.mxu0 0.0
        %5635 = vmatpush1.msra.mxu0 0.0
        %5636 = vmatprep.subr.mxu0 0.0
        %5637 = vmatpush1.msra.mxu0 0.0
        %5638 = vmatprep.subr.mxu0 0.0
        %5639 = vmatpush1.msra.mxu0 0.0
        %5640 = vmatprep.subr.mxu0 0.0
        %5641 = vmatpush1.msra.mxu0 0.0
        %5642 = vmatprep.subr.mxu0 0.0
        %5643 = vmatpush1.msra.mxu0 0.0
        %5644 = vmatprep.subr.mxu0 0.0
        %5645 = vmatpush1.msra.mxu0 0.0
        %5646 = vmatprep.subr.mxu0 0.0
        %5647 = vmatpush1.msra.mxu0 0.0
        %5648 = vmatprep.subr.mxu0 0.0
        %5649 = vmatpush1.msra.mxu0 0.0
        %5650 = vmatprep.subr.mxu0 0.0
        %5651 = vmatpush1.msra.mxu0 0.0
        %5652 = vmatprep.subr.mxu0 0.0
        %5653 = vmatpush1.msra.mxu0 0.0
        %5654 = vmatprep.subr.mxu0 0.0
        %5655 = vmatpush1.msra.mxu0 0.0
        %5656 = vmatprep.subr.mxu0 0.0
        %5657 = vmatpush1.msra.mxu0 0.0
        %5658 = vmatprep.subr.mxu0 0.0
        %5659 = vmatpush1.msra.mxu0 0.0
        %5660 = vmatprep.subr.mxu0 0.0
        %5661 = vmatpush1.msra.mxu0 0.0
        %5662 = vmatprep.subr.mxu0 0.0
        %5663 = vmatpush1.msra.mxu0 0.0
        %5664 = vmatprep.subr.mxu0 0.0
        %5665 = vmatpush1.msra.mxu0 0.0
        %5666 = vmatprep.subr.mxu0 0.0
        %5667 = vmatpush1.msra.mxu0 0.0
        %5668 = vmatprep.subr.mxu0 0.0
        %5669 = vmatpush1.msra.mxu0 0.0
        %5670 = vmatprep.subr.mxu0 0.0
        %5671 = vmatpush1.msra.mxu0 0.0
        %5672 = vmatprep.subr.mxu0 0.0
        %5673 = vmatpush1.msra.mxu0 0.0
        %5674 = vmatprep.subr.mxu0 0.0
        %5675 = vmatpush1.msra.mxu0 0.0
        %5676 = vmatprep.subr.mxu0 0.0
        %5677 = vmatpush1.msra.mxu0 0.0
        %5678 = vmatprep.subr.mxu0 0.0
        %5679 = vmatpush1.msra.mxu0 0.0
        %5680 = vmatprep.subr.mxu0 0.0
        %5681 = vmatpush1.msra.mxu0 0.0
        %5682 = vmatprep.subr.mxu0 0.0
        %5683 = vmatpush1.msra.mxu0 0.0
        %5684 = vmatprep.subr.mxu0 0.0
        %5685 = vmatpush1.msra.mxu0 0.0
        %5686 = vmatprep.mubr.f32.mxu0 0.0
        %5687 = vmatmul.mubr.f32.gmra.mrb[0].mxu0 %v5620
        %v5688 = vpop.f32.mrb[0].mxu0
        %v5689 = vadd.f32 %v3102, %v5688
        %v5690 = vpop.f32.mrb[0].mxu0
        %5691 = vdwg.mxu0
        %5692 = vst.msk [vmem:[%s485] sm:$0xff] %vm491, %v5689
        %s5693 = sand.u32 %s357, 1
        %s5694 = scalar_lea.sflag [#allocation7], %s5693
        %s5695 = sand.u32 %s357, 1
        %s5696 = smul.addr %s5695, 8
        %s5697 = scalar_lea.vmem [#allocation6], %s5696
        // Predicated region
        $region81: #{bimamba_forward_call.1} parent=79 // pred_check
          %p5698 = pneg %p367
        $region82: #{bimamba_forward_call.1} parent=79 // pred_check_branch
          %5700 = sbr.rel (%p5698) target = $region84
        $region83: #{bimamba_forward_call.1} parent=79 // pred_region
          %s5702 = ssub.s32 128, 128
          %5703 = vsyncadd %s5694, %s5702
          %s5704 = smul.addr %s29, 128
          %s5705 = scalar_lea.hbm %s15, %s5704
          %s5707 = sshll.u32 %s5697, 4
          %s5708 = int_to_ptr.vmem [resolvable:$true] %s5707
          %5710 = dma.vmem_to_hbm [thread:$0]  %s5708, 128, %s5705, %s5694
        $region84: #{bimamba_forward_call.1} parent=79 // pred_fallthru
          _
      $region80: #{bimamba_forward_call.1} parent=5 // pred_fallthru
        _
      %p5711 = scmp.le.s32.totalorder 2, %s24
      // Predicated region
      $region85: #{bimamba_forward_call.1} parent=5 // pred_check
        %p5712 = pneg %p5711
      $region86: #{bimamba_forward_call.1} parent=5 // pred_check_branch
        %5714 = sbr.rel (%p5712) target = $region88
      $region87: #{bimamba_forward_call.1} parent=5 // pred_region
        %s5715 = ssub.s32 %s24, 2
        // Predicated region
        $region89: #{bimamba_forward_call.1} parent=87 // pred_check
          %p5716 = pneg %p373
        $region90: #{bimamba_forward_call.1} parent=87 // pred_check_branch
          %5718 = sbr.rel (%p5716) target = $region92
        $region91: #{bimamba_forward_call.1} parent=87 // pred_region
          %s5719 = sand.u32 %s358, 1
          %s5720 = scalar_lea.sflag [#allocation7], %s5719
          %s5721 = sand.u32 %s358, 1
          %s5722 = smul.addr %s5721, 8
          %s5723 = scalar_lea.vmem [#allocation6], %s5722
          %5724 = dma.done %s5720, 128
        $region92: #{bimamba_forward_call.1} parent=87 // pred_fallthru
          _
      $region88: #{bimamba_forward_call.1} parent=5 // pred_fallthru
        _
    $region6: #{bimamba_forward_call.1} parent=1 // loop_footer
      %s28 = sadd.s32 1, %s24
    $region7: #{bimamba_forward_call.1} parent=1 // loop_footer_branch
      %23 = sbr.rel target = $region3
    $region8: #{bimamba_forward_call.1} parent=1 // loop_exit
      _
    %5725 = vsyncpa [#allocation7], 1
    %s5726 = scalar_lea.sflag [#allocation7], 1
    %5727 = vsyncpa %s5726, 1

</llo_original>
